<compile_context>
chip_gen: v7x
topology: tpu7x:2x2x1
jax: 0.10.0
libtpu: 0.0.40
codegen_flags: <defaults>
</compile_context>

<pallas_src>
import functools
import math

import jax
import jax.numpy as jnp
from jax.experimental import pallas as pl
from jax.experimental.pallas import tpu as pltpu

D_MODEL = 32
NUM_HEADS = 4
HEAD_DIM = D_MODEL // NUM_HEADS
FF_DIM = 64
NUM_LAYERS = 2
VOCAB = 32
MAX_LEN = 64
PAD_ID = 0
NEG_INF = -1e30  # finite stand-in for float('-inf'); exp underflows to 0 in f32


# ----------------------------- fused Pallas kernel -----------------------------

def _decoder_stack_kernel(
    # per-batch data (one batch element per grid step)
    tok_ref, pe_ref, enc_ref,
    # shared embedding table + stacked per-layer weights (leading dim = L)
    emb_ref,
    wqkv_ref, bqkv_ref, wo_s_ref, bo_s_ref, ln1g_ref, ln1b_ref,
    wqc_ref, bqc_ref, wkvc_ref, bkvc_ref, woc_ref, boc_ref, ln2g_ref, ln2b_ref,
    w1_ref, b1_ref, w2_ref, b2_ref, ln3g_ref, ln3b_ref,
    # outputs
    y_ref, attn_ref,
    *, num_layers, num_heads, head_dim, d_model, vocab, pad_id,
    attn_scale, pe_scale, eps, seq_len):
    f32 = jnp.float32

    # ---- embedding lookup as a one-hot matmul (no gather, stays on MXU) ----
    tok_row = tok_ref[0]                                               # (1, Lt) int32
    onehot_t = (jax.lax.broadcasted_iota(jnp.int32, (vocab, seq_len), 0)
                == tok_row).astype(f32)                                # (V, Lt)
    emb = jax.lax.dot_general(onehot_t, emb_ref[...],
                              (((0,), (0,)), ((), ())),
                              preferred_element_type=f32)              # (Lt, D)

    # ---- additive self-attention mask built in-kernel: causal + key padding ----
    rows = jax.lax.broadcasted_iota(jnp.int32, (seq_len, seq_len), 0)
    cols = jax.lax.broadcasted_iota(jnp.int32, (seq_len, seq_len), 1)
    mask = jnp.where(cols > rows, NEG_INF, 0.0)                        # causal
    mask = mask + jnp.where(tok_row == pad_id, NEG_INF, 0.0)           # (Lt, Lt)

    # embedding * sqrt(d_model) + positional encoding (PE broadcast over the
    # sequence axis — reproduces the reference's pe[:, :x.size(1)] quirk).
    x = emb * pe_scale + pe_ref[0].astype(f32)                         # (Lt, D)
    enc = enc_ref[0].astype(f32)                                       # (Ls, D)
    # dropout: eval-mode identity  # TODO(synk): training-mode dropout not implemented

    def layer_norm(v, g, b):
        mu = jnp.mean(v, axis=-1, keepdims=True)
        var = jnp.mean(jnp.square(v - mu), axis=-1, keepdims=True)
        return (v - mu) * jax.lax.rsqrt(var + eps) * g + b

    def mha(q_all, k_all, v_all, add_mask, w_out, b_out, want_probs):
        """Multi-head attention over lane-sliced heads, fully in VMEM/vregs.

        The output projection is folded into the head loop as
        sum_h (softmax(q_h k_h^T) v_h) @ W_out[h*Dh:(h+1)*Dh, :], avoiding any
        head concat / transpose round-trip.
        """
        lq = q_all.shape[0]
        out = jnp.zeros((lq, d_model), f32)
        probs_sum = jnp.zeros((lq, k_all.shape[0]), f32) if want_probs else None
        for h in range(num_heads):                       # static unrolled loop
            lo, hi = h * head_dim, (h + 1) * head_dim
            qh = q_all[:, lo:hi]
            kh = k_all[:, lo:hi]
            vh = v_all[:, lo:hi]
            s = jax.lax.dot_general(qh, kh, (((1,), (1,)), ((), ())),
                                    preferred_element_type=f32) * attn_scale
            if add_mask is not None:
                s = s + add_mask
            s = s - jnp.max(s, axis=-1, keepdims=True)
            e = jnp.exp(s)
            p = e / jnp.sum(e, axis=-1, keepdims=True)
            oh = jnp.dot(p, vh, preferred_element_type=f32)            # (Lq, Dh)
            out = out + jnp.dot(oh, w_out[lo:hi, :], preferred_element_type=f32)
            if want_probs:
                probs_sum = probs_sum + p
        out = out + b_out
        probs = probs_sum * (1.0 / num_heads) if want_probs else None
        return out, probs

    for li in range(num_layers):                         # static unrolled loop
        # --- masked self-attention (fused QKV matmul, probs discarded) ---
        qkv = jnp.dot(x, wqkv_ref[li], preferred_element_type=f32) + bqkv_ref[li]
        q = qkv[:, 0:d_model]
        k = qkv[:, d_model:2 * d_model]
        v = qkv[:, 2 * d_model:3 * d_model]
        sa, _ = mha(q, k, v, mask, wo_s_ref[li], bo_s_ref[li], want_probs=False)
        x = layer_norm(x + sa, ln1g_ref[li], ln1b_ref[li])

        # --- cross-attention (zero mask dropped; head-averaged probs written) ---
        qc = jnp.dot(x, wqc_ref[li], preferred_element_type=f32) + bqc_ref[li]
        kv = jnp.dot(enc, wkvc_ref[li], preferred_element_type=f32) + bkvc_ref[li]
        kc = kv[:, 0:d_model]
        vc = kv[:, d_model:2 * d_model]
        ca, probs = mha(qc, kc, vc, None, woc_ref[li], boc_ref[li], want_probs=True)
        x = layer_norm(x + ca, ln2g_ref[li], ln2b_ref[li])
        attn_ref[0, li] = probs.astype(attn_ref.dtype)

        # --- feed-forward ---
        h1 = jnp.maximum(jnp.dot(x, w1_ref[li], preferred_element_type=f32)
                         + b1_ref[li], 0.0)
        ff = jnp.dot(h1, w2_ref[li], preferred_element_type=f32) + b2_ref[li]
        x = layer_norm(x + ff, ln3g_ref[li], ln3b_ref[li])

    y_ref[0] = x.astype(y_ref.dtype)


# ----------------------------- wrapper -----------------------------

_WEIGHT_ORDER = ["wqkv", "bqkv", "wo_self", "bo_self", "ln1_g", "ln1_b",
                 "wq_cross", "bq_cross", "wkv_cross", "bkv_cross",
                 "wo_cross", "bo_cross", "ln2_g", "ln2_b",
                 "w1", "b1", "w2", "b2", "ln3_g", "ln3_b"]


def decoder_forward(params, tgt_tokens, src_img):
    B, Lt = tgt_tokens.shape
    Ls = src_img.shape[0]
    D = D_MODEL

    # tokens passed once per batch element in row layout (B, 1, Lt); the kernel
    # builds the embedding one-hot and the causal+padding mask from them.
    tok = tgt_tokens.astype(jnp.int32)[:, None, :]                      # (B, 1, Lt)
    # reference quirk: pe[:, :x.size(1)] slices by batch with seq-first x
    pe_b = jnp.transpose(params["pe"][:, :B, :], (1, 0, 2))             # (B, 1, D)
    enc = jnp.transpose(src_img, (1, 0, 2))                             # (B, Ls, D)

    weights = [params["embedding"]] + [params[n] for n in _WEIGHT_ORDER]

    def _batch_spec(shape):
        nd = len(shape)
        return pl.BlockSpec((1,) + tuple(shape[1:]),
                            lambda b, nd=nd: (b,) + (0,) * (nd - 1))

    def _weight_spec(shape):
        nd = len(shape)
        return pl.BlockSpec(tuple(shape), lambda b, nd=nd: (0,) * nd)

    in_specs = [_batch_spec(tok.shape), _batch_spec(pe_b.shape),
                _batch_spec(enc.shape)]
    in_specs += [_weight_spec(w.shape) for w in weights]

    out_shape = (jax.ShapeDtypeStruct((B, Lt, D), jnp.float32),
                 jax.ShapeDtypeStruct((B, NUM_LAYERS, Lt, Ls), jnp.float32))
    out_specs = (pl.BlockSpec((1, Lt, D), lambda b: (b, 0, 0)),
                 pl.BlockSpec((1, NUM_LAYERS, Lt, Ls), lambda b: (b, 0, 0, 0)))

    kernel = functools.partial(
        _decoder_stack_kernel,
        num_layers=NUM_LAYERS, num_heads=NUM_HEADS, head_dim=HEAD_DIM,
        d_model=D, vocab=VOCAB, pad_id=PAD_ID,
        attn_scale=1.0 / math.sqrt(HEAD_DIM),
        pe_scale=math.sqrt(float(D)), eps=1e-5, seq_len=Lt)

    y, attns = pl.pallas_call(
        kernel,
        out_shape=out_shape,
        grid=(B,),
        in_specs=in_specs,
        out_specs=out_specs,
        compiler_params=pltpu.CompilerParams(dimension_semantics=("parallel",)),
    )(tok, pe_b, enc, *weights)

    out = jnp.transpose(y, (1, 0, 2))                   # (Lt, B, D) seq-first, as reference
    attns_all = jnp.transpose(attns, (1, 0, 2, 3))      # (NUM_LAYERS, B, Lt, Ls)
    return out, attns_all


# ----------------------------- parameter init -----------------------------

def init_params(key):
    ks = iter(jax.random.split(key, 16))

    def dense(shape):
        return jax.random.normal(next(ks), shape, jnp.float32) * 0.02

    L, D, F = NUM_LAYERS, D_MODEL, FF_DIM

    emb = dense((VOCAB, D)).at[PAD_ID].set(0.0)         # padding_idx row is zero

    pos = jnp.arange(MAX_LEN, dtype=jnp.float32)[:, None]
    div = jnp.exp(-jnp.arange(0, D, 2, dtype=jnp.float32) * (math.log(10000.0) / D))
    pe = jnp.zeros((MAX_LEN, D), jnp.float32)
    pe = pe.at[:, 0::2].set(jnp.sin(pos * div))
    pe = pe.at[:, 1::2].set(jnp.cos(pos * div))
    pe = pe[None]                                       # (1, MAX_LEN, D)

    z = lambda *s: jnp.zeros(s, jnp.float32)
    o = lambda *s: jnp.ones(s, jnp.float32)

    return {
        "embedding": emb, "pe": pe,
        # stacked per-layer weights, leading dim = NUM_LAYERS
        "wqkv": dense((L, D, 3 * D)), "bqkv": z(L, 1, 3 * D),
        "wo_self": dense((L, D, D)), "bo_self": z(L, 1, D),
        "ln1_g": o(L, 1, D), "ln1_b": z(L, 1, D),
        "wq_cross": dense((L, D, D)), "bq_cross": z(L, 1, D),
        "wkv_cross": dense((L, D, 2 * D)), "bkv_cross": z(L, 1, 2 * D),
        "wo_cross": dense((L, D, D)), "bo_cross": z(L, 1, D),
        "ln2_g": o(L, 1, D), "ln2_b": z(L, 1, D),
        "w1": dense((L, D, F)), "b1": z(L, 1, F),
        "w2": dense((L, F, D)), "b2": z(L, 1, D),
        "ln3_g": o(L, 1, D), "ln3_b": z(L, 1, D),
    }


if __name__ == "__main__":
    key = jax.random.PRNGKey(0)
    pkey, tkey, skey = jax.random.split(key, 3)
    params = init_params(pkey)

    B, Lt, Ls = 2, 8, 16
    tgt = jax.random.randint(tkey, (B, Lt), 1, VOCAB).astype(jnp.int32)
    tgt = tgt.at[0, -2:].set(PAD_ID)          # some trailing padding
    tgt = tgt.at[1, -3:].set(PAD_ID)
    src = jax.random.normal(skey, (Ls, B, D_MODEL), jnp.float32)  # encoder output, seq-first

    fwd = jax.jit(decoder_forward)
    out, attns = fwd(params, tgt, src)
    jax.block_until_ready((out, attns))

    assert out.shape == (Lt, B, D_MODEL)
    assert attns.shape == (NUM_LAYERS, B, Lt, Ls)
    assert bool(jnp.isfinite(out).all()) and bool(jnp.isfinite(attns).all())
    print("KERNEL_OK")
</pallas_src>

<mosaic_0001>
module attributes {stable_mosaic.version = 11 : i64} {
  func.func @_decoder_stack_kernel(%arg0: i32, %arg1: memref<1x1x8xi32, #tpu.memory_space<vmem>>, %arg2: memref<1x1x32xf32, #tpu.memory_space<vmem>>, %arg3: memref<1x16x32xf32, #tpu.memory_space<vmem>>, %arg4: memref<32x32xf32, #tpu.memory_space<vmem>>, %arg5: memref<2x32x96xf32, #tpu.memory_space<vmem>>, %arg6: memref<2x1x96xf32, #tpu.memory_space<vmem>>, %arg7: memref<2x32x32xf32, #tpu.memory_space<vmem>>, %arg8: memref<2x1x32xf32, #tpu.memory_space<vmem>>, %arg9: memref<2x1x32xf32, #tpu.memory_space<vmem>>, %arg10: memref<2x1x32xf32, #tpu.memory_space<vmem>>, %arg11: memref<2x32x32xf32, #tpu.memory_space<vmem>>, %arg12: memref<2x1x32xf32, #tpu.memory_space<vmem>>, %arg13: memref<2x32x64xf32, #tpu.memory_space<vmem>>, %arg14: memref<2x1x64xf32, #tpu.memory_space<vmem>>, %arg15: memref<2x32x32xf32, #tpu.memory_space<vmem>>, %arg16: memref<2x1x32xf32, #tpu.memory_space<vmem>>, %arg17: memref<2x1x32xf32, #tpu.memory_space<vmem>>, %arg18: memref<2x1x32xf32, #tpu.memory_space<vmem>>, %arg19: memref<2x32x64xf32, #tpu.memory_space<vmem>>, %arg20: memref<2x1x64xf32, #tpu.memory_space<vmem>>, %arg21: memref<2x64x32xf32, #tpu.memory_space<vmem>>, %arg22: memref<2x1x32xf32, #tpu.memory_space<vmem>>, %arg23: memref<2x1x32xf32, #tpu.memory_space<vmem>>, %arg24: memref<2x1x32xf32, #tpu.memory_space<vmem>>, %arg25: memref<1x8x32xf32, #tpu.memory_space<vmem>>, %arg26: memref<1x2x8x16xf32, #tpu.memory_space<vmem>>) attributes {dimension_semantics = [#tpu.dimension_semantics<parallel>], iteration_bounds = array<i64: 2>, scalar_prefetch = 0 : i64, scratch_operands = 0 : i64, tpu.core_type = #tpu.core_type<tc>, window_params = [{transform_indices = @transform_0, window_bounds = array<i64: 1, 1, 8>}, {transform_indices = @transform_1, window_bounds = array<i64: 1, 1, 32>}, {transform_indices = @transform_2, window_bounds = array<i64: 1, 16, 32>}, {pipeline_mode = #tpu.pipeline_mode<synchronous>, transform_indices = @transform_3, window_bounds = array<i64: 32, 32>}, {pipeline_mode = #tpu.pipeline_mode<synchronous>, transform_indices = @transform_4, window_bounds = array<i64: 2, 32, 96>}, {pipeline_mode = #tpu.pipeline_mode<synchronous>, transform_indices = @transform_5, window_bounds = array<i64: 2, 1, 96>}, {pipeline_mode = #tpu.pipeline_mode<synchronous>, transform_indices = @transform_6, window_bounds = array<i64: 2, 32, 32>}, {pipeline_mode = #tpu.pipeline_mode<synchronous>, transform_indices = @transform_7, window_bounds = array<i64: 2, 1, 32>}, {pipeline_mode = #tpu.pipeline_mode<synchronous>, transform_indices = @transform_8, window_bounds = array<i64: 2, 1, 32>}, {pipeline_mode = #tpu.pipeline_mode<synchronous>, transform_indices = @transform_9, window_bounds = array<i64: 2, 1, 32>}, {pipeline_mode = #tpu.pipeline_mode<synchronous>, transform_indices = @transform_10, window_bounds = array<i64: 2, 32, 32>}, {pipeline_mode = #tpu.pipeline_mode<synchronous>, transform_indices = @transform_11, window_bounds = array<i64: 2, 1, 32>}, {pipeline_mode = #tpu.pipeline_mode<synchronous>, transform_indices = @transform_12, window_bounds = array<i64: 2, 32, 64>}, {pipeline_mode = #tpu.pipeline_mode<synchronous>, transform_indices = @transform_13, window_bounds = array<i64: 2, 1, 64>}, {pipeline_mode = #tpu.pipeline_mode<synchronous>, transform_indices = @transform_14, window_bounds = array<i64: 2, 32, 32>}, {pipeline_mode = #tpu.pipeline_mode<synchronous>, transform_indices = @transform_15, window_bounds = array<i64: 2, 1, 32>}, {pipeline_mode = #tpu.pipeline_mode<synchronous>, transform_indices = @transform_16, window_bounds = array<i64: 2, 1, 32>}, {pipeline_mode = #tpu.pipeline_mode<synchronous>, transform_indices = @transform_17, window_bounds = array<i64: 2, 1, 32>}, {pipeline_mode = #tpu.pipeline_mode<synchronous>, transform_indices = @transform_18, window_bounds = array<i64: 2, 32, 64>}, {pipeline_mode = #tpu.pipeline_mode<synchronous>, transform_indices = @transform_19, window_bounds = array<i64: 2, 1, 64>}, {pipeline_mode = #tpu.pipeline_mode<synchronous>, transform_indices = @transform_20, window_bounds = array<i64: 2, 64, 32>}, {pipeline_mode = #tpu.pipeline_mode<synchronous>, transform_indices = @transform_21, window_bounds = array<i64: 2, 1, 32>}, {pipeline_mode = #tpu.pipeline_mode<synchronous>, transform_indices = @transform_22, window_bounds = array<i64: 2, 1, 32>}, {pipeline_mode = #tpu.pipeline_mode<synchronous>, transform_indices = @transform_23, window_bounds = array<i64: 2, 1, 32>}, {transform_indices = @transform_24, window_bounds = array<i64: 1, 8, 32>}, {transform_indices = @transform_25, window_bounds = array<i64: 1, 2, 8, 16>}]} {
    %c0 = arith.constant 0 : index
    %c0_0 = arith.constant 0 : index
    %c0_1 = arith.constant 0 : index
    %0 = vector.load %arg1[%c0, %c0_0, %c0_1] : memref<1x1x8xi32, #tpu.memory_space<vmem>>, vector<1x1x8xi32>
    %1 = vector.shape_cast %0 : vector<1x1x8xi32> to vector<1x8xi32>
    %2 = tpu.iota {dimensions = array<i32: 0>} : vector<32x8xi32>
    %3 = vector.broadcast %1 : vector<1x8xi32> to vector<32x8xi32>
    %4 = arith.cmpi eq, %2, %3 : vector<32x8xi32>
    %5 = arith.extui %4 : vector<32x8xi1> to vector<32x8xi32>
    %6 = arith.sitofp %5 : vector<32x8xi32> to vector<32x8xf32>
    %c0_2 = arith.constant 0 : index
    %c0_3 = arith.constant 0 : index
    %7 = vector.load %arg4[%c0_2, %c0_3] : memref<32x32xf32, #tpu.memory_space<vmem>>, vector<32x32xf32>
    %cst = arith.constant dense<0.000000e+00> : vector<8x32xf32>
    %8 = tpu.matmul %6, %7, %cst {dimension_numbers = #tpu.dot_dimension_numbers<[0], [0], [1], [1], [0, 1, 1, 1], [], []>} : vector<32x8xf32>, vector<32x32xf32>, vector<8x32xf32> -> vector<8x32xf32>
    %9 = tpu.iota {dimensions = array<i32: 0>} : vector<8x8xi32>
    %10 = tpu.iota {dimensions = array<i32: 1>} : vector<8x8xi32>
    %11 = arith.cmpi sgt, %10, %9 : vector<8x8xi32>
    %cst_4 = arith.constant -1.000000e+30 : f32
    %cst_5 = arith.constant 0.000000e+00 : f32
    %12 = vector.broadcast %cst_4 : f32 to vector<8x8xf32>
    %13 = vector.broadcast %cst_5 : f32 to vector<8x8xf32>
    %14 = arith.select %11, %12, %13 : vector<8x8xi1>, vector<8x8xf32>
    %c0_i32 = arith.constant 0 : i32
    %15 = vector.broadcast %c0_i32 : i32 to vector<1x8xi32>
    %16 = arith.cmpi eq, %1, %15 : vector<1x8xi32>
    %cst_6 = arith.constant -1.000000e+30 : f32
    %cst_7 = arith.constant 0.000000e+00 : f32
    %17 = vector.broadcast %cst_6 : f32 to vector<1x8xf32>
    %18 = vector.broadcast %cst_7 : f32 to vector<1x8xf32>
    %19 = arith.select %16, %17, %18 : vector<1x8xi1>, vector<1x8xf32>
    %20 = vector.broadcast %19 : vector<1x8xf32> to vector<8x8xf32>
    %21 = arith.addf %14, %20 : vector<8x8xf32>
    %cst_8 = arith.constant 5.65685415 : f32
    %22 = vector.broadcast %cst_8 : f32 to vector<8x32xf32>
    %23 = arith.mulf %8, %22 : vector<8x32xf32>
    %c0_9 = arith.constant 0 : index
    %c0_10 = arith.constant 0 : index
    %c0_11 = arith.constant 0 : index
    %24 = vector.load %arg2[%c0_9, %c0_10, %c0_11] : memref<1x1x32xf32, #tpu.memory_space<vmem>>, vector<1x1x32xf32>
    %25 = vector.shape_cast %24 : vector<1x1x32xf32> to vector<1x32xf32>
    %26 = vector.broadcast %25 : vector<1x32xf32> to vector<8x32xf32>
    %27 = arith.addf %23, %26 : vector<8x32xf32>
    %c0_12 = arith.constant 0 : index
    %c0_13 = arith.constant 0 : index
    %c0_14 = arith.constant 0 : index
    %28 = vector.load %arg3[%c0_12, %c0_13, %c0_14] : memref<1x16x32xf32, #tpu.memory_space<vmem>>, vector<1x16x32xf32>
    %29 = vector.shape_cast %28 : vector<1x16x32xf32> to vector<16x32xf32>
    %c0_15 = arith.constant 0 : index
    %c0_16 = arith.constant 0 : index
    %c0_17 = arith.constant 0 : index
    %30 = vector.load %arg5[%c0_15, %c0_16, %c0_17] : memref<2x32x96xf32, #tpu.memory_space<vmem>>, vector<1x32x96xf32>
    %31 = vector.shape_cast %30 : vector<1x32x96xf32> to vector<32x96xf32>
    %cst_18 = arith.constant dense<0.000000e+00> : vector<8x96xf32>
    %32 = tpu.matmul %27, %31, %cst_18 {dimension_numbers = #tpu.dot_dimension_numbers<[1], [0], [0], [1], [0, 0, 1, 1], [], []>} : vector<8x32xf32>, vector<32x96xf32>, vector<8x96xf32> -> vector<8x96xf32>
    %c0_19 = arith.constant 0 : index
    %c0_20 = arith.constant 0 : index
    %c0_21 = arith.constant 0 : index
    %33 = vector.load %arg6[%c0_19, %c0_20, %c0_21] : memref<2x1x96xf32, #tpu.memory_space<vmem>>, vector<1x1x96xf32>
    %34 = vector.shape_cast %33 : vector<1x1x96xf32> to vector<1x96xf32>
    %35 = vector.broadcast %34 : vector<1x96xf32> to vector<8x96xf32>
    %36 = arith.addf %32, %35 : vector<8x96xf32>
    %37 = vector.extract_strided_slice %36 {offsets = [0, 0], sizes = [8, 32], strides = [1, 1]} : vector<8x96xf32> to vector<8x32xf32>
    %38 = vector.extract_strided_slice %36 {offsets = [0, 32], sizes = [8, 32], strides = [1, 1]} : vector<8x96xf32> to vector<8x32xf32>
    %39 = vector.extract_strided_slice %36 {offsets = [0, 64], sizes = [8, 32], strides = [1, 1]} : vector<8x96xf32> to vector<8x32xf32>
    %c0_22 = arith.constant 0 : index
    %c0_23 = arith.constant 0 : index
    %c0_24 = arith.constant 0 : index
    %40 = vector.load %arg7[%c0_22, %c0_23, %c0_24] : memref<2x32x32xf32, #tpu.memory_space<vmem>>, vector<1x32x32xf32>
    %41 = vector.shape_cast %40 : vector<1x32x32xf32> to vector<32x32xf32>
    %c0_25 = arith.constant 0 : index
    %c0_26 = arith.constant 0 : index
    %c0_27 = arith.constant 0 : index
    %42 = vector.load %arg8[%c0_25, %c0_26, %c0_27] : memref<2x1x32xf32, #tpu.memory_space<vmem>>, vector<1x1x32xf32>
    %43 = vector.shape_cast %42 : vector<1x1x32xf32> to vector<1x32xf32>
    %cst_28 = arith.constant 0.000000e+00 : f32
    %44 = vector.broadcast %cst_28 : f32 to vector<8x32xf32>
    %45 = vector.extract_strided_slice %37 {offsets = [0, 0], sizes = [8, 8], strides = [1, 1]} : vector<8x32xf32> to vector<8x8xf32>
    %46 = vector.extract_strided_slice %38 {offsets = [0, 0], sizes = [8, 8], strides = [1, 1]} : vector<8x32xf32> to vector<8x8xf32>
    %47 = vector.extract_strided_slice %39 {offsets = [0, 0], sizes = [8, 8], strides = [1, 1]} : vector<8x32xf32> to vector<8x8xf32>
    %cst_29 = arith.constant dense<0.000000e+00> : vector<8x8xf32>
    %48 = tpu.matmul %45, %46, %cst_29 {dimension_numbers = #tpu.dot_dimension_numbers<[1], [1], [0], [0], [0, 0, 1, 0], [], []>} : vector<8x8xf32>, vector<8x8xf32>, vector<8x8xf32> -> vector<8x8xf32>
    %cst_30 = arith.constant 0.353553385 : f32
    %49 = vector.broadcast %cst_30 : f32 to vector<8x8xf32>
    %50 = arith.mulf %48, %49 : vector<8x8xf32>
    %51 = arith.addf %50, %21 : vector<8x8xf32>
    %cst_31 = arith.constant dense<0xFF800000> : vector<8xf32>
    %52 = vector.multi_reduction <maximumf>, %51, %cst_31 [1] : vector<8x8xf32> to vector<8xf32>
    %53 = vector.shape_cast %52 : vector<8xf32> to vector<8x1xf32>
    %54 = vector.broadcast %53 : vector<8x1xf32> to vector<8x8xf32>
    %55 = arith.subf %51, %54 : vector<8x8xf32>
    %56 = math.exp %55 : vector<8x8xf32>
    %cst_32 = arith.constant dense<0.000000e+00> : vector<8xf32>
    %57 = vector.multi_reduction <add>, %56, %cst_32 [1] : vector<8x8xf32> to vector<8xf32>
    %58 = vector.shape_cast %57 : vector<8xf32> to vector<8x1xf32>
    %59 = vector.broadcast %58 : vector<8x1xf32> to vector<8x8xf32>
    %60 = arith.divf %56, %59 : vector<8x8xf32>
    %cst_33 = arith.constant dense<0.000000e+00> : vector<8x8xf32>
    %61 = tpu.matmul %60, %47, %cst_33 {dimension_numbers = #tpu.dot_dimension_numbers<[1], [0], [0], [1], [0, 0, 1, 1], [], []>} : vector<8x8xf32>, vector<8x8xf32>, vector<8x8xf32> -> vector<8x8xf32>
    %62 = vector.extract_strided_slice %41 {offsets = [0, 0], sizes = [8, 32], strides = [1, 1]} : vector<32x32xf32> to vector<8x32xf32>
    %cst_34 = arith.constant dense<0.000000e+00> : vector<8x32xf32>
    %63 = tpu.matmul %61, %62, %cst_34 {dimension_numbers = #tpu.dot_dimension_numbers<[1], [0], [0], [1], [0, 0, 1, 1], [], []>} : vector<8x8xf32>, vector<8x32xf32>, vector<8x32xf32> -> vector<8x32xf32>
    %64 = arith.addf %44, %63 : vector<8x32xf32>
    %65 = vector.extract_strided_slice %37 {offsets = [0, 8], sizes = [8, 8], strides = [1, 1]} : vector<8x32xf32> to vector<8x8xf32>
    %66 = vector.extract_strided_slice %38 {offsets = [0, 8], sizes = [8, 8], strides = [1, 1]} : vector<8x32xf32> to vector<8x8xf32>
    %67 = vector.extract_strided_slice %39 {offsets = [0, 8], sizes = [8, 8], strides = [1, 1]} : vector<8x32xf32> to vector<8x8xf32>
    %cst_35 = arith.constant dense<0.000000e+00> : vector<8x8xf32>
    %68 = tpu.matmul %65, %66, %cst_35 {dimension_numbers = #tpu.dot_dimension_numbers<[1], [1], [0], [0], [0, 0, 1, 0], [], []>} : vector<8x8xf32>, vector<8x8xf32>, vector<8x8xf32> -> vector<8x8xf32>
    %cst_36 = arith.constant 0.353553385 : f32
    %69 = vector.broadcast %cst_36 : f32 to vector<8x8xf32>
    %70 = arith.mulf %68, %69 : vector<8x8xf32>
    %71 = arith.addf %70, %21 : vector<8x8xf32>
    %cst_37 = arith.constant dense<0xFF800000> : vector<8xf32>
    %72 = vector.multi_reduction <maximumf>, %71, %cst_37 [1] : vector<8x8xf32> to vector<8xf32>
    %73 = vector.shape_cast %72 : vector<8xf32> to vector<8x1xf32>
    %74 = vector.broadcast %73 : vector<8x1xf32> to vector<8x8xf32>
    %75 = arith.subf %71, %74 : vector<8x8xf32>
    %76 = math.exp %75 : vector<8x8xf32>
    %cst_38 = arith.constant dense<0.000000e+00> : vector<8xf32>
    %77 = vector.multi_reduction <add>, %76, %cst_38 [1] : vector<8x8xf32> to vector<8xf32>
    %78 = vector.shape_cast %77 : vector<8xf32> to vector<8x1xf32>
    %79 = vector.broadcast %78 : vector<8x1xf32> to vector<8x8xf32>
    %80 = arith.divf %76, %79 : vector<8x8xf32>
    %cst_39 = arith.constant dense<0.000000e+00> : vector<8x8xf32>
    %81 = tpu.matmul %80, %67, %cst_39 {dimension_numbers = #tpu.dot_dimension_numbers<[1], [0], [0], [1], [0, 0, 1, 1], [], []>} : vector<8x8xf32>, vector<8x8xf32>, vector<8x8xf32> -> vector<8x8xf32>
    %82 = vector.extract_strided_slice %41 {offsets = [8, 0], sizes = [8, 32], strides = [1, 1]} : vector<32x32xf32> to vector<8x32xf32>
    %cst_40 = arith.constant dense<0.000000e+00> : vector<8x32xf32>
    %83 = tpu.matmul %81, %82, %cst_40 {dimension_numbers = #tpu.dot_dimension_numbers<[1], [0], [0], [1], [0, 0, 1, 1], [], []>} : vector<8x8xf32>, vector<8x32xf32>, vector<8x32xf32> -> vector<8x32xf32>
    %84 = arith.addf %64, %83 : vector<8x32xf32>
    %85 = vector.extract_strided_slice %37 {offsets = [0, 16], sizes = [8, 8], strides = [1, 1]} : vector<8x32xf32> to vector<8x8xf32>
    %86 = vector.extract_strided_slice %38 {offsets = [0, 16], sizes = [8, 8], strides = [1, 1]} : vector<8x32xf32> to vector<8x8xf32>
    %87 = vector.extract_strided_slice %39 {offsets = [0, 16], sizes = [8, 8], strides = [1, 1]} : vector<8x32xf32> to vector<8x8xf32>
    %cst_41 = arith.constant dense<0.000000e+00> : vector<8x8xf32>
    %88 = tpu.matmul %85, %86, %cst_41 {dimension_numbers = #tpu.dot_dimension_numbers<[1], [1], [0], [0], [0, 0, 1, 0], [], []>} : vector<8x8xf32>, vector<8x8xf32>, vector<8x8xf32> -> vector<8x8xf32>
    %cst_42 = arith.constant 0.353553385 : f32
    %89 = vector.broadcast %cst_42 : f32 to vector<8x8xf32>
    %90 = arith.mulf %88, %89 : vector<8x8xf32>
    %91 = arith.addf %90, %21 : vector<8x8xf32>
    %cst_43 = arith.constant dense<0xFF800000> : vector<8xf32>
    %92 = vector.multi_reduction <maximumf>, %91, %cst_43 [1] : vector<8x8xf32> to vector<8xf32>
    %93 = vector.shape_cast %92 : vector<8xf32> to vector<8x1xf32>
    %94 = vector.broadcast %93 : vector<8x1xf32> to vector<8x8xf32>
    %95 = arith.subf %91, %94 : vector<8x8xf32>
    %96 = math.exp %95 : vector<8x8xf32>
    %cst_44 = arith.constant dense<0.000000e+00> : vector<8xf32>
    %97 = vector.multi_reduction <add>, %96, %cst_44 [1] : vector<8x8xf32> to vector<8xf32>
    %98 = vector.shape_cast %97 : vector<8xf32> to vector<8x1xf32>
    %99 = vector.broadcast %98 : vector<8x1xf32> to vector<8x8xf32>
    %100 = arith.divf %96, %99 : vector<8x8xf32>
    %cst_45 = arith.constant dense<0.000000e+00> : vector<8x8xf32>
    %101 = tpu.matmul %100, %87, %cst_45 {dimension_numbers = #tpu.dot_dimension_numbers<[1], [0], [0], [1], [0, 0, 1, 1], [], []>} : vector<8x8xf32>, vector<8x8xf32>, vector<8x8xf32> -> vector<8x8xf32>
    %102 = vector.extract_strided_slice %41 {offsets = [16, 0], sizes = [8, 32], strides = [1, 1]} : vector<32x32xf32> to vector<8x32xf32>
    %cst_46 = arith.constant dense<0.000000e+00> : vector<8x32xf32>
    %103 = tpu.matmul %101, %102, %cst_46 {dimension_numbers = #tpu.dot_dimension_numbers<[1], [0], [0], [1], [0, 0, 1, 1], [], []>} : vector<8x8xf32>, vector<8x32xf32>, vector<8x32xf32> -> vector<8x32xf32>
    %104 = arith.addf %84, %103 : vector<8x32xf32>
    %105 = vector.extract_strided_slice %37 {offsets = [0, 24], sizes = [8, 8], strides = [1, 1]} : vector<8x32xf32> to vector<8x8xf32>
    %106 = vector.extract_strided_slice %38 {offsets = [0, 24], sizes = [8, 8], strides = [1, 1]} : vector<8x32xf32> to vector<8x8xf32>
    %107 = vector.extract_strided_slice %39 {offsets = [0, 24], sizes = [8, 8], strides = [1, 1]} : vector<8x32xf32> to vector<8x8xf32>
    %cst_47 = arith.constant dense<0.000000e+00> : vector<8x8xf32>
    %108 = tpu.matmul %105, %106, %cst_47 {dimension_numbers = #tpu.dot_dimension_numbers<[1], [1], [0], [0], [0, 0, 1, 0], [], []>} : vector<8x8xf32>, vector<8x8xf32>, vector<8x8xf32> -> vector<8x8xf32>
    %cst_48 = arith.constant 0.353553385 : f32
    %109 = vector.broadcast %cst_48 : f32 to vector<8x8xf32>
    %110 = arith.mulf %108, %109 : vector<8x8xf32>
    %111 = arith.addf %110, %21 : vector<8x8xf32>
    %cst_49 = arith.constant dense<0xFF800000> : vector<8xf32>
    %112 = vector.multi_reduction <maximumf>, %111, %cst_49 [1] : vector<8x8xf32> to vector<8xf32>
    %113 = vector.shape_cast %112 : vector<8xf32> to vector<8x1xf32>
    %114 = vector.broadcast %113 : vector<8x1xf32> to vector<8x8xf32>
    %115 = arith.subf %111, %114 : vector<8x8xf32>
    %116 = math.exp %115 : vector<8x8xf32>
    %cst_50 = arith.constant dense<0.000000e+00> : vector<8xf32>
    %117 = vector.multi_reduction <add>, %116, %cst_50 [1] : vector<8x8xf32> to vector<8xf32>
    %118 = vector.shape_cast %117 : vector<8xf32> to vector<8x1xf32>
    %119 = vector.broadcast %118 : vector<8x1xf32> to vector<8x8xf32>
    %120 = arith.divf %116, %119 : vector<8x8xf32>
    %cst_51 = arith.constant dense<0.000000e+00> : vector<8x8xf32>
    %121 = tpu.matmul %120, %107, %cst_51 {dimension_numbers = #tpu.dot_dimension_numbers<[1], [0], [0], [1], [0, 0, 1, 1], [], []>} : vector<8x8xf32>, vector<8x8xf32>, vector<8x8xf32> -> vector<8x8xf32>
    %122 = vector.extract_strided_slice %41 {offsets = [24, 0], sizes = [8, 32], strides = [1, 1]} : vector<32x32xf32> to vector<8x32xf32>
    %cst_52 = arith.constant dense<0.000000e+00> : vector<8x32xf32>
    %123 = tpu.matmul %121, %122, %cst_52 {dimension_numbers = #tpu.dot_dimension_numbers<[1], [0], [0], [1], [0, 0, 1, 1], [], []>} : vector<8x8xf32>, vector<8x32xf32>, vector<8x32xf32> -> vector<8x32xf32>
    %124 = arith.addf %104, %123 : vector<8x32xf32>
    %125 = vector.broadcast %43 : vector<1x32xf32> to vector<8x32xf32>
    %126 = arith.addf %124, %125 : vector<8x32xf32>
    %127 = arith.addf %27, %126 : vector<8x32xf32>
    %c0_53 = arith.constant 0 : index
    %c0_54 = arith.constant 0 : index
    %c0_55 = arith.constant 0 : index
    %128 = vector.load %arg9[%c0_53, %c0_54, %c0_55] : memref<2x1x32xf32, #tpu.memory_space<vmem>>, vector<1x1x32xf32>
    %129 = vector.shape_cast %128 : vector<1x1x32xf32> to vector<1x32xf32>
    %c0_56 = arith.constant 0 : index
    %c0_57 = arith.constant 0 : index
    %c0_58 = arith.constant 0 : index
    %130 = vector.load %arg10[%c0_56, %c0_57, %c0_58] : memref<2x1x32xf32, #tpu.memory_space<vmem>>, vector<1x1x32xf32>
    %131 = vector.shape_cast %130 : vector<1x1x32xf32> to vector<1x32xf32>
    %cst_59 = arith.constant dense<0.000000e+00> : vector<8xf32>
    %132 = vector.multi_reduction <add>, %127, %cst_59 [1] : vector<8x32xf32> to vector<8xf32>
    %133 = vector.shape_cast %132 : vector<8xf32> to vector<8x1xf32>
    %cst_60 = arith.constant 3.200000e+01 : f32
    %134 = vector.broadcast %cst_60 : f32 to vector<8x1xf32>
    %135 = arith.divf %133, %134 : vector<8x1xf32>
    %136 = vector.broadcast %135 : vector<8x1xf32> to vector<8x32xf32>
    %137 = arith.subf %127, %136 : vector<8x32xf32>
    %138 = arith.mulf %137, %137 : vector<8x32xf32>
    %cst_61 = arith.constant dense<0.000000e+00> : vector<8xf32>
    %139 = vector.multi_reduction <add>, %138, %cst_61 [1] : vector<8x32xf32> to vector<8xf32>
    %140 = vector.shape_cast %139 : vector<8xf32> to vector<8x1xf32>
    %cst_62 = arith.constant 3.200000e+01 : f32
    %141 = vector.broadcast %cst_62 : f32 to vector<8x1xf32>
    %142 = arith.divf %140, %141 : vector<8x1xf32>
    %143 = vector.broadcast %135 : vector<8x1xf32> to vector<8x32xf32>
    %144 = arith.subf %127, %143 : vector<8x32xf32>
    %cst_63 = arith.constant 9.99999974E-6 : f32
    %145 = vector.broadcast %cst_63 : f32 to vector<8x1xf32>
    %146 = arith.addf %142, %145 : vector<8x1xf32>
    %147 = math.rsqrt %146 : vector<8x1xf32>
    %148 = vector.broadcast %147 : vector<8x1xf32> to vector<8x32xf32>
    %149 = arith.mulf %144, %148 : vector<8x32xf32>
    %150 = vector.broadcast %129 : vector<1x32xf32> to vector<8x32xf32>
    %151 = arith.mulf %149, %150 : vector<8x32xf32>
    %152 = vector.broadcast %131 : vector<1x32xf32> to vector<8x32xf32>
    %153 = arith.addf %151, %152 : vector<8x32xf32>
    %c0_64 = arith.constant 0 : index
    %c0_65 = arith.constant 0 : index
    %c0_66 = arith.constant 0 : index
    %154 = vector.load %arg11[%c0_64, %c0_65, %c0_66] : memref<2x32x32xf32, #tpu.memory_space<vmem>>, vector<1x32x32xf32>
    %155 = vector.shape_cast %154 : vector<1x32x32xf32> to vector<32x32xf32>
    %cst_67 = arith.constant dense<0.000000e+00> : vector<8x32xf32>
    %156 = tpu.matmul %153, %155, %cst_67 {dimension_numbers = #tpu.dot_dimension_numbers<[1], [0], [0], [1], [0, 0, 1, 1], [], []>} : vector<8x32xf32>, vector<32x32xf32>, vector<8x32xf32> -> vector<8x32xf32>
    %c0_68 = arith.constant 0 : index
    %c0_69 = arith.constant 0 : index
    %c0_70 = arith.constant 0 : index
    %157 = vector.load %arg12[%c0_68, %c0_69, %c0_70] : memref<2x1x32xf32, #tpu.memory_space<vmem>>, vector<1x1x32xf32>
    %158 = vector.shape_cast %157 : vector<1x1x32xf32> to vector<1x32xf32>
    %159 = vector.broadcast %158 : vector<1x32xf32> to vector<8x32xf32>
    %160 = arith.addf %156, %159 : vector<8x32xf32>
    %c0_71 = arith.constant 0 : index
    %c0_72 = arith.constant 0 : index
    %c0_73 = arith.constant 0 : index
    %161 = vector.load %arg13[%c0_71, %c0_72, %c0_73] : memref<2x32x64xf32, #tpu.memory_space<vmem>>, vector<1x32x64xf32>
    %162 = vector.shape_cast %161 : vector<1x32x64xf32> to vector<32x64xf32>
    %cst_74 = arith.constant dense<0.000000e+00> : vector<16x64xf32>
    %163 = tpu.matmul %29, %162, %cst_74 {dimension_numbers = #tpu.dot_dimension_numbers<[1], [0], [0], [1], [0, 0, 1, 1], [], []>} : vector<16x32xf32>, vector<32x64xf32>, vector<16x64xf32> -> vector<16x64xf32>
    %c0_75 = arith.constant 0 : index
    %c0_76 = arith.constant 0 : index
    %c0_77 = arith.constant 0 : index
    %164 = vector.load %arg14[%c0_75, %c0_76, %c0_77] : memref<2x1x64xf32, #tpu.memory_space<vmem>>, vector<1x1x64xf32>
    %165 = vector.shape_cast %164 : vector<1x1x64xf32> to vector<1x64xf32>
    %166 = vector.broadcast %165 : vector<1x64xf32> to vector<16x64xf32>
    %167 = arith.addf %163, %166 : vector<16x64xf32>
    %168 = vector.extract_strided_slice %167 {offsets = [0, 0], sizes = [16, 32], strides = [1, 1]} : vector<16x64xf32> to vector<16x32xf32>
    %169 = vector.extract_strided_slice %167 {offsets = [0, 32], sizes = [16, 32], strides = [1, 1]} : vector<16x64xf32> to vector<16x32xf32>
    %c0_78 = arith.constant 0 : index
    %c0_79 = arith.constant 0 : index
    %c0_80 = arith.constant 0 : index
    %170 = vector.load %arg15[%c0_78, %c0_79, %c0_80] : memref<2x32x32xf32, #tpu.memory_space<vmem>>, vector<1x32x32xf32>
    %171 = vector.shape_cast %170 : vector<1x32x32xf32> to vector<32x32xf32>
    %c0_81 = arith.constant 0 : index
    %c0_82 = arith.constant 0 : index
    %c0_83 = arith.constant 0 : index
    %172 = vector.load %arg16[%c0_81, %c0_82, %c0_83] : memref<2x1x32xf32, #tpu.memory_space<vmem>>, vector<1x1x32xf32>
    %173 = vector.shape_cast %172 : vector<1x1x32xf32> to vector<1x32xf32>
    %cst_84 = arith.constant 0.000000e+00 : f32
    %174 = vector.broadcast %cst_84 : f32 to vector<8x32xf32>
    %cst_85 = arith.constant 0.000000e+00 : f32
    %175 = vector.broadcast %cst_85 : f32 to vector<8x16xf32>
    %176 = vector.extract_strided_slice %160 {offsets = [0, 0], sizes = [8, 8], strides = [1, 1]} : vector<8x32xf32> to vector<8x8xf32>
    %177 = vector.extract_strided_slice %168 {offsets = [0, 0], sizes = [16, 8], strides = [1, 1]} : vector<16x32xf32> to vector<16x8xf32>
    %178 = vector.extract_strided_slice %169 {offsets = [0, 0], sizes = [16, 8], strides = [1, 1]} : vector<16x32xf32> to vector<16x8xf32>
    %cst_86 = arith.constant dense<0.000000e+00> : vector<8x16xf32>
    %179 = tpu.matmul %176, %177, %cst_86 {dimension_numbers = #tpu.dot_dimension_numbers<[1], [1], [0], [0], [0, 0, 1, 0], [], []>} : vector<8x8xf32>, vector<16x8xf32>, vector<8x16xf32> -> vector<8x16xf32>
    %cst_87 = arith.constant 0.353553385 : f32
    %180 = vector.broadcast %cst_87 : f32 to vector<8x16xf32>
    %181 = arith.mulf %179, %180 : vector<8x16xf32>
    %cst_88 = arith.constant dense<0xFF800000> : vector<8xf32>
    %182 = vector.multi_reduction <maximumf>, %181, %cst_88 [1] : vector<8x16xf32> to vector<8xf32>
    %183 = vector.shape_cast %182 : vector<8xf32> to vector<8x1xf32>
    %184 = vector.broadcast %183 : vector<8x1xf32> to vector<8x16xf32>
    %185 = arith.subf %181, %184 : vector<8x16xf32>
    %186 = math.exp %185 : vector<8x16xf32>
    %cst_89 = arith.constant dense<0.000000e+00> : vector<8xf32>
    %187 = vector.multi_reduction <add>, %186, %cst_89 [1] : vector<8x16xf32> to vector<8xf32>
    %188 = vector.shape_cast %187 : vector<8xf32> to vector<8x1xf32>
    %189 = vector.broadcast %188 : vector<8x1xf32> to vector<8x16xf32>
    %190 = arith.divf %186, %189 : vector<8x16xf32>
    %cst_90 = arith.constant dense<0.000000e+00> : vector<8x8xf32>
    %191 = tpu.matmul %190, %178, %cst_90 {dimension_numbers = #tpu.dot_dimension_numbers<[1], [0], [0], [1], [0, 0, 1, 1], [], []>} : vector<8x16xf32>, vector<16x8xf32>, vector<8x8xf32> -> vector<8x8xf32>
    %192 = vector.extract_strided_slice %171 {offsets = [0, 0], sizes = [8, 32], strides = [1, 1]} : vector<32x32xf32> to vector<8x32xf32>
    %cst_91 = arith.constant dense<0.000000e+00> : vector<8x32xf32>
    %193 = tpu.matmul %191, %192, %cst_91 {dimension_numbers = #tpu.dot_dimension_numbers<[1], [0], [0], [1], [0, 0, 1, 1], [], []>} : vector<8x8xf32>, vector<8x32xf32>, vector<8x32xf32> -> vector<8x32xf32>
    %194 = arith.addf %174, %193 : vector<8x32xf32>
    %195 = arith.addf %175, %190 : vector<8x16xf32>
    %196 = vector.extract_strided_slice %160 {offsets = [0, 8], sizes = [8, 8], strides = [1, 1]} : vector<8x32xf32> to vector<8x8xf32>
    %197 = vector.extract_strided_slice %168 {offsets = [0, 8], sizes = [16, 8], strides = [1, 1]} : vector<16x32xf32> to vector<16x8xf32>
    %198 = vector.extract_strided_slice %169 {offsets = [0, 8], sizes = [16, 8], strides = [1, 1]} : vector<16x32xf32> to vector<16x8xf32>
    %cst_92 = arith.constant dense<0.000000e+00> : vector<8x16xf32>
    %199 = tpu.matmul %196, %197, %cst_92 {dimension_numbers = #tpu.dot_dimension_numbers<[1], [1], [0], [0], [0, 0, 1, 0], [], []>} : vector<8x8xf32>, vector<16x8xf32>, vector<8x16xf32> -> vector<8x16xf32>
    %cst_93 = arith.constant 0.353553385 : f32
    %200 = vector.broadcast %cst_93 : f32 to vector<8x16xf32>
    %201 = arith.mulf %199, %200 : vector<8x16xf32>
    %cst_94 = arith.constant dense<0xFF800000> : vector<8xf32>
    %202 = vector.multi_reduction <maximumf>, %201, %cst_94 [1] : vector<8x16xf32> to vector<8xf32>
    %203 = vector.shape_cast %202 : vector<8xf32> to vector<8x1xf32>
    %204 = vector.broadcast %203 : vector<8x1xf32> to vector<8x16xf32>
    %205 = arith.subf %201, %204 : vector<8x16xf32>
    %206 = math.exp %205 : vector<8x16xf32>
    %cst_95 = arith.constant dense<0.000000e+00> : vector<8xf32>
    %207 = vector.multi_reduction <add>, %206, %cst_95 [1] : vector<8x16xf32> to vector<8xf32>
    %208 = vector.shape_cast %207 : vector<8xf32> to vector<8x1xf32>
    %209 = vector.broadcast %208 : vector<8x1xf32> to vector<8x16xf32>
    %210 = arith.divf %206, %209 : vector<8x16xf32>
    %cst_96 = arith.constant dense<0.000000e+00> : vector<8x8xf32>
    %211 = tpu.matmul %210, %198, %cst_96 {dimension_numbers = #tpu.dot_dimension_numbers<[1], [0], [0], [1], [0, 0, 1, 1], [], []>} : vector<8x16xf32>, vector<16x8xf32>, vector<8x8xf32> -> vector<8x8xf32>
    %212 = vector.extract_strided_slice %171 {offsets = [8, 0], sizes = [8, 32], strides = [1, 1]} : vector<32x32xf32> to vector<8x32xf32>
    %cst_97 = arith.constant dense<0.000000e+00> : vector<8x32xf32>
    %213 = tpu.matmul %211, %212, %cst_97 {dimension_numbers = #tpu.dot_dimension_numbers<[1], [0], [0], [1], [0, 0, 1, 1], [], []>} : vector<8x8xf32>, vector<8x32xf32>, vector<8x32xf32> -> vector<8x32xf32>
    %214 = arith.addf %194, %213 : vector<8x32xf32>
    %215 = arith.addf %195, %210 : vector<8x16xf32>
    %216 = vector.extract_strided_slice %160 {offsets = [0, 16], sizes = [8, 8], strides = [1, 1]} : vector<8x32xf32> to vector<8x8xf32>
    %217 = vector.extract_strided_slice %168 {offsets = [0, 16], sizes = [16, 8], strides = [1, 1]} : vector<16x32xf32> to vector<16x8xf32>
    %218 = vector.extract_strided_slice %169 {offsets = [0, 16], sizes = [16, 8], strides = [1, 1]} : vector<16x32xf32> to vector<16x8xf32>
    %cst_98 = arith.constant dense<0.000000e+00> : vector<8x16xf32>
    %219 = tpu.matmul %216, %217, %cst_98 {dimension_numbers = #tpu.dot_dimension_numbers<[1], [1], [0], [0], [0, 0, 1, 0], [], []>} : vector<8x8xf32>, vector<16x8xf32>, vector<8x16xf32> -> vector<8x16xf32>
    %cst_99 = arith.constant 0.353553385 : f32
    %220 = vector.broadcast %cst_99 : f32 to vector<8x16xf32>
    %221 = arith.mulf %219, %220 : vector<8x16xf32>
    %cst_100 = arith.constant dense<0xFF800000> : vector<8xf32>
    %222 = vector.multi_reduction <maximumf>, %221, %cst_100 [1] : vector<8x16xf32> to vector<8xf32>
    %223 = vector.shape_cast %222 : vector<8xf32> to vector<8x1xf32>
    %224 = vector.broadcast %223 : vector<8x1xf32> to vector<8x16xf32>
    %225 = arith.subf %221, %224 : vector<8x16xf32>
    %226 = math.exp %225 : vector<8x16xf32>
    %cst_101 = arith.constant dense<0.000000e+00> : vector<8xf32>
    %227 = vector.multi_reduction <add>, %226, %cst_101 [1] : vector<8x16xf32> to vector<8xf32>
    %228 = vector.shape_cast %227 : vector<8xf32> to vector<8x1xf32>
    %229 = vector.broadcast %228 : vector<8x1xf32> to vector<8x16xf32>
    %230 = arith.divf %226, %229 : vector<8x16xf32>
    %cst_102 = arith.constant dense<0.000000e+00> : vector<8x8xf32>
    %231 = tpu.matmul %230, %218, %cst_102 {dimension_numbers = #tpu.dot_dimension_numbers<[1], [0], [0], [1], [0, 0, 1, 1], [], []>} : vector<8x16xf32>, vector<16x8xf32>, vector<8x8xf32> -> vector<8x8xf32>
    %232 = vector.extract_strided_slice %171 {offsets = [16, 0], sizes = [8, 32], strides = [1, 1]} : vector<32x32xf32> to vector<8x32xf32>
    %cst_103 = arith.constant dense<0.000000e+00> : vector<8x32xf32>
    %233 = tpu.matmul %231, %232, %cst_103 {dimension_numbers = #tpu.dot_dimension_numbers<[1], [0], [0], [1], [0, 0, 1, 1], [], []>} : vector<8x8xf32>, vector<8x32xf32>, vector<8x32xf32> -> vector<8x32xf32>
    %234 = arith.addf %214, %233 : vector<8x32xf32>
    %235 = arith.addf %215, %230 : vector<8x16xf32>
    %236 = vector.extract_strided_slice %160 {offsets = [0, 24], sizes = [8, 8], strides = [1, 1]} : vector<8x32xf32> to vector<8x8xf32>
    %237 = vector.extract_strided_slice %168 {offsets = [0, 24], sizes = [16, 8], strides = [1, 1]} : vector<16x32xf32> to vector<16x8xf32>
    %238 = vector.extract_strided_slice %169 {offsets = [0, 24], sizes = [16, 8], strides = [1, 1]} : vector<16x32xf32> to vector<16x8xf32>
    %cst_104 = arith.constant dense<0.000000e+00> : vector<8x16xf32>
    %239 = tpu.matmul %236, %237, %cst_104 {dimension_numbers = #tpu.dot_dimension_numbers<[1], [1], [0], [0], [0, 0, 1, 0], [], []>} : vector<8x8xf32>, vector<16x8xf32>, vector<8x16xf32> -> vector<8x16xf32>
    %cst_105 = arith.constant 0.353553385 : f32
    %240 = vector.broadcast %cst_105 : f32 to vector<8x16xf32>
    %241 = arith.mulf %239, %240 : vector<8x16xf32>
    %cst_106 = arith.constant dense<0xFF800000> : vector<8xf32>
    %242 = vector.multi_reduction <maximumf>, %241, %cst_106 [1] : vector<8x16xf32> to vector<8xf32>
    %243 = vector.shape_cast %242 : vector<8xf32> to vector<8x1xf32>
    %244 = vector.broadcast %243 : vector<8x1xf32> to vector<8x16xf32>
    %245 = arith.subf %241, %244 : vector<8x16xf32>
    %246 = math.exp %245 : vector<8x16xf32>
    %cst_107 = arith.constant dense<0.000000e+00> : vector<8xf32>
    %247 = vector.multi_reduction <add>, %246, %cst_107 [1] : vector<8x16xf32> to vector<8xf32>
    %248 = vector.shape_cast %247 : vector<8xf32> to vector<8x1xf32>
    %249 = vector.broadcast %248 : vector<8x1xf32> to vector<8x16xf32>
    %250 = arith.divf %246, %249 : vector<8x16xf32>
    %cst_108 = arith.constant dense<0.000000e+00> : vector<8x8xf32>
    %251 = tpu.matmul %250, %238, %cst_108 {dimension_numbers = #tpu.dot_dimension_numbers<[1], [0], [0], [1], [0, 0, 1, 1], [], []>} : vector<8x16xf32>, vector<16x8xf32>, vector<8x8xf32> -> vector<8x8xf32>
    %252 = vector.extract_strided_slice %171 {offsets = [24, 0], sizes = [8, 32], strides = [1, 1]} : vector<32x32xf32> to vector<8x32xf32>
    %cst_109 = arith.constant dense<0.000000e+00> : vector<8x32xf32>
    %253 = tpu.matmul %251, %252, %cst_109 {dimension_numbers = #tpu.dot_dimension_numbers<[1], [0], [0], [1], [0, 0, 1, 1], [], []>} : vector<8x8xf32>, vector<8x32xf32>, vector<8x32xf32> -> vector<8x32xf32>
    %254 = arith.addf %234, %253 : vector<8x32xf32>
    %255 = arith.addf %235, %250 : vector<8x16xf32>
    %256 = vector.broadcast %173 : vector<1x32xf32> to vector<8x32xf32>
    %257 = arith.addf %254, %256 : vector<8x32xf32>
    %cst_110 = arith.constant 2.500000e-01 : f32
    %258 = vector.broadcast %cst_110 : f32 to vector<8x16xf32>
    %259 = arith.mulf %255, %258 : vector<8x16xf32>
    %260 = arith.addf %153, %257 : vector<8x32xf32>
    %c0_111 = arith.constant 0 : index
    %c0_112 = arith.constant 0 : index
    %c0_113 = arith.constant 0 : index
    %261 = vector.load %arg17[%c0_111, %c0_112, %c0_113] : memref<2x1x32xf32, #tpu.memory_space<vmem>>, vector<1x1x32xf32>
    %262 = vector.shape_cast %261 : vector<1x1x32xf32> to vector<1x32xf32>
    %c0_114 = arith.constant 0 : index
    %c0_115 = arith.constant 0 : index
    %c0_116 = arith.constant 0 : index
    %263 = vector.load %arg18[%c0_114, %c0_115, %c0_116] : memref<2x1x32xf32, #tpu.memory_space<vmem>>, vector<1x1x32xf32>
    %264 = vector.shape_cast %263 : vector<1x1x32xf32> to vector<1x32xf32>
    %cst_117 = arith.constant dense<0.000000e+00> : vector<8xf32>
    %265 = vector.multi_reduction <add>, %260, %cst_117 [1] : vector<8x32xf32> to vector<8xf32>
    %266 = vector.shape_cast %265 : vector<8xf32> to vector<8x1xf32>
    %cst_118 = arith.constant 3.200000e+01 : f32
    %267 = vector.broadcast %cst_118 : f32 to vector<8x1xf32>
    %268 = arith.divf %266, %267 : vector<8x1xf32>
    %269 = vector.broadcast %268 : vector<8x1xf32> to vector<8x32xf32>
    %270 = arith.subf %260, %269 : vector<8x32xf32>
    %271 = arith.mulf %270, %270 : vector<8x32xf32>
    %cst_119 = arith.constant dense<0.000000e+00> : vector<8xf32>
    %272 = vector.multi_reduction <add>, %271, %cst_119 [1] : vector<8x32xf32> to vector<8xf32>
    %273 = vector.shape_cast %272 : vector<8xf32> to vector<8x1xf32>
    %cst_120 = arith.constant 3.200000e+01 : f32
    %274 = vector.broadcast %cst_120 : f32 to vector<8x1xf32>
    %275 = arith.divf %273, %274 : vector<8x1xf32>
    %276 = vector.broadcast %268 : vector<8x1xf32> to vector<8x32xf32>
    %277 = arith.subf %260, %276 : vector<8x32xf32>
    %cst_121 = arith.constant 9.99999974E-6 : f32
    %278 = vector.broadcast %cst_121 : f32 to vector<8x1xf32>
    %279 = arith.addf %275, %278 : vector<8x1xf32>
    %280 = math.rsqrt %279 : vector<8x1xf32>
    %281 = vector.broadcast %280 : vector<8x1xf32> to vector<8x32xf32>
    %282 = arith.mulf %277, %281 : vector<8x32xf32>
    %283 = vector.broadcast %262 : vector<1x32xf32> to vector<8x32xf32>
    %284 = arith.mulf %282, %283 : vector<8x32xf32>
    %285 = vector.broadcast %264 : vector<1x32xf32> to vector<8x32xf32>
    %286 = arith.addf %284, %285 : vector<8x32xf32>
    %c0_122 = arith.constant 0 : index
    %c0_123 = arith.constant 0 : index
    %c0_124 = arith.constant 0 : index
    %c0_125 = arith.constant 0 : index
    %287 = vector.load %arg26[%c0_122, %c0_123, %c0_124, %c0_125] : memref<1x2x8x16xf32, #tpu.memory_space<vmem>>, vector<1x1x8x16xf32>
    %288 = vector.shape_cast %287 : vector<1x1x8x16xf32> to vector<8x16xf32>
    %289 = vector.shape_cast %259 : vector<8x16xf32> to vector<1x1x8x16xf32>
    tpu.vector_store %arg26[%c0_122, %c0_123, %c0_124, %c0_125], %289 {strides = array<i32>} : memref<1x2x8x16xf32, #tpu.memory_space<vmem>>, vector<1x1x8x16xf32>,
    %c0_126 = arith.constant 0 : index
    %c0_127 = arith.constant 0 : index
    %c0_128 = arith.constant 0 : index
    %290 = vector.load %arg19[%c0_126, %c0_127, %c0_128] : memref<2x32x64xf32, #tpu.memory_space<vmem>>, vector<1x32x64xf32>
    %291 = vector.shape_cast %290 : vector<1x32x64xf32> to vector<32x64xf32>
    %cst_129 = arith.constant dense<0.000000e+00> : vector<8x64xf32>
    %292 = tpu.matmul %286, %291, %cst_129 {dimension_numbers = #tpu.dot_dimension_numbers<[1], [0], [0], [1], [0, 0, 1, 1], [], []>} : vector<8x32xf32>, vector<32x64xf32>, vector<8x64xf32> -> vector<8x64xf32>
    %c0_130 = arith.constant 0 : index
    %c0_131 = arith.constant 0 : index
    %c0_132 = arith.constant 0 : index
    %293 = vector.load %arg20[%c0_130, %c0_131, %c0_132] : memref<2x1x64xf32, #tpu.memory_space<vmem>>, vector<1x1x64xf32>
    %294 = vector.shape_cast %293 : vector<1x1x64xf32> to vector<1x64xf32>
    %295 = vector.broadcast %294 : vector<1x64xf32> to vector<8x64xf32>
    %296 = arith.addf %292, %295 : vector<8x64xf32>
    %cst_133 = arith.constant 0.000000e+00 : f32
    %297 = vector.broadcast %cst_133 : f32 to vector<8x64xf32>
    %298 = arith.maximumf %296, %297 : vector<8x64xf32>
    %c0_134 = arith.constant 0 : index
    %c0_135 = arith.constant 0 : index
    %c0_136 = arith.constant 0 : index
    %299 = vector.load %arg21[%c0_134, %c0_135, %c0_136] : memref<2x64x32xf32, #tpu.memory_space<vmem>>, vector<1x64x32xf32>
    %300 = vector.shape_cast %299 : vector<1x64x32xf32> to vector<64x32xf32>
    %cst_137 = arith.constant dense<0.000000e+00> : vector<8x32xf32>
    %301 = tpu.matmul %298, %300, %cst_137 {dimension_numbers = #tpu.dot_dimension_numbers<[1], [0], [0], [1], [0, 0, 1, 1], [], []>} : vector<8x64xf32>, vector<64x32xf32>, vector<8x32xf32> -> vector<8x32xf32>
    %c0_138 = arith.constant 0 : index
    %c0_139 = arith.constant 0 : index
    %c0_140 = arith.constant 0 : index
    %302 = vector.load %arg22[%c0_138, %c0_139, %c0_140] : memref<2x1x32xf32, #tpu.memory_space<vmem>>, vector<1x1x32xf32>
    %303 = vector.shape_cast %302 : vector<1x1x32xf32> to vector<1x32xf32>
    %304 = vector.broadcast %303 : vector<1x32xf32> to vector<8x32xf32>
    %305 = arith.addf %301, %304 : vector<8x32xf32>
    %306 = arith.addf %286, %305 : vector<8x32xf32>
    %c0_141 = arith.constant 0 : index
    %c0_142 = arith.constant 0 : index
    %c0_143 = arith.constant 0 : index
    %307 = vector.load %arg23[%c0_141, %c0_142, %c0_143] : memref<2x1x32xf32, #tpu.memory_space<vmem>>, vector<1x1x32xf32>
    %308 = vector.shape_cast %307 : vector<1x1x32xf32> to vector<1x32xf32>
    %c0_144 = arith.constant 0 : index
    %c0_145 = arith.constant 0 : index
    %c0_146 = arith.constant 0 : index
    %309 = vector.load %arg24[%c0_144, %c0_145, %c0_146] : memref<2x1x32xf32, #tpu.memory_space<vmem>>, vector<1x1x32xf32>
    %310 = vector.shape_cast %309 : vector<1x1x32xf32> to vector<1x32xf32>
    %cst_147 = arith.constant dense<0.000000e+00> : vector<8xf32>
    %311 = vector.multi_reduction <add>, %306, %cst_147 [1] : vector<8x32xf32> to vector<8xf32>
    %312 = vector.shape_cast %311 : vector<8xf32> to vector<8x1xf32>
    %cst_148 = arith.constant 3.200000e+01 : f32
    %313 = vector.broadcast %cst_148 : f32 to vector<8x1xf32>
    %314 = arith.divf %312, %313 : vector<8x1xf32>
    %315 = vector.broadcast %314 : vector<8x1xf32> to vector<8x32xf32>
    %316 = arith.subf %306, %315 : vector<8x32xf32>
    %317 = arith.mulf %316, %316 : vector<8x32xf32>
    %cst_149 = arith.constant dense<0.000000e+00> : vector<8xf32>
    %318 = vector.multi_reduction <add>, %317, %cst_149 [1] : vector<8x32xf32> to vector<8xf32>
    %319 = vector.shape_cast %318 : vector<8xf32> to vector<8x1xf32>
    %cst_150 = arith.constant 3.200000e+01 : f32
    %320 = vector.broadcast %cst_150 : f32 to vector<8x1xf32>
    %321 = arith.divf %319, %320 : vector<8x1xf32>
    %322 = vector.broadcast %314 : vector<8x1xf32> to vector<8x32xf32>
    %323 = arith.subf %306, %322 : vector<8x32xf32>
    %cst_151 = arith.constant 9.99999974E-6 : f32
    %324 = vector.broadcast %cst_151 : f32 to vector<8x1xf32>
    %325 = arith.addf %321, %324 : vector<8x1xf32>
    %326 = math.rsqrt %325 : vector<8x1xf32>
    %327 = vector.broadcast %326 : vector<8x1xf32> to vector<8x32xf32>
    %328 = arith.mulf %323, %327 : vector<8x32xf32>
    %329 = vector.broadcast %308 : vector<1x32xf32> to vector<8x32xf32>
    %330 = arith.mulf %328, %329 : vector<8x32xf32>
    %331 = vector.broadcast %310 : vector<1x32xf32> to vector<8x32xf32>
    %332 = arith.addf %330, %331 : vector<8x32xf32>
    %c1 = arith.constant 1 : index
    %c0_152 = arith.constant 0 : index
    %c0_153 = arith.constant 0 : index
    %333 = vector.load %arg5[%c1, %c0_152, %c0_153] : memref<2x32x96xf32, #tpu.memory_space<vmem>>, vector<1x32x96xf32>
    %334 = vector.shape_cast %333 : vector<1x32x96xf32> to vector<32x96xf32>
    %cst_154 = arith.constant dense<0.000000e+00> : vector<8x96xf32>
    %335 = tpu.matmul %332, %334, %cst_154 {dimension_numbers = #tpu.dot_dimension_numbers<[1], [0], [0], [1], [0, 0, 1, 1], [], []>} : vector<8x32xf32>, vector<32x96xf32>, vector<8x96xf32> -> vector<8x96xf32>
    %c1_155 = arith.constant 1 : index
    %c0_156 = arith.constant 0 : index
    %c0_157 = arith.constant 0 : index
    %336 = vector.load %arg6[%c1_155, %c0_156, %c0_157] : memref<2x1x96xf32, #tpu.memory_space<vmem>>, vector<1x1x96xf32>
    %337 = vector.shape_cast %336 : vector<1x1x96xf32> to vector<1x96xf32>
    %338 = vector.broadcast %337 : vector<1x96xf32> to vector<8x96xf32>
    %339 = arith.addf %335, %338 : vector<8x96xf32>
    %340 = vector.extract_strided_slice %339 {offsets = [0, 0], sizes = [8, 32], strides = [1, 1]} : vector<8x96xf32> to vector<8x32xf32>
    %341 = vector.extract_strided_slice %339 {offsets = [0, 32], sizes = [8, 32], strides = [1, 1]} : vector<8x96xf32> to vector<8x32xf32>
    %342 = vector.extract_strided_slice %339 {offsets = [0, 64], sizes = [8, 32], strides = [1, 1]} : vector<8x96xf32> to vector<8x32xf32>
    %c1_158 = arith.constant 1 : index
    %c0_159 = arith.constant 0 : index
    %c0_160 = arith.constant 0 : index
    %343 = vector.load %arg7[%c1_158, %c0_159, %c0_160] : memref<2x32x32xf32, #tpu.memory_space<vmem>>, vector<1x32x32xf32>
    %344 = vector.shape_cast %343 : vector<1x32x32xf32> to vector<32x32xf32>
    %c1_161 = arith.constant 1 : index
    %c0_162 = arith.constant 0 : index
    %c0_163 = arith.constant 0 : index
    %345 = vector.load %arg8[%c1_161, %c0_162, %c0_163] : memref<2x1x32xf32, #tpu.memory_space<vmem>>, vector<1x1x32xf32>
    %346 = vector.shape_cast %345 : vector<1x1x32xf32> to vector<1x32xf32>
    %cst_164 = arith.constant 0.000000e+00 : f32
    %347 = vector.broadcast %cst_164 : f32 to vector<8x32xf32>
    %348 = vector.extract_strided_slice %340 {offsets = [0, 0], sizes = [8, 8], strides = [1, 1]} : vector<8x32xf32> to vector<8x8xf32>
    %349 = vector.extract_strided_slice %341 {offsets = [0, 0], sizes = [8, 8], strides = [1, 1]} : vector<8x32xf32> to vector<8x8xf32>
    %350 = vector.extract_strided_slice %342 {offsets = [0, 0], sizes = [8, 8], strides = [1, 1]} : vector<8x32xf32> to vector<8x8xf32>
    %cst_165 = arith.constant dense<0.000000e+00> : vector<8x8xf32>
    %351 = tpu.matmul %348, %349, %cst_165 {dimension_numbers = #tpu.dot_dimension_numbers<[1], [1], [0], [0], [0, 0, 1, 0], [], []>} : vector<8x8xf32>, vector<8x8xf32>, vector<8x8xf32> -> vector<8x8xf32>
    %cst_166 = arith.constant 0.353553385 : f32
    %352 = vector.broadcast %cst_166 : f32 to vector<8x8xf32>
    %353 = arith.mulf %351, %352 : vector<8x8xf32>
    %354 = arith.addf %353, %21 : vector<8x8xf32>
    %cst_167 = arith.constant dense<0xFF800000> : vector<8xf32>
    %355 = vector.multi_reduction <maximumf>, %354, %cst_167 [1] : vector<8x8xf32> to vector<8xf32>
    %356 = vector.shape_cast %355 : vector<8xf32> to vector<8x1xf32>
    %357 = vector.broadcast %356 : vector<8x1xf32> to vector<8x8xf32>
    %358 = arith.subf %354, %357 : vector<8x8xf32>
    %359 = math.exp %358 : vector<8x8xf32>
    %cst_168 = arith.constant dense<0.000000e+00> : vector<8xf32>
    %360 = vector.multi_reduction <add>, %359, %cst_168 [1] : vector<8x8xf32> to vector<8xf32>
    %361 = vector.shape_cast %360 : vector<8xf32> to vector<8x1xf32>
    %362 = vector.broadcast %361 : vector<8x1xf32> to vector<8x8xf32>
    %363 = arith.divf %359, %362 : vector<8x8xf32>
    %cst_169 = arith.constant dense<0.000000e+00> : vector<8x8xf32>
    %364 = tpu.matmul %363, %350, %cst_169 {dimension_numbers = #tpu.dot_dimension_numbers<[1], [0], [0], [1], [0, 0, 1, 1], [], []>} : vector<8x8xf32>, vector<8x8xf32>, vector<8x8xf32> -> vector<8x8xf32>
    %365 = vector.extract_strided_slice %344 {offsets = [0, 0], sizes = [8, 32], strides = [1, 1]} : vector<32x32xf32> to vector<8x32xf32>
    %cst_170 = arith.constant dense<0.000000e+00> : vector<8x32xf32>
    %366 = tpu.matmul %364, %365, %cst_170 {dimension_numbers = #tpu.dot_dimension_numbers<[1], [0], [0], [1], [0, 0, 1, 1], [], []>} : vector<8x8xf32>, vector<8x32xf32>, vector<8x32xf32> -> vector<8x32xf32>
    %367 = arith.addf %347, %366 : vector<8x32xf32>
    %368 = vector.extract_strided_slice %340 {offsets = [0, 8], sizes = [8, 8], strides = [1, 1]} : vector<8x32xf32> to vector<8x8xf32>
    %369 = vector.extract_strided_slice %341 {offsets = [0, 8], sizes = [8, 8], strides = [1, 1]} : vector<8x32xf32> to vector<8x8xf32>
    %370 = vector.extract_strided_slice %342 {offsets = [0, 8], sizes = [8, 8], strides = [1, 1]} : vector<8x32xf32> to vector<8x8xf32>
    %cst_171 = arith.constant dense<0.000000e+00> : vector<8x8xf32>
    %371 = tpu.matmul %368, %369, %cst_171 {dimension_numbers = #tpu.dot_dimension_numbers<[1], [1], [0], [0], [0, 0, 1, 0], [], []>} : vector<8x8xf32>, vector<8x8xf32>, vector<8x8xf32> -> vector<8x8xf32>
    %cst_172 = arith.constant 0.353553385 : f32
    %372 = vector.broadcast %cst_172 : f32 to vector<8x8xf32>
    %373 = arith.mulf %371, %372 : vector<8x8xf32>
    %374 = arith.addf %373, %21 : vector<8x8xf32>
    %cst_173 = arith.constant dense<0xFF800000> : vector<8xf32>
    %375 = vector.multi_reduction <maximumf>, %374, %cst_173 [1] : vector<8x8xf32> to vector<8xf32>
    %376 = vector.shape_cast %375 : vector<8xf32> to vector<8x1xf32>
    %377 = vector.broadcast %376 : vector<8x1xf32> to vector<8x8xf32>
    %378 = arith.subf %374, %377 : vector<8x8xf32>
    %379 = math.exp %378 : vector<8x8xf32>
    %cst_174 = arith.constant dense<0.000000e+00> : vector<8xf32>
    %380 = vector.multi_reduction <add>, %379, %cst_174 [1] : vector<8x8xf32> to vector<8xf32>
    %381 = vector.shape_cast %380 : vector<8xf32> to vector<8x1xf32>
    %382 = vector.broadcast %381 : vector<8x1xf32> to vector<8x8xf32>
    %383 = arith.divf %379, %382 : vector<8x8xf32>
    %cst_175 = arith.constant dense<0.000000e+00> : vector<8x8xf32>
    %384 = tpu.matmul %383, %370, %cst_175 {dimension_numbers = #tpu.dot_dimension_numbers<[1], [0], [0], [1], [0, 0, 1, 1], [], []>} : vector<8x8xf32>, vector<8x8xf32>, vector<8x8xf32> -> vector<8x8xf32>
    %385 = vector.extract_strided_slice %344 {offsets = [8, 0], sizes = [8, 32], strides = [1, 1]} : vector<32x32xf32> to vector<8x32xf32>
    %cst_176 = arith.constant dense<0.000000e+00> : vector<8x32xf32>
    %386 = tpu.matmul %384, %385, %cst_176 {dimension_numbers = #tpu.dot_dimension_numbers<[1], [0], [0], [1], [0, 0, 1, 1], [], []>} : vector<8x8xf32>, vector<8x32xf32>, vector<8x32xf32> -> vector<8x32xf32>
    %387 = arith.addf %367, %386 : vector<8x32xf32>
    %388 = vector.extract_strided_slice %340 {offsets = [0, 16], sizes = [8, 8], strides = [1, 1]} : vector<8x32xf32> to vector<8x8xf32>
    %389 = vector.extract_strided_slice %341 {offsets = [0, 16], sizes = [8, 8], strides = [1, 1]} : vector<8x32xf32> to vector<8x8xf32>
    %390 = vector.extract_strided_slice %342 {offsets = [0, 16], sizes = [8, 8], strides = [1, 1]} : vector<8x32xf32> to vector<8x8xf32>
    %cst_177 = arith.constant dense<0.000000e+00> : vector<8x8xf32>
    %391 = tpu.matmul %388, %389, %cst_177 {dimension_numbers = #tpu.dot_dimension_numbers<[1], [1], [0], [0], [0, 0, 1, 0], [], []>} : vector<8x8xf32>, vector<8x8xf32>, vector<8x8xf32> -> vector<8x8xf32>
    %cst_178 = arith.constant 0.353553385 : f32
    %392 = vector.broadcast %cst_178 : f32 to vector<8x8xf32>
    %393 = arith.mulf %391, %392 : vector<8x8xf32>
    %394 = arith.addf %393, %21 : vector<8x8xf32>
    %cst_179 = arith.constant dense<0xFF800000> : vector<8xf32>
    %395 = vector.multi_reduction <maximumf>, %394, %cst_179 [1] : vector<8x8xf32> to vector<8xf32>
    %396 = vector.shape_cast %395 : vector<8xf32> to vector<8x1xf32>
    %397 = vector.broadcast %396 : vector<8x1xf32> to vector<8x8xf32>
    %398 = arith.subf %394, %397 : vector<8x8xf32>
    %399 = math.exp %398 : vector<8x8xf32>
    %cst_180 = arith.constant dense<0.000000e+00> : vector<8xf32>
    %400 = vector.multi_reduction <add>, %399, %cst_180 [1] : vector<8x8xf32> to vector<8xf32>
    %401 = vector.shape_cast %400 : vector<8xf32> to vector<8x1xf32>
    %402 = vector.broadcast %401 : vector<8x1xf32> to vector<8x8xf32>
    %403 = arith.divf %399, %402 : vector<8x8xf32>
    %cst_181 = arith.constant dense<0.000000e+00> : vector<8x8xf32>
    %404 = tpu.matmul %403, %390, %cst_181 {dimension_numbers = #tpu.dot_dimension_numbers<[1], [0], [0], [1], [0, 0, 1, 1], [], []>} : vector<8x8xf32>, vector<8x8xf32>, vector<8x8xf32> -> vector<8x8xf32>
    %405 = vector.extract_strided_slice %344 {offsets = [16, 0], sizes = [8, 32], strides = [1, 1]} : vector<32x32xf32> to vector<8x32xf32>
    %cst_182 = arith.constant dense<0.000000e+00> : vector<8x32xf32>
    %406 = tpu.matmul %404, %405, %cst_182 {dimension_numbers = #tpu.dot_dimension_numbers<[1], [0], [0], [1], [0, 0, 1, 1], [], []>} : vector<8x8xf32>, vector<8x32xf32>, vector<8x32xf32> -> vector<8x32xf32>
    %407 = arith.addf %387, %406 : vector<8x32xf32>
    %408 = vector.extract_strided_slice %340 {offsets = [0, 24], sizes = [8, 8], strides = [1, 1]} : vector<8x32xf32> to vector<8x8xf32>
    %409 = vector.extract_strided_slice %341 {offsets = [0, 24], sizes = [8, 8], strides = [1, 1]} : vector<8x32xf32> to vector<8x8xf32>
    %410 = vector.extract_strided_slice %342 {offsets = [0, 24], sizes = [8, 8], strides = [1, 1]} : vector<8x32xf32> to vector<8x8xf32>
    %cst_183 = arith.constant dense<0.000000e+00> : vector<8x8xf32>
    %411 = tpu.matmul %408, %409, %cst_183 {dimension_numbers = #tpu.dot_dimension_numbers<[1], [1], [0], [0], [0, 0, 1, 0], [], []>} : vector<8x8xf32>, vector<8x8xf32>, vector<8x8xf32> -> vector<8x8xf32>
    %cst_184 = arith.constant 0.353553385 : f32
    %412 = vector.broadcast %cst_184 : f32 to vector<8x8xf32>
    %413 = arith.mulf %411, %412 : vector<8x8xf32>
    %414 = arith.addf %413, %21 : vector<8x8xf32>
    %cst_185 = arith.constant dense<0xFF800000> : vector<8xf32>
    %415 = vector.multi_reduction <maximumf>, %414, %cst_185 [1] : vector<8x8xf32> to vector<8xf32>
    %416 = vector.shape_cast %415 : vector<8xf32> to vector<8x1xf32>
    %417 = vector.broadcast %416 : vector<8x1xf32> to vector<8x8xf32>
    %418 = arith.subf %414, %417 : vector<8x8xf32>
    %419 = math.exp %418 : vector<8x8xf32>
    %cst_186 = arith.constant dense<0.000000e+00> : vector<8xf32>
    %420 = vector.multi_reduction <add>, %419, %cst_186 [1] : vector<8x8xf32> to vector<8xf32>
    %421 = vector.shape_cast %420 : vector<8xf32> to vector<8x1xf32>
    %422 = vector.broadcast %421 : vector<8x1xf32> to vector<8x8xf32>
    %423 = arith.divf %419, %422 : vector<8x8xf32>
    %cst_187 = arith.constant dense<0.000000e+00> : vector<8x8xf32>
    %424 = tpu.matmul %423, %410, %cst_187 {dimension_numbers = #tpu.dot_dimension_numbers<[1], [0], [0], [1], [0, 0, 1, 1], [], []>} : vector<8x8xf32>, vector<8x8xf32>, vector<8x8xf32> -> vector<8x8xf32>
    %425 = vector.extract_strided_slice %344 {offsets = [24, 0], sizes = [8, 32], strides = [1, 1]} : vector<32x32xf32> to vector<8x32xf32>
    %cst_188 = arith.constant dense<0.000000e+00> : vector<8x32xf32>
    %426 = tpu.matmul %424, %425, %cst_188 {dimension_numbers = #tpu.dot_dimension_numbers<[1], [0], [0], [1], [0, 0, 1, 1], [], []>} : vector<8x8xf32>, vector<8x32xf32>, vector<8x32xf32> -> vector<8x32xf32>
    %427 = arith.addf %407, %426 : vector<8x32xf32>
    %428 = vector.broadcast %346 : vector<1x32xf32> to vector<8x32xf32>
    %429 = arith.addf %427, %428 : vector<8x32xf32>
    %430 = arith.addf %332, %429 : vector<8x32xf32>
    %c1_189 = arith.constant 1 : index
    %c0_190 = arith.constant 0 : index
    %c0_191 = arith.constant 0 : index
    %431 = vector.load %arg9[%c1_189, %c0_190, %c0_191] : memref<2x1x32xf32, #tpu.memory_space<vmem>>, vector<1x1x32xf32>
    %432 = vector.shape_cast %431 : vector<1x1x32xf32> to vector<1x32xf32>
    %c1_192 = arith.constant 1 : index
    %c0_193 = arith.constant 0 : index
    %c0_194 = arith.constant 0 : index
    %433 = vector.load %arg10[%c1_192, %c0_193, %c0_194] : memref<2x1x32xf32, #tpu.memory_space<vmem>>, vector<1x1x32xf32>
    %434 = vector.shape_cast %433 : vector<1x1x32xf32> to vector<1x32xf32>
    %cst_195 = arith.constant dense<0.000000e+00> : vector<8xf32>
    %435 = vector.multi_reduction <add>, %430, %cst_195 [1] : vector<8x32xf32> to vector<8xf32>
    %436 = vector.shape_cast %435 : vector<8xf32> to vector<8x1xf32>
    %cst_196 = arith.constant 3.200000e+01 : f32
    %437 = vector.broadcast %cst_196 : f32 to vector<8x1xf32>
    %438 = arith.divf %436, %437 : vector<8x1xf32>
    %439 = vector.broadcast %438 : vector<8x1xf32> to vector<8x32xf32>
    %440 = arith.subf %430, %439 : vector<8x32xf32>
    %441 = arith.mulf %440, %440 : vector<8x32xf32>
    %cst_197 = arith.constant dense<0.000000e+00> : vector<8xf32>
    %442 = vector.multi_reduction <add>, %441, %cst_197 [1] : vector<8x32xf32> to vector<8xf32>
    %443 = vector.shape_cast %442 : vector<8xf32> to vector<8x1xf32>
    %cst_198 = arith.constant 3.200000e+01 : f32
    %444 = vector.broadcast %cst_198 : f32 to vector<8x1xf32>
    %445 = arith.divf %443, %444 : vector<8x1xf32>
    %446 = vector.broadcast %438 : vector<8x1xf32> to vector<8x32xf32>
    %447 = arith.subf %430, %446 : vector<8x32xf32>
    %cst_199 = arith.constant 9.99999974E-6 : f32
    %448 = vector.broadcast %cst_199 : f32 to vector<8x1xf32>
    %449 = arith.addf %445, %448 : vector<8x1xf32>
    %450 = math.rsqrt %449 : vector<8x1xf32>
    %451 = vector.broadcast %450 : vector<8x1xf32> to vector<8x32xf32>
    %452 = arith.mulf %447, %451 : vector<8x32xf32>
    %453 = vector.broadcast %432 : vector<1x32xf32> to vector<8x32xf32>
    %454 = arith.mulf %452, %453 : vector<8x32xf32>
    %455 = vector.broadcast %434 : vector<1x32xf32> to vector<8x32xf32>
    %456 = arith.addf %454, %455 : vector<8x32xf32>
    %c1_200 = arith.constant 1 : index
    %c0_201 = arith.constant 0 : index
    %c0_202 = arith.constant 0 : index
    %457 = vector.load %arg11[%c1_200, %c0_201, %c0_202] : memref<2x32x32xf32, #tpu.memory_space<vmem>>, vector<1x32x32xf32>
    %458 = vector.shape_cast %457 : vector<1x32x32xf32> to vector<32x32xf32>
    %cst_203 = arith.constant dense<0.000000e+00> : vector<8x32xf32>
    %459 = tpu.matmul %456, %458, %cst_203 {dimension_numbers = #tpu.dot_dimension_numbers<[1], [0], [0], [1], [0, 0, 1, 1], [], []>} : vector<8x32xf32>, vector<32x32xf32>, vector<8x32xf32> -> vector<8x32xf32>
    %c1_204 = arith.constant 1 : index
    %c0_205 = arith.constant 0 : index
    %c0_206 = arith.constant 0 : index
    %460 = vector.load %arg12[%c1_204, %c0_205, %c0_206] : memref<2x1x32xf32, #tpu.memory_space<vmem>>, vector<1x1x32xf32>
    %461 = vector.shape_cast %460 : vector<1x1x32xf32> to vector<1x32xf32>
    %462 = vector.broadcast %461 : vector<1x32xf32> to vector<8x32xf32>
    %463 = arith.addf %459, %462 : vector<8x32xf32>
    %c1_207 = arith.constant 1 : index
    %c0_208 = arith.constant 0 : index
    %c0_209 = arith.constant 0 : index
    %464 = vector.load %arg13[%c1_207, %c0_208, %c0_209] : memref<2x32x64xf32, #tpu.memory_space<vmem>>, vector<1x32x64xf32>
    %465 = vector.shape_cast %464 : vector<1x32x64xf32> to vector<32x64xf32>
    %cst_210 = arith.constant dense<0.000000e+00> : vector<16x64xf32>
    %466 = tpu.matmul %29, %465, %cst_210 {dimension_numbers = #tpu.dot_dimension_numbers<[1], [0], [0], [1], [0, 0, 1, 1], [], []>} : vector<16x32xf32>, vector<32x64xf32>, vector<16x64xf32> -> vector<16x64xf32>
    %c1_211 = arith.constant 1 : index
    %c0_212 = arith.constant 0 : index
    %c0_213 = arith.constant 0 : index
    %467 = vector.load %arg14[%c1_211, %c0_212, %c0_213] : memref<2x1x64xf32, #tpu.memory_space<vmem>>, vector<1x1x64xf32>
    %468 = vector.shape_cast %467 : vector<1x1x64xf32> to vector<1x64xf32>
    %469 = vector.broadcast %468 : vector<1x64xf32> to vector<16x64xf32>
    %470 = arith.addf %466, %469 : vector<16x64xf32>
    %471 = vector.extract_strided_slice %470 {offsets = [0, 0], sizes = [16, 32], strides = [1, 1]} : vector<16x64xf32> to vector<16x32xf32>
    %472 = vector.extract_strided_slice %470 {offsets = [0, 32], sizes = [16, 32], strides = [1, 1]} : vector<16x64xf32> to vector<16x32xf32>
    %c1_214 = arith.constant 1 : index
    %c0_215 = arith.constant 0 : index
    %c0_216 = arith.constant 0 : index
    %473 = vector.load %arg15[%c1_214, %c0_215, %c0_216] : memref<2x32x32xf32, #tpu.memory_space<vmem>>, vector<1x32x32xf32>
    %474 = vector.shape_cast %473 : vector<1x32x32xf32> to vector<32x32xf32>
    %c1_217 = arith.constant 1 : index
    %c0_218 = arith.constant 0 : index
    %c0_219 = arith.constant 0 : index
    %475 = vector.load %arg16[%c1_217, %c0_218, %c0_219] : memref<2x1x32xf32, #tpu.memory_space<vmem>>, vector<1x1x32xf32>
    %476 = vector.shape_cast %475 : vector<1x1x32xf32> to vector<1x32xf32>
    %cst_220 = arith.constant 0.000000e+00 : f32
    %477 = vector.broadcast %cst_220 : f32 to vector<8x32xf32>
    %cst_221 = arith.constant 0.000000e+00 : f32
    %478 = vector.broadcast %cst_221 : f32 to vector<8x16xf32>
    %479 = vector.extract_strided_slice %463 {offsets = [0, 0], sizes = [8, 8], strides = [1, 1]} : vector<8x32xf32> to vector<8x8xf32>
    %480 = vector.extract_strided_slice %471 {offsets = [0, 0], sizes = [16, 8], strides = [1, 1]} : vector<16x32xf32> to vector<16x8xf32>
    %481 = vector.extract_strided_slice %472 {offsets = [0, 0], sizes = [16, 8], strides = [1, 1]} : vector<16x32xf32> to vector<16x8xf32>
    %cst_222 = arith.constant dense<0.000000e+00> : vector<8x16xf32>
    %482 = tpu.matmul %479, %480, %cst_222 {dimension_numbers = #tpu.dot_dimension_numbers<[1], [1], [0], [0], [0, 0, 1, 0], [], []>} : vector<8x8xf32>, vector<16x8xf32>, vector<8x16xf32> -> vector<8x16xf32>
    %cst_223 = arith.constant 0.353553385 : f32
    %483 = vector.broadcast %cst_223 : f32 to vector<8x16xf32>
    %484 = arith.mulf %482, %483 : vector<8x16xf32>
    %cst_224 = arith.constant dense<0xFF800000> : vector<8xf32>
    %485 = vector.multi_reduction <maximumf>, %484, %cst_224 [1] : vector<8x16xf32> to vector<8xf32>
    %486 = vector.shape_cast %485 : vector<8xf32> to vector<8x1xf32>
    %487 = vector.broadcast %486 : vector<8x1xf32> to vector<8x16xf32>
    %488 = arith.subf %484, %487 : vector<8x16xf32>
    %489 = math.exp %488 : vector<8x16xf32>
    %cst_225 = arith.constant dense<0.000000e+00> : vector<8xf32>
    %490 = vector.multi_reduction <add>, %489, %cst_225 [1] : vector<8x16xf32> to vector<8xf32>
    %491 = vector.shape_cast %490 : vector<8xf32> to vector<8x1xf32>
    %492 = vector.broadcast %491 : vector<8x1xf32> to vector<8x16xf32>
    %493 = arith.divf %489, %492 : vector<8x16xf32>
    %cst_226 = arith.constant dense<0.000000e+00> : vector<8x8xf32>
    %494 = tpu.matmul %493, %481, %cst_226 {dimension_numbers = #tpu.dot_dimension_numbers<[1], [0], [0], [1], [0, 0, 1, 1], [], []>} : vector<8x16xf32>, vector<16x8xf32>, vector<8x8xf32> -> vector<8x8xf32>
    %495 = vector.extract_strided_slice %474 {offsets = [0, 0], sizes = [8, 32], strides = [1, 1]} : vector<32x32xf32> to vector<8x32xf32>
    %cst_227 = arith.constant dense<0.000000e+00> : vector<8x32xf32>
    %496 = tpu.matmul %494, %495, %cst_227 {dimension_numbers = #tpu.dot_dimension_numbers<[1], [0], [0], [1], [0, 0, 1, 1], [], []>} : vector<8x8xf32>, vector<8x32xf32>, vector<8x32xf32> -> vector<8x32xf32>
    %497 = arith.addf %477, %496 : vector<8x32xf32>
    %498 = arith.addf %478, %493 : vector<8x16xf32>
    %499 = vector.extract_strided_slice %463 {offsets = [0, 8], sizes = [8, 8], strides = [1, 1]} : vector<8x32xf32> to vector<8x8xf32>
    %500 = vector.extract_strided_slice %471 {offsets = [0, 8], sizes = [16, 8], strides = [1, 1]} : vector<16x32xf32> to vector<16x8xf32>
    %501 = vector.extract_strided_slice %472 {offsets = [0, 8], sizes = [16, 8], strides = [1, 1]} : vector<16x32xf32> to vector<16x8xf32>
    %cst_228 = arith.constant dense<0.000000e+00> : vector<8x16xf32>
    %502 = tpu.matmul %499, %500, %cst_228 {dimension_numbers = #tpu.dot_dimension_numbers<[1], [1], [0], [0], [0, 0, 1, 0], [], []>} : vector<8x8xf32>, vector<16x8xf32>, vector<8x16xf32> -> vector<8x16xf32>
    %cst_229 = arith.constant 0.353553385 : f32
    %503 = vector.broadcast %cst_229 : f32 to vector<8x16xf32>
    %504 = arith.mulf %502, %503 : vector<8x16xf32>
    %cst_230 = arith.constant dense<0xFF800000> : vector<8xf32>
    %505 = vector.multi_reduction <maximumf>, %504, %cst_230 [1] : vector<8x16xf32> to vector<8xf32>
    %506 = vector.shape_cast %505 : vector<8xf32> to vector<8x1xf32>
    %507 = vector.broadcast %506 : vector<8x1xf32> to vector<8x16xf32>
    %508 = arith.subf %504, %507 : vector<8x16xf32>
    %509 = math.exp %508 : vector<8x16xf32>
    %cst_231 = arith.constant dense<0.000000e+00> : vector<8xf32>
    %510 = vector.multi_reduction <add>, %509, %cst_231 [1] : vector<8x16xf32> to vector<8xf32>
    %511 = vector.shape_cast %510 : vector<8xf32> to vector<8x1xf32>
    %512 = vector.broadcast %511 : vector<8x1xf32> to vector<8x16xf32>
    %513 = arith.divf %509, %512 : vector<8x16xf32>
    %cst_232 = arith.constant dense<0.000000e+00> : vector<8x8xf32>
    %514 = tpu.matmul %513, %501, %cst_232 {dimension_numbers = #tpu.dot_dimension_numbers<[1], [0], [0], [1], [0, 0, 1, 1], [], []>} : vector<8x16xf32>, vector<16x8xf32>, vector<8x8xf32> -> vector<8x8xf32>
    %515 = vector.extract_strided_slice %474 {offsets = [8, 0], sizes = [8, 32], strides = [1, 1]} : vector<32x32xf32> to vector<8x32xf32>
    %cst_233 = arith.constant dense<0.000000e+00> : vector<8x32xf32>
    %516 = tpu.matmul %514, %515, %cst_233 {dimension_numbers = #tpu.dot_dimension_numbers<[1], [0], [0], [1], [0, 0, 1, 1], [], []>} : vector<8x8xf32>, vector<8x32xf32>, vector<8x32xf32> -> vector<8x32xf32>
    %517 = arith.addf %497, %516 : vector<8x32xf32>
    %518 = arith.addf %498, %513 : vector<8x16xf32>
    %519 = vector.extract_strided_slice %463 {offsets = [0, 16], sizes = [8, 8], strides = [1, 1]} : vector<8x32xf32> to vector<8x8xf32>
    %520 = vector.extract_strided_slice %471 {offsets = [0, 16], sizes = [16, 8], strides = [1, 1]} : vector<16x32xf32> to vector<16x8xf32>
    %521 = vector.extract_strided_slice %472 {offsets = [0, 16], sizes = [16, 8], strides = [1, 1]} : vector<16x32xf32> to vector<16x8xf32>
    %cst_234 = arith.constant dense<0.000000e+00> : vector<8x16xf32>
    %522 = tpu.matmul %519, %520, %cst_234 {dimension_numbers = #tpu.dot_dimension_numbers<[1], [1], [0], [0], [0, 0, 1, 0], [], []>} : vector<8x8xf32>, vector<16x8xf32>, vector<8x16xf32> -> vector<8x16xf32>
    %cst_235 = arith.constant 0.353553385 : f32
    %523 = vector.broadcast %cst_235 : f32 to vector<8x16xf32>
    %524 = arith.mulf %522, %523 : vector<8x16xf32>
    %cst_236 = arith.constant dense<0xFF800000> : vector<8xf32>
    %525 = vector.multi_reduction <maximumf>, %524, %cst_236 [1] : vector<8x16xf32> to vector<8xf32>
    %526 = vector.shape_cast %525 : vector<8xf32> to vector<8x1xf32>
    %527 = vector.broadcast %526 : vector<8x1xf32> to vector<8x16xf32>
    %528 = arith.subf %524, %527 : vector<8x16xf32>
    %529 = math.exp %528 : vector<8x16xf32>
    %cst_237 = arith.constant dense<0.000000e+00> : vector<8xf32>
    %530 = vector.multi_reduction <add>, %529, %cst_237 [1] : vector<8x16xf32> to vector<8xf32>
    %531 = vector.shape_cast %530 : vector<8xf32> to vector<8x1xf32>
    %532 = vector.broadcast %531 : vector<8x1xf32> to vector<8x16xf32>
    %533 = arith.divf %529, %532 : vector<8x16xf32>
    %cst_238 = arith.constant dense<0.000000e+00> : vector<8x8xf32>
    %534 = tpu.matmul %533, %521, %cst_238 {dimension_numbers = #tpu.dot_dimension_numbers<[1], [0], [0], [1], [0, 0, 1, 1], [], []>} : vector<8x16xf32>, vector<16x8xf32>, vector<8x8xf32> -> vector<8x8xf32>
    %535 = vector.extract_strided_slice %474 {offsets = [16, 0], sizes = [8, 32], strides = [1, 1]} : vector<32x32xf32> to vector<8x32xf32>
    %cst_239 = arith.constant dense<0.000000e+00> : vector<8x32xf32>
    %536 = tpu.matmul %534, %535, %cst_239 {dimension_numbers = #tpu.dot_dimension_numbers<[1], [0], [0], [1], [0, 0, 1, 1], [], []>} : vector<8x8xf32>, vector<8x32xf32>, vector<8x32xf32> -> vector<8x32xf32>
    %537 = arith.addf %517, %536 : vector<8x32xf32>
    %538 = arith.addf %518, %533 : vector<8x16xf32>
    %539 = vector.extract_strided_slice %463 {offsets = [0, 24], sizes = [8, 8], strides = [1, 1]} : vector<8x32xf32> to vector<8x8xf32>
    %540 = vector.extract_strided_slice %471 {offsets = [0, 24], sizes = [16, 8], strides = [1, 1]} : vector<16x32xf32> to vector<16x8xf32>
    %541 = vector.extract_strided_slice %472 {offsets = [0, 24], sizes = [16, 8], strides = [1, 1]} : vector<16x32xf32> to vector<16x8xf32>
    %cst_240 = arith.constant dense<0.000000e+00> : vector<8x16xf32>
    %542 = tpu.matmul %539, %540, %cst_240 {dimension_numbers = #tpu.dot_dimension_numbers<[1], [1], [0], [0], [0, 0, 1, 0], [], []>} : vector<8x8xf32>, vector<16x8xf32>, vector<8x16xf32> -> vector<8x16xf32>
    %cst_241 = arith.constant 0.353553385 : f32
    %543 = vector.broadcast %cst_241 : f32 to vector<8x16xf32>
    %544 = arith.mulf %542, %543 : vector<8x16xf32>
    %cst_242 = arith.constant dense<0xFF800000> : vector<8xf32>
    %545 = vector.multi_reduction <maximumf>, %544, %cst_242 [1] : vector<8x16xf32> to vector<8xf32>
    %546 = vector.shape_cast %545 : vector<8xf32> to vector<8x1xf32>
    %547 = vector.broadcast %546 : vector<8x1xf32> to vector<8x16xf32>
    %548 = arith.subf %544, %547 : vector<8x16xf32>
    %549 = math.exp %548 : vector<8x16xf32>
    %cst_243 = arith.constant dense<0.000000e+00> : vector<8xf32>
    %550 = vector.multi_reduction <add>, %549, %cst_243 [1] : vector<8x16xf32> to vector<8xf32>
    %551 = vector.shape_cast %550 : vector<8xf32> to vector<8x1xf32>
    %552 = vector.broadcast %551 : vector<8x1xf32> to vector<8x16xf32>
    %553 = arith.divf %549, %552 : vector<8x16xf32>
    %cst_244 = arith.constant dense<0.000000e+00> : vector<8x8xf32>
    %554 = tpu.matmul %553, %541, %cst_244 {dimension_numbers = #tpu.dot_dimension_numbers<[1], [0], [0], [1], [0, 0, 1, 1], [], []>} : vector<8x16xf32>, vector<16x8xf32>, vector<8x8xf32> -> vector<8x8xf32>
    %555 = vector.extract_strided_slice %474 {offsets = [24, 0], sizes = [8, 32], strides = [1, 1]} : vector<32x32xf32> to vector<8x32xf32>
    %cst_245 = arith.constant dense<0.000000e+00> : vector<8x32xf32>
    %556 = tpu.matmul %554, %555, %cst_245 {dimension_numbers = #tpu.dot_dimension_numbers<[1], [0], [0], [1], [0, 0, 1, 1], [], []>} : vector<8x8xf32>, vector<8x32xf32>, vector<8x32xf32> -> vector<8x32xf32>
    %557 = arith.addf %537, %556 : vector<8x32xf32>
    %558 = arith.addf %538, %553 : vector<8x16xf32>
    %559 = vector.broadcast %476 : vector<1x32xf32> to vector<8x32xf32>
    %560 = arith.addf %557, %559 : vector<8x32xf32>
    %cst_246 = arith.constant 2.500000e-01 : f32
    %561 = vector.broadcast %cst_246 : f32 to vector<8x16xf32>
    %562 = arith.mulf %558, %561 : vector<8x16xf32>
    %563 = arith.addf %456, %560 : vector<8x32xf32>
    %c1_247 = arith.constant 1 : index
    %c0_248 = arith.constant 0 : index
    %c0_249 = arith.constant 0 : index
    %564 = vector.load %arg17[%c1_247, %c0_248, %c0_249] : memref<2x1x32xf32, #tpu.memory_space<vmem>>, vector<1x1x32xf32>
    %565 = vector.shape_cast %564 : vector<1x1x32xf32> to vector<1x32xf32>
    %c1_250 = arith.constant 1 : index
    %c0_251 = arith.constant 0 : index
    %c0_252 = arith.constant 0 : index
    %566 = vector.load %arg18[%c1_250, %c0_251, %c0_252] : memref<2x1x32xf32, #tpu.memory_space<vmem>>, vector<1x1x32xf32>
    %567 = vector.shape_cast %566 : vector<1x1x32xf32> to vector<1x32xf32>
    %cst_253 = arith.constant dense<0.000000e+00> : vector<8xf32>
    %568 = vector.multi_reduction <add>, %563, %cst_253 [1] : vector<8x32xf32> to vector<8xf32>
    %569 = vector.shape_cast %568 : vector<8xf32> to vector<8x1xf32>
    %cst_254 = arith.constant 3.200000e+01 : f32
    %570 = vector.broadcast %cst_254 : f32 to vector<8x1xf32>
    %571 = arith.divf %569, %570 : vector<8x1xf32>
    %572 = vector.broadcast %571 : vector<8x1xf32> to vector<8x32xf32>
    %573 = arith.subf %563, %572 : vector<8x32xf32>
    %574 = arith.mulf %573, %573 : vector<8x32xf32>
    %cst_255 = arith.constant dense<0.000000e+00> : vector<8xf32>
    %575 = vector.multi_reduction <add>, %574, %cst_255 [1] : vector<8x32xf32> to vector<8xf32>
    %576 = vector.shape_cast %575 : vector<8xf32> to vector<8x1xf32>
    %cst_256 = arith.constant 3.200000e+01 : f32
    %577 = vector.broadcast %cst_256 : f32 to vector<8x1xf32>
    %578 = arith.divf %576, %577 : vector<8x1xf32>
    %579 = vector.broadcast %571 : vector<8x1xf32> to vector<8x32xf32>
    %580 = arith.subf %563, %579 : vector<8x32xf32>
    %cst_257 = arith.constant 9.99999974E-6 : f32
    %581 = vector.broadcast %cst_257 : f32 to vector<8x1xf32>
    %582 = arith.addf %578, %581 : vector<8x1xf32>
    %583 = math.rsqrt %582 : vector<8x1xf32>
    %584 = vector.broadcast %583 : vector<8x1xf32> to vector<8x32xf32>
    %585 = arith.mulf %580, %584 : vector<8x32xf32>
    %586 = vector.broadcast %565 : vector<1x32xf32> to vector<8x32xf32>
    %587 = arith.mulf %585, %586 : vector<8x32xf32>
    %588 = vector.broadcast %567 : vector<1x32xf32> to vector<8x32xf32>
    %589 = arith.addf %587, %588 : vector<8x32xf32>
    %c0_258 = arith.constant 0 : index
    %c1_259 = arith.constant 1 : index
    %c0_260 = arith.constant 0 : index
    %c0_261 = arith.constant 0 : index
    %590 = vector.load %arg26[%c0_258, %c1_259, %c0_260, %c0_261] : memref<1x2x8x16xf32, #tpu.memory_space<vmem>>, vector<1x1x8x16xf32>
    %591 = vector.shape_cast %590 : vector<1x1x8x16xf32> to vector<8x16xf32>
    %592 = vector.shape_cast %562 : vector<8x16xf32> to vector<1x1x8x16xf32>
    tpu.vector_store %arg26[%c0_258, %c1_259, %c0_260, %c0_261], %592 {strides = array<i32>} : memref<1x2x8x16xf32, #tpu.memory_space<vmem>>, vector<1x1x8x16xf32>,
    %c1_262 = arith.constant 1 : index
    %c0_263 = arith.constant 0 : index
    %c0_264 = arith.constant 0 : index
    %593 = vector.load %arg19[%c1_262, %c0_263, %c0_264] : memref<2x32x64xf32, #tpu.memory_space<vmem>>, vector<1x32x64xf32>
    %594 = vector.shape_cast %593 : vector<1x32x64xf32> to vector<32x64xf32>
    %cst_265 = arith.constant dense<0.000000e+00> : vector<8x64xf32>
    %595 = tpu.matmul %589, %594, %cst_265 {dimension_numbers = #tpu.dot_dimension_numbers<[1], [0], [0], [1], [0, 0, 1, 1], [], []>} : vector<8x32xf32>, vector<32x64xf32>, vector<8x64xf32> -> vector<8x64xf32>
    %c1_266 = arith.constant 1 : index
    %c0_267 = arith.constant 0 : index
    %c0_268 = arith.constant 0 : index
    %596 = vector.load %arg20[%c1_266, %c0_267, %c0_268] : memref<2x1x64xf32, #tpu.memory_space<vmem>>, vector<1x1x64xf32>
    %597 = vector.shape_cast %596 : vector<1x1x64xf32> to vector<1x64xf32>
    %598 = vector.broadcast %597 : vector<1x64xf32> to vector<8x64xf32>
    %599 = arith.addf %595, %598 : vector<8x64xf32>
    %cst_269 = arith.constant 0.000000e+00 : f32
    %600 = vector.broadcast %cst_269 : f32 to vector<8x64xf32>
    %601 = arith.maximumf %599, %600 : vector<8x64xf32>
    %c1_270 = arith.constant 1 : index
    %c0_271 = arith.constant 0 : index
    %c0_272 = arith.constant 0 : index
    %602 = vector.load %arg21[%c1_270, %c0_271, %c0_272] : memref<2x64x32xf32, #tpu.memory_space<vmem>>, vector<1x64x32xf32>
    %603 = vector.shape_cast %602 : vector<1x64x32xf32> to vector<64x32xf32>
    %cst_273 = arith.constant dense<0.000000e+00> : vector<8x32xf32>
    %604 = tpu.matmul %601, %603, %cst_273 {dimension_numbers = #tpu.dot_dimension_numbers<[1], [0], [0], [1], [0, 0, 1, 1], [], []>} : vector<8x64xf32>, vector<64x32xf32>, vector<8x32xf32> -> vector<8x32xf32>
    %c1_274 = arith.constant 1 : index
    %c0_275 = arith.constant 0 : index
    %c0_276 = arith.constant 0 : index
    %605 = vector.load %arg22[%c1_274, %c0_275, %c0_276] : memref<2x1x32xf32, #tpu.memory_space<vmem>>, vector<1x1x32xf32>
    %606 = vector.shape_cast %605 : vector<1x1x32xf32> to vector<1x32xf32>
    %607 = vector.broadcast %606 : vector<1x32xf32> to vector<8x32xf32>
    %608 = arith.addf %604, %607 : vector<8x32xf32>
    %609 = arith.addf %589, %608 : vector<8x32xf32>
    %c1_277 = arith.constant 1 : index
    %c0_278 = arith.constant 0 : index
    %c0_279 = arith.constant 0 : index
    %610 = vector.load %arg23[%c1_277, %c0_278, %c0_279] : memref<2x1x32xf32, #tpu.memory_space<vmem>>, vector<1x1x32xf32>
    %611 = vector.shape_cast %610 : vector<1x1x32xf32> to vector<1x32xf32>
    %c1_280 = arith.constant 1 : index
    %c0_281 = arith.constant 0 : index
    %c0_282 = arith.constant 0 : index
    %612 = vector.load %arg24[%c1_280, %c0_281, %c0_282] : memref<2x1x32xf32, #tpu.memory_space<vmem>>, vector<1x1x32xf32>
    %613 = vector.shape_cast %612 : vector<1x1x32xf32> to vector<1x32xf32>
    %cst_283 = arith.constant dense<0.000000e+00> : vector<8xf32>
    %614 = vector.multi_reduction <add>, %609, %cst_283 [1] : vector<8x32xf32> to vector<8xf32>
    %615 = vector.shape_cast %614 : vector<8xf32> to vector<8x1xf32>
    %cst_284 = arith.constant 3.200000e+01 : f32
    %616 = vector.broadcast %cst_284 : f32 to vector<8x1xf32>
    %617 = arith.divf %615, %616 : vector<8x1xf32>
    %618 = vector.broadcast %617 : vector<8x1xf32> to vector<8x32xf32>
    %619 = arith.subf %609, %618 : vector<8x32xf32>
    %620 = arith.mulf %619, %619 : vector<8x32xf32>
    %cst_285 = arith.constant dense<0.000000e+00> : vector<8xf32>
    %621 = vector.multi_reduction <add>, %620, %cst_285 [1] : vector<8x32xf32> to vector<8xf32>
    %622 = vector.shape_cast %621 : vector<8xf32> to vector<8x1xf32>
    %cst_286 = arith.constant 3.200000e+01 : f32
    %623 = vector.broadcast %cst_286 : f32 to vector<8x1xf32>
    %624 = arith.divf %622, %623 : vector<8x1xf32>
    %625 = vector.broadcast %617 : vector<8x1xf32> to vector<8x32xf32>
    %626 = arith.subf %609, %625 : vector<8x32xf32>
    %cst_287 = arith.constant 9.99999974E-6 : f32
    %627 = vector.broadcast %cst_287 : f32 to vector<8x1xf32>
    %628 = arith.addf %624, %627 : vector<8x1xf32>
    %629 = math.rsqrt %628 : vector<8x1xf32>
    %630 = vector.broadcast %629 : vector<8x1xf32> to vector<8x32xf32>
    %631 = arith.mulf %626, %630 : vector<8x32xf32>
    %632 = vector.broadcast %611 : vector<1x32xf32> to vector<8x32xf32>
    %633 = arith.mulf %631, %632 : vector<8x32xf32>
    %634 = vector.broadcast %613 : vector<1x32xf32> to vector<8x32xf32>
    %635 = arith.addf %633, %634 : vector<8x32xf32>
    %c0_288 = arith.constant 0 : index
    %c0_289 = arith.constant 0 : index
    %c0_290 = arith.constant 0 : index
    %636 = vector.load %arg25[%c0_288, %c0_289, %c0_290] : memref<1x8x32xf32, #tpu.memory_space<vmem>>, vector<1x8x32xf32>
    %637 = vector.shape_cast %636 : vector<1x8x32xf32> to vector<8x32xf32>
    %638 = vector.shape_cast %635 : vector<8x32xf32> to vector<1x8x32xf32>
    tpu.vector_store %arg25[%c0_288, %c0_289, %c0_290], %638 {strides = array<i32>} : memref<1x8x32xf32, #tpu.memory_space<vmem>>, vector<1x8x32xf32>,
    return
  }
  func.func @transform_0(%arg0: i32) -> (i32, i32, i32) {
    %c0_i32 = arith.constant 0 : i32
    %c0_i32_0 = arith.constant 0 : i32
    %c0_i32_1 = arith.constant 0 : i32
    return %arg0, %c0_i32, %c0_i32_0 : i32, i32, i32
  }
  func.func @transform_1(%arg0: i32) -> (i32, i32, i32) {
    %c0_i32 = arith.constant 0 : i32
    %c0_i32_0 = arith.constant 0 : i32
    %c0_i32_1 = arith.constant 0 : i32
    return %arg0, %c0_i32, %c0_i32_0 : i32, i32, i32
  }
  func.func @transform_2(%arg0: i32) -> (i32, i32, i32) {
    %c0_i32 = arith.constant 0 : i32
    %c0_i32_0 = arith.constant 0 : i32
    %c0_i32_1 = arith.constant 0 : i32
    return %arg0, %c0_i32, %c0_i32_0 : i32, i32, i32
  }
  func.func @transform_3(%arg0: i32) -> (i32, i32) {
    %c0_i32 = arith.constant 0 : i32
    %c0_i32_0 = arith.constant 0 : i32
    %c0_i32_1 = arith.constant 0 : i32
    return %c0_i32, %c0_i32_0 : i32, i32
  }
  func.func @transform_4(%arg0: i32) -> (i32, i32, i32) {
    %c0_i32 = arith.constant 0 : i32
    %c0_i32_0 = arith.constant 0 : i32
    %c0_i32_1 = arith.constant 0 : i32
    %c0_i32_2 = arith.constant 0 : i32
    return %c0_i32, %c0_i32_0, %c0_i32_1 : i32, i32, i32
  }
  func.func @transform_5(%arg0: i32) -> (i32, i32, i32) {
    %c0_i32 = arith.constant 0 : i32
    %c0_i32_0 = arith.constant 0 : i32
    %c0_i32_1 = arith.constant 0 : i32
    %c0_i32_2 = arith.constant 0 : i32
    return %c0_i32, %c0_i32_0, %c0_i32_1 : i32, i32, i32
  }
  func.func @transform_6(%arg0: i32) -> (i32, i32, i32) {
    %c0_i32 = arith.constant 0 : i32
    %c0_i32_0 = arith.constant 0 : i32
    %c0_i32_1 = arith.constant 0 : i32
    %c0_i32_2 = arith.constant 0 : i32
    return %c0_i32, %c0_i32_0, %c0_i32_1 : i32, i32, i32
  }
  func.func @transform_7(%arg0: i32) -> (i32, i32, i32) {
    %c0_i32 = arith.constant 0 : i32
    %c0_i32_0 = arith.constant 0 : i32
    %c0_i32_1 = arith.constant 0 : i32
    %c0_i32_2 = arith.constant 0 : i32
    return %c0_i32, %c0_i32_0, %c0_i32_1 : i32, i32, i32
  }
  func.func @transform_8(%arg0: i32) -> (i32, i32, i32) {
    %c0_i32 = arith.constant 0 : i32
    %c0_i32_0 = arith.constant 0 : i32
    %c0_i32_1 = arith.constant 0 : i32
    %c0_i32_2 = arith.constant 0 : i32
    return %c0_i32, %c0_i32_0, %c0_i32_1 : i32, i32, i32
  }
  func.func @transform_9(%arg0: i32) -> (i32, i32, i32) {
    %c0_i32 = arith.constant 0 : i32
    %c0_i32_0 = arith.constant 0 : i32
    %c0_i32_1 = arith.constant 0 : i32
    %c0_i32_2 = arith.constant 0 : i32
    return %c0_i32, %c0_i32_0, %c0_i32_1 : i32, i32, i32
  }
  func.func @transform_10(%arg0: i32) -> (i32, i32, i32) {
    %c0_i32 = arith.constant 0 : i32
    %c0_i32_0 = arith.constant 0 : i32
    %c0_i32_1 = arith.constant 0 : i32
    %c0_i32_2 = arith.constant 0 : i32
    return %c0_i32, %c0_i32_0, %c0_i32_1 : i32, i32, i32
  }
  func.func @transform_11(%arg0: i32) -> (i32, i32, i32) {
    %c0_i32 = arith.constant 0 : i32
    %c0_i32_0 = arith.constant 0 : i32
    %c0_i32_1 = arith.constant 0 : i32
    %c0_i32_2 = arith.constant 0 : i32
    return %c0_i32, %c0_i32_0, %c0_i32_1 : i32, i32, i32
  }
  func.func @transform_12(%arg0: i32) -> (i32, i32, i32) {
    %c0_i32 = arith.constant 0 : i32
    %c0_i32_0 = arith.constant 0 : i32
    %c0_i32_1 = arith.constant 0 : i32
    %c0_i32_2 = arith.constant 0 : i32
    return %c0_i32, %c0_i32_0, %c0_i32_1 : i32, i32, i32
  }
  func.func @transform_13(%arg0: i32) -> (i32, i32, i32) {
    %c0_i32 = arith.constant 0 : i32
    %c0_i32_0 = arith.constant 0 : i32
    %c0_i32_1 = arith.constant 0 : i32
    %c0_i32_2 = arith.constant 0 : i32
    return %c0_i32, %c0_i32_0, %c0_i32_1 : i32, i32, i32
  }
  func.func @transform_14(%arg0: i32) -> (i32, i32, i32) {
    %c0_i32 = arith.constant 0 : i32
    %c0_i32_0 = arith.constant 0 : i32
    %c0_i32_1 = arith.constant 0 : i32
    %c0_i32_2 = arith.constant 0 : i32
    return %c0_i32, %c0_i32_0, %c0_i32_1 : i32, i32, i32
  }
  func.func @transform_15(%arg0: i32) -> (i32, i32, i32) {
    %c0_i32 = arith.constant 0 : i32
    %c0_i32_0 = arith.constant 0 : i32
    %c0_i32_1 = arith.constant 0 : i32
    %c0_i32_2 = arith.constant 0 : i32
    return %c0_i32, %c0_i32_0, %c0_i32_1 : i32, i32, i32
  }
  func.func @transform_16(%arg0: i32) -> (i32, i32, i32) {
    %c0_i32 = arith.constant 0 : i32
    %c0_i32_0 = arith.constant 0 : i32
    %c0_i32_1 = arith.constant 0 : i32
    %c0_i32_2 = arith.constant 0 : i32
    return %c0_i32, %c0_i32_0, %c0_i32_1 : i32, i32, i32
  }
  func.func @transform_17(%arg0: i32) -> (i32, i32, i32) {
    %c0_i32 = arith.constant 0 : i32
    %c0_i32_0 = arith.constant 0 : i32
    %c0_i32_1 = arith.constant 0 : i32
    %c0_i32_2 = arith.constant 0 : i32
    return %c0_i32, %c0_i32_0, %c0_i32_1 : i32, i32, i32
  }
  func.func @transform_18(%arg0: i32) -> (i32, i32, i32) {
    %c0_i32 = arith.constant 0 : i32
    %c0_i32_0 = arith.constant 0 : i32
    %c0_i32_1 = arith.constant 0 : i32
    %c0_i32_2 = arith.constant 0 : i32
    return %c0_i32, %c0_i32_0, %c0_i32_1 : i32, i32, i32
  }
  func.func @transform_19(%arg0: i32) -> (i32, i32, i32) {
    %c0_i32 = arith.constant 0 : i32
    %c0_i32_0 = arith.constant 0 : i32
    %c0_i32_1 = arith.constant 0 : i32
    %c0_i32_2 = arith.constant 0 : i32
    return %c0_i32, %c0_i32_0, %c0_i32_1 : i32, i32, i32
  }
  func.func @transform_20(%arg0: i32) -> (i32, i32, i32) {
    %c0_i32 = arith.constant 0 : i32
    %c0_i32_0 = arith.constant 0 : i32
    %c0_i32_1 = arith.constant 0 : i32
    %c0_i32_2 = arith.constant 0 : i32
    return %c0_i32, %c0_i32_0, %c0_i32_1 : i32, i32, i32
  }
  func.func @transform_21(%arg0: i32) -> (i32, i32, i32) {
    %c0_i32 = arith.constant 0 : i32
    %c0_i32_0 = arith.constant 0 : i32
    %c0_i32_1 = arith.constant 0 : i32
    %c0_i32_2 = arith.constant 0 : i32
    return %c0_i32, %c0_i32_0, %c0_i32_1 : i32, i32, i32
  }
  func.func @transform_22(%arg0: i32) -> (i32, i32, i32) {
    %c0_i32 = arith.constant 0 : i32
    %c0_i32_0 = arith.constant 0 : i32
    %c0_i32_1 = arith.constant 0 : i32
    %c0_i32_2 = arith.constant 0 : i32
    return %c0_i32, %c0_i32_0, %c0_i32_1 : i32, i32, i32
  }
  func.func @transform_23(%arg0: i32) -> (i32, i32, i32) {
    %c0_i32 = arith.constant 0 : i32
    %c0_i32_0 = arith.constant 0 : i32
    %c0_i32_1 = arith.constant 0 : i32
    %c0_i32_2 = arith.constant 0 : i32
    return %c0_i32, %c0_i32_0, %c0_i32_1 : i32, i32, i32
  }
  func.func @transform_24(%arg0: i32) -> (i32, i32, i32) {
    %c0_i32 = arith.constant 0 : i32
    %c0_i32_0 = arith.constant 0 : i32
    %c0_i32_1 = arith.constant 0 : i32
    return %arg0, %c0_i32, %c0_i32_0 : i32, i32, i32
  }
  func.func @transform_25(%arg0: i32) -> (i32, i32, i32, i32) {
    %c0_i32 = arith.constant 0 : i32
    %c0_i32_0 = arith.constant 0 : i32
    %c0_i32_1 = arith.constant 0 : i32
    %c0_i32_2 = arith.constant 0 : i32
    return %arg0, %c0_i32, %c0_i32_0, %c0_i32_1 : i32, i32, i32, i32
  }
}

</mosaic_0001>

<llo_original>
// kernel: decoder_forward.1
$region0: #{decoder_forward.1}
  #allocation0 [shape = 'u32[]', space=smem, size = 0x4, offset = 0x4, fixed_abs, tag = 'smem constant byte address 0x4 - core index']
  #allocation1 [shape = 'u32[144,128]{1,0:T(1,128)}', space=vmem, size = 0x12000, scoped, tag = 'internal scratch']
  %s0 = inlined_call_operand.vmem [shape: s32[2,1,8], index: 0, kind: input, shape index: {}]
  %s1 = inlined_call_operand.vmem [shape: f32[2,1,32], index: 1, kind: input, shape index: {}]
  %s2 = inlined_call_operand.vmem [shape: f32[2,16,32], index: 2, kind: input, shape index: {}]
  %s3 = inlined_call_operand.hbm [shape: f32[32,32], index: 3, kind: input, shape index: {}]
  %s4 = inlined_call_operand.vmem [shape: f32[2,32,96], index: 4, kind: input, shape index: {}]
  %s5 = inlined_call_operand.hbm [shape: f32[2,1,96], index: 5, kind: input, shape index: {}]
  %s6 = inlined_call_operand.vmem [shape: f32[2,32,32], index: 6, kind: input, shape index: {}]
  %s7 = inlined_call_operand.hbm [shape: f32[2,1,32], index: 7, kind: input, shape index: {}]
  %s8 = inlined_call_operand.hbm [shape: f32[2,1,32], index: 8, kind: input, shape index: {}]
  %s9 = inlined_call_operand.hbm [shape: f32[2,1,32], index: 9, kind: input, shape index: {}]
  %s10 = inlined_call_operand.vmem [shape: f32[2,32,32], index: 10, kind: input, shape index: {}]
  %s11 = inlined_call_operand.hbm [shape: f32[2,1,32], index: 11, kind: input, shape index: {}]
  %s12 = inlined_call_operand.vmem [shape: f32[2,32,64], index: 12, kind: input, shape index: {}]
  %s13 = inlined_call_operand.hbm [shape: f32[2,1,64], index: 13, kind: input, shape index: {}]
  %s14 = inlined_call_operand.vmem [shape: f32[2,32,32], index: 14, kind: input, shape index: {}]
  %s15 = inlined_call_operand.hbm [shape: f32[2,1,32], index: 15, kind: input, shape index: {}]
  %s16 = inlined_call_operand.hbm [shape: f32[2,1,32], index: 16, kind: input, shape index: {}]
  %s17 = inlined_call_operand.hbm [shape: f32[2,1,32], index: 17, kind: input, shape index: {}]
  %s18 = inlined_call_operand.hbm [shape: f32[2,32,64], index: 18, kind: input, shape index: {}]
  %s19 = inlined_call_operand.hbm [shape: f32[2,1,64], index: 19, kind: input, shape index: {}]
  %s20 = inlined_call_operand.vmem [shape: f32[2,64,32], index: 20, kind: input, shape index: {}]
  %s21 = inlined_call_operand.hbm [shape: f32[2,1,32], index: 21, kind: input, shape index: {}]
  %s22 = inlined_call_operand.hbm [shape: f32[2,1,32], index: 22, kind: input, shape index: {}]
  %s23 = inlined_call_operand.hbm [shape: f32[2,1,32], index: 23, kind: input, shape index: {}]
  %s24 = inlined_call_operand.vmem [shape: f32[2,8,32], index: 24, kind: output, shape index: {0}]
  %s25 = inlined_call_operand.vmem [shape: f32[2,2,8,16], index: 25, kind: output, shape index: {1}]
  %26 = xla_tuple %s24, %s25
  %s27 = sld [smem:[#allocation0]]
  $region197: #{decoder_forward.1} parent=0
    _
  %s29 = ssub.s32 1, %s27
  %s30 = scalar_select 0, %s29, %s27
  $region1: #{decoder_forward.1} parent=0
    #allocation2 [shape = 'u8[16384]{0}', space=vmem, size = 0x4000, scoped, tag = 'input window, operand 3, single buffered']
    #allocation3 [shape = 's32[2]{0}', space=sflag, size = 0x8, scoped, tag = 'scoped memory for decoder_forward.1']
    #allocation4 [shape = 'u8[1024]{0}', space=vmem, size = 0x400, scoped, tag = 'input window, operand 5, single buffered']
    #allocation5 [shape = 's32[1]{0}', space=sflag, size = 0x4, scoped, tag = 'scoped memory for decoder_forward.1']
    #allocation6 [shape = 'u8[1024]{0}', space=vmem, size = 0x400, scoped, tag = 'input window, operand 7, single buffered']
    #allocation7 [shape = 'u8[1024]{0}', space=vmem, size = 0x400, scoped, tag = 'input window, operand 8, single buffered']
    #allocation8 [shape = 's32[1]{0}', space=sflag, size = 0x4, scoped, tag = 'scoped memory for decoder_forward.1']
    #allocation9 [shape = 'u8[1024]{0}', space=vmem, size = 0x400, scoped, tag = 'input window, operand 9, single buffered']
    #allocation10 [shape = 'u8[1024]{0}', space=vmem, size = 0x400, scoped, tag = 'input window, operand 11, single buffered']
    #allocation11 [shape = 's32[1]{0}', space=sflag, size = 0x4, scoped, tag = 'scoped memory for decoder_forward.1']
    #allocation12 [shape = 'u8[1024]{0}', space=vmem, size = 0x400, scoped, tag = 'input window, operand 13, single buffered']
    #allocation13 [shape = 'u8[1024]{0}', space=vmem, size = 0x400, scoped, tag = 'input window, operand 15, single buffered']
    #allocation14 [shape = 's32[1]{0}', space=sflag, size = 0x4, scoped, tag = 'scoped memory for decoder_forward.1']
    #allocation15 [shape = 'u8[1024]{0}', space=vmem, size = 0x400, scoped, tag = 'input window, operand 16, single buffered']
    #allocation16 [shape = 'u8[1024]{0}', space=vmem, size = 0x400, scoped, tag = 'input window, operand 17, single buffered']
    #allocation17 [shape = 's32[1]{0}', space=sflag, size = 0x4, scoped, tag = 'scoped memory for decoder_forward.1']
    #allocation18 [shape = 'u8[32768]{0}', space=vmem, size = 0x8000, scoped, tag = 'input window, operand 18, single buffered']
    #allocation19 [shape = 'u8[1024]{0}', space=vmem, size = 0x400, scoped, tag = 'input window, operand 19, single buffered']
    #allocation20 [shape = 's32[1]{0}', space=sflag, size = 0x4, scoped, tag = 'scoped memory for decoder_forward.1']
    #allocation21 [shape = 'u8[1024]{0}', space=vmem, size = 0x400, scoped, tag = 'input window, operand 21, single buffered']
    #allocation22 [shape = 'u8[1024]{0}', space=vmem, size = 0x400, scoped, tag = 'input window, operand 22, single buffered']
    #allocation23 [shape = 's32[1]{0}', space=sflag, size = 0x4, scoped, tag = 'scoped memory for decoder_forward.1']
    #allocation24 [shape = 'u8[1024]{0}', space=vmem, size = 0x400, scoped, tag = 'input window, operand 23, single buffered']
    %31 = vsyncpa [#allocation3], 0
    %32 = vsyncpa [#allocation5], 0
    %33 = vsyncpa [#allocation8], 0
    %34 = vsyncpa [#allocation11], 0
    %35 = vsyncpa [#allocation14], 0
    %36 = vsyncpa [#allocation17], 0
    %37 = vsyncpa [#allocation20], 0
    %38 = vsyncpa [#allocation23], 0
    loop: start=0, step=1, limit=4
    $region2: #{decoder_forward.1} parent=1 // loop_pre_header
      _
    $region3: #{decoder_forward.1} parent=1 // loop_header
      %s40 = sphi 0, %s44
      %p41 = scmp.ge.s32.totalorder %s40, 4
      %s50 = sphi 0, %s52
      %s53 = sphi 0, %s50
      %s54 = sphi 0, %s53
      %s70 = sphi 0, %s54
      %s76 = sphi 0, %s78
      %s79 = sphi 0, %s76
      %s80 = sphi 0, %s79
      %s96 = sphi 0, %s80
      %s102 = sphi 0, %s104
      %s105 = sphi 0, %s102
      %s106 = sphi 0, %s105
      %s122 = sphi 0, %s106
      %s126 = sphi 0, %s126
      %s128 = sphi 0, %s126
      %s129 = sphi 0, %s128
      %s143 = sphi 0, %s129
      %s147 = sphi 0, %s147
      %s149 = sphi 0, %s147
      %s150 = sphi 0, %s149
      %s164 = sphi 0, %s150
      %s168 = sphi 0, %s168
      %s170 = sphi 0, %s168
      %s171 = sphi 0, %s170
      %s185 = sphi 0, %s171
      %s189 = sphi 0, %s189
      %s191 = sphi 0, %s189
      %s192 = sphi 0, %s191
      %s206 = sphi 0, %s192
      %s210 = sphi 0, %s210
      %s212 = sphi 0, %s210
      %s213 = sphi 0, %s212
      %s227 = sphi 0, %s213
      %s231 = sphi 0, %s231
      %s233 = sphi 0, %s231
      %s234 = sphi 0, %s233
      %s248 = sphi 0, %s234
      %s252 = sphi 0, %s252
      %s254 = sphi 0, %s252
      %s255 = sphi 0, %s254
      %s269 = sphi 0, %s255
      %s273 = sphi 0, %s273
      %s275 = sphi 0, %s273
      %s276 = sphi 0, %s275
      %s290 = sphi 0, %s276
      %s294 = sphi 0, %s294
      %s296 = sphi 0, %s294
      %s297 = sphi 0, %s296
      %s311 = sphi 0, %s297
      %s315 = sphi 0, %s315
      %s317 = sphi 0, %s315
      %s318 = sphi 0, %s317
      %s332 = sphi 0, %s318
      %s336 = sphi 0, %s336
      %s338 = sphi 0, %s336
      %s339 = sphi 0, %s338
      %s353 = sphi 0, %s339
      %s357 = sphi 0, %s357
      %s359 = sphi 0, %s357
      %s360 = sphi 0, %s359
      %s374 = sphi 0, %s360
      %s378 = sphi 0, %s378
      %s380 = sphi 0, %s378
      %s381 = sphi 0, %s380
      %s395 = sphi 0, %s381
      %s399 = sphi 0, %s399
      %s401 = sphi 0, %s399
      %s402 = sphi 0, %s401
      %s416 = sphi 0, %s402
      %s420 = sphi 0, %s420
      %s422 = sphi 0, %s420
      %s423 = sphi 0, %s422
      %s437 = sphi 0, %s423
      %s441 = sphi 0, %s441
      %s443 = sphi 0, %s441
      %s444 = sphi 0, %s443
      %s458 = sphi 0, %s444
      %s462 = sphi 0, %s462
      %s464 = sphi 0, %s462
      %s465 = sphi 0, %s464
      %s479 = sphi 0, %s465
      %s483 = sphi 0, %s483
      %s485 = sphi 0, %s483
      %s486 = sphi 0, %s485
      %s500 = sphi 0, %s486
      %s504 = sphi 0, %s504
      %s506 = sphi 0, %s504
      %s507 = sphi 0, %s506
      %s521 = sphi 0, %s507
      %s525 = sphi 0, %s525
      %s527 = sphi 0, %s525
      %s528 = sphi 0, %s527
      %s542 = sphi 0, %s528
      %s546 = sphi 0, %s546
      %s548 = sphi 0, %s546
      %s549 = sphi 0, %s548
      %s563 = sphi 0, %s549
      %s569 = sphi 0, %s571
      %s572 = sphi 0, %s569
      %s573 = sphi 0, %s572
      %s589 = sphi 0, %s573
      %s595 = sphi 0, %s597
      %s598 = sphi 0, %s595
      %s599 = sphi 0, %s598
      %s615 = sphi 0, %s599
    $region4: #{decoder_forward.1} parent=1 // loop_header_branch
      %43 = sbr.rel (%p41) target = $region8
    $region5: #{decoder_forward.1} parent=1 // loop_body
      %s45 = ssub.s32 %s40, 1
      %s46 = ssub.s32 %s40, 2
      %s47 = sadd.s32 %s40, 1
      %s48 = ssub.s32 %s40, %s47
      %p49 = scmp.eq.s32.totalorder %s48, 0
      %s51 = sadd.s32 %s50, 1
      %s52 = scalar_select %p49, %s50, %s51
      %p55 = pneg %p49
      %p56 = scmp.eq.s32.totalorder %s40, 1
      %p57 = por %p55, %p56
      %p58 = scmp.ne.s32.totalorder %s50, %s53
      %p59 = scmp.eq.s32.totalorder %s40, 0
      %p60 = por %p58, %p59
      %p61 = scmp.ne.s32.totalorder %s50, %s53
      %p62 = scmp.eq.s32.totalorder %s45, 1
      %p63 = por %p61, %p62
      %p64 = scmp.ne.s32.totalorder %s53, %s54
      %p65 = scmp.eq.s32.totalorder %s45, 0
      %p66 = por %p64, %p65
      %p67 = scmp.ne.s32.totalorder %s53, %s54
      %p68 = scmp.eq.s32.totalorder %s46, 1
      %p69 = por %p67, %p68
      %p71 = scmp.ne.s32.totalorder %s54, %s70
      %p72 = scmp.eq.s32.totalorder %s46, 0
      %p73 = por %p71, %p72
      %s74 = ssub.s32 %s40, %s47
      %p75 = scmp.eq.s32.totalorder %s74, 0
      %s77 = sadd.s32 %s76, 1
      %s78 = scalar_select %p75, %s76, %s77
      %p81 = pneg %p75
      %p82 = scmp.eq.s32.totalorder %s40, 1
      %p83 = por %p81, %p82
      %p84 = scmp.ne.s32.totalorder %s76, %s79
      %p85 = scmp.eq.s32.totalorder %s40, 0
      %p86 = por %p84, %p85
      %p87 = scmp.ne.s32.totalorder %s76, %s79
      %p88 = scmp.eq.s32.totalorder %s45, 1
      %p89 = por %p87, %p88
      %p90 = scmp.ne.s32.totalorder %s79, %s80
      %p91 = scmp.eq.s32.totalorder %s45, 0
      %p92 = por %p90, %p91
      %p93 = scmp.ne.s32.totalorder %s79, %s80
      %p94 = scmp.eq.s32.totalorder %s46, 1
      %p95 = por %p93, %p94
      %p97 = scmp.ne.s32.totalorder %s80, %s96
      %p98 = scmp.eq.s32.totalorder %s46, 0
      %p99 = por %p97, %p98
      %s100 = ssub.s32 %s40, %s47
      %p101 = scmp.eq.s32.totalorder %s100, 0
      %s103 = sadd.s32 %s102, 1
      %s104 = scalar_select %p101, %s102, %s103
      %p107 = pneg %p101
      %p108 = scmp.eq.s32.totalorder %s40, 1
      %p109 = por %p107, %p108
      %p110 = scmp.ne.s32.totalorder %s102, %s105
      %p111 = scmp.eq.s32.totalorder %s40, 0
      %p112 = por %p110, %p111
      %p113 = scmp.ne.s32.totalorder %s102, %s105
      %p114 = scmp.eq.s32.totalorder %s45, 1
      %p115 = por %p113, %p114
      %p116 = scmp.ne.s32.totalorder %s105, %s106
      %p117 = scmp.eq.s32.totalorder %s45, 0
      %p118 = por %p116, %p117
      %p119 = scmp.ne.s32.totalorder %s105, %s106
      %p120 = scmp.eq.s32.totalorder %s46, 1
      %p121 = por %p119, %p120
      %p123 = scmp.ne.s32.totalorder %s106, %s122
      %p124 = scmp.eq.s32.totalorder %s46, 0
      %p125 = por %p123, %p124
      %s127 = sadd.s32 %s126, 1
      %p130 = scmp.eq.s32.totalorder %s40, 1
      %p131 = scmp.ne.s32.totalorder %s126, %s128
      %p132 = scmp.eq.s32.totalorder %s40, 0
      %p133 = por %p131, %p132
      %p134 = scmp.ne.s32.totalorder %s126, %s128
      %p135 = scmp.eq.s32.totalorder %s45, 1
      %p136 = por %p134, %p135
      %p137 = scmp.ne.s32.totalorder %s128, %s129
      %p138 = scmp.eq.s32.totalorder %s45, 0
      %p139 = por %p137, %p138
      %p140 = scmp.ne.s32.totalorder %s128, %s129
      %p141 = scmp.eq.s32.totalorder %s46, 1
      %p142 = por %p140, %p141
      %p144 = scmp.ne.s32.totalorder %s129, %s143
      %p145 = scmp.eq.s32.totalorder %s46, 0
      %p146 = por %p144, %p145
      %s148 = sadd.s32 %s147, 1
      %p151 = scmp.eq.s32.totalorder %s40, 1
      %p152 = scmp.ne.s32.totalorder %s147, %s149
      %p153 = scmp.eq.s32.totalorder %s40, 0
      %p154 = por %p152, %p153
      %p155 = scmp.ne.s32.totalorder %s147, %s149
      %p156 = scmp.eq.s32.totalorder %s45, 1
      %p157 = por %p155, %p156
      %p158 = scmp.ne.s32.totalorder %s149, %s150
      %p159 = scmp.eq.s32.totalorder %s45, 0
      %p160 = por %p158, %p159
      %p161 = scmp.ne.s32.totalorder %s149, %s150
      %p162 = scmp.eq.s32.totalorder %s46, 1
      %p163 = por %p161, %p162
      %p165 = scmp.ne.s32.totalorder %s150, %s164
      %p166 = scmp.eq.s32.totalorder %s46, 0
      %p167 = por %p165, %p166
      %s169 = sadd.s32 %s168, 1
      %p172 = scmp.eq.s32.totalorder %s40, 1
      %p173 = scmp.ne.s32.totalorder %s168, %s170
      %p174 = scmp.eq.s32.totalorder %s40, 0
      %p175 = por %p173, %p174
      %p176 = scmp.ne.s32.totalorder %s168, %s170
      %p177 = scmp.eq.s32.totalorder %s45, 1
      %p178 = por %p176, %p177
      %p179 = scmp.ne.s32.totalorder %s170, %s171
      %p180 = scmp.eq.s32.totalorder %s45, 0
      %p181 = por %p179, %p180
      %p182 = scmp.ne.s32.totalorder %s170, %s171
      %p183 = scmp.eq.s32.totalorder %s46, 1
      %p184 = por %p182, %p183
      %p186 = scmp.ne.s32.totalorder %s171, %s185
      %p187 = scmp.eq.s32.totalorder %s46, 0
      %p188 = por %p186, %p187
      %s190 = sadd.s32 %s189, 1
      %p193 = scmp.eq.s32.totalorder %s40, 1
      %p194 = scmp.ne.s32.totalorder %s189, %s191
      %p195 = scmp.eq.s32.totalorder %s40, 0
      %p196 = por %p194, %p195
      %p197 = scmp.ne.s32.totalorder %s189, %s191
      %p198 = scmp.eq.s32.totalorder %s45, 1
      %p199 = por %p197, %p198
      %p200 = scmp.ne.s32.totalorder %s191, %s192
      %p201 = scmp.eq.s32.totalorder %s45, 0
      %p202 = por %p200, %p201
      %p203 = scmp.ne.s32.totalorder %s191, %s192
      %p204 = scmp.eq.s32.totalorder %s46, 1
      %p205 = por %p203, %p204
      %p207 = scmp.ne.s32.totalorder %s192, %s206
      %p208 = scmp.eq.s32.totalorder %s46, 0
      %p209 = por %p207, %p208
      %s211 = sadd.s32 %s210, 1
      %p214 = scmp.eq.s32.totalorder %s40, 1
      %p215 = scmp.ne.s32.totalorder %s210, %s212
      %p216 = scmp.eq.s32.totalorder %s40, 0
      %p217 = por %p215, %p216
      %p218 = scmp.ne.s32.totalorder %s210, %s212
      %p219 = scmp.eq.s32.totalorder %s45, 1
      %p220 = por %p218, %p219
      %p221 = scmp.ne.s32.totalorder %s212, %s213
      %p222 = scmp.eq.s32.totalorder %s45, 0
      %p223 = por %p221, %p222
      %p224 = scmp.ne.s32.totalorder %s212, %s213
      %p225 = scmp.eq.s32.totalorder %s46, 1
      %p226 = por %p224, %p225
      %p228 = scmp.ne.s32.totalorder %s213, %s227
      %p229 = scmp.eq.s32.totalorder %s46, 0
      %p230 = por %p228, %p229
      %s232 = sadd.s32 %s231, 1
      %p235 = scmp.eq.s32.totalorder %s40, 1
      %p236 = scmp.ne.s32.totalorder %s231, %s233
      %p237 = scmp.eq.s32.totalorder %s40, 0
      %p238 = por %p236, %p237
      %p239 = scmp.ne.s32.totalorder %s231, %s233
      %p240 = scmp.eq.s32.totalorder %s45, 1
      %p241 = por %p239, %p240
      %p242 = scmp.ne.s32.totalorder %s233, %s234
      %p243 = scmp.eq.s32.totalorder %s45, 0
      %p244 = por %p242, %p243
      %p245 = scmp.ne.s32.totalorder %s233, %s234
      %p246 = scmp.eq.s32.totalorder %s46, 1
      %p247 = por %p245, %p246
      %p249 = scmp.ne.s32.totalorder %s234, %s248
      %p250 = scmp.eq.s32.totalorder %s46, 0
      %p251 = por %p249, %p250
      %s253 = sadd.s32 %s252, 1
      %p256 = scmp.eq.s32.totalorder %s40, 1
      %p257 = scmp.ne.s32.totalorder %s252, %s254
      %p258 = scmp.eq.s32.totalorder %s40, 0
      %p259 = por %p257, %p258
      %p260 = scmp.ne.s32.totalorder %s252, %s254
      %p261 = scmp.eq.s32.totalorder %s45, 1
      %p262 = por %p260, %p261
      %p263 = scmp.ne.s32.totalorder %s254, %s255
      %p264 = scmp.eq.s32.totalorder %s45, 0
      %p265 = por %p263, %p264
      %p266 = scmp.ne.s32.totalorder %s254, %s255
      %p267 = scmp.eq.s32.totalorder %s46, 1
      %p268 = por %p266, %p267
      %p270 = scmp.ne.s32.totalorder %s255, %s269
      %p271 = scmp.eq.s32.totalorder %s46, 0
      %p272 = por %p270, %p271
      %s274 = sadd.s32 %s273, 1
      %p277 = scmp.eq.s32.totalorder %s40, 1
      %p278 = scmp.ne.s32.totalorder %s273, %s275
      %p279 = scmp.eq.s32.totalorder %s40, 0
      %p280 = por %p278, %p279
      %p281 = scmp.ne.s32.totalorder %s273, %s275
      %p282 = scmp.eq.s32.totalorder %s45, 1
      %p283 = por %p281, %p282
      %p284 = scmp.ne.s32.totalorder %s275, %s276
      %p285 = scmp.eq.s32.totalorder %s45, 0
      %p286 = por %p284, %p285
      %p287 = scmp.ne.s32.totalorder %s275, %s276
      %p288 = scmp.eq.s32.totalorder %s46, 1
      %p289 = por %p287, %p288
      %p291 = scmp.ne.s32.totalorder %s276, %s290
      %p292 = scmp.eq.s32.totalorder %s46, 0
      %p293 = por %p291, %p292
      %s295 = sadd.s32 %s294, 1
      %p298 = scmp.eq.s32.totalorder %s40, 1
      %p299 = scmp.ne.s32.totalorder %s294, %s296
      %p300 = scmp.eq.s32.totalorder %s40, 0
      %p301 = por %p299, %p300
      %p302 = scmp.ne.s32.totalorder %s294, %s296
      %p303 = scmp.eq.s32.totalorder %s45, 1
      %p304 = por %p302, %p303
      %p305 = scmp.ne.s32.totalorder %s296, %s297
      %p306 = scmp.eq.s32.totalorder %s45, 0
      %p307 = por %p305, %p306
      %p308 = scmp.ne.s32.totalorder %s296, %s297
      %p309 = scmp.eq.s32.totalorder %s46, 1
      %p310 = por %p308, %p309
      %p312 = scmp.ne.s32.totalorder %s297, %s311
      %p313 = scmp.eq.s32.totalorder %s46, 0
      %p314 = por %p312, %p313
      %s316 = sadd.s32 %s315, 1
      %p319 = scmp.eq.s32.totalorder %s40, 1
      %p320 = scmp.ne.s32.totalorder %s315, %s317
      %p321 = scmp.eq.s32.totalorder %s40, 0
      %p322 = por %p320, %p321
      %p323 = scmp.ne.s32.totalorder %s315, %s317
      %p324 = scmp.eq.s32.totalorder %s45, 1
      %p325 = por %p323, %p324
      %p326 = scmp.ne.s32.totalorder %s317, %s318
      %p327 = scmp.eq.s32.totalorder %s45, 0
      %p328 = por %p326, %p327
      %p329 = scmp.ne.s32.totalorder %s317, %s318
      %p330 = scmp.eq.s32.totalorder %s46, 1
      %p331 = por %p329, %p330
      %p333 = scmp.ne.s32.totalorder %s318, %s332
      %p334 = scmp.eq.s32.totalorder %s46, 0
      %p335 = por %p333, %p334
      %s337 = sadd.s32 %s336, 1
      %p340 = scmp.eq.s32.totalorder %s40, 1
      %p341 = scmp.ne.s32.totalorder %s336, %s338
      %p342 = scmp.eq.s32.totalorder %s40, 0
      %p343 = por %p341, %p342
      %p344 = scmp.ne.s32.totalorder %s336, %s338
      %p345 = scmp.eq.s32.totalorder %s45, 1
      %p346 = por %p344, %p345
      %p347 = scmp.ne.s32.totalorder %s338, %s339
      %p348 = scmp.eq.s32.totalorder %s45, 0
      %p349 = por %p347, %p348
      %p350 = scmp.ne.s32.totalorder %s338, %s339
      %p351 = scmp.eq.s32.totalorder %s46, 1
      %p352 = por %p350, %p351
      %p354 = scmp.ne.s32.totalorder %s339, %s353
      %p355 = scmp.eq.s32.totalorder %s46, 0
      %p356 = por %p354, %p355
      %s358 = sadd.s32 %s357, 1
      %p361 = scmp.eq.s32.totalorder %s40, 1
      %p362 = scmp.ne.s32.totalorder %s357, %s359
      %p363 = scmp.eq.s32.totalorder %s40, 0
      %p364 = por %p362, %p363
      %p365 = scmp.ne.s32.totalorder %s357, %s359
      %p366 = scmp.eq.s32.totalorder %s45, 1
      %p367 = por %p365, %p366
      %p368 = scmp.ne.s32.totalorder %s359, %s360
      %p369 = scmp.eq.s32.totalorder %s45, 0
      %p370 = por %p368, %p369
      %p371 = scmp.ne.s32.totalorder %s359, %s360
      %p372 = scmp.eq.s32.totalorder %s46, 1
      %p373 = por %p371, %p372
      %p375 = scmp.ne.s32.totalorder %s360, %s374
      %p376 = scmp.eq.s32.totalorder %s46, 0
      %p377 = por %p375, %p376
      %s379 = sadd.s32 %s378, 1
      %p382 = scmp.eq.s32.totalorder %s40, 1
      %p383 = scmp.ne.s32.totalorder %s378, %s380
      %p384 = scmp.eq.s32.totalorder %s40, 0
      %p385 = por %p383, %p384
      %p386 = scmp.ne.s32.totalorder %s378, %s380
      %p387 = scmp.eq.s32.totalorder %s45, 1
      %p388 = por %p386, %p387
      %p389 = scmp.ne.s32.totalorder %s380, %s381
      %p390 = scmp.eq.s32.totalorder %s45, 0
      %p391 = por %p389, %p390
      %p392 = scmp.ne.s32.totalorder %s380, %s381
      %p393 = scmp.eq.s32.totalorder %s46, 1
      %p394 = por %p392, %p393
      %p396 = scmp.ne.s32.totalorder %s381, %s395
      %p397 = scmp.eq.s32.totalorder %s46, 0
      %p398 = por %p396, %p397
      %s400 = sadd.s32 %s399, 1
      %p403 = scmp.eq.s32.totalorder %s40, 1
      %p404 = scmp.ne.s32.totalorder %s399, %s401
      %p405 = scmp.eq.s32.totalorder %s40, 0
      %p406 = por %p404, %p405
      %p407 = scmp.ne.s32.totalorder %s399, %s401
      %p408 = scmp.eq.s32.totalorder %s45, 1
      %p409 = por %p407, %p408
      %p410 = scmp.ne.s32.totalorder %s401, %s402
      %p411 = scmp.eq.s32.totalorder %s45, 0
      %p412 = por %p410, %p411
      %p413 = scmp.ne.s32.totalorder %s401, %s402
      %p414 = scmp.eq.s32.totalorder %s46, 1
      %p415 = por %p413, %p414
      %p417 = scmp.ne.s32.totalorder %s402, %s416
      %p418 = scmp.eq.s32.totalorder %s46, 0
      %p419 = por %p417, %p418
      %s421 = sadd.s32 %s420, 1
      %p424 = scmp.eq.s32.totalorder %s40, 1
      %p425 = scmp.ne.s32.totalorder %s420, %s422
      %p426 = scmp.eq.s32.totalorder %s40, 0
      %p427 = por %p425, %p426
      %p428 = scmp.ne.s32.totalorder %s420, %s422
      %p429 = scmp.eq.s32.totalorder %s45, 1
      %p430 = por %p428, %p429
      %p431 = scmp.ne.s32.totalorder %s422, %s423
      %p432 = scmp.eq.s32.totalorder %s45, 0
      %p433 = por %p431, %p432
      %p434 = scmp.ne.s32.totalorder %s422, %s423
      %p435 = scmp.eq.s32.totalorder %s46, 1
      %p436 = por %p434, %p435
      %p438 = scmp.ne.s32.totalorder %s423, %s437
      %p439 = scmp.eq.s32.totalorder %s46, 0
      %p440 = por %p438, %p439
      %s442 = sadd.s32 %s441, 1
      %p445 = scmp.eq.s32.totalorder %s40, 1
      %p446 = scmp.ne.s32.totalorder %s441, %s443
      %p447 = scmp.eq.s32.totalorder %s40, 0
      %p448 = por %p446, %p447
      %p449 = scmp.ne.s32.totalorder %s441, %s443
      %p450 = scmp.eq.s32.totalorder %s45, 1
      %p451 = por %p449, %p450
      %p452 = scmp.ne.s32.totalorder %s443, %s444
      %p453 = scmp.eq.s32.totalorder %s45, 0
      %p454 = por %p452, %p453
      %p455 = scmp.ne.s32.totalorder %s443, %s444
      %p456 = scmp.eq.s32.totalorder %s46, 1
      %p457 = por %p455, %p456
      %p459 = scmp.ne.s32.totalorder %s444, %s458
      %p460 = scmp.eq.s32.totalorder %s46, 0
      %p461 = por %p459, %p460
      %s463 = sadd.s32 %s462, 1
      %p466 = scmp.eq.s32.totalorder %s40, 1
      %p467 = scmp.ne.s32.totalorder %s462, %s464
      %p468 = scmp.eq.s32.totalorder %s40, 0
      %p469 = por %p467, %p468
      %p470 = scmp.ne.s32.totalorder %s462, %s464
      %p471 = scmp.eq.s32.totalorder %s45, 1
      %p472 = por %p470, %p471
      %p473 = scmp.ne.s32.totalorder %s464, %s465
      %p474 = scmp.eq.s32.totalorder %s45, 0
      %p475 = por %p473, %p474
      %p476 = scmp.ne.s32.totalorder %s464, %s465
      %p477 = scmp.eq.s32.totalorder %s46, 1
      %p478 = por %p476, %p477
      %p480 = scmp.ne.s32.totalorder %s465, %s479
      %p481 = scmp.eq.s32.totalorder %s46, 0
      %p482 = por %p480, %p481
      %s484 = sadd.s32 %s483, 1
      %p487 = scmp.eq.s32.totalorder %s40, 1
      %p488 = scmp.ne.s32.totalorder %s483, %s485
      %p489 = scmp.eq.s32.totalorder %s40, 0
      %p490 = por %p488, %p489
      %p491 = scmp.ne.s32.totalorder %s483, %s485
      %p492 = scmp.eq.s32.totalorder %s45, 1
      %p493 = por %p491, %p492
      %p494 = scmp.ne.s32.totalorder %s485, %s486
      %p495 = scmp.eq.s32.totalorder %s45, 0
      %p496 = por %p494, %p495
      %p497 = scmp.ne.s32.totalorder %s485, %s486
      %p498 = scmp.eq.s32.totalorder %s46, 1
      %p499 = por %p497, %p498
      %p501 = scmp.ne.s32.totalorder %s486, %s500
      %p502 = scmp.eq.s32.totalorder %s46, 0
      %p503 = por %p501, %p502
      %s505 = sadd.s32 %s504, 1
      %p508 = scmp.eq.s32.totalorder %s40, 1
      %p509 = scmp.ne.s32.totalorder %s504, %s506
      %p510 = scmp.eq.s32.totalorder %s40, 0
      %p511 = por %p509, %p510
      %p512 = scmp.ne.s32.totalorder %s504, %s506
      %p513 = scmp.eq.s32.totalorder %s45, 1
      %p514 = por %p512, %p513
      %p515 = scmp.ne.s32.totalorder %s506, %s507
      %p516 = scmp.eq.s32.totalorder %s45, 0
      %p517 = por %p515, %p516
      %p518 = scmp.ne.s32.totalorder %s506, %s507
      %p519 = scmp.eq.s32.totalorder %s46, 1
      %p520 = por %p518, %p519
      %p522 = scmp.ne.s32.totalorder %s507, %s521
      %p523 = scmp.eq.s32.totalorder %s46, 0
      %p524 = por %p522, %p523
      %s526 = sadd.s32 %s525, 1
      %p529 = scmp.eq.s32.totalorder %s40, 1
      %p530 = scmp.ne.s32.totalorder %s525, %s527
      %p531 = scmp.eq.s32.totalorder %s40, 0
      %p532 = por %p530, %p531
      %p533 = scmp.ne.s32.totalorder %s525, %s527
      %p534 = scmp.eq.s32.totalorder %s45, 1
      %p535 = por %p533, %p534
      %p536 = scmp.ne.s32.totalorder %s527, %s528
      %p537 = scmp.eq.s32.totalorder %s45, 0
      %p538 = por %p536, %p537
      %p539 = scmp.ne.s32.totalorder %s527, %s528
      %p540 = scmp.eq.s32.totalorder %s46, 1
      %p541 = por %p539, %p540
      %p543 = scmp.ne.s32.totalorder %s528, %s542
      %p544 = scmp.eq.s32.totalorder %s46, 0
      %p545 = por %p543, %p544
      %s547 = sadd.s32 %s546, 1
      %p550 = scmp.eq.s32.totalorder %s40, 1
      %p551 = scmp.ne.s32.totalorder %s546, %s548
      %p552 = scmp.eq.s32.totalorder %s40, 0
      %p553 = por %p551, %p552
      %p554 = scmp.ne.s32.totalorder %s546, %s548
      %p555 = scmp.eq.s32.totalorder %s45, 1
      %p556 = por %p554, %p555
      %p557 = scmp.ne.s32.totalorder %s548, %s549
      %p558 = scmp.eq.s32.totalorder %s45, 0
      %p559 = por %p557, %p558
      %p560 = scmp.ne.s32.totalorder %s548, %s549
      %p561 = scmp.eq.s32.totalorder %s46, 1
      %p562 = por %p560, %p561
      %p564 = scmp.ne.s32.totalorder %s549, %s563
      %p565 = scmp.eq.s32.totalorder %s46, 0
      %p566 = por %p564, %p565
      %s567 = ssub.s32 %s40, %s47
      %p568 = scmp.eq.s32.totalorder %s567, 0
      %s570 = sadd.s32 %s569, 1
      %s571 = scalar_select %p568, %s569, %s570
      %p574 = pneg %p568
      %p575 = scmp.eq.s32.totalorder %s40, 1
      %p576 = por %p574, %p575
      %p577 = scmp.ne.s32.totalorder %s569, %s572
      %p578 = scmp.eq.s32.totalorder %s40, 0
      %p579 = por %p577, %p578
      %p580 = scmp.ne.s32.totalorder %s569, %s572
      %p581 = scmp.eq.s32.totalorder %s45, 1
      %p582 = por %p580, %p581
      %p583 = scmp.ne.s32.totalorder %s572, %s573
      %p584 = scmp.eq.s32.totalorder %s45, 0
      %p585 = por %p583, %p584
      %p586 = scmp.ne.s32.totalorder %s572, %s573
      %p587 = scmp.eq.s32.totalorder %s46, 1
      %p588 = por %p586, %p587
      %p590 = scmp.ne.s32.totalorder %s573, %s589
      %p591 = scmp.eq.s32.totalorder %s46, 0
      %p592 = por %p590, %p591
      %s593 = ssub.s32 %s40, %s47
      %p594 = scmp.eq.s32.totalorder %s593, 0
      %s596 = sadd.s32 %s595, 1
      %s597 = scalar_select %p594, %s595, %s596
      %p600 = pneg %p594
      %p601 = scmp.eq.s32.totalorder %s40, 1
      %p602 = por %p600, %p601
      %p603 = scmp.ne.s32.totalorder %s595, %s598
      %p604 = scmp.eq.s32.totalorder %s40, 0
      %p605 = por %p603, %p604
      %p606 = scmp.ne.s32.totalorder %s595, %s598
      %p607 = scmp.eq.s32.totalorder %s45, 1
      %p608 = por %p606, %p607
      %p609 = scmp.ne.s32.totalorder %s598, %s599
      %p610 = scmp.eq.s32.totalorder %s45, 0
      %p611 = por %p609, %p610
      %p612 = scmp.ne.s32.totalorder %s598, %s599
      %p613 = scmp.eq.s32.totalorder %s46, 1
      %p614 = por %p612, %p613
      %p616 = scmp.ne.s32.totalorder %s599, %s615
      %p617 = scmp.eq.s32.totalorder %s46, 0
      %p618 = por %p616, %p617
      %p619 = scmp.le.s32.totalorder 1, %s40
      %p620 = scmp.lt.s32.totalorder %s40, 3
      %p621 = pnand %p619, %p620
      %p622 = pneg %p621
      // Predicated region
      $region9: #{decoder_forward.1} parent=5 // pred_check
        _
      $region10: #{decoder_forward.1} parent=5 // pred_check_branch
        %624 = sbr.rel (%p621) target = $region12
      $region11: #{decoder_forward.1} parent=5 // pred_region
        %s625 = ssub.s32 %s40, 1
        // Predicated region
        $region13: #{decoder_forward.1} parent=11 // pred_check
          %p626 = pneg %p139
        $region14: #{decoder_forward.1} parent=11 // pred_check_branch
          %628 = sbr.rel (%p626) target = $region16
        $region15: #{decoder_forward.1} parent=11 // pred_region
          %s630 = ssub.s32 512, 512
          %631 = vsyncadd [#allocation3], %s630
          %s632 = sshll.u32 [#allocation2], 4
          %s633 = int_to_ptr.vmem [resolvable:$true] %s632
          %638 = dma.hbm_to_vmem [thread:$0]  %s3, 512, %s633, [#allocation3], 128, 128, 8
        $region16: #{decoder_forward.1} parent=11 // pred_fallthru
          _
        // Predicated region
        $region17: #{decoder_forward.1} parent=11 // pred_check
          %p639 = pneg %p160
        $region18: #{decoder_forward.1} parent=11 // pred_check_branch
          %641 = sbr.rel (%p639) target = $region20
        $region19: #{decoder_forward.1} parent=11 // pred_region
          _
        $region20: #{decoder_forward.1} parent=11 // pred_fallthru
          _
        // Predicated region
        $region21: #{decoder_forward.1} parent=11 // pred_check
          %p642 = pneg %p181
        $region22: #{decoder_forward.1} parent=11 // pred_check_branch
          %644 = sbr.rel (%p642) target = $region24
        $region23: #{decoder_forward.1} parent=11 // pred_region
          %s646 = ssub.s32 32, 32
          %647 = vsyncadd [#allocation5], %s646
          %s648 = sshll.u32 [#allocation4], 4
          %s649 = int_to_ptr.vmem [resolvable:$true] %s648
          %654 = dma.hbm_to_vmem [thread:$0]  %s5, 32, %s649, [#allocation5], 16, 16, 1
        $region24: #{decoder_forward.1} parent=11 // pred_fallthru
          _
        // Predicated region
        $region25: #{decoder_forward.1} parent=11 // pred_check
          %p655 = pneg %p202
        $region26: #{decoder_forward.1} parent=11 // pred_check_branch
          %657 = sbr.rel (%p655) target = $region28
        $region27: #{decoder_forward.1} parent=11 // pred_region
          _
        $region28: #{decoder_forward.1} parent=11 // pred_fallthru
          _
        // Predicated region
        $region29: #{decoder_forward.1} parent=11 // pred_check
          %p658 = pneg %p223
        $region30: #{decoder_forward.1} parent=11 // pred_check_branch
          %660 = sbr.rel (%p658) target = $region32
        $region31: #{decoder_forward.1} parent=11 // pred_region
          %s662 = ssub.s32 32, 32
          %663 = vsyncadd [#allocation5], %s662
          %s664 = sshll.u32 [#allocation6], 4
          %s665 = int_to_ptr.vmem [resolvable:$true] %s664
          %670 = dma.hbm_to_vmem [thread:$0]  %s7, 32, %s665, [#allocation5], 16, 16, 1
        $region32: #{decoder_forward.1} parent=11 // pred_fallthru
          _
        // Predicated region
        $region33: #{decoder_forward.1} parent=11 // pred_check
          %p671 = pneg %p244
        $region34: #{decoder_forward.1} parent=11 // pred_check_branch
          %673 = sbr.rel (%p671) target = $region36
        $region35: #{decoder_forward.1} parent=11 // pred_region
          %s675 = ssub.s32 32, 32
          %676 = vsyncadd [#allocation8], %s675
          %s677 = sshll.u32 [#allocation7], 4
          %s678 = int_to_ptr.vmem [resolvable:$true] %s677
          %683 = dma.hbm_to_vmem [thread:$0]  %s8, 32, %s678, [#allocation8], 16, 16, 1
        $region36: #{decoder_forward.1} parent=11 // pred_fallthru
          _
        // Predicated region
        $region37: #{decoder_forward.1} parent=11 // pred_check
          %p684 = pneg %p265
        $region38: #{decoder_forward.1} parent=11 // pred_check_branch
          %686 = sbr.rel (%p684) target = $region40
        $region39: #{decoder_forward.1} parent=11 // pred_region
          %s688 = ssub.s32 32, 32
          %689 = vsyncadd [#allocation8], %s688
          %s690 = sshll.u32 [#allocation9], 4
          %s691 = int_to_ptr.vmem [resolvable:$true] %s690
          %696 = dma.hbm_to_vmem [thread:$0]  %s9, 32, %s691, [#allocation8], 16, 16, 1
        $region40: #{decoder_forward.1} parent=11 // pred_fallthru
          _
        // Predicated region
        $region41: #{decoder_forward.1} parent=11 // pred_check
          %p697 = pneg %p286
        $region42: #{decoder_forward.1} parent=11 // pred_check_branch
          %699 = sbr.rel (%p697) target = $region44
        $region43: #{decoder_forward.1} parent=11 // pred_region
          _
        $region44: #{decoder_forward.1} parent=11 // pred_fallthru
          _
        // Predicated region
        $region45: #{decoder_forward.1} parent=11 // pred_check
          %p700 = pneg %p307
        $region46: #{decoder_forward.1} parent=11 // pred_check_branch
          %702 = sbr.rel (%p700) target = $region48
        $region47: #{decoder_forward.1} parent=11 // pred_region
          %s704 = ssub.s32 32, 32
          %705 = vsyncadd [#allocation11], %s704
          %s706 = sshll.u32 [#allocation10], 4
          %s707 = int_to_ptr.vmem [resolvable:$true] %s706
          %712 = dma.hbm_to_vmem [thread:$0]  %s11, 32, %s707, [#allocation11], 16, 16, 1
        $region48: #{decoder_forward.1} parent=11 // pred_fallthru
          _
        // Predicated region
        $region49: #{decoder_forward.1} parent=11 // pred_check
          %p713 = pneg %p328
        $region50: #{decoder_forward.1} parent=11 // pred_check_branch
          %715 = sbr.rel (%p713) target = $region52
        $region51: #{decoder_forward.1} parent=11 // pred_region
          _
        $region52: #{decoder_forward.1} parent=11 // pred_fallthru
          _
        // Predicated region
        $region53: #{decoder_forward.1} parent=11 // pred_check
          %p716 = pneg %p349
        $region54: #{decoder_forward.1} parent=11 // pred_check_branch
          %718 = sbr.rel (%p716) target = $region56
        $region55: #{decoder_forward.1} parent=11 // pred_region
          %s720 = ssub.s32 32, 32
          %721 = vsyncadd [#allocation11], %s720
          %s722 = sshll.u32 [#allocation12], 4
          %s723 = int_to_ptr.vmem [resolvable:$true] %s722
          %728 = dma.hbm_to_vmem [thread:$0]  %s13, 32, %s723, [#allocation11], 16, 16, 1
        $region56: #{decoder_forward.1} parent=11 // pred_fallthru
          _
        // Predicated region
        $region57: #{decoder_forward.1} parent=11 // pred_check
          %p729 = pneg %p370
        $region58: #{decoder_forward.1} parent=11 // pred_check_branch
          %731 = sbr.rel (%p729) target = $region60
        $region59: #{decoder_forward.1} parent=11 // pred_region
          _
        $region60: #{decoder_forward.1} parent=11 // pred_fallthru
          _
        // Predicated region
        $region61: #{decoder_forward.1} parent=11 // pred_check
          %p732 = pneg %p391
        $region62: #{decoder_forward.1} parent=11 // pred_check_branch
          %734 = sbr.rel (%p732) target = $region64
        $region63: #{decoder_forward.1} parent=11 // pred_region
          %s736 = ssub.s32 32, 32
          %737 = vsyncadd [#allocation14], %s736
          %s738 = sshll.u32 [#allocation13], 4
          %s739 = int_to_ptr.vmem [resolvable:$true] %s738
          %744 = dma.hbm_to_vmem [thread:$0]  %s15, 32, %s739, [#allocation14], 16, 16, 1
        $region64: #{decoder_forward.1} parent=11 // pred_fallthru
          _
        // Predicated region
        $region65: #{decoder_forward.1} parent=11 // pred_check
          %p745 = pneg %p412
        $region66: #{decoder_forward.1} parent=11 // pred_check_branch
          %747 = sbr.rel (%p745) target = $region68
        $region67: #{decoder_forward.1} parent=11 // pred_region
          %s749 = ssub.s32 32, 32
          %750 = vsyncadd [#allocation14], %s749
          %s751 = sshll.u32 [#allocation15], 4
          %s752 = int_to_ptr.vmem [resolvable:$true] %s751
          %757 = dma.hbm_to_vmem [thread:$0]  %s16, 32, %s752, [#allocation14], 16, 16, 1
        $region68: #{decoder_forward.1} parent=11 // pred_fallthru
          _
        // Predicated region
        $region69: #{decoder_forward.1} parent=11 // pred_check
          %p758 = pneg %p433
        $region70: #{decoder_forward.1} parent=11 // pred_check_branch
          %760 = sbr.rel (%p758) target = $region72
        $region71: #{decoder_forward.1} parent=11 // pred_region
          %s762 = ssub.s32 32, 32
          %763 = vsyncadd [#allocation17], %s762
          %s764 = sshll.u32 [#allocation16], 4
          %s765 = int_to_ptr.vmem [resolvable:$true] %s764
          %770 = dma.hbm_to_vmem [thread:$0]  %s17, 32, %s765, [#allocation17], 16, 16, 1
        $region72: #{decoder_forward.1} parent=11 // pred_fallthru
          _
        // Predicated region
        $region73: #{decoder_forward.1} parent=11 // pred_check
          %p771 = pneg %p454
        $region74: #{decoder_forward.1} parent=11 // pred_check_branch
          %773 = sbr.rel (%p771) target = $region76
        $region75: #{decoder_forward.1} parent=11 // pred_region
          %s775 = ssub.s32 1024, 1024
          %776 = vsyncadd [#allocation17], %s775
          %s777 = sshll.u32 [#allocation18], 4
          %s778 = int_to_ptr.vmem [resolvable:$true] %s777
          %783 = dma.hbm_to_vmem [thread:$0]  %s18, 1024, %s778, [#allocation17], 128, 128, 8
        $region76: #{decoder_forward.1} parent=11 // pred_fallthru
          _
        // Predicated region
        $region77: #{decoder_forward.1} parent=11 // pred_check
          %p784 = pneg %p475
        $region78: #{decoder_forward.1} parent=11 // pred_check_branch
          %786 = sbr.rel (%p784) target = $region80
        $region79: #{decoder_forward.1} parent=11 // pred_region
          %s788 = ssub.s32 32, 32
          %789 = vsyncadd [#allocation20], %s788
          %s790 = sshll.u32 [#allocation19], 4
          %s791 = int_to_ptr.vmem [resolvable:$true] %s790
          %796 = dma.hbm_to_vmem [thread:$0]  %s19, 32, %s791, [#allocation20], 16, 16, 1
        $region80: #{decoder_forward.1} parent=11 // pred_fallthru
          _
        // Predicated region
        $region81: #{decoder_forward.1} parent=11 // pred_check
          %p797 = pneg %p496
        $region82: #{decoder_forward.1} parent=11 // pred_check_branch
          %799 = sbr.rel (%p797) target = $region84
        $region83: #{decoder_forward.1} parent=11 // pred_region
          _
        $region84: #{decoder_forward.1} parent=11 // pred_fallthru
          _
        // Predicated region
        $region85: #{decoder_forward.1} parent=11 // pred_check
          %p800 = pneg %p517
        $region86: #{decoder_forward.1} parent=11 // pred_check_branch
          %802 = sbr.rel (%p800) target = $region88
        $region87: #{decoder_forward.1} parent=11 // pred_region
          %s804 = ssub.s32 32, 32
          %805 = vsyncadd [#allocation20], %s804
          %s806 = sshll.u32 [#allocation21], 4
          %s807 = int_to_ptr.vmem [resolvable:$true] %s806
          %812 = dma.hbm_to_vmem [thread:$0]  %s21, 32, %s807, [#allocation20], 16, 16, 1
        $region88: #{decoder_forward.1} parent=11 // pred_fallthru
          _
        // Predicated region
        $region89: #{decoder_forward.1} parent=11 // pred_check
          %p813 = pneg %p538
        $region90: #{decoder_forward.1} parent=11 // pred_check_branch
          %815 = sbr.rel (%p813) target = $region92
        $region91: #{decoder_forward.1} parent=11 // pred_region
          %s817 = ssub.s32 32, 32
          %818 = vsyncadd [#allocation23], %s817
          %s819 = sshll.u32 [#allocation22], 4
          %s820 = int_to_ptr.vmem [resolvable:$true] %s819
          %825 = dma.hbm_to_vmem [thread:$0]  %s22, 32, %s820, [#allocation23], 16, 16, 1
        $region92: #{decoder_forward.1} parent=11 // pred_fallthru
          _
        // Predicated region
        $region93: #{decoder_forward.1} parent=11 // pred_check
          %p826 = pneg %p559
        $region94: #{decoder_forward.1} parent=11 // pred_check_branch
          %828 = sbr.rel (%p826) target = $region96
        $region95: #{decoder_forward.1} parent=11 // pred_region
          %s830 = ssub.s32 32, 32
          %831 = vsyncadd [#allocation23], %s830
          %s832 = sshll.u32 [#allocation24], 4
          %s833 = int_to_ptr.vmem [resolvable:$true] %s832
          %838 = dma.hbm_to_vmem [thread:$0]  %s23, 32, %s833, [#allocation23], 16, 16, 1
        $region96: #{decoder_forward.1} parent=11 // pred_fallthru
          _
      $region12: #{decoder_forward.1} parent=5 // pred_fallthru
        _
      %p839 = scmp.lt.s32.totalorder %s40, 2
      // Predicated region
      $region97: #{decoder_forward.1} parent=5 // pred_check
        %p840 = pneg %p839
      $region98: #{decoder_forward.1} parent=5 // pred_check_branch
        %842 = sbr.rel (%p840) target = $region100
      $region99: #{decoder_forward.1} parent=5 // pred_region
        // Predicated region
        $region101: #{decoder_forward.1} parent=99 // pred_check
          %p843 = pneg %p60
        $region102: #{decoder_forward.1} parent=99 // pred_check_branch
          %845 = sbr.rel (%p843) target = $region104
        $region103: #{decoder_forward.1} parent=99 // pred_region
          %p846 = scmp.lt.s32.totalorder %s40, 1
          %s847 = scalar_select %p846, %s40, 1
          %s848 = scalar_lea.vmem %s0, %s847
        $region104: #{decoder_forward.1} parent=99 // pred_fallthru
          _
        // Predicated region
        $region105: #{decoder_forward.1} parent=99 // pred_check
          %p849 = pneg %p86
        $region106: #{decoder_forward.1} parent=99 // pred_check_branch
          %851 = sbr.rel (%p849) target = $region108
        $region107: #{decoder_forward.1} parent=99 // pred_region
          %p852 = scmp.lt.s32.totalorder %s40, 1
          %s853 = scalar_select %p852, %s40, 1
          %s854 = scalar_lea.vmem %s1, %s853
        $region108: #{decoder_forward.1} parent=99 // pred_fallthru
          _
        // Predicated region
        $region109: #{decoder_forward.1} parent=99 // pred_check
          %p855 = pneg %p112
        $region110: #{decoder_forward.1} parent=99 // pred_check_branch
          %857 = sbr.rel (%p855) target = $region112
        $region111: #{decoder_forward.1} parent=99 // pred_region
          %p858 = scmp.lt.s32.totalorder %s40, 1
          %s859 = scalar_select %p858, %s40, 1
          %s860 = smul.addr %s859, 2
          %s861 = smul.addr %s860, 8
          %s862 = scalar_lea.vmem %s2, %s861
        $region112: #{decoder_forward.1} parent=99 // pred_fallthru
          _
      $region100: #{decoder_forward.1} parent=5 // pred_fallthru
        _
      %p863 = scmp.le.s32.totalorder 1, %s40
      %p864 = scmp.lt.s32.totalorder %s40, 3
      %p865 = pnand %p863, %p864
      %p866 = pneg %p865
      // Predicated region
      $region113: #{decoder_forward.1} parent=5 // pred_check
        _
      $region114: #{decoder_forward.1} parent=5 // pred_check_branch
        %868 = sbr.rel (%p865) target = $region116
      $region115: #{decoder_forward.1} parent=5 // pred_region
        %s869 = ssub.s32 %s40, 1
        // Predicated region
        $region117: #{decoder_forward.1} parent=115 // pred_check
          %p870 = pneg %p139
        $region118: #{decoder_forward.1} parent=115 // pred_check_branch
          %872 = sbr.rel (%p870) target = $region120
        $region119: #{decoder_forward.1} parent=115 // pred_region
          %873 = dma.done [#allocation3], 512
        $region120: #{decoder_forward.1} parent=115 // pred_fallthru
          _
        // Predicated region
        $region121: #{decoder_forward.1} parent=115 // pred_check
          %p874 = pneg %p181
        $region122: #{decoder_forward.1} parent=115 // pred_check_branch
          %876 = sbr.rel (%p874) target = $region124
        $region123: #{decoder_forward.1} parent=115 // pred_region
          %877 = dma.done [#allocation5], 32
        $region124: #{decoder_forward.1} parent=115 // pred_fallthru
          _
        // Predicated region
        $region125: #{decoder_forward.1} parent=115 // pred_check
          %p878 = pneg %p223
        $region126: #{decoder_forward.1} parent=115 // pred_check_branch
          %880 = sbr.rel (%p878) target = $region128
        $region127: #{decoder_forward.1} parent=115 // pred_region
          %881 = dma.done [#allocation5], 32
        $region128: #{decoder_forward.1} parent=115 // pred_fallthru
          _
        // Predicated region
        $region129: #{decoder_forward.1} parent=115 // pred_check
          %p882 = pneg %p244
        $region130: #{decoder_forward.1} parent=115 // pred_check_branch
          %884 = sbr.rel (%p882) target = $region132
        $region131: #{decoder_forward.1} parent=115 // pred_region
          %885 = dma.done [#allocation8], 32
        $region132: #{decoder_forward.1} parent=115 // pred_fallthru
          _
        // Predicated region
        $region133: #{decoder_forward.1} parent=115 // pred_check
          %p886 = pneg %p265
        $region134: #{decoder_forward.1} parent=115 // pred_check_branch
          %888 = sbr.rel (%p886) target = $region136
        $region135: #{decoder_forward.1} parent=115 // pred_region
          %889 = dma.done [#allocation8], 32
        $region136: #{decoder_forward.1} parent=115 // pred_fallthru
          _
        // Predicated region
        $region137: #{decoder_forward.1} parent=115 // pred_check
          %p890 = pneg %p307
        $region138: #{decoder_forward.1} parent=115 // pred_check_branch
          %892 = sbr.rel (%p890) target = $region140
        $region139: #{decoder_forward.1} parent=115 // pred_region
          %893 = dma.done [#allocation11], 32
        $region140: #{decoder_forward.1} parent=115 // pred_fallthru
          _
        // Predicated region
        $region141: #{decoder_forward.1} parent=115 // pred_check
          %p894 = pneg %p349
        $region142: #{decoder_forward.1} parent=115 // pred_check_branch
          %896 = sbr.rel (%p894) target = $region144
        $region143: #{decoder_forward.1} parent=115 // pred_region
          %897 = dma.done [#allocation11], 32
        $region144: #{decoder_forward.1} parent=115 // pred_fallthru
          _
        // Predicated region
        $region145: #{decoder_forward.1} parent=115 // pred_check
          %p898 = pneg %p391
        $region146: #{decoder_forward.1} parent=115 // pred_check_branch
          %900 = sbr.rel (%p898) target = $region148
        $region147: #{decoder_forward.1} parent=115 // pred_region
          %901 = dma.done [#allocation14], 32
        $region148: #{decoder_forward.1} parent=115 // pred_fallthru
          _
        // Predicated region
        $region149: #{decoder_forward.1} parent=115 // pred_check
          %p902 = pneg %p412
        $region150: #{decoder_forward.1} parent=115 // pred_check_branch
          %904 = sbr.rel (%p902) target = $region152
        $region151: #{decoder_forward.1} parent=115 // pred_region
          %905 = dma.done [#allocation14], 32
        $region152: #{decoder_forward.1} parent=115 // pred_fallthru
          _
        // Predicated region
        $region153: #{decoder_forward.1} parent=115 // pred_check
          %p906 = pneg %p433
        $region154: #{decoder_forward.1} parent=115 // pred_check_branch
          %908 = sbr.rel (%p906) target = $region156
        $region155: #{decoder_forward.1} parent=115 // pred_region
          %909 = dma.done [#allocation17], 32
        $region156: #{decoder_forward.1} parent=115 // pred_fallthru
          _
        // Predicated region
        $region157: #{decoder_forward.1} parent=115 // pred_check
          %p910 = pneg %p454
        $region158: #{decoder_forward.1} parent=115 // pred_check_branch
          %912 = sbr.rel (%p910) target = $region160
        $region159: #{decoder_forward.1} parent=115 // pred_region
          %913 = dma.done [#allocation17], 1024
        $region160: #{decoder_forward.1} parent=115 // pred_fallthru
          _
        // Predicated region
        $region161: #{decoder_forward.1} parent=115 // pred_check
          %p914 = pneg %p475
        $region162: #{decoder_forward.1} parent=115 // pred_check_branch
          %916 = sbr.rel (%p914) target = $region164
        $region163: #{decoder_forward.1} parent=115 // pred_region
          %917 = dma.done [#allocation20], 32
        $region164: #{decoder_forward.1} parent=115 // pred_fallthru
          _
        // Predicated region
        $region165: #{decoder_forward.1} parent=115 // pred_check
          %p918 = pneg %p517
        $region166: #{decoder_forward.1} parent=115 // pred_check_branch
          %920 = sbr.rel (%p918) target = $region168
        $region167: #{decoder_forward.1} parent=115 // pred_region
          %921 = dma.done [#allocation20], 32
        $region168: #{decoder_forward.1} parent=115 // pred_fallthru
          _
        // Predicated region
        $region169: #{decoder_forward.1} parent=115 // pred_check
          %p922 = pneg %p538
        $region170: #{decoder_forward.1} parent=115 // pred_check_branch
          %924 = sbr.rel (%p922) target = $region172
        $region171: #{decoder_forward.1} parent=115 // pred_region
          %925 = dma.done [#allocation23], 32
        $region172: #{decoder_forward.1} parent=115 // pred_fallthru
          _
        // Predicated region
        $region173: #{decoder_forward.1} parent=115 // pred_check
          %p926 = pneg %p559
        $region174: #{decoder_forward.1} parent=115 // pred_check_branch
          %928 = sbr.rel (%p926) target = $region176
        $region175: #{decoder_forward.1} parent=115 // pred_region
          %929 = dma.done [#allocation23], 32
        $region176: #{decoder_forward.1} parent=115 // pred_fallthru
          _
        %p930 = scmp.lt.s32.totalorder %s45, 1
        %s931 = scalar_select %p930, %s45, 1
        %s932 = scalar_lea.vmem %s0, %s931
        %p933 = pneg %p66
        %p934 = pneg %p63
        %p935 = scmp.lt.s32.totalorder %s45, 1
        %s936 = scalar_select %p935, %s45, 1
        %s937 = scalar_lea.vmem %s1, %s936
        %p938 = pneg %p92
        %p939 = pneg %p89
        %p940 = scmp.lt.s32.totalorder %s45, 1
        %s941 = scalar_select %p940, %s45, 1
        %s942 = smul.addr %s941, 2
        %s943 = smul.addr %s942, 8
        %s944 = scalar_lea.vmem %s2, %s943
        %p945 = pneg %p118
        %p946 = pneg %p115
        %p947 = pneg %p139
        %p948 = pneg %p136
        %p949 = pneg %p160
        %p950 = pneg %p157
        %p951 = pneg %p181
        %p952 = pneg %p178
        %p953 = pneg %p202
        %p954 = pneg %p199
        %p955 = pneg %p223
        %p956 = pneg %p220
        %p957 = pneg %p244
        %p958 = pneg %p241
        %p959 = pneg %p265
        %p960 = pneg %p262
        %p961 = pneg %p286
        %p962 = pneg %p283
        %p963 = pneg %p307
        %p964 = pneg %p304
        %p965 = pneg %p328
        %p966 = pneg %p325
        %p967 = pneg %p349
        %p968 = pneg %p346
        %p969 = pneg %p370
        %p970 = pneg %p367
        %p971 = pneg %p391
        %p972 = pneg %p388
        %p973 = pneg %p412
        %p974 = pneg %p409
        %p975 = pneg %p433
        %p976 = pneg %p430
        %p977 = pneg %p454
        %p978 = pneg %p451
        %p979 = pneg %p475
        %p980 = pneg %p472
        %p981 = pneg %p496
        %p982 = pneg %p493
        %p983 = pneg %p517
        %p984 = pneg %p514
        %p985 = pneg %p538
        %p986 = pneg %p535
        %p987 = pneg %p559
        %p988 = pneg %p556
        %p989 = pneg %p585
        %p990 = pneg %p582
        %p991 = scmp.lt.s32.totalorder %s45, 1
        %s992 = scalar_select %p991, %s45, 1
        %s993 = smul.addr %s992, 8
        %s994 = scalar_lea.vmem %s24, %s993
        %p995 = pneg %p611
        %p996 = pneg %p608
        %p997 = scmp.lt.s32.totalorder %s45, 1
        %s998 = scalar_select %p997, %s45, 1
        %s999 = smul.addr %s998, 2
        %s1000 = smul.addr %s999, 8
        %s1001 = scalar_lea.vmem %s25, %s1000
        %p1002 = scmp.lt.s32.totalorder %s45, 1
        %s1003 = scalar_select %p1002, %s45, 1
        %s1004 = scalar_lea.vmem %s0, %s1003
        %p1005 = scmp.lt.s32.totalorder %s45, 1
        %s1006 = scalar_select %p1005, %s45, 1
        %s1007 = scalar_lea.vmem %s1, %s1006
        %p1008 = scmp.lt.s32.totalorder %s45, 1
        %s1009 = scalar_select %p1008, %s45, 1
        %s1010 = smul.addr %s1009, 2
        %s1011 = smul.addr %s1010, 8
        %s1012 = scalar_lea.vmem %s2, %s1011
        %p1013 = scmp.lt.s32.totalorder %s45, 1
        %s1014 = scalar_select %p1013, %s45, 1
        %s1015 = smul.addr %s1014, 8
        %s1016 = scalar_lea.vmem %s24, %s1015
        %p1017 = scmp.lt.s32.totalorder %s45, 1
        %s1018 = scalar_select %p1017, %s45, 1
        %s1019 = smul.addr %s1018, 2
        %s1020 = smul.addr %s1019, 8
        %s1021 = scalar_lea.vmem %s25, %s1020
        %v1022 = vld [vmem:[%s1004] sm:$0x1]
        %v1023 = vlaneseq
        %v1024 = vshrl.u32 %v1023, 7
        %v1025 = vadd.s32 %v1024, 8
        %v1026 = vadd.s32 %v1024, 16
        %v1027 = vadd.s32 %v1024, 24
        %v1028 = vlaneseq
        %v1029 = vshrl.u32 %v1028, 7
        %v1030 = vsub.s32 0, %v1029
        %v1031 = vrot.slane %v1022, %v1030
        %vm1032 = vcmp.eq.s32.totalorder %v1024, %v1031
        %vm1033 = vcmp.eq.s32.totalorder %v1025, %v1031
        %vm1034 = vcmp.eq.s32.totalorder %v1026, %v1031
        %vm1035 = vcmp.eq.s32.totalorder %v1027, %v1031
        %v1036 = vsel %vm1032, 1, 0
        %v1037 = vsel %vm1033, 1, 0
        %v1038 = vsel %vm1034, 1, 0
        %v1039 = vsel %vm1035, 1, 0
        %v1040 = vcvt.s32.f32 %v1036
        %v1041 = vcvt.s32.f32 %v1037
        %v1042 = vcvt.s32.f32 %v1038
        %v1043 = vcvt.s32.f32 %v1039
        %v1044 = vld [vmem:[#allocation2] sm:$0xff]
        %v1045 = vld [vmem:[#allocation2 + $0x8] sm:$0xff]
        %v1046 = vld [vmem:[#allocation2 + $0x10] sm:$0xff]
        %v1047 = vld [vmem:[#allocation2 + $0x18] sm:$0xff]
        %1048 = vxpose.xlu0.b32.start [1/16] %v1040, 128
        %1049 = vxpose.xlu0.b32.cont [2/16] %v1041, 128
        %1050 = vxpose.xlu0.b32.cont [3/16] %v1042, 128
        %1051 = vxpose.xlu0.b32.cont [4/16] %v1043, 128
        %1052 = vxpose.xlu0.b32.cont [5/16] 0.0, 128
        %1053 = vxpose.xlu0.b32.cont [6/16] 0.0, 128
        %1054 = vxpose.xlu0.b32.cont [7/16] 0.0, 128
        %1055 = vxpose.xlu0.b32.cont [8/16] 0.0, 128
        %1056 = vxpose.xlu0.b32.cont [9/16] 0.0, 128
        %1057 = vxpose.xlu0.b32.cont [10/16] 0.0, 128
        %1058 = vxpose.xlu0.b32.cont [11/16] 0.0, 128
        %1059 = vxpose.xlu0.b32.cont [12/16] 0.0, 128
        %1060 = vxpose.xlu0.b32.cont [13/16] 0.0, 128
        %1061 = vxpose.xlu0.b32.cont [14/16] 0.0, 128
        %1062 = vxpose.xlu0.b32.cont [15/16] 0.0, 128
        %1063 = vxpose.xlu0.b32.end [16/16] 0.0, 128
        %v1064 = vpop.trf.xlu0
        %v1065 = vpop.trf.xlu0
        %v1066 = vpop.trf.xlu0
        %v1067 = vpop.trf.xlu0
        %v1068 = vpop.trf.xlu0
        %v1069 = vpop.trf.xlu0
        %v1070 = vpop.trf.xlu0
        %v1071 = vpop.trf.xlu0
        %v1072 = vpop.trf.xlu0
        %v1073 = vpop.trf.xlu0
        %v1074 = vpop.trf.xlu0
        %v1075 = vpop.trf.xlu0
        %v1076 = vpop.trf.xlu0
        %v1077 = vpop.trf.xlu0
        %v1078 = vpop.trf.xlu0
        %v1079 = vpop.trf.xlu0
        %vm1080 = vcmask 261120
        %v1082 = vsel %vm1080, %v1064, 0
        %1084 = vmatprep.subr.mxu0 0.0
        %1085 = vmatpush1.msra.mxu0 %v1044
        %1086 = vmatprep.subr.mxu0 0.0
        %1087 = vmatpush1.msra.mxu0 %v1045
        %1088 = vmatprep.subr.mxu0 0.0
        %1089 = vmatpush1.msra.mxu0 %v1046
        %1090 = vmatprep.subr.mxu0 0.0
        %1091 = vmatpush1.msra.mxu0 %v1047
        %1092 = vmatprep.subr.mxu0 0.0
        %1093 = vmatpush1.msra.mxu0 0.0
        %1094 = vmatprep.subr.mxu0 0.0
        %1095 = vmatpush1.msra.mxu0 0.0
        %1096 = vmatprep.subr.mxu0 0.0
        %1097 = vmatpush1.msra.mxu0 0.0
        %1098 = vmatprep.subr.mxu0 0.0
        %1099 = vmatpush1.msra.mxu0 0.0
        %1100 = vmatprep.subr.mxu0 0.0
        %1101 = vmatpush1.msra.mxu0 0.0
        %1102 = vmatprep.subr.mxu0 0.0
        %1103 = vmatpush1.msra.mxu0 0.0
        %1104 = vmatprep.subr.mxu0 0.0
        %1105 = vmatpush1.msra.mxu0 0.0
        %1106 = vmatprep.subr.mxu0 0.0
        %1107 = vmatpush1.msra.mxu0 0.0
        %1108 = vmatprep.subr.mxu0 0.0
        %1109 = vmatpush1.msra.mxu0 0.0
        %1110 = vmatprep.subr.mxu0 0.0
        %1111 = vmatpush1.msra.mxu0 0.0
        %1112 = vmatprep.subr.mxu0 0.0
        %1113 = vmatpush1.msra.mxu0 0.0
        %1114 = vmatprep.subr.mxu0 0.0
        %1115 = vmatpush1.msra.mxu0 0.0
        %1116 = vmatprep.subr.mxu0 0.0
        %1117 = vmatpush1.msra.mxu0 0.0
        %1118 = vmatprep.subr.mxu0 0.0
        %1119 = vmatpush1.msra.mxu0 0.0
        %1120 = vmatprep.subr.mxu0 0.0
        %1121 = vmatpush1.msra.mxu0 0.0
        %1122 = vmatprep.subr.mxu0 0.0
        %1123 = vmatpush1.msra.mxu0 0.0
        %1124 = vmatprep.subr.mxu0 0.0
        %1125 = vmatpush1.msra.mxu0 0.0
        %1126 = vmatprep.subr.mxu0 0.0
        %1127 = vmatpush1.msra.mxu0 0.0
        %1128 = vmatprep.subr.mxu0 0.0
        %1129 = vmatpush1.msra.mxu0 0.0
        %1130 = vmatprep.subr.mxu0 0.0
        %1131 = vmatpush1.msra.mxu0 0.0
        %1132 = vmatprep.subr.mxu0 0.0
        %1133 = vmatpush1.msra.mxu0 0.0
        %1134 = vmatprep.subr.mxu0 0.0
        %1135 = vmatpush1.msra.mxu0 0.0
        %1136 = vmatprep.subr.mxu0 0.0
        %1137 = vmatpush1.msra.mxu0 0.0
        %1138 = vmatprep.subr.mxu0 0.0
        %1139 = vmatpush1.msra.mxu0 0.0
        %1140 = vmatprep.subr.mxu0 0.0
        %1141 = vmatpush1.msra.mxu0 0.0
        %1142 = vmatprep.subr.mxu0 0.0
        %1143 = vmatpush1.msra.mxu0 0.0
        %1144 = vmatprep.subr.mxu0 0.0
        %1145 = vmatpush1.msra.mxu0 0.0
        %1146 = vmatprep.subr.mxu0 0.0
        %1147 = vmatpush1.msra.mxu0 0.0
        %1148 = vmatprep.mubr.f32.mxu0 0.0
        %1149 = vmatmul.mubr.f32.gmra.mrb[0].mxu0 %v1082
        %v1150 = vpop.f32.mrb[0].mxu0
        %v1151 = vadd.f32 0.0, %v1150
        %v1152 = vpop.f32.mrb[0].mxu0
        %1153 = vdwg.mxu0
        %v1154 = vlaneseq
        %v1155 = vand.u32 %v1154, 127
        %vm1156 = vcmp.gt.s32.totalorder %v1155, %v1024
        %v1157 = vsel %vm1156, -1e+30, 0.0
        %vm1158 = vcmp.eq.s32.totalorder %v1022, 0
        %v1159 = vsel %vm1158, -1e+30, 0.0
        %v1161 = vlaneseq
        %v1162 = vshrl.u32 %v1161, 7
        %v1163 = vsub.s32 0, %v1162
        %v1164 = vrot.slane %v1159, %v1163
        %v1166 = vadd.f32 %v1157, %v1164
        %v1167 = vmul.f32 %v1151, 5.656854
        %v1168 = vld [vmem:[%s1007] sm:$0x1]
        %v1170 = vlaneseq
        %v1171 = vshrl.u32 %v1170, 7
        %v1172 = vsub.s32 0, %v1171
        %v1173 = vrot.slane %v1168, %v1172
        %v1175 = vadd.f32 %v1167, %v1173
        %v1176 = vld [vmem:[%s1012] sm:$0xff]
        %v1177 = vld [vmem:[%s1012 + $0x8] sm:$0xff]
        %v1178 = vld [vmem:[%s4] sm:$0xff]
        %v1179 = vld [vmem:[%s4 + $0x8] sm:$0xff]
        %v1180 = vld [vmem:[%s4 + $0x10] sm:$0xff]
        %v1181 = vld [vmem:[%s4 + $0x18] sm:$0xff]
        %v1182 = vld [vmem:[#allocation4] sm:$0x1]
        %v1184 = vlaneseq
        %v1185 = vshrl.u32 %v1184, 7
        %v1186 = vsub.s32 0, %v1185
        %v1187 = vrot.slane %v1182, %v1186
        %v1190 = vsel %vm1080, %v1175, 0
        %1192 = vmatprep.subr.mxu0 0.0
        %1193 = vmatpush1.msra.mxu0 %v1178
        %1194 = vmatprep.subr.mxu0 0.0
        %1195 = vmatpush1.msra.mxu0 %v1179
        %1196 = vmatprep.subr.mxu0 0.0
        %1197 = vmatpush1.msra.mxu0 %v1180
        %1198 = vmatprep.subr.mxu0 0.0
        %1199 = vmatpush1.msra.mxu0 %v1181
        %1200 = vmatprep.subr.mxu0 0.0
        %1201 = vmatpush1.msra.mxu0 0.0
        %1202 = vmatprep.subr.mxu0 0.0
        %1203 = vmatpush1.msra.mxu0 0.0
        %1204 = vmatprep.subr.mxu0 0.0
        %1205 = vmatpush1.msra.mxu0 0.0
        %1206 = vmatprep.subr.mxu0 0.0
        %1207 = vmatpush1.msra.mxu0 0.0
        %1208 = vmatprep.subr.mxu0 0.0
        %1209 = vmatpush1.msra.mxu0 0.0
        %1210 = vmatprep.subr.mxu0 0.0
        %1211 = vmatpush1.msra.mxu0 0.0
        %1212 = vmatprep.subr.mxu0 0.0
        %1213 = vmatpush1.msra.mxu0 0.0
        %1214 = vmatprep.subr.mxu0 0.0
        %1215 = vmatpush1.msra.mxu0 0.0
        %1216 = vmatprep.subr.mxu0 0.0
        %1217 = vmatpush1.msra.mxu0 0.0
        %1218 = vmatprep.subr.mxu0 0.0
        %1219 = vmatpush1.msra.mxu0 0.0
        %1220 = vmatprep.subr.mxu0 0.0
        %1221 = vmatpush1.msra.mxu0 0.0
        %1222 = vmatprep.subr.mxu0 0.0
        %1223 = vmatpush1.msra.mxu0 0.0
        %1224 = vmatprep.subr.mxu0 0.0
        %1225 = vmatpush1.msra.mxu0 0.0
        %1226 = vmatprep.subr.mxu0 0.0
        %1227 = vmatpush1.msra.mxu0 0.0
        %1228 = vmatprep.subr.mxu0 0.0
        %1229 = vmatpush1.msra.mxu0 0.0
        %1230 = vmatprep.subr.mxu0 0.0
        %1231 = vmatpush1.msra.mxu0 0.0
        %1232 = vmatprep.subr.mxu0 0.0
        %1233 = vmatpush1.msra.mxu0 0.0
        %1234 = vmatprep.subr.mxu0 0.0
        %1235 = vmatpush1.msra.mxu0 0.0
        %1236 = vmatprep.subr.mxu0 0.0
        %1237 = vmatpush1.msra.mxu0 0.0
        %1238 = vmatprep.subr.mxu0 0.0
        %1239 = vmatpush1.msra.mxu0 0.0
        %1240 = vmatprep.subr.mxu0 0.0
        %1241 = vmatpush1.msra.mxu0 0.0
        %1242 = vmatprep.subr.mxu0 0.0
        %1243 = vmatpush1.msra.mxu0 0.0
        %1244 = vmatprep.subr.mxu0 0.0
        %1245 = vmatpush1.msra.mxu0 0.0
        %1246 = vmatprep.subr.mxu0 0.0
        %1247 = vmatpush1.msra.mxu0 0.0
        %1248 = vmatprep.subr.mxu0 0.0
        %1249 = vmatpush1.msra.mxu0 0.0
        %1250 = vmatprep.subr.mxu0 0.0
        %1251 = vmatpush1.msra.mxu0 0.0
        %1252 = vmatprep.subr.mxu0 0.0
        %1253 = vmatpush1.msra.mxu0 0.0
        %1254 = vmatprep.subr.mxu0 0.0
        %1255 = vmatpush1.msra.mxu0 0.0
        %1256 = vmatprep.mubr.f32.mxu0 0.0
        %1257 = vmatmul.mubr.f32.gmra.mrb[0].mxu0 %v1190
        %v1258 = vpop.f32.mrb[0].mxu0
        %v1259 = vadd.f32 %v1187, %v1258
        %v1260 = vpop.f32.mrb[0].mxu0
        %1261 = vdwg.mxu0
        %v1262 = vld [vmem:[%s6] sm:$0xff]
        %v1263 = vld [vmem:[%s6 + $0x8] sm:$0xff]
        %v1264 = vld [vmem:[%s6 + $0x10] sm:$0xff]
        %v1265 = vld [vmem:[%s6 + $0x18] sm:$0xff]
        %v1266 = vld [vmem:[#allocation6] sm:$0x1]
        %1268 = vrot.lane.b32.xlu0 %v1259, 96
        %v1269 = vpop.permute.xlu0 %1268
        %vm1270 = vcmask 64512
        %v1271 = vsel %vm1270, %v1259, 0
        %v1273 = vsel %vm1270, %v1269, 0
        %1275 = vmatprep.subr.mxu0 0.0
        %1276 = vmatpush1.xpose.msra.mxu0 %v1273
        %1277 = vmatprep.subr.mxu0 0.0
        %1278 = vmatpush1.xpose.msra.mxu0 0.0
        %1279 = vmatprep.subr.mxu0 0.0
        %1280 = vmatpush1.xpose.msra.mxu0 0.0
        %1281 = vmatprep.subr.mxu0 0.0
        %1282 = vmatpush1.xpose.msra.mxu0 0.0
        %1283 = vmatprep.subr.mxu0 0.0
        %1284 = vmatpush1.xpose.msra.mxu0 0.0
        %1285 = vmatprep.subr.mxu0 0.0
        %1286 = vmatpush1.xpose.msra.mxu0 0.0
        %1287 = vmatprep.subr.mxu0 0.0
        %1288 = vmatpush1.xpose.msra.mxu0 0.0
        %1289 = vmatprep.subr.mxu0 0.0
        %1290 = vmatpush1.xpose.msra.mxu0 0.0
        %1291 = vmatprep.subr.mxu0 0.0
        %1292 = vmatpush1.xpose.msra.mxu0 0.0
        %1293 = vmatprep.subr.mxu0 0.0
        %1294 = vmatpush1.xpose.msra.mxu0 0.0
        %1295 = vmatprep.subr.mxu0 0.0
        %1296 = vmatpush1.xpose.msra.mxu0 0.0
        %1297 = vmatprep.subr.mxu0 0.0
        %1298 = vmatpush1.xpose.msra.mxu0 0.0
        %1299 = vmatprep.subr.mxu0 0.0
        %1300 = vmatpush1.xpose.msra.mxu0 0.0
        %1301 = vmatprep.subr.mxu0 0.0
        %1302 = vmatpush1.xpose.msra.mxu0 0.0
        %1303 = vmatprep.subr.mxu0 0.0
        %1304 = vmatpush1.xpose.msra.mxu0 0.0
        %1305 = vmatprep.subr.mxu0 0.0
        %1306 = vmatpush1.xpose.msra.mxu0 0.0
        %1307 = vmatprep.subr.mxu0 0.0
        %1308 = vmatpush1.xpose.msra.mxu0 0.0
        %1309 = vmatprep.subr.mxu0 0.0
        %1310 = vmatpush1.xpose.msra.mxu0 0.0
        %1311 = vmatprep.subr.mxu0 0.0
        %1312 = vmatpush1.xpose.msra.mxu0 0.0
        %1313 = vmatprep.subr.mxu0 0.0
        %1314 = vmatpush1.xpose.msra.mxu0 0.0
        %1315 = vmatprep.subr.mxu0 0.0
        %1316 = vmatpush1.xpose.msra.mxu0 0.0
        %1317 = vmatprep.subr.mxu0 0.0
        %1318 = vmatpush1.xpose.msra.mxu0 0.0
        %1319 = vmatprep.subr.mxu0 0.0
        %1320 = vmatpush1.xpose.msra.mxu0 0.0
        %1321 = vmatprep.subr.mxu0 0.0
        %1322 = vmatpush1.xpose.msra.mxu0 0.0
        %1323 = vmatprep.subr.mxu0 0.0
        %1324 = vmatpush1.xpose.msra.mxu0 0.0
        %1325 = vmatprep.subr.mxu0 0.0
        %1326 = vmatpush1.xpose.msra.mxu0 0.0
        %1327 = vmatprep.subr.mxu0 0.0
        %1328 = vmatpush1.xpose.msra.mxu0 0.0
        %1329 = vmatprep.subr.mxu0 0.0
        %1330 = vmatpush1.xpose.msra.mxu0 0.0
        %1331 = vmatprep.subr.mxu0 0.0
        %1332 = vmatpush1.xpose.msra.mxu0 0.0
        %1333 = vmatprep.subr.mxu0 0.0
        %1334 = vmatpush1.xpose.msra.mxu0 0.0
        %1335 = vmatprep.subr.mxu0 0.0
        %1336 = vmatpush1.xpose.msra.mxu0 0.0
        %1337 = vmatprep.subr.mxu0 0.0
        %1338 = vmatpush1.xpose.msra.mxu0 0.0
        %1339 = vmatprep.mubr.f32.mxu0 0.0
        %1340 = vmatmul.mubr.f32.gmra.mrb[0].mxu0 %v1271
        %v1341 = vpop.f32.mrb[0].mxu0
        %v1342 = vadd.f32 0.0, %v1341
        %v1343 = vpop.f32.mrb[0].mxu0
        %1344 = vdwg.mxu0
        %v1345 = vmul.f32 %v1342, 0.35355338
        %v1346 = vadd.f32 %v1345, %v1166
        %v1347 = vsel %vm1270, %v1346, -inf
        %1348 = vmax.xlane.f32.xlu0 %v1347
        %v1349 = vpop.xlane.xlu0 %1348
        %v1350 = vsub.f32 %v1346, %v1349
        %v1351 = vmul.f32 %v1350, 1.442695
        %v1352 = vpow.pop %v1351
        %v1353 = vsel %vm1270, %v1352, 0.0
        %1354 = vadd.xlane.f32.xlu0 %v1353
        %v1355 = vpop.xlane.xlu0 %1354
        %v1356 = vrcp.pop %v1355
        %v1357 = vmul.f32 %v1352, %v1356
        %1358 = vrot.lane.b32.xlu0 %v1259, 64
        %v1359 = vpop.permute.xlu0 %1358
        %v1362 = vsel %vm1270, %v1357, 0
        %1364 = vmatprep.subr.mxu0 0.0
        %1365 = vmatpush1.msra.mxu0 %v1359
        %1366 = vmatprep.subr.mxu0 0.0
        %1367 = vmatpush1.msra.mxu0 0.0
        %1368 = vmatprep.subr.mxu0 0.0
        %1369 = vmatpush1.msra.mxu0 0.0
        %1370 = vmatprep.subr.mxu0 0.0
        %1371 = vmatpush1.msra.mxu0 0.0
        %1372 = vmatprep.subr.mxu0 0.0
        %1373 = vmatpush1.msra.mxu0 0.0
        %1374 = vmatprep.subr.mxu0 0.0
        %1375 = vmatpush1.msra.mxu0 0.0
        %1376 = vmatprep.subr.mxu0 0.0
        %1377 = vmatpush1.msra.mxu0 0.0
        %1378 = vmatprep.subr.mxu0 0.0
        %1379 = vmatpush1.msra.mxu0 0.0
        %1380 = vmatprep.subr.mxu0 0.0
        %1381 = vmatpush1.msra.mxu0 0.0
        %1382 = vmatprep.subr.mxu0 0.0
        %1383 = vmatpush1.msra.mxu0 0.0
        %1384 = vmatprep.subr.mxu0 0.0
        %1385 = vmatpush1.msra.mxu0 0.0
        %1386 = vmatprep.subr.mxu0 0.0
        %1387 = vmatpush1.msra.mxu0 0.0
        %1388 = vmatprep.subr.mxu0 0.0
        %1389 = vmatpush1.msra.mxu0 0.0
        %1390 = vmatprep.subr.mxu0 0.0
        %1391 = vmatpush1.msra.mxu0 0.0
        %1392 = vmatprep.subr.mxu0 0.0
        %1393 = vmatpush1.msra.mxu0 0.0
        %1394 = vmatprep.subr.mxu0 0.0
        %1395 = vmatpush1.msra.mxu0 0.0
        %1396 = vmatprep.subr.mxu0 0.0
        %1397 = vmatpush1.msra.mxu0 0.0
        %1398 = vmatprep.subr.mxu0 0.0
        %1399 = vmatpush1.msra.mxu0 0.0
        %1400 = vmatprep.subr.mxu0 0.0
        %1401 = vmatpush1.msra.mxu0 0.0
        %1402 = vmatprep.subr.mxu0 0.0
        %1403 = vmatpush1.msra.mxu0 0.0
        %1404 = vmatprep.subr.mxu0 0.0
        %1405 = vmatpush1.msra.mxu0 0.0
        %1406 = vmatprep.subr.mxu0 0.0
        %1407 = vmatpush1.msra.mxu0 0.0
        %1408 = vmatprep.subr.mxu0 0.0
        %1409 = vmatpush1.msra.mxu0 0.0
        %1410 = vmatprep.subr.mxu0 0.0
        %1411 = vmatpush1.msra.mxu0 0.0
        %1412 = vmatprep.subr.mxu0 0.0
        %1413 = vmatpush1.msra.mxu0 0.0
        %1414 = vmatprep.subr.mxu0 0.0
        %1415 = vmatpush1.msra.mxu0 0.0
        %1416 = vmatprep.subr.mxu0 0.0
        %1417 = vmatpush1.msra.mxu0 0.0
        %1418 = vmatprep.subr.mxu0 0.0
        %1419 = vmatpush1.msra.mxu0 0.0
        %1420 = vmatprep.subr.mxu0 0.0
        %1421 = vmatpush1.msra.mxu0 0.0
        %1422 = vmatprep.subr.mxu0 0.0
        %1423 = vmatpush1.msra.mxu0 0.0
        %1424 = vmatprep.subr.mxu0 0.0
        %1425 = vmatpush1.msra.mxu0 0.0
        %1426 = vmatprep.subr.mxu0 0.0
        %1427 = vmatpush1.msra.mxu0 0.0
        %1428 = vmatprep.mubr.f32.mxu0 0.0
        %1429 = vmatmul.mubr.f32.gmra.mrb[0].mxu0 %v1362
        %v1430 = vpop.f32.mrb[0].mxu0
        %v1431 = vadd.f32 0.0, %v1430
        %v1432 = vpop.f32.mrb[0].mxu0
        %1433 = vdwg.mxu0
        %1434 = vrot.lane.b32.xlu0 %v1259, 120
        %v1435 = vpop.permute.xlu0 %1434
        %1436 = vrot.lane.b32.xlu0 %v1259, 88
        %v1437 = vpop.permute.xlu0 %1436
        %v1438 = vsel %vm1270, %v1435, 0
        %v1440 = vsel %vm1270, %v1437, 0
        %1442 = vmatprep.subr.mxu0 0.0
        %1443 = vmatpush1.xpose.msra.mxu0 %v1440
        %1444 = vmatprep.subr.mxu0 0.0
        %1445 = vmatpush1.xpose.msra.mxu0 0.0
        %1446 = vmatprep.subr.mxu0 0.0
        %1447 = vmatpush1.xpose.msra.mxu0 0.0
        %1448 = vmatprep.subr.mxu0 0.0
        %1449 = vmatpush1.xpose.msra.mxu0 0.0
        %1450 = vmatprep.subr.mxu0 0.0
        %1451 = vmatpush1.xpose.msra.mxu0 0.0
        %1452 = vmatprep.subr.mxu0 0.0
        %1453 = vmatpush1.xpose.msra.mxu0 0.0
        %1454 = vmatprep.subr.mxu0 0.0
        %1455 = vmatpush1.xpose.msra.mxu0 0.0
        %1456 = vmatprep.subr.mxu0 0.0
        %1457 = vmatpush1.xpose.msra.mxu0 0.0
        %1458 = vmatprep.subr.mxu0 0.0
        %1459 = vmatpush1.xpose.msra.mxu0 0.0
        %1460 = vmatprep.subr.mxu0 0.0
        %1461 = vmatpush1.xpose.msra.mxu0 0.0
        %1462 = vmatprep.subr.mxu0 0.0
        %1463 = vmatpush1.xpose.msra.mxu0 0.0
        %1464 = vmatprep.subr.mxu0 0.0
        %1465 = vmatpush1.xpose.msra.mxu0 0.0
        %1466 = vmatprep.subr.mxu0 0.0
        %1467 = vmatpush1.xpose.msra.mxu0 0.0
        %1468 = vmatprep.subr.mxu0 0.0
        %1469 = vmatpush1.xpose.msra.mxu0 0.0
        %1470 = vmatprep.subr.mxu0 0.0
        %1471 = vmatpush1.xpose.msra.mxu0 0.0
        %1472 = vmatprep.subr.mxu0 0.0
        %1473 = vmatpush1.xpose.msra.mxu0 0.0
        %1474 = vmatprep.subr.mxu0 0.0
        %1475 = vmatpush1.xpose.msra.mxu0 0.0
        %1476 = vmatprep.subr.mxu0 0.0
        %1477 = vmatpush1.xpose.msra.mxu0 0.0
        %1478 = vmatprep.subr.mxu0 0.0
        %1479 = vmatpush1.xpose.msra.mxu0 0.0
        %1480 = vmatprep.subr.mxu0 0.0
        %1481 = vmatpush1.xpose.msra.mxu0 0.0
        %1482 = vmatprep.subr.mxu0 0.0
        %1483 = vmatpush1.xpose.msra.mxu0 0.0
        %1484 = vmatprep.subr.mxu0 0.0
        %1485 = vmatpush1.xpose.msra.mxu0 0.0
        %1486 = vmatprep.subr.mxu0 0.0
        %1487 = vmatpush1.xpose.msra.mxu0 0.0
        %1488 = vmatprep.subr.mxu0 0.0
        %1489 = vmatpush1.xpose.msra.mxu0 0.0
        %1490 = vmatprep.subr.mxu0 0.0
        %1491 = vmatpush1.xpose.msra.mxu0 0.0
        %1492 = vmatprep.subr.mxu0 0.0
        %1493 = vmatpush1.xpose.msra.mxu0 0.0
        %1494 = vmatprep.subr.mxu0 0.0
        %1495 = vmatpush1.xpose.msra.mxu0 0.0
        %1496 = vmatprep.subr.mxu0 0.0
        %1497 = vmatpush1.xpose.msra.mxu0 0.0
        %1498 = vmatprep.subr.mxu0 0.0
        %1499 = vmatpush1.xpose.msra.mxu0 0.0
        %1500 = vmatprep.subr.mxu0 0.0
        %1501 = vmatpush1.xpose.msra.mxu0 0.0
        %1502 = vmatprep.subr.mxu0 0.0
        %1503 = vmatpush1.xpose.msra.mxu0 0.0
        %1504 = vmatprep.subr.mxu0 0.0
        %1505 = vmatpush1.xpose.msra.mxu0 0.0
        %1506 = vmatprep.mubr.f32.mxu0 0.0
        %1507 = vmatmul.mubr.f32.gmra.mrb[0].mxu0 %v1438
        %v1508 = vpop.f32.mrb[0].mxu0
        %v1509 = vadd.f32 0.0, %v1508
        %v1510 = vpop.f32.mrb[0].mxu0
        %1511 = vdwg.mxu0
        %v1512 = vmul.f32 %v1509, 0.35355338
        %v1513 = vadd.f32 %v1512, %v1166
        %v1514 = vsel %vm1270, %v1513, -inf
        %1515 = vmax.xlane.f32.xlu0 %v1514
        %v1516 = vpop.xlane.xlu0 %1515
        %v1517 = vsub.f32 %v1513, %v1516
        %v1518 = vmul.f32 %v1517, 1.442695
        %v1519 = vpow.pop %v1518
        %v1520 = vsel %vm1270, %v1519, 0.0
        %1521 = vadd.xlane.f32.xlu0 %v1520
        %v1522 = vpop.xlane.xlu0 %1521
        %v1523 = vrcp.pop %v1522
        %v1524 = vmul.f32 %v1519, %v1523
        %1525 = vrot.lane.b32.xlu0 %v1259, 56
        %v1526 = vpop.permute.xlu0 %1525
        %v1529 = vsel %vm1270, %v1524, 0
        %1531 = vmatprep.subr.mxu0 0.0
        %1532 = vmatpush1.msra.mxu0 %v1526
        %1533 = vmatprep.subr.mxu0 0.0
        %1534 = vmatpush1.msra.mxu0 0.0
        %1535 = vmatprep.subr.mxu0 0.0
        %1536 = vmatpush1.msra.mxu0 0.0
        %1537 = vmatprep.subr.mxu0 0.0
        %1538 = vmatpush1.msra.mxu0 0.0
        %1539 = vmatprep.subr.mxu0 0.0
        %1540 = vmatpush1.msra.mxu0 0.0
        %1541 = vmatprep.subr.mxu0 0.0
        %1542 = vmatpush1.msra.mxu0 0.0
        %1543 = vmatprep.subr.mxu0 0.0
        %1544 = vmatpush1.msra.mxu0 0.0
        %1545 = vmatprep.subr.mxu0 0.0
        %1546 = vmatpush1.msra.mxu0 0.0
        %1547 = vmatprep.subr.mxu0 0.0
        %1548 = vmatpush1.msra.mxu0 0.0
        %1549 = vmatprep.subr.mxu0 0.0
        %1550 = vmatpush1.msra.mxu0 0.0
        %1551 = vmatprep.subr.mxu0 0.0
        %1552 = vmatpush1.msra.mxu0 0.0
        %1553 = vmatprep.subr.mxu0 0.0
        %1554 = vmatpush1.msra.mxu0 0.0
        %1555 = vmatprep.subr.mxu0 0.0
        %1556 = vmatpush1.msra.mxu0 0.0
        %1557 = vmatprep.subr.mxu0 0.0
        %1558 = vmatpush1.msra.mxu0 0.0
        %1559 = vmatprep.subr.mxu0 0.0
        %1560 = vmatpush1.msra.mxu0 0.0
        %1561 = vmatprep.subr.mxu0 0.0
        %1562 = vmatpush1.msra.mxu0 0.0
        %1563 = vmatprep.subr.mxu0 0.0
        %1564 = vmatpush1.msra.mxu0 0.0
        %1565 = vmatprep.subr.mxu0 0.0
        %1566 = vmatpush1.msra.mxu0 0.0
        %1567 = vmatprep.subr.mxu0 0.0
        %1568 = vmatpush1.msra.mxu0 0.0
        %1569 = vmatprep.subr.mxu0 0.0
        %1570 = vmatpush1.msra.mxu0 0.0
        %1571 = vmatprep.subr.mxu0 0.0
        %1572 = vmatpush1.msra.mxu0 0.0
        %1573 = vmatprep.subr.mxu0 0.0
        %1574 = vmatpush1.msra.mxu0 0.0
        %1575 = vmatprep.subr.mxu0 0.0
        %1576 = vmatpush1.msra.mxu0 0.0
        %1577 = vmatprep.subr.mxu0 0.0
        %1578 = vmatpush1.msra.mxu0 0.0
        %1579 = vmatprep.subr.mxu0 0.0
        %1580 = vmatpush1.msra.mxu0 0.0
        %1581 = vmatprep.subr.mxu0 0.0
        %1582 = vmatpush1.msra.mxu0 0.0
        %1583 = vmatprep.subr.mxu0 0.0
        %1584 = vmatpush1.msra.mxu0 0.0
        %1585 = vmatprep.subr.mxu0 0.0
        %1586 = vmatpush1.msra.mxu0 0.0
        %1587 = vmatprep.subr.mxu0 0.0
        %1588 = vmatpush1.msra.mxu0 0.0
        %1589 = vmatprep.subr.mxu0 0.0
        %1590 = vmatpush1.msra.mxu0 0.0
        %1591 = vmatprep.subr.mxu0 0.0
        %1592 = vmatpush1.msra.mxu0 0.0
        %1593 = vmatprep.subr.mxu0 0.0
        %1594 = vmatpush1.msra.mxu0 0.0
        %1595 = vmatprep.mubr.f32.mxu0 0.0
        %1596 = vmatmul.mubr.f32.gmra.mrb[0].mxu0 %v1529
        %v1597 = vpop.f32.mrb[0].mxu0
        %v1598 = vadd.f32 0.0, %v1597
        %v1599 = vpop.f32.mrb[0].mxu0
        %1600 = vdwg.mxu0
        %v1602 = vsel %vm1270, %v1598, 0
        %1604 = vmatprep.subr.mxu0 0.0
        %1605 = vmatpush1.msra.mxu0 %v1263
        %1606 = vmatprep.subr.mxu0 0.0
        %1607 = vmatpush1.msra.mxu0 0.0
        %1608 = vmatprep.subr.mxu0 0.0
        %1609 = vmatpush1.msra.mxu0 0.0
        %1610 = vmatprep.subr.mxu0 0.0
        %1611 = vmatpush1.msra.mxu0 0.0
        %1612 = vmatprep.subr.mxu0 0.0
        %1613 = vmatpush1.msra.mxu0 0.0
        %1614 = vmatprep.subr.mxu0 0.0
        %1615 = vmatpush1.msra.mxu0 0.0
        %1616 = vmatprep.subr.mxu0 0.0
        %1617 = vmatpush1.msra.mxu0 0.0
        %1618 = vmatprep.subr.mxu0 0.0
        %1619 = vmatpush1.msra.mxu0 0.0
        %1620 = vmatprep.subr.mxu0 0.0
        %1621 = vmatpush1.msra.mxu0 0.0
        %1622 = vmatprep.subr.mxu0 0.0
        %1623 = vmatpush1.msra.mxu0 0.0
        %1624 = vmatprep.subr.mxu0 0.0
        %1625 = vmatpush1.msra.mxu0 0.0
        %1626 = vmatprep.subr.mxu0 0.0
        %1627 = vmatpush1.msra.mxu0 0.0
        %1628 = vmatprep.subr.mxu0 0.0
        %1629 = vmatpush1.msra.mxu0 0.0
        %1630 = vmatprep.subr.mxu0 0.0
        %1631 = vmatpush1.msra.mxu0 0.0
        %1632 = vmatprep.subr.mxu0 0.0
        %1633 = vmatpush1.msra.mxu0 0.0
        %1634 = vmatprep.subr.mxu0 0.0
        %1635 = vmatpush1.msra.mxu0 0.0
        %1636 = vmatprep.subr.mxu0 0.0
        %1637 = vmatpush1.msra.mxu0 0.0
        %1638 = vmatprep.subr.mxu0 0.0
        %1639 = vmatpush1.msra.mxu0 0.0
        %1640 = vmatprep.subr.mxu0 0.0
        %1641 = vmatpush1.msra.mxu0 0.0
        %1642 = vmatprep.subr.mxu0 0.0
        %1643 = vmatpush1.msra.mxu0 0.0
        %1644 = vmatprep.subr.mxu0 0.0
        %1645 = vmatpush1.msra.mxu0 0.0
        %1646 = vmatprep.subr.mxu0 0.0
        %1647 = vmatpush1.msra.mxu0 0.0
        %1648 = vmatprep.subr.mxu0 0.0
        %1649 = vmatpush1.msra.mxu0 0.0
        %1650 = vmatprep.subr.mxu0 0.0
        %1651 = vmatpush1.msra.mxu0 0.0
        %1652 = vmatprep.subr.mxu0 0.0
        %1653 = vmatpush1.msra.mxu0 0.0
        %1654 = vmatprep.subr.mxu0 0.0
        %1655 = vmatpush1.msra.mxu0 0.0
        %1656 = vmatprep.subr.mxu0 0.0
        %1657 = vmatpush1.msra.mxu0 0.0
        %1658 = vmatprep.subr.mxu0 0.0
        %1659 = vmatpush1.msra.mxu0 0.0
        %1660 = vmatprep.subr.mxu0 0.0
        %1661 = vmatpush1.msra.mxu0 0.0
        %1662 = vmatprep.subr.mxu0 0.0
        %1663 = vmatpush1.msra.mxu0 0.0
        %1664 = vmatprep.subr.mxu0 0.0
        %1665 = vmatpush1.msra.mxu0 0.0
        %1666 = vmatprep.subr.mxu0 0.0
        %1667 = vmatpush1.msra.mxu0 0.0
        %1668 = vmatprep.mubr.f32.mxu0 0.0
        %1669 = vmatmul.mubr.f32.gmra.mrb[0].mxu0 %v1602
        %v1670 = vpop.f32.mrb[0].mxu0
        %v1671 = vadd.f32 0.0, %v1670
        %v1672 = vpop.f32.mrb[0].mxu0
        %1673 = vdwg.mxu0
        %v1675 = vsel %vm1270, %v1431, 0
        %1677 = vmatprep.subr.mxu0 0.0
        %1678 = vmatpush1.msra.mxu0 %v1262
        %1679 = vmatprep.subr.mxu0 0.0
        %1680 = vmatpush1.msra.mxu0 0.0
        %1681 = vmatprep.subr.mxu0 0.0
        %1682 = vmatpush1.msra.mxu0 0.0
        %1683 = vmatprep.subr.mxu0 0.0
        %1684 = vmatpush1.msra.mxu0 0.0
        %1685 = vmatprep.subr.mxu0 0.0
        %1686 = vmatpush1.msra.mxu0 0.0
        %1687 = vmatprep.subr.mxu0 0.0
        %1688 = vmatpush1.msra.mxu0 0.0
        %1689 = vmatprep.subr.mxu0 0.0
        %1690 = vmatpush1.msra.mxu0 0.0
        %1691 = vmatprep.subr.mxu0 0.0
        %1692 = vmatpush1.msra.mxu0 0.0
        %1693 = vmatprep.subr.mxu0 0.0
        %1694 = vmatpush1.msra.mxu0 0.0
        %1695 = vmatprep.subr.mxu0 0.0
        %1696 = vmatpush1.msra.mxu0 0.0
        %1697 = vmatprep.subr.mxu0 0.0
        %1698 = vmatpush1.msra.mxu0 0.0
        %1699 = vmatprep.subr.mxu0 0.0
        %1700 = vmatpush1.msra.mxu0 0.0
        %1701 = vmatprep.subr.mxu0 0.0
        %1702 = vmatpush1.msra.mxu0 0.0
        %1703 = vmatprep.subr.mxu0 0.0
        %1704 = vmatpush1.msra.mxu0 0.0
        %1705 = vmatprep.subr.mxu0 0.0
        %1706 = vmatpush1.msra.mxu0 0.0
        %1707 = vmatprep.subr.mxu0 0.0
        %1708 = vmatpush1.msra.mxu0 0.0
        %1709 = vmatprep.subr.mxu0 0.0
        %1710 = vmatpush1.msra.mxu0 0.0
        %1711 = vmatprep.subr.mxu0 0.0
        %1712 = vmatpush1.msra.mxu0 0.0
        %1713 = vmatprep.subr.mxu0 0.0
        %1714 = vmatpush1.msra.mxu0 0.0
        %1715 = vmatprep.subr.mxu0 0.0
        %1716 = vmatpush1.msra.mxu0 0.0
        %1717 = vmatprep.subr.mxu0 0.0
        %1718 = vmatpush1.msra.mxu0 0.0
        %1719 = vmatprep.subr.mxu0 0.0
        %1720 = vmatpush1.msra.mxu0 0.0
        %1721 = vmatprep.subr.mxu0 0.0
        %1722 = vmatpush1.msra.mxu0 0.0
        %1723 = vmatprep.subr.mxu0 0.0
        %1724 = vmatpush1.msra.mxu0 0.0
        %1725 = vmatprep.subr.mxu0 0.0
        %1726 = vmatpush1.msra.mxu0 0.0
        %1727 = vmatprep.subr.mxu0 0.0
        %1728 = vmatpush1.msra.mxu0 0.0
        %1729 = vmatprep.subr.mxu0 0.0
        %1730 = vmatpush1.msra.mxu0 0.0
        %1731 = vmatprep.subr.mxu0 0.0
        %1732 = vmatpush1.msra.mxu0 0.0
        %1733 = vmatprep.subr.mxu0 0.0
        %1734 = vmatpush1.msra.mxu0 0.0
        %1735 = vmatprep.subr.mxu0 0.0
        %1736 = vmatpush1.msra.mxu0 0.0
        %1737 = vmatprep.subr.mxu0 0.0
        %1738 = vmatpush1.msra.mxu0 0.0
        %1739 = vmatprep.subr.mxu0 0.0
        %1740 = vmatpush1.msra.mxu0 0.0
        %1741 = vmatprep.mubr.f32.mxu0 0.0
        %1742 = vmatmul.mubr.f32.gmra.mrb[0].mxu0 %v1675
        %v1743 = vpop.f32.mrb[0].mxu0
        %v1744 = vadd.f32 %v1671, %v1743
        %v1745 = vpop.f32.mrb[0].mxu0
        %1746 = vdwg.mxu0
        %1747 = vrot.lane.b32.xlu0 %v1259, 112
        %v1748 = vpop.permute.xlu0 %1747
        %1749 = vrot.lane.b32.xlu0 %v1259, 80
        %v1750 = vpop.permute.xlu0 %1749
        %v1751 = vsel %vm1270, %v1748, 0
        %v1753 = vsel %vm1270, %v1750, 0
        %1755 = vmatprep.subr.mxu0 0.0
        %1756 = vmatpush1.xpose.msra.mxu0 %v1753
        %1757 = vmatprep.subr.mxu0 0.0
        %1758 = vmatpush1.xpose.msra.mxu0 0.0
        %1759 = vmatprep.subr.mxu0 0.0
        %1760 = vmatpush1.xpose.msra.mxu0 0.0
        %1761 = vmatprep.subr.mxu0 0.0
        %1762 = vmatpush1.xpose.msra.mxu0 0.0
        %1763 = vmatprep.subr.mxu0 0.0
        %1764 = vmatpush1.xpose.msra.mxu0 0.0
        %1765 = vmatprep.subr.mxu0 0.0
        %1766 = vmatpush1.xpose.msra.mxu0 0.0
        %1767 = vmatprep.subr.mxu0 0.0
        %1768 = vmatpush1.xpose.msra.mxu0 0.0
        %1769 = vmatprep.subr.mxu0 0.0
        %1770 = vmatpush1.xpose.msra.mxu0 0.0
        %1771 = vmatprep.subr.mxu0 0.0
        %1772 = vmatpush1.xpose.msra.mxu0 0.0
        %1773 = vmatprep.subr.mxu0 0.0
        %1774 = vmatpush1.xpose.msra.mxu0 0.0
        %1775 = vmatprep.subr.mxu0 0.0
        %1776 = vmatpush1.xpose.msra.mxu0 0.0
        %1777 = vmatprep.subr.mxu0 0.0
        %1778 = vmatpush1.xpose.msra.mxu0 0.0
        %1779 = vmatprep.subr.mxu0 0.0
        %1780 = vmatpush1.xpose.msra.mxu0 0.0
        %1781 = vmatprep.subr.mxu0 0.0
        %1782 = vmatpush1.xpose.msra.mxu0 0.0
        %1783 = vmatprep.subr.mxu0 0.0
        %1784 = vmatpush1.xpose.msra.mxu0 0.0
        %1785 = vmatprep.subr.mxu0 0.0
        %1786 = vmatpush1.xpose.msra.mxu0 0.0
        %1787 = vmatprep.subr.mxu0 0.0
        %1788 = vmatpush1.xpose.msra.mxu0 0.0
        %1789 = vmatprep.subr.mxu0 0.0
        %1790 = vmatpush1.xpose.msra.mxu0 0.0
        %1791 = vmatprep.subr.mxu0 0.0
        %1792 = vmatpush1.xpose.msra.mxu0 0.0
        %1793 = vmatprep.subr.mxu0 0.0
        %1794 = vmatpush1.xpose.msra.mxu0 0.0
        %1795 = vmatprep.subr.mxu0 0.0
        %1796 = vmatpush1.xpose.msra.mxu0 0.0
        %1797 = vmatprep.subr.mxu0 0.0
        %1798 = vmatpush1.xpose.msra.mxu0 0.0
        %1799 = vmatprep.subr.mxu0 0.0
        %1800 = vmatpush1.xpose.msra.mxu0 0.0
        %1801 = vmatprep.subr.mxu0 0.0
        %1802 = vmatpush1.xpose.msra.mxu0 0.0
        %1803 = vmatprep.subr.mxu0 0.0
        %1804 = vmatpush1.xpose.msra.mxu0 0.0
        %1805 = vmatprep.subr.mxu0 0.0
        %1806 = vmatpush1.xpose.msra.mxu0 0.0
        %1807 = vmatprep.subr.mxu0 0.0
        %1808 = vmatpush1.xpose.msra.mxu0 0.0
        %1809 = vmatprep.subr.mxu0 0.0
        %1810 = vmatpush1.xpose.msra.mxu0 0.0
        %1811 = vmatprep.subr.mxu0 0.0
        %1812 = vmatpush1.xpose.msra.mxu0 0.0
        %1813 = vmatprep.subr.mxu0 0.0
        %1814 = vmatpush1.xpose.msra.mxu0 0.0
        %1815 = vmatprep.subr.mxu0 0.0
        %1816 = vmatpush1.xpose.msra.mxu0 0.0
        %1817 = vmatprep.subr.mxu0 0.0
        %1818 = vmatpush1.xpose.msra.mxu0 0.0
        %1819 = vmatprep.mubr.f32.mxu0 0.0
        %1820 = vmatmul.mubr.f32.gmra.mrb[0].mxu0 %v1751
        %v1821 = vpop.f32.mrb[0].mxu0
        %v1822 = vadd.f32 0.0, %v1821
        %v1823 = vpop.f32.mrb[0].mxu0
        %1824 = vdwg.mxu0
        %v1825 = vmul.f32 %v1822, 0.35355338
        %v1826 = vadd.f32 %v1825, %v1166
        %v1827 = vsel %vm1270, %v1826, -inf
        %1828 = vmax.xlane.f32.xlu0 %v1827
        %v1829 = vpop.xlane.xlu0 %1828
        %v1830 = vsub.f32 %v1826, %v1829
        %v1831 = vmul.f32 %v1830, 1.442695
        %v1832 = vpow.pop %v1831
        %v1833 = vsel %vm1270, %v1832, 0.0
        %1834 = vadd.xlane.f32.xlu0 %v1833
        %v1835 = vpop.xlane.xlu0 %1834
        %v1836 = vrcp.pop %v1835
        %v1837 = vmul.f32 %v1832, %v1836
        %1838 = vrot.lane.b32.xlu0 %v1259, 48
        %v1839 = vpop.permute.xlu0 %1838
        %v1842 = vsel %vm1270, %v1837, 0
        %1844 = vmatprep.subr.mxu0 0.0
        %1845 = vmatpush1.msra.mxu0 %v1839
        %1846 = vmatprep.subr.mxu0 0.0
        %1847 = vmatpush1.msra.mxu0 0.0
        %1848 = vmatprep.subr.mxu0 0.0
        %1849 = vmatpush1.msra.mxu0 0.0
        %1850 = vmatprep.subr.mxu0 0.0
        %1851 = vmatpush1.msra.mxu0 0.0
        %1852 = vmatprep.subr.mxu0 0.0
        %1853 = vmatpush1.msra.mxu0 0.0
        %1854 = vmatprep.subr.mxu0 0.0
        %1855 = vmatpush1.msra.mxu0 0.0
        %1856 = vmatprep.subr.mxu0 0.0
        %1857 = vmatpush1.msra.mxu0 0.0
        %1858 = vmatprep.subr.mxu0 0.0
        %1859 = vmatpush1.msra.mxu0 0.0
        %1860 = vmatprep.subr.mxu0 0.0
        %1861 = vmatpush1.msra.mxu0 0.0
        %1862 = vmatprep.subr.mxu0 0.0
        %1863 = vmatpush1.msra.mxu0 0.0
        %1864 = vmatprep.subr.mxu0 0.0
        %1865 = vmatpush1.msra.mxu0 0.0
        %1866 = vmatprep.subr.mxu0 0.0
        %1867 = vmatpush1.msra.mxu0 0.0
        %1868 = vmatprep.subr.mxu0 0.0
        %1869 = vmatpush1.msra.mxu0 0.0
        %1870 = vmatprep.subr.mxu0 0.0
        %1871 = vmatpush1.msra.mxu0 0.0
        %1872 = vmatprep.subr.mxu0 0.0
        %1873 = vmatpush1.msra.mxu0 0.0
        %1874 = vmatprep.subr.mxu0 0.0
        %1875 = vmatpush1.msra.mxu0 0.0
        %1876 = vmatprep.subr.mxu0 0.0
        %1877 = vmatpush1.msra.mxu0 0.0
        %1878 = vmatprep.subr.mxu0 0.0
        %1879 = vmatpush1.msra.mxu0 0.0
        %1880 = vmatprep.subr.mxu0 0.0
        %1881 = vmatpush1.msra.mxu0 0.0
        %1882 = vmatprep.subr.mxu0 0.0
        %1883 = vmatpush1.msra.mxu0 0.0
        %1884 = vmatprep.subr.mxu0 0.0
        %1885 = vmatpush1.msra.mxu0 0.0
        %1886 = vmatprep.subr.mxu0 0.0
        %1887 = vmatpush1.msra.mxu0 0.0
        %1888 = vmatprep.subr.mxu0 0.0
        %1889 = vmatpush1.msra.mxu0 0.0
        %1890 = vmatprep.subr.mxu0 0.0
        %1891 = vmatpush1.msra.mxu0 0.0
        %1892 = vmatprep.subr.mxu0 0.0
        %1893 = vmatpush1.msra.mxu0 0.0
        %1894 = vmatprep.subr.mxu0 0.0
        %1895 = vmatpush1.msra.mxu0 0.0
        %1896 = vmatprep.subr.mxu0 0.0
        %1897 = vmatpush1.msra.mxu0 0.0
        %1898 = vmatprep.subr.mxu0 0.0
        %1899 = vmatpush1.msra.mxu0 0.0
        %1900 = vmatprep.subr.mxu0 0.0
        %1901 = vmatpush1.msra.mxu0 0.0
        %1902 = vmatprep.subr.mxu0 0.0
        %1903 = vmatpush1.msra.mxu0 0.0
        %1904 = vmatprep.subr.mxu0 0.0
        %1905 = vmatpush1.msra.mxu0 0.0
        %1906 = vmatprep.subr.mxu0 0.0
        %1907 = vmatpush1.msra.mxu0 0.0
        %1908 = vmatprep.mubr.f32.mxu0 0.0
        %1909 = vmatmul.mubr.f32.gmra.mrb[0].mxu0 %v1842
        %v1910 = vpop.f32.mrb[0].mxu0
        %v1911 = vadd.f32 0.0, %v1910
        %v1912 = vpop.f32.mrb[0].mxu0
        %1913 = vdwg.mxu0
        %v1915 = vsel %vm1270, %v1911, 0
        %1917 = vmatprep.subr.mxu0 0.0
        %1918 = vmatpush1.msra.mxu0 %v1264
        %1919 = vmatprep.subr.mxu0 0.0
        %1920 = vmatpush1.msra.mxu0 0.0
        %1921 = vmatprep.subr.mxu0 0.0
        %1922 = vmatpush1.msra.mxu0 0.0
        %1923 = vmatprep.subr.mxu0 0.0
        %1924 = vmatpush1.msra.mxu0 0.0
        %1925 = vmatprep.subr.mxu0 0.0
        %1926 = vmatpush1.msra.mxu0 0.0
        %1927 = vmatprep.subr.mxu0 0.0
        %1928 = vmatpush1.msra.mxu0 0.0
        %1929 = vmatprep.subr.mxu0 0.0
        %1930 = vmatpush1.msra.mxu0 0.0
        %1931 = vmatprep.subr.mxu0 0.0
        %1932 = vmatpush1.msra.mxu0 0.0
        %1933 = vmatprep.subr.mxu0 0.0
        %1934 = vmatpush1.msra.mxu0 0.0
        %1935 = vmatprep.subr.mxu0 0.0
        %1936 = vmatpush1.msra.mxu0 0.0
        %1937 = vmatprep.subr.mxu0 0.0
        %1938 = vmatpush1.msra.mxu0 0.0
        %1939 = vmatprep.subr.mxu0 0.0
        %1940 = vmatpush1.msra.mxu0 0.0
        %1941 = vmatprep.subr.mxu0 0.0
        %1942 = vmatpush1.msra.mxu0 0.0
        %1943 = vmatprep.subr.mxu0 0.0
        %1944 = vmatpush1.msra.mxu0 0.0
        %1945 = vmatprep.subr.mxu0 0.0
        %1946 = vmatpush1.msra.mxu0 0.0
        %1947 = vmatprep.subr.mxu0 0.0
        %1948 = vmatpush1.msra.mxu0 0.0
        %1949 = vmatprep.subr.mxu0 0.0
        %1950 = vmatpush1.msra.mxu0 0.0
        %1951 = vmatprep.subr.mxu0 0.0
        %1952 = vmatpush1.msra.mxu0 0.0
        %1953 = vmatprep.subr.mxu0 0.0
        %1954 = vmatpush1.msra.mxu0 0.0
        %1955 = vmatprep.subr.mxu0 0.0
        %1956 = vmatpush1.msra.mxu0 0.0
        %1957 = vmatprep.subr.mxu0 0.0
        %1958 = vmatpush1.msra.mxu0 0.0
        %1959 = vmatprep.subr.mxu0 0.0
        %1960 = vmatpush1.msra.mxu0 0.0
        %1961 = vmatprep.subr.mxu0 0.0
        %1962 = vmatpush1.msra.mxu0 0.0
        %1963 = vmatprep.subr.mxu0 0.0
        %1964 = vmatpush1.msra.mxu0 0.0
        %1965 = vmatprep.subr.mxu0 0.0
        %1966 = vmatpush1.msra.mxu0 0.0
        %1967 = vmatprep.subr.mxu0 0.0
        %1968 = vmatpush1.msra.mxu0 0.0
        %1969 = vmatprep.subr.mxu0 0.0
        %1970 = vmatpush1.msra.mxu0 0.0
        %1971 = vmatprep.subr.mxu0 0.0
        %1972 = vmatpush1.msra.mxu0 0.0
        %1973 = vmatprep.subr.mxu0 0.0
        %1974 = vmatpush1.msra.mxu0 0.0
        %1975 = vmatprep.subr.mxu0 0.0
        %1976 = vmatpush1.msra.mxu0 0.0
        %1977 = vmatprep.subr.mxu0 0.0
        %1978 = vmatpush1.msra.mxu0 0.0
        %1979 = vmatprep.subr.mxu0 0.0
        %1980 = vmatpush1.msra.mxu0 0.0
        %1981 = vmatprep.mubr.f32.mxu0 0.0
        %1982 = vmatmul.mubr.f32.gmra.mrb[0].mxu0 %v1915
        %v1983 = vpop.f32.mrb[0].mxu0
        %v1984 = vadd.f32 0.0, %v1983
        %v1985 = vpop.f32.mrb[0].mxu0
        %1986 = vdwg.mxu0
        %v1987 = vadd.f32 %v1744, %v1984
        %1988 = vrot.lane.b32.xlu0 %v1259, 104
        %v1989 = vpop.permute.xlu0 %1988
        %1990 = vrot.lane.b32.xlu0 %v1259, 72
        %v1991 = vpop.permute.xlu0 %1990
        %v1992 = vsel %vm1270, %v1989, 0
        %v1994 = vsel %vm1270, %v1991, 0
        %1996 = vmatprep.subr.mxu0 0.0
        %1997 = vmatpush1.xpose.msra.mxu0 %v1994
        %1998 = vmatprep.subr.mxu0 0.0
        %1999 = vmatpush1.xpose.msra.mxu0 0.0
        %2000 = vmatprep.subr.mxu0 0.0
        %2001 = vmatpush1.xpose.msra.mxu0 0.0
        %2002 = vmatprep.subr.mxu0 0.0
        %2003 = vmatpush1.xpose.msra.mxu0 0.0
        %2004 = vmatprep.subr.mxu0 0.0
        %2005 = vmatpush1.xpose.msra.mxu0 0.0
        %2006 = vmatprep.subr.mxu0 0.0
        %2007 = vmatpush1.xpose.msra.mxu0 0.0
        %2008 = vmatprep.subr.mxu0 0.0
        %2009 = vmatpush1.xpose.msra.mxu0 0.0
        %2010 = vmatprep.subr.mxu0 0.0
        %2011 = vmatpush1.xpose.msra.mxu0 0.0
        %2012 = vmatprep.subr.mxu0 0.0
        %2013 = vmatpush1.xpose.msra.mxu0 0.0
        %2014 = vmatprep.subr.mxu0 0.0
        %2015 = vmatpush1.xpose.msra.mxu0 0.0
        %2016 = vmatprep.subr.mxu0 0.0
        %2017 = vmatpush1.xpose.msra.mxu0 0.0
        %2018 = vmatprep.subr.mxu0 0.0
        %2019 = vmatpush1.xpose.msra.mxu0 0.0
        %2020 = vmatprep.subr.mxu0 0.0
        %2021 = vmatpush1.xpose.msra.mxu0 0.0
        %2022 = vmatprep.subr.mxu0 0.0
        %2023 = vmatpush1.xpose.msra.mxu0 0.0
        %2024 = vmatprep.subr.mxu0 0.0
        %2025 = vmatpush1.xpose.msra.mxu0 0.0
        %2026 = vmatprep.subr.mxu0 0.0
        %2027 = vmatpush1.xpose.msra.mxu0 0.0
        %2028 = vmatprep.subr.mxu0 0.0
        %2029 = vmatpush1.xpose.msra.mxu0 0.0
        %2030 = vmatprep.subr.mxu0 0.0
        %2031 = vmatpush1.xpose.msra.mxu0 0.0
        %2032 = vmatprep.subr.mxu0 0.0
        %2033 = vmatpush1.xpose.msra.mxu0 0.0
        %2034 = vmatprep.subr.mxu0 0.0
        %2035 = vmatpush1.xpose.msra.mxu0 0.0
        %2036 = vmatprep.subr.mxu0 0.0
        %2037 = vmatpush1.xpose.msra.mxu0 0.0
        %2038 = vmatprep.subr.mxu0 0.0
        %2039 = vmatpush1.xpose.msra.mxu0 0.0
        %2040 = vmatprep.subr.mxu0 0.0
        %2041 = vmatpush1.xpose.msra.mxu0 0.0
        %2042 = vmatprep.subr.mxu0 0.0
        %2043 = vmatpush1.xpose.msra.mxu0 0.0
        %2044 = vmatprep.subr.mxu0 0.0
        %2045 = vmatpush1.xpose.msra.mxu0 0.0
        %2046 = vmatprep.subr.mxu0 0.0
        %2047 = vmatpush1.xpose.msra.mxu0 0.0
        %2048 = vmatprep.subr.mxu0 0.0
        %2049 = vmatpush1.xpose.msra.mxu0 0.0
        %2050 = vmatprep.subr.mxu0 0.0
        %2051 = vmatpush1.xpose.msra.mxu0 0.0
        %2052 = vmatprep.subr.mxu0 0.0
        %2053 = vmatpush1.xpose.msra.mxu0 0.0
        %2054 = vmatprep.subr.mxu0 0.0
        %2055 = vmatpush1.xpose.msra.mxu0 0.0
        %2056 = vmatprep.subr.mxu0 0.0
        %2057 = vmatpush1.xpose.msra.mxu0 0.0
        %2058 = vmatprep.subr.mxu0 0.0
        %2059 = vmatpush1.xpose.msra.mxu0 0.0
        %2060 = vmatprep.mubr.f32.mxu0 0.0
        %2061 = vmatmul.mubr.f32.gmra.mrb[0].mxu0 %v1992
        %v2062 = vpop.f32.mrb[0].mxu0
        %v2063 = vadd.f32 0.0, %v2062
        %v2064 = vpop.f32.mrb[0].mxu0
        %2065 = vdwg.mxu0
        %v2066 = vmul.f32 %v2063, 0.35355338
        %v2067 = vadd.f32 %v2066, %v1166
        %v2068 = vsel %vm1270, %v2067, -inf
        %2069 = vmax.xlane.f32.xlu0 %v2068
        %v2070 = vpop.xlane.xlu0 %2069
        %v2071 = vsub.f32 %v2067, %v2070
        %v2072 = vmul.f32 %v2071, 1.442695
        %v2073 = vpow.pop %v2072
        %v2074 = vsel %vm1270, %v2073, 0.0
        %2075 = vadd.xlane.f32.xlu0 %v2074
        %v2076 = vpop.xlane.xlu0 %2075
        %v2077 = vrcp.pop %v2076
        %v2078 = vmul.f32 %v2073, %v2077
        %2079 = vrot.lane.b32.xlu0 %v1259, 40
        %v2080 = vpop.permute.xlu0 %2079
        %v2083 = vsel %vm1270, %v2078, 0
        %2085 = vmatprep.subr.mxu0 0.0
        %2086 = vmatpush1.msra.mxu0 %v2080
        %2087 = vmatprep.subr.mxu0 0.0
        %2088 = vmatpush1.msra.mxu0 0.0
        %2089 = vmatprep.subr.mxu0 0.0
        %2090 = vmatpush1.msra.mxu0 0.0
        %2091 = vmatprep.subr.mxu0 0.0
        %2092 = vmatpush1.msra.mxu0 0.0
        %2093 = vmatprep.subr.mxu0 0.0
        %2094 = vmatpush1.msra.mxu0 0.0
        %2095 = vmatprep.subr.mxu0 0.0
        %2096 = vmatpush1.msra.mxu0 0.0
        %2097 = vmatprep.subr.mxu0 0.0
        %2098 = vmatpush1.msra.mxu0 0.0
        %2099 = vmatprep.subr.mxu0 0.0
        %2100 = vmatpush1.msra.mxu0 0.0
        %2101 = vmatprep.subr.mxu0 0.0
        %2102 = vmatpush1.msra.mxu0 0.0
        %2103 = vmatprep.subr.mxu0 0.0
        %2104 = vmatpush1.msra.mxu0 0.0
        %2105 = vmatprep.subr.mxu0 0.0
        %2106 = vmatpush1.msra.mxu0 0.0
        %2107 = vmatprep.subr.mxu0 0.0
        %2108 = vmatpush1.msra.mxu0 0.0
        %2109 = vmatprep.subr.mxu0 0.0
        %2110 = vmatpush1.msra.mxu0 0.0
        %2111 = vmatprep.subr.mxu0 0.0
        %2112 = vmatpush1.msra.mxu0 0.0
        %2113 = vmatprep.subr.mxu0 0.0
        %2114 = vmatpush1.msra.mxu0 0.0
        %2115 = vmatprep.subr.mxu0 0.0
        %2116 = vmatpush1.msra.mxu0 0.0
        %2117 = vmatprep.subr.mxu0 0.0
        %2118 = vmatpush1.msra.mxu0 0.0
        %2119 = vmatprep.subr.mxu0 0.0
        %2120 = vmatpush1.msra.mxu0 0.0
        %2121 = vmatprep.subr.mxu0 0.0
        %2122 = vmatpush1.msra.mxu0 0.0
        %2123 = vmatprep.subr.mxu0 0.0
        %2124 = vmatpush1.msra.mxu0 0.0
        %2125 = vmatprep.subr.mxu0 0.0
        %2126 = vmatpush1.msra.mxu0 0.0
        %2127 = vmatprep.subr.mxu0 0.0
        %2128 = vmatpush1.msra.mxu0 0.0
        %2129 = vmatprep.subr.mxu0 0.0
        %2130 = vmatpush1.msra.mxu0 0.0
        %2131 = vmatprep.subr.mxu0 0.0
        %2132 = vmatpush1.msra.mxu0 0.0
        %2133 = vmatprep.subr.mxu0 0.0
        %2134 = vmatpush1.msra.mxu0 0.0
        %2135 = vmatprep.subr.mxu0 0.0
        %2136 = vmatpush1.msra.mxu0 0.0
        %2137 = vmatprep.subr.mxu0 0.0
        %2138 = vmatpush1.msra.mxu0 0.0
        %2139 = vmatprep.subr.mxu0 0.0
        %2140 = vmatpush1.msra.mxu0 0.0
        %2141 = vmatprep.subr.mxu0 0.0
        %2142 = vmatpush1.msra.mxu0 0.0
        %2143 = vmatprep.subr.mxu0 0.0
        %2144 = vmatpush1.msra.mxu0 0.0
        %2145 = vmatprep.subr.mxu0 0.0
        %2146 = vmatpush1.msra.mxu0 0.0
        %2147 = vmatprep.subr.mxu0 0.0
        %2148 = vmatpush1.msra.mxu0 0.0
        %2149 = vmatprep.mubr.f32.mxu0 0.0
        %2150 = vmatmul.mubr.f32.gmra.mrb[0].mxu0 %v2083
        %v2151 = vpop.f32.mrb[0].mxu0
        %v2152 = vadd.f32 0.0, %v2151
        %v2153 = vpop.f32.mrb[0].mxu0
        %2154 = vdwg.mxu0
        %v2156 = vsel %vm1270, %v2152, 0
        %2158 = vmatprep.subr.mxu0 0.0
        %2159 = vmatpush1.msra.mxu0 %v1265
        %2160 = vmatprep.subr.mxu0 0.0
        %2161 = vmatpush1.msra.mxu0 0.0
        %2162 = vmatprep.subr.mxu0 0.0
        %2163 = vmatpush1.msra.mxu0 0.0
        %2164 = vmatprep.subr.mxu0 0.0
        %2165 = vmatpush1.msra.mxu0 0.0
        %2166 = vmatprep.subr.mxu0 0.0
        %2167 = vmatpush1.msra.mxu0 0.0
        %2168 = vmatprep.subr.mxu0 0.0
        %2169 = vmatpush1.msra.mxu0 0.0
        %2170 = vmatprep.subr.mxu0 0.0
        %2171 = vmatpush1.msra.mxu0 0.0
        %2172 = vmatprep.subr.mxu0 0.0
        %2173 = vmatpush1.msra.mxu0 0.0
        %2174 = vmatprep.subr.mxu0 0.0
        %2175 = vmatpush1.msra.mxu0 0.0
        %2176 = vmatprep.subr.mxu0 0.0
        %2177 = vmatpush1.msra.mxu0 0.0
        %2178 = vmatprep.subr.mxu0 0.0
        %2179 = vmatpush1.msra.mxu0 0.0
        %2180 = vmatprep.subr.mxu0 0.0
        %2181 = vmatpush1.msra.mxu0 0.0
        %2182 = vmatprep.subr.mxu0 0.0
        %2183 = vmatpush1.msra.mxu0 0.0
        %2184 = vmatprep.subr.mxu0 0.0
        %2185 = vmatpush1.msra.mxu0 0.0
        %2186 = vmatprep.subr.mxu0 0.0
        %2187 = vmatpush1.msra.mxu0 0.0
        %2188 = vmatprep.subr.mxu0 0.0
        %2189 = vmatpush1.msra.mxu0 0.0
        %2190 = vmatprep.subr.mxu0 0.0
        %2191 = vmatpush1.msra.mxu0 0.0
        %2192 = vmatprep.subr.mxu0 0.0
        %2193 = vmatpush1.msra.mxu0 0.0
        %2194 = vmatprep.subr.mxu0 0.0
        %2195 = vmatpush1.msra.mxu0 0.0
        %2196 = vmatprep.subr.mxu0 0.0
        %2197 = vmatpush1.msra.mxu0 0.0
        %2198 = vmatprep.subr.mxu0 0.0
        %2199 = vmatpush1.msra.mxu0 0.0
        %2200 = vmatprep.subr.mxu0 0.0
        %2201 = vmatpush1.msra.mxu0 0.0
        %2202 = vmatprep.subr.mxu0 0.0
        %2203 = vmatpush1.msra.mxu0 0.0
        %2204 = vmatprep.subr.mxu0 0.0
        %2205 = vmatpush1.msra.mxu0 0.0
        %2206 = vmatprep.subr.mxu0 0.0
        %2207 = vmatpush1.msra.mxu0 0.0
        %2208 = vmatprep.subr.mxu0 0.0
        %2209 = vmatpush1.msra.mxu0 0.0
        %2210 = vmatprep.subr.mxu0 0.0
        %2211 = vmatpush1.msra.mxu0 0.0
        %2212 = vmatprep.subr.mxu0 0.0
        %2213 = vmatpush1.msra.mxu0 0.0
        %2214 = vmatprep.subr.mxu0 0.0
        %2215 = vmatpush1.msra.mxu0 0.0
        %2216 = vmatprep.subr.mxu0 0.0
        %2217 = vmatpush1.msra.mxu0 0.0
        %2218 = vmatprep.subr.mxu0 0.0
        %2219 = vmatpush1.msra.mxu0 0.0
        %2220 = vmatprep.subr.mxu0 0.0
        %2221 = vmatpush1.msra.mxu0 0.0
        %2222 = vmatprep.mubr.f32.mxu0 0.0
        %2223 = vmatmul.mubr.f32.gmra.mrb[0].mxu0 %v2156
        %v2224 = vpop.f32.mrb[0].mxu0
        %v2225 = vadd.f32 0.0, %v2224
        %v2226 = vpop.f32.mrb[0].mxu0
        %2227 = vdwg.mxu0
        %v2228 = vadd.f32 %v1987, %v2225
        %v2230 = vlaneseq
        %v2231 = vshrl.u32 %v2230, 7
        %v2232 = vsub.s32 0, %v2231
        %v2233 = vrot.slane %v1266, %v2232
        %v2235 = vadd.f32 %v2228, %v2233
        %v2236 = vadd.f32 %v1175, %v2235
        %v2237 = vld [vmem:[#allocation7] sm:$0x1]
        %v2238 = vld [vmem:[#allocation9] sm:$0x1]
        %v2239 = vsel %vm1080, %v2236, 0.0
        %2240 = vadd.xlane.f32.xlu0 %v2239
        %v2241 = vpop.xlane.xlu0 %2240
        %v2242 = vrcp.pop 32.0
        %v2243 = vmul.f32 %v2241, %v2242
        %v2244 = vsub.f32 %v2236, %v2243
        %v2245 = vmul.f32 %v2244, %v2244
        %v2246 = vsel %vm1080, %v2245, 0.0
        %2247 = vadd.xlane.f32.xlu0 %v2246
        %v2248 = vpop.xlane.xlu0 %2247
        %v2249 = vmul.f32 %v2248, %v2242
        %v2250 = vadd.f32 %v2249, 1e-05
        %v2251 = vrsqrt.pop %v2250
        %v2252 = vmul.f32 %v2244, %v2251
        %v2254 = vlaneseq
        %v2255 = vshrl.u32 %v2254, 7
        %v2256 = vsub.s32 0, %v2255
        %v2257 = vrot.slane %v2237, %v2256
        %v2259 = vmul.f32 %v2252, %v2257
        %v2261 = vlaneseq
        %v2262 = vshrl.u32 %v2261, 7
        %v2263 = vsub.s32 0, %v2262
        %v2264 = vrot.slane %v2238, %v2263
        %v2266 = vadd.f32 %v2259, %v2264
        %v2267 = vld [vmem:[%s10] sm:$0xff]
        %v2268 = vld [vmem:[%s10 + $0x8] sm:$0xff]
        %v2269 = vld [vmem:[%s10 + $0x10] sm:$0xff]
        %v2270 = vld [vmem:[%s10 + $0x18] sm:$0xff]
        %v2271 = vld [vmem:[#allocation10] sm:$0x1]
        %v2273 = vlaneseq
        %v2274 = vshrl.u32 %v2273, 7
        %v2275 = vsub.s32 0, %v2274
        %v2276 = vrot.slane %v2271, %v2275
        %v2279 = vsel %vm1080, %v2266, 0
        %2281 = vmatprep.subr.mxu0 0.0
        %2282 = vmatpush1.msra.mxu0 %v2267
        %2283 = vmatprep.subr.mxu0 0.0
        %2284 = vmatpush1.msra.mxu0 %v2268
        %2285 = vmatprep.subr.mxu0 0.0
        %2286 = vmatpush1.msra.mxu0 %v2269
        %2287 = vmatprep.subr.mxu0 0.0
        %2288 = vmatpush1.msra.mxu0 %v2270
        %2289 = vmatprep.subr.mxu0 0.0
        %2290 = vmatpush1.msra.mxu0 0.0
        %2291 = vmatprep.subr.mxu0 0.0
        %2292 = vmatpush1.msra.mxu0 0.0
        %2293 = vmatprep.subr.mxu0 0.0
        %2294 = vmatpush1.msra.mxu0 0.0
        %2295 = vmatprep.subr.mxu0 0.0
        %2296 = vmatpush1.msra.mxu0 0.0
        %2297 = vmatprep.subr.mxu0 0.0
        %2298 = vmatpush1.msra.mxu0 0.0
        %2299 = vmatprep.subr.mxu0 0.0
        %2300 = vmatpush1.msra.mxu0 0.0
        %2301 = vmatprep.subr.mxu0 0.0
        %2302 = vmatpush1.msra.mxu0 0.0
        %2303 = vmatprep.subr.mxu0 0.0
        %2304 = vmatpush1.msra.mxu0 0.0
        %2305 = vmatprep.subr.mxu0 0.0
        %2306 = vmatpush1.msra.mxu0 0.0
        %2307 = vmatprep.subr.mxu0 0.0
        %2308 = vmatpush1.msra.mxu0 0.0
        %2309 = vmatprep.subr.mxu0 0.0
        %2310 = vmatpush1.msra.mxu0 0.0
        %2311 = vmatprep.subr.mxu0 0.0
        %2312 = vmatpush1.msra.mxu0 0.0
        %2313 = vmatprep.subr.mxu0 0.0
        %2314 = vmatpush1.msra.mxu0 0.0
        %2315 = vmatprep.subr.mxu0 0.0
        %2316 = vmatpush1.msra.mxu0 0.0
        %2317 = vmatprep.subr.mxu0 0.0
        %2318 = vmatpush1.msra.mxu0 0.0
        %2319 = vmatprep.subr.mxu0 0.0
        %2320 = vmatpush1.msra.mxu0 0.0
        %2321 = vmatprep.subr.mxu0 0.0
        %2322 = vmatpush1.msra.mxu0 0.0
        %2323 = vmatprep.subr.mxu0 0.0
        %2324 = vmatpush1.msra.mxu0 0.0
        %2325 = vmatprep.subr.mxu0 0.0
        %2326 = vmatpush1.msra.mxu0 0.0
        %2327 = vmatprep.subr.mxu0 0.0
        %2328 = vmatpush1.msra.mxu0 0.0
        %2329 = vmatprep.subr.mxu0 0.0
        %2330 = vmatpush1.msra.mxu0 0.0
        %2331 = vmatprep.subr.mxu0 0.0
        %2332 = vmatpush1.msra.mxu0 0.0
        %2333 = vmatprep.subr.mxu0 0.0
        %2334 = vmatpush1.msra.mxu0 0.0
        %2335 = vmatprep.subr.mxu0 0.0
        %2336 = vmatpush1.msra.mxu0 0.0
        %2337 = vmatprep.subr.mxu0 0.0
        %2338 = vmatpush1.msra.mxu0 0.0
        %2339 = vmatprep.subr.mxu0 0.0
        %2340 = vmatpush1.msra.mxu0 0.0
        %2341 = vmatprep.subr.mxu0 0.0
        %2342 = vmatpush1.msra.mxu0 0.0
        %2343 = vmatprep.subr.mxu0 0.0
        %2344 = vmatpush1.msra.mxu0 0.0
        %2345 = vmatprep.mubr.f32.mxu0 0.0
        %2346 = vmatmul.mubr.f32.gmra.mrb[0].mxu0 %v2279
        %v2347 = vpop.f32.mrb[0].mxu0
        %v2348 = vadd.f32 %v2276, %v2347
        %v2349 = vpop.f32.mrb[0].mxu0
        %2350 = vdwg.mxu0
        %v2351 = vld [vmem:[%s12] sm:$0xff]
        %v2352 = vld [vmem:[%s12 + $0x8] sm:$0xff]
        %v2353 = vld [vmem:[%s12 + $0x10] sm:$0xff]
        %v2354 = vld [vmem:[%s12 + $0x18] sm:$0xff]
        %v2355 = vld [vmem:[#allocation12] sm:$0x1]
        %v2357 = vlaneseq
        %v2358 = vshrl.u32 %v2357, 7
        %v2359 = vsub.s32 0, %v2358
        %v2360 = vrot.slane %v2355, %v2359
        %v2363 = vsel %vm1080, %v1176, 0
        %v2366 = vsel %vm1080, %v1177, 0
        %2368 = vmatprep.subr.mxu0 0.0
        %2369 = vmatpush1.msra.mxu0 %v2351
        %2370 = vmatprep.subr.mxu0 0.0
        %2371 = vmatpush1.msra.mxu0 %v2352
        %2372 = vmatprep.subr.mxu0 0.0
        %2373 = vmatpush1.msra.mxu0 %v2353
        %2374 = vmatprep.subr.mxu0 0.0
        %2375 = vmatpush1.msra.mxu0 %v2354
        %2376 = vmatprep.subr.mxu0 0.0
        %2377 = vmatpush1.msra.mxu0 0.0
        %2378 = vmatprep.subr.mxu0 0.0
        %2379 = vmatpush1.msra.mxu0 0.0
        %2380 = vmatprep.subr.mxu0 0.0
        %2381 = vmatpush1.msra.mxu0 0.0
        %2382 = vmatprep.subr.mxu0 0.0
        %2383 = vmatpush1.msra.mxu0 0.0
        %2384 = vmatprep.subr.mxu0 0.0
        %2385 = vmatpush1.msra.mxu0 0.0
        %2386 = vmatprep.subr.mxu0 0.0
        %2387 = vmatpush1.msra.mxu0 0.0
        %2388 = vmatprep.subr.mxu0 0.0
        %2389 = vmatpush1.msra.mxu0 0.0
        %2390 = vmatprep.subr.mxu0 0.0
        %2391 = vmatpush1.msra.mxu0 0.0
        %2392 = vmatprep.subr.mxu0 0.0
        %2393 = vmatpush1.msra.mxu0 0.0
        %2394 = vmatprep.subr.mxu0 0.0
        %2395 = vmatpush1.msra.mxu0 0.0
        %2396 = vmatprep.subr.mxu0 0.0
        %2397 = vmatpush1.msra.mxu0 0.0
        %2398 = vmatprep.subr.mxu0 0.0
        %2399 = vmatpush1.msra.mxu0 0.0
        %2400 = vmatprep.subr.mxu0 0.0
        %2401 = vmatpush1.msra.mxu0 0.0
        %2402 = vmatprep.subr.mxu0 0.0
        %2403 = vmatpush1.msra.mxu0 0.0
        %2404 = vmatprep.subr.mxu0 0.0
        %2405 = vmatpush1.msra.mxu0 0.0
        %2406 = vmatprep.subr.mxu0 0.0
        %2407 = vmatpush1.msra.mxu0 0.0
        %2408 = vmatprep.subr.mxu0 0.0
        %2409 = vmatpush1.msra.mxu0 0.0
        %2410 = vmatprep.subr.mxu0 0.0
        %2411 = vmatpush1.msra.mxu0 0.0
        %2412 = vmatprep.subr.mxu0 0.0
        %2413 = vmatpush1.msra.mxu0 0.0
        %2414 = vmatprep.subr.mxu0 0.0
        %2415 = vmatpush1.msra.mxu0 0.0
        %2416 = vmatprep.subr.mxu0 0.0
        %2417 = vmatpush1.msra.mxu0 0.0
        %2418 = vmatprep.subr.mxu0 0.0
        %2419 = vmatpush1.msra.mxu0 0.0
        %2420 = vmatprep.subr.mxu0 0.0
        %2421 = vmatpush1.msra.mxu0 0.0
        %2422 = vmatprep.subr.mxu0 0.0
        %2423 = vmatpush1.msra.mxu0 0.0
        %2424 = vmatprep.subr.mxu0 0.0
        %2425 = vmatpush1.msra.mxu0 0.0
        %2426 = vmatprep.subr.mxu0 0.0
        %2427 = vmatpush1.msra.mxu0 0.0
        %2428 = vmatprep.subr.mxu0 0.0
        %2429 = vmatpush1.msra.mxu0 0.0
        %2430 = vmatprep.subr.mxu0 0.0
        %2431 = vmatpush1.msra.mxu0 0.0
        %2432 = vmatprep.mubr.f32.mxu0 0.0
        %2433 = vmatmul.mubr.f32.gmra.mrb[0].mxu0 %v2363
        %v2434 = vpop.f32.mrb[0].mxu0
        %v2435 = vadd.f32 %v2360, %v2434
        %v2436 = vpop.f32.mrb[0].mxu0
        %2437 = vmatprep.mubr.f32.mxu0 0.0
        %2438 = vmatmul.mubr.f32.gmra.mrb[0].mxu0 %v2366
        %v2439 = vpop.f32.mrb[0].mxu0
        %v2440 = vadd.f32 %v2360, %v2439
        %v2441 = vpop.f32.mrb[0].mxu0
        %2442 = vdwg.mxu0
        %v2443 = vld [vmem:[%s14] sm:$0xff]
        %v2444 = vld [vmem:[%s14 + $0x8] sm:$0xff]
        %v2445 = vld [vmem:[%s14 + $0x10] sm:$0xff]
        %v2446 = vld [vmem:[%s14 + $0x18] sm:$0xff]
        %v2447 = vld [vmem:[#allocation13] sm:$0x1]
        %v2449 = vsel %vm1270, %v2348, 0
        %v2452 = vsel %vm1270, %v2435, 0
        %v2455 = vsel %vm1270, %v2440, 0
        %2457 = vmatprep.subr.mxu0 0.0
        %2458 = vmatpush1.xpose.msra.mxu0 %v2452
        %2459 = vmatprep.subr.mxu0 0.0
        %2460 = vmatpush1.xpose.msra.mxu0 %v2455
        %2461 = vmatprep.subr.mxu0 0.0
        %2462 = vmatpush1.xpose.msra.mxu0 0.0
        %2463 = vmatprep.subr.mxu0 0.0
        %2464 = vmatpush1.xpose.msra.mxu0 0.0
        %2465 = vmatprep.subr.mxu0 0.0
        %2466 = vmatpush1.xpose.msra.mxu0 0.0
        %2467 = vmatprep.subr.mxu0 0.0
        %2468 = vmatpush1.xpose.msra.mxu0 0.0
        %2469 = vmatprep.subr.mxu0 0.0
        %2470 = vmatpush1.xpose.msra.mxu0 0.0
        %2471 = vmatprep.subr.mxu0 0.0
        %2472 = vmatpush1.xpose.msra.mxu0 0.0
        %2473 = vmatprep.subr.mxu0 0.0
        %2474 = vmatpush1.xpose.msra.mxu0 0.0
        %2475 = vmatprep.subr.mxu0 0.0
        %2476 = vmatpush1.xpose.msra.mxu0 0.0
        %2477 = vmatprep.subr.mxu0 0.0
        %2478 = vmatpush1.xpose.msra.mxu0 0.0
        %2479 = vmatprep.subr.mxu0 0.0
        %2480 = vmatpush1.xpose.msra.mxu0 0.0
        %2481 = vmatprep.subr.mxu0 0.0
        %2482 = vmatpush1.xpose.msra.mxu0 0.0
        %2483 = vmatprep.subr.mxu0 0.0
        %2484 = vmatpush1.xpose.msra.mxu0 0.0
        %2485 = vmatprep.subr.mxu0 0.0
        %2486 = vmatpush1.xpose.msra.mxu0 0.0
        %2487 = vmatprep.subr.mxu0 0.0
        %2488 = vmatpush1.xpose.msra.mxu0 0.0
        %2489 = vmatprep.subr.mxu0 0.0
        %2490 = vmatpush1.xpose.msra.mxu0 0.0
        %2491 = vmatprep.subr.mxu0 0.0
        %2492 = vmatpush1.xpose.msra.mxu0 0.0
        %2493 = vmatprep.subr.mxu0 0.0
        %2494 = vmatpush1.xpose.msra.mxu0 0.0
        %2495 = vmatprep.subr.mxu0 0.0
        %2496 = vmatpush1.xpose.msra.mxu0 0.0
        %2497 = vmatprep.subr.mxu0 0.0
        %2498 = vmatpush1.xpose.msra.mxu0 0.0
        %2499 = vmatprep.subr.mxu0 0.0
        %2500 = vmatpush1.xpose.msra.mxu0 0.0
        %2501 = vmatprep.subr.mxu0 0.0
        %2502 = vmatpush1.xpose.msra.mxu0 0.0
        %2503 = vmatprep.subr.mxu0 0.0
        %2504 = vmatpush1.xpose.msra.mxu0 0.0
        %2505 = vmatprep.subr.mxu0 0.0
        %2506 = vmatpush1.xpose.msra.mxu0 0.0
        %2507 = vmatprep.subr.mxu0 0.0
        %2508 = vmatpush1.xpose.msra.mxu0 0.0
        %2509 = vmatprep.subr.mxu0 0.0
        %2510 = vmatpush1.xpose.msra.mxu0 0.0
        %2511 = vmatprep.subr.mxu0 0.0
        %2512 = vmatpush1.xpose.msra.mxu0 0.0
        %2513 = vmatprep.subr.mxu0 0.0
        %2514 = vmatpush1.xpose.msra.mxu0 0.0
        %2515 = vmatprep.subr.mxu0 0.0
        %2516 = vmatpush1.xpose.msra.mxu0 0.0
        %2517 = vmatprep.subr.mxu0 0.0
        %2518 = vmatpush1.xpose.msra.mxu0 0.0
        %2519 = vmatprep.subr.mxu0 0.0
        %2520 = vmatpush1.xpose.msra.mxu0 0.0
        %2521 = vmatprep.mubr.f32.mxu0 0.0
        %2522 = vmatmul.mubr.f32.gmra.mrb[0].mxu0 %v2449
        %v2523 = vpop.f32.mrb[0].mxu0
        %v2524 = vadd.f32 0.0, %v2523
        %v2525 = vpop.f32.mrb[0].mxu0
        %2526 = vdwg.mxu0
        %v2527 = vmul.f32 %v2524, 0.35355338
        %vm2528 = vcmask 130048
        %v2529 = vsel %vm2528, %v2527, -inf
        %2530 = vmax.xlane.f32.xlu0 %v2529
        %v2531 = vpop.xlane.xlu0 %2530
        %v2532 = vsub.f32 %v2527, %v2531
        %v2533 = vmul.f32 %v2532, 1.442695
        %v2534 = vpow.pop %v2533
        %v2535 = vsel %vm2528, %v2534, 0.0
        %2536 = vadd.xlane.f32.xlu0 %v2535
        %v2537 = vpop.xlane.xlu0 %2536
        %v2538 = vrcp.pop %v2537
        %v2539 = vmul.f32 %v2534, %v2538
        %2540 = vrot.lane.b32.xlu0 %v2435, 96
        %v2541 = vpop.permute.xlu0 %2540
        %2542 = vrot.lane.b32.xlu0 %v2440, 96
        %v2543 = vpop.permute.xlu0 %2542
        %v2547 = vsel %vm2528, %v2539, 0
        %2549 = vmatprep.subr.mxu0 0.0
        %2550 = vmatpush1.msra.mxu0 %v2541
        %2551 = vmatprep.subr.mxu0 0.0
        %2552 = vmatpush1.msra.mxu0 %v2543
        %2553 = vmatprep.subr.mxu0 0.0
        %2554 = vmatpush1.msra.mxu0 0.0
        %2555 = vmatprep.subr.mxu0 0.0
        %2556 = vmatpush1.msra.mxu0 0.0
        %2557 = vmatprep.subr.mxu0 0.0
        %2558 = vmatpush1.msra.mxu0 0.0
        %2559 = vmatprep.subr.mxu0 0.0
        %2560 = vmatpush1.msra.mxu0 0.0
        %2561 = vmatprep.subr.mxu0 0.0
        %2562 = vmatpush1.msra.mxu0 0.0
        %2563 = vmatprep.subr.mxu0 0.0
        %2564 = vmatpush1.msra.mxu0 0.0
        %2565 = vmatprep.subr.mxu0 0.0
        %2566 = vmatpush1.msra.mxu0 0.0
        %2567 = vmatprep.subr.mxu0 0.0
        %2568 = vmatpush1.msra.mxu0 0.0
        %2569 = vmatprep.subr.mxu0 0.0
        %2570 = vmatpush1.msra.mxu0 0.0
        %2571 = vmatprep.subr.mxu0 0.0
        %2572 = vmatpush1.msra.mxu0 0.0
        %2573 = vmatprep.subr.mxu0 0.0
        %2574 = vmatpush1.msra.mxu0 0.0
        %2575 = vmatprep.subr.mxu0 0.0
        %2576 = vmatpush1.msra.mxu0 0.0
        %2577 = vmatprep.subr.mxu0 0.0
        %2578 = vmatpush1.msra.mxu0 0.0
        %2579 = vmatprep.subr.mxu0 0.0
        %2580 = vmatpush1.msra.mxu0 0.0
        %2581 = vmatprep.subr.mxu0 0.0
        %2582 = vmatpush1.msra.mxu0 0.0
        %2583 = vmatprep.subr.mxu0 0.0
        %2584 = vmatpush1.msra.mxu0 0.0
        %2585 = vmatprep.subr.mxu0 0.0
        %2586 = vmatpush1.msra.mxu0 0.0
        %2587 = vmatprep.subr.mxu0 0.0
        %2588 = vmatpush1.msra.mxu0 0.0
        %2589 = vmatprep.subr.mxu0 0.0
        %2590 = vmatpush1.msra.mxu0 0.0
        %2591 = vmatprep.subr.mxu0 0.0
        %2592 = vmatpush1.msra.mxu0 0.0
        %2593 = vmatprep.subr.mxu0 0.0
        %2594 = vmatpush1.msra.mxu0 0.0
        %2595 = vmatprep.subr.mxu0 0.0
        %2596 = vmatpush1.msra.mxu0 0.0
        %2597 = vmatprep.subr.mxu0 0.0
        %2598 = vmatpush1.msra.mxu0 0.0
        %2599 = vmatprep.subr.mxu0 0.0
        %2600 = vmatpush1.msra.mxu0 0.0
        %2601 = vmatprep.subr.mxu0 0.0
        %2602 = vmatpush1.msra.mxu0 0.0
        %2603 = vmatprep.subr.mxu0 0.0
        %2604 = vmatpush1.msra.mxu0 0.0
        %2605 = vmatprep.subr.mxu0 0.0
        %2606 = vmatpush1.msra.mxu0 0.0
        %2607 = vmatprep.subr.mxu0 0.0
        %2608 = vmatpush1.msra.mxu0 0.0
        %2609 = vmatprep.subr.mxu0 0.0
        %2610 = vmatpush1.msra.mxu0 0.0
        %2611 = vmatprep.subr.mxu0 0.0
        %2612 = vmatpush1.msra.mxu0 0.0
        %2613 = vmatprep.mubr.f32.mxu0 0.0
        %2614 = vmatmul.mubr.f32.gmra.mrb[0].mxu0 %v2547
        %v2615 = vpop.f32.mrb[0].mxu0
        %v2616 = vadd.f32 0.0, %v2615
        %v2617 = vpop.f32.mrb[0].mxu0
        %2618 = vdwg.mxu0
        %v2619 = vadd.f32 %v2539, 0.0
        %2620 = vrot.lane.b32.xlu0 %v2348, 120
        %v2621 = vpop.permute.xlu0 %2620
        %2622 = vrot.lane.b32.xlu0 %v2435, 120
        %v2623 = vpop.permute.xlu0 %2622
        %2624 = vrot.lane.b32.xlu0 %v2440, 120
        %v2625 = vpop.permute.xlu0 %2624
        %v2626 = vsel %vm1270, %v2621, 0
        %v2628 = vsel %vm1270, %v2623, 0
        %v2630 = vsel %vm1270, %v2625, 0
        %2632 = vmatprep.subr.mxu0 0.0
        %2633 = vmatpush1.xpose.msra.mxu0 %v2628
        %2634 = vmatprep.subr.mxu0 0.0
        %2635 = vmatpush1.xpose.msra.mxu0 %v2630
        %2636 = vmatprep.subr.mxu0 0.0
        %2637 = vmatpush1.xpose.msra.mxu0 0.0
        %2638 = vmatprep.subr.mxu0 0.0
        %2639 = vmatpush1.xpose.msra.mxu0 0.0
        %2640 = vmatprep.subr.mxu0 0.0
        %2641 = vmatpush1.xpose.msra.mxu0 0.0
        %2642 = vmatprep.subr.mxu0 0.0
        %2643 = vmatpush1.xpose.msra.mxu0 0.0
        %2644 = vmatprep.subr.mxu0 0.0
        %2645 = vmatpush1.xpose.msra.mxu0 0.0
        %2646 = vmatprep.subr.mxu0 0.0
        %2647 = vmatpush1.xpose.msra.mxu0 0.0
        %2648 = vmatprep.subr.mxu0 0.0
        %2649 = vmatpush1.xpose.msra.mxu0 0.0
        %2650 = vmatprep.subr.mxu0 0.0
        %2651 = vmatpush1.xpose.msra.mxu0 0.0
        %2652 = vmatprep.subr.mxu0 0.0
        %2653 = vmatpush1.xpose.msra.mxu0 0.0
        %2654 = vmatprep.subr.mxu0 0.0
        %2655 = vmatpush1.xpose.msra.mxu0 0.0
        %2656 = vmatprep.subr.mxu0 0.0
        %2657 = vmatpush1.xpose.msra.mxu0 0.0
        %2658 = vmatprep.subr.mxu0 0.0
        %2659 = vmatpush1.xpose.msra.mxu0 0.0
        %2660 = vmatprep.subr.mxu0 0.0
        %2661 = vmatpush1.xpose.msra.mxu0 0.0
        %2662 = vmatprep.subr.mxu0 0.0
        %2663 = vmatpush1.xpose.msra.mxu0 0.0
        %2664 = vmatprep.subr.mxu0 0.0
        %2665 = vmatpush1.xpose.msra.mxu0 0.0
        %2666 = vmatprep.subr.mxu0 0.0
        %2667 = vmatpush1.xpose.msra.mxu0 0.0
        %2668 = vmatprep.subr.mxu0 0.0
        %2669 = vmatpush1.xpose.msra.mxu0 0.0
        %2670 = vmatprep.subr.mxu0 0.0
        %2671 = vmatpush1.xpose.msra.mxu0 0.0
        %2672 = vmatprep.subr.mxu0 0.0
        %2673 = vmatpush1.xpose.msra.mxu0 0.0
        %2674 = vmatprep.subr.mxu0 0.0
        %2675 = vmatpush1.xpose.msra.mxu0 0.0
        %2676 = vmatprep.subr.mxu0 0.0
        %2677 = vmatpush1.xpose.msra.mxu0 0.0
        %2678 = vmatprep.subr.mxu0 0.0
        %2679 = vmatpush1.xpose.msra.mxu0 0.0
        %2680 = vmatprep.subr.mxu0 0.0
        %2681 = vmatpush1.xpose.msra.mxu0 0.0
        %2682 = vmatprep.subr.mxu0 0.0
        %2683 = vmatpush1.xpose.msra.mxu0 0.0
        %2684 = vmatprep.subr.mxu0 0.0
        %2685 = vmatpush1.xpose.msra.mxu0 0.0
        %2686 = vmatprep.subr.mxu0 0.0
        %2687 = vmatpush1.xpose.msra.mxu0 0.0
        %2688 = vmatprep.subr.mxu0 0.0
        %2689 = vmatpush1.xpose.msra.mxu0 0.0
        %2690 = vmatprep.subr.mxu0 0.0
        %2691 = vmatpush1.xpose.msra.mxu0 0.0
        %2692 = vmatprep.subr.mxu0 0.0
        %2693 = vmatpush1.xpose.msra.mxu0 0.0
        %2694 = vmatprep.subr.mxu0 0.0
        %2695 = vmatpush1.xpose.msra.mxu0 0.0
        %2696 = vmatprep.mubr.f32.mxu0 0.0
        %2697 = vmatmul.mubr.f32.gmra.mrb[0].mxu0 %v2626
        %v2698 = vpop.f32.mrb[0].mxu0
        %v2699 = vadd.f32 0.0, %v2698
        %v2700 = vpop.f32.mrb[0].mxu0
        %2701 = vdwg.mxu0
        %v2702 = vmul.f32 %v2699, 0.35355338
        %v2703 = vsel %vm2528, %v2702, -inf
        %2704 = vmax.xlane.f32.xlu0 %v2703
        %v2705 = vpop.xlane.xlu0 %2704
        %v2706 = vsub.f32 %v2702, %v2705
        %v2707 = vmul.f32 %v2706, 1.442695
        %v2708 = vpow.pop %v2707
        %v2709 = vsel %vm2528, %v2708, 0.0
        %2710 = vadd.xlane.f32.xlu0 %v2709
        %v2711 = vpop.xlane.xlu0 %2710
        %v2712 = vrcp.pop %v2711
        %v2713 = vmul.f32 %v2708, %v2712
        %2714 = vrot.lane.b32.xlu0 %v2435, 88
        %v2715 = vpop.permute.xlu0 %2714
        %2716 = vrot.lane.b32.xlu0 %v2440, 88
        %v2717 = vpop.permute.xlu0 %2716
        %v2721 = vsel %vm2528, %v2713, 0
        %2723 = vmatprep.subr.mxu0 0.0
        %2724 = vmatpush1.msra.mxu0 %v2715
        %2725 = vmatprep.subr.mxu0 0.0
        %2726 = vmatpush1.msra.mxu0 %v2717
        %2727 = vmatprep.subr.mxu0 0.0
        %2728 = vmatpush1.msra.mxu0 0.0
        %2729 = vmatprep.subr.mxu0 0.0
        %2730 = vmatpush1.msra.mxu0 0.0
        %2731 = vmatprep.subr.mxu0 0.0
        %2732 = vmatpush1.msra.mxu0 0.0
        %2733 = vmatprep.subr.mxu0 0.0
        %2734 = vmatpush1.msra.mxu0 0.0
        %2735 = vmatprep.subr.mxu0 0.0
        %2736 = vmatpush1.msra.mxu0 0.0
        %2737 = vmatprep.subr.mxu0 0.0
        %2738 = vmatpush1.msra.mxu0 0.0
        %2739 = vmatprep.subr.mxu0 0.0
        %2740 = vmatpush1.msra.mxu0 0.0
        %2741 = vmatprep.subr.mxu0 0.0
        %2742 = vmatpush1.msra.mxu0 0.0
        %2743 = vmatprep.subr.mxu0 0.0
        %2744 = vmatpush1.msra.mxu0 0.0
        %2745 = vmatprep.subr.mxu0 0.0
        %2746 = vmatpush1.msra.mxu0 0.0
        %2747 = vmatprep.subr.mxu0 0.0
        %2748 = vmatpush1.msra.mxu0 0.0
        %2749 = vmatprep.subr.mxu0 0.0
        %2750 = vmatpush1.msra.mxu0 0.0
        %2751 = vmatprep.subr.mxu0 0.0
        %2752 = vmatpush1.msra.mxu0 0.0
        %2753 = vmatprep.subr.mxu0 0.0
        %2754 = vmatpush1.msra.mxu0 0.0
        %2755 = vmatprep.subr.mxu0 0.0
        %2756 = vmatpush1.msra.mxu0 0.0
        %2757 = vmatprep.subr.mxu0 0.0
        %2758 = vmatpush1.msra.mxu0 0.0
        %2759 = vmatprep.subr.mxu0 0.0
        %2760 = vmatpush1.msra.mxu0 0.0
        %2761 = vmatprep.subr.mxu0 0.0
        %2762 = vmatpush1.msra.mxu0 0.0
        %2763 = vmatprep.subr.mxu0 0.0
        %2764 = vmatpush1.msra.mxu0 0.0
        %2765 = vmatprep.subr.mxu0 0.0
        %2766 = vmatpush1.msra.mxu0 0.0
        %2767 = vmatprep.subr.mxu0 0.0
        %2768 = vmatpush1.msra.mxu0 0.0
        %2769 = vmatprep.subr.mxu0 0.0
        %2770 = vmatpush1.msra.mxu0 0.0
        %2771 = vmatprep.subr.mxu0 0.0
        %2772 = vmatpush1.msra.mxu0 0.0
        %2773 = vmatprep.subr.mxu0 0.0
        %2774 = vmatpush1.msra.mxu0 0.0
        %2775 = vmatprep.subr.mxu0 0.0
        %2776 = vmatpush1.msra.mxu0 0.0
        %2777 = vmatprep.subr.mxu0 0.0
        %2778 = vmatpush1.msra.mxu0 0.0
        %2779 = vmatprep.subr.mxu0 0.0
        %2780 = vmatpush1.msra.mxu0 0.0
        %2781 = vmatprep.subr.mxu0 0.0
        %2782 = vmatpush1.msra.mxu0 0.0
        %2783 = vmatprep.subr.mxu0 0.0
        %2784 = vmatpush1.msra.mxu0 0.0
        %2785 = vmatprep.subr.mxu0 0.0
        %2786 = vmatpush1.msra.mxu0 0.0
        %2787 = vmatprep.mubr.f32.mxu0 0.0
        %2788 = vmatmul.mubr.f32.gmra.mrb[0].mxu0 %v2721
        %v2789 = vpop.f32.mrb[0].mxu0
        %v2790 = vadd.f32 0.0, %v2789
        %v2791 = vpop.f32.mrb[0].mxu0
        %2792 = vdwg.mxu0
        %v2794 = vsel %vm1270, %v2790, 0
        %2796 = vmatprep.subr.mxu0 0.0
        %2797 = vmatpush1.msra.mxu0 %v2444
        %2798 = vmatprep.subr.mxu0 0.0
        %2799 = vmatpush1.msra.mxu0 0.0
        %2800 = vmatprep.subr.mxu0 0.0
        %2801 = vmatpush1.msra.mxu0 0.0
        %2802 = vmatprep.subr.mxu0 0.0
        %2803 = vmatpush1.msra.mxu0 0.0
        %2804 = vmatprep.subr.mxu0 0.0
        %2805 = vmatpush1.msra.mxu0 0.0
        %2806 = vmatprep.subr.mxu0 0.0
        %2807 = vmatpush1.msra.mxu0 0.0
        %2808 = vmatprep.subr.mxu0 0.0
        %2809 = vmatpush1.msra.mxu0 0.0
        %2810 = vmatprep.subr.mxu0 0.0
        %2811 = vmatpush1.msra.mxu0 0.0
        %2812 = vmatprep.subr.mxu0 0.0
        %2813 = vmatpush1.msra.mxu0 0.0
        %2814 = vmatprep.subr.mxu0 0.0
        %2815 = vmatpush1.msra.mxu0 0.0
        %2816 = vmatprep.subr.mxu0 0.0
        %2817 = vmatpush1.msra.mxu0 0.0
        %2818 = vmatprep.subr.mxu0 0.0
        %2819 = vmatpush1.msra.mxu0 0.0
        %2820 = vmatprep.subr.mxu0 0.0
        %2821 = vmatpush1.msra.mxu0 0.0
        %2822 = vmatprep.subr.mxu0 0.0
        %2823 = vmatpush1.msra.mxu0 0.0
        %2824 = vmatprep.subr.mxu0 0.0
        %2825 = vmatpush1.msra.mxu0 0.0
        %2826 = vmatprep.subr.mxu0 0.0
        %2827 = vmatpush1.msra.mxu0 0.0
        %2828 = vmatprep.subr.mxu0 0.0
        %2829 = vmatpush1.msra.mxu0 0.0
        %2830 = vmatprep.subr.mxu0 0.0
        %2831 = vmatpush1.msra.mxu0 0.0
        %2832 = vmatprep.subr.mxu0 0.0
        %2833 = vmatpush1.msra.mxu0 0.0
        %2834 = vmatprep.subr.mxu0 0.0
        %2835 = vmatpush1.msra.mxu0 0.0
        %2836 = vmatprep.subr.mxu0 0.0
        %2837 = vmatpush1.msra.mxu0 0.0
        %2838 = vmatprep.subr.mxu0 0.0
        %2839 = vmatpush1.msra.mxu0 0.0
        %2840 = vmatprep.subr.mxu0 0.0
        %2841 = vmatpush1.msra.mxu0 0.0
        %2842 = vmatprep.subr.mxu0 0.0
        %2843 = vmatpush1.msra.mxu0 0.0
        %2844 = vmatprep.subr.mxu0 0.0
        %2845 = vmatpush1.msra.mxu0 0.0
        %2846 = vmatprep.subr.mxu0 0.0
        %2847 = vmatpush1.msra.mxu0 0.0
        %2848 = vmatprep.subr.mxu0 0.0
        %2849 = vmatpush1.msra.mxu0 0.0
        %2850 = vmatprep.subr.mxu0 0.0
        %2851 = vmatpush1.msra.mxu0 0.0
        %2852 = vmatprep.subr.mxu0 0.0
        %2853 = vmatpush1.msra.mxu0 0.0
        %2854 = vmatprep.subr.mxu0 0.0
        %2855 = vmatpush1.msra.mxu0 0.0
        %2856 = vmatprep.subr.mxu0 0.0
        %2857 = vmatpush1.msra.mxu0 0.0
        %2858 = vmatprep.subr.mxu0 0.0
        %2859 = vmatpush1.msra.mxu0 0.0
        %2860 = vmatprep.mubr.f32.mxu0 0.0
        %2861 = vmatmul.mubr.f32.gmra.mrb[0].mxu0 %v2794
        %v2862 = vpop.f32.mrb[0].mxu0
        %v2863 = vadd.f32 0.0, %v2862
        %v2864 = vpop.f32.mrb[0].mxu0
        %2865 = vdwg.mxu0
        %v2867 = vsel %vm1270, %v2616, 0
        %2869 = vmatprep.subr.mxu0 0.0
        %2870 = vmatpush1.msra.mxu0 %v2443
        %2871 = vmatprep.subr.mxu0 0.0
        %2872 = vmatpush1.msra.mxu0 0.0
        %2873 = vmatprep.subr.mxu0 0.0
        %2874 = vmatpush1.msra.mxu0 0.0
        %2875 = vmatprep.subr.mxu0 0.0
        %2876 = vmatpush1.msra.mxu0 0.0
        %2877 = vmatprep.subr.mxu0 0.0
        %2878 = vmatpush1.msra.mxu0 0.0
        %2879 = vmatprep.subr.mxu0 0.0
        %2880 = vmatpush1.msra.mxu0 0.0
        %2881 = vmatprep.subr.mxu0 0.0
        %2882 = vmatpush1.msra.mxu0 0.0
        %2883 = vmatprep.subr.mxu0 0.0
        %2884 = vmatpush1.msra.mxu0 0.0
        %2885 = vmatprep.subr.mxu0 0.0
        %2886 = vmatpush1.msra.mxu0 0.0
        %2887 = vmatprep.subr.mxu0 0.0
        %2888 = vmatpush1.msra.mxu0 0.0
        %2889 = vmatprep.subr.mxu0 0.0
        %2890 = vmatpush1.msra.mxu0 0.0
        %2891 = vmatprep.subr.mxu0 0.0
        %2892 = vmatpush1.msra.mxu0 0.0
        %2893 = vmatprep.subr.mxu0 0.0
        %2894 = vmatpush1.msra.mxu0 0.0
        %2895 = vmatprep.subr.mxu0 0.0
        %2896 = vmatpush1.msra.mxu0 0.0
        %2897 = vmatprep.subr.mxu0 0.0
        %2898 = vmatpush1.msra.mxu0 0.0
        %2899 = vmatprep.subr.mxu0 0.0
        %2900 = vmatpush1.msra.mxu0 0.0
        %2901 = vmatprep.subr.mxu0 0.0
        %2902 = vmatpush1.msra.mxu0 0.0
        %2903 = vmatprep.subr.mxu0 0.0
        %2904 = vmatpush1.msra.mxu0 0.0
        %2905 = vmatprep.subr.mxu0 0.0
        %2906 = vmatpush1.msra.mxu0 0.0
        %2907 = vmatprep.subr.mxu0 0.0
        %2908 = vmatpush1.msra.mxu0 0.0
        %2909 = vmatprep.subr.mxu0 0.0
        %2910 = vmatpush1.msra.mxu0 0.0
        %2911 = vmatprep.subr.mxu0 0.0
        %2912 = vmatpush1.msra.mxu0 0.0
        %2913 = vmatprep.subr.mxu0 0.0
        %2914 = vmatpush1.msra.mxu0 0.0
        %2915 = vmatprep.subr.mxu0 0.0
        %2916 = vmatpush1.msra.mxu0 0.0
        %2917 = vmatprep.subr.mxu0 0.0
        %2918 = vmatpush1.msra.mxu0 0.0
        %2919 = vmatprep.subr.mxu0 0.0
        %2920 = vmatpush1.msra.mxu0 0.0
        %2921 = vmatprep.subr.mxu0 0.0
        %2922 = vmatpush1.msra.mxu0 0.0
        %2923 = vmatprep.subr.mxu0 0.0
        %2924 = vmatpush1.msra.mxu0 0.0
        %2925 = vmatprep.subr.mxu0 0.0
        %2926 = vmatpush1.msra.mxu0 0.0
        %2927 = vmatprep.subr.mxu0 0.0
        %2928 = vmatpush1.msra.mxu0 0.0
        %2929 = vmatprep.subr.mxu0 0.0
        %2930 = vmatpush1.msra.mxu0 0.0
        %2931 = vmatprep.subr.mxu0 0.0
        %2932 = vmatpush1.msra.mxu0 0.0
        %2933 = vmatprep.mubr.f32.mxu0 0.0
        %2934 = vmatmul.mubr.f32.gmra.mrb[0].mxu0 %v2867
        %v2935 = vpop.f32.mrb[0].mxu0
        %v2936 = vadd.f32 %v2863, %v2935
        %v2937 = vpop.f32.mrb[0].mxu0
        %2938 = vdwg.mxu0
        %v2939 = vadd.f32 %v2619, %v2713
        %2940 = vrot.lane.b32.xlu0 %v2348, 112
        %v2941 = vpop.permute.xlu0 %2940
        %2942 = vrot.lane.b32.xlu0 %v2435, 112
        %v2943 = vpop.permute.xlu0 %2942
        %2944 = vrot.lane.b32.xlu0 %v2440, 112
        %v2945 = vpop.permute.xlu0 %2944
        %v2946 = vsel %vm1270, %v2941, 0
        %v2948 = vsel %vm1270, %v2943, 0
        %v2950 = vsel %vm1270, %v2945, 0
        %2952 = vmatprep.subr.mxu0 0.0
        %2953 = vmatpush1.xpose.msra.mxu0 %v2948
        %2954 = vmatprep.subr.mxu0 0.0
        %2955 = vmatpush1.xpose.msra.mxu0 %v2950
        %2956 = vmatprep.subr.mxu0 0.0
        %2957 = vmatpush1.xpose.msra.mxu0 0.0
        %2958 = vmatprep.subr.mxu0 0.0
        %2959 = vmatpush1.xpose.msra.mxu0 0.0
        %2960 = vmatprep.subr.mxu0 0.0
        %2961 = vmatpush1.xpose.msra.mxu0 0.0
        %2962 = vmatprep.subr.mxu0 0.0
        %2963 = vmatpush1.xpose.msra.mxu0 0.0
        %2964 = vmatprep.subr.mxu0 0.0
        %2965 = vmatpush1.xpose.msra.mxu0 0.0
        %2966 = vmatprep.subr.mxu0 0.0
        %2967 = vmatpush1.xpose.msra.mxu0 0.0
        %2968 = vmatprep.subr.mxu0 0.0
        %2969 = vmatpush1.xpose.msra.mxu0 0.0
        %2970 = vmatprep.subr.mxu0 0.0
        %2971 = vmatpush1.xpose.msra.mxu0 0.0
        %2972 = vmatprep.subr.mxu0 0.0
        %2973 = vmatpush1.xpose.msra.mxu0 0.0
        %2974 = vmatprep.subr.mxu0 0.0
        %2975 = vmatpush1.xpose.msra.mxu0 0.0
        %2976 = vmatprep.subr.mxu0 0.0
        %2977 = vmatpush1.xpose.msra.mxu0 0.0
        %2978 = vmatprep.subr.mxu0 0.0
        %2979 = vmatpush1.xpose.msra.mxu0 0.0
        %2980 = vmatprep.subr.mxu0 0.0
        %2981 = vmatpush1.xpose.msra.mxu0 0.0
        %2982 = vmatprep.subr.mxu0 0.0
        %2983 = vmatpush1.xpose.msra.mxu0 0.0
        %2984 = vmatprep.subr.mxu0 0.0
        %2985 = vmatpush1.xpose.msra.mxu0 0.0
        %2986 = vmatprep.subr.mxu0 0.0
        %2987 = vmatpush1.xpose.msra.mxu0 0.0
        %2988 = vmatprep.subr.mxu0 0.0
        %2989 = vmatpush1.xpose.msra.mxu0 0.0
        %2990 = vmatprep.subr.mxu0 0.0
        %2991 = vmatpush1.xpose.msra.mxu0 0.0
        %2992 = vmatprep.subr.mxu0 0.0
        %2993 = vmatpush1.xpose.msra.mxu0 0.0
        %2994 = vmatprep.subr.mxu0 0.0
        %2995 = vmatpush1.xpose.msra.mxu0 0.0
        %2996 = vmatprep.subr.mxu0 0.0
        %2997 = vmatpush1.xpose.msra.mxu0 0.0
        %2998 = vmatprep.subr.mxu0 0.0
        %2999 = vmatpush1.xpose.msra.mxu0 0.0
        %3000 = vmatprep.subr.mxu0 0.0
        %3001 = vmatpush1.xpose.msra.mxu0 0.0
        %3002 = vmatprep.subr.mxu0 0.0
        %3003 = vmatpush1.xpose.msra.mxu0 0.0
        %3004 = vmatprep.subr.mxu0 0.0
        %3005 = vmatpush1.xpose.msra.mxu0 0.0
        %3006 = vmatprep.subr.mxu0 0.0
        %3007 = vmatpush1.xpose.msra.mxu0 0.0
        %3008 = vmatprep.subr.mxu0 0.0
        %3009 = vmatpush1.xpose.msra.mxu0 0.0
        %3010 = vmatprep.subr.mxu0 0.0
        %3011 = vmatpush1.xpose.msra.mxu0 0.0
        %3012 = vmatprep.subr.mxu0 0.0
        %3013 = vmatpush1.xpose.msra.mxu0 0.0
        %3014 = vmatprep.subr.mxu0 0.0
        %3015 = vmatpush1.xpose.msra.mxu0 0.0
        %3016 = vmatprep.mubr.f32.mxu0 0.0
        %3017 = vmatmul.mubr.f32.gmra.mrb[0].mxu0 %v2946
        %v3018 = vpop.f32.mrb[0].mxu0
        %v3019 = vadd.f32 0.0, %v3018
        %v3020 = vpop.f32.mrb[0].mxu0
        %3021 = vdwg.mxu0
        %v3022 = vmul.f32 %v3019, 0.35355338
        %v3023 = vsel %vm2528, %v3022, -inf
        %3024 = vmax.xlane.f32.xlu0 %v3023
        %v3025 = vpop.xlane.xlu0 %3024
        %v3026 = vsub.f32 %v3022, %v3025
        %v3027 = vmul.f32 %v3026, 1.442695
        %v3028 = vpow.pop %v3027
        %v3029 = vsel %vm2528, %v3028, 0.0
        %3030 = vadd.xlane.f32.xlu0 %v3029
        %v3031 = vpop.xlane.xlu0 %3030
        %v3032 = vrcp.pop %v3031
        %v3033 = vmul.f32 %v3028, %v3032
        %3034 = vrot.lane.b32.xlu0 %v2435, 80
        %v3035 = vpop.permute.xlu0 %3034
        %3036 = vrot.lane.b32.xlu0 %v2440, 80
        %v3037 = vpop.permute.xlu0 %3036
        %v3041 = vsel %vm2528, %v3033, 0
        %3043 = vmatprep.subr.mxu0 0.0
        %3044 = vmatpush1.msra.mxu0 %v3035
        %3045 = vmatprep.subr.mxu0 0.0
        %3046 = vmatpush1.msra.mxu0 %v3037
        %3047 = vmatprep.subr.mxu0 0.0
        %3048 = vmatpush1.msra.mxu0 0.0
        %3049 = vmatprep.subr.mxu0 0.0
        %3050 = vmatpush1.msra.mxu0 0.0
        %3051 = vmatprep.subr.mxu0 0.0
        %3052 = vmatpush1.msra.mxu0 0.0
        %3053 = vmatprep.subr.mxu0 0.0
        %3054 = vmatpush1.msra.mxu0 0.0
        %3055 = vmatprep.subr.mxu0 0.0
        %3056 = vmatpush1.msra.mxu0 0.0
        %3057 = vmatprep.subr.mxu0 0.0
        %3058 = vmatpush1.msra.mxu0 0.0
        %3059 = vmatprep.subr.mxu0 0.0
        %3060 = vmatpush1.msra.mxu0 0.0
        %3061 = vmatprep.subr.mxu0 0.0
        %3062 = vmatpush1.msra.mxu0 0.0
        %3063 = vmatprep.subr.mxu0 0.0
        %3064 = vmatpush1.msra.mxu0 0.0
        %3065 = vmatprep.subr.mxu0 0.0
        %3066 = vmatpush1.msra.mxu0 0.0
        %3067 = vmatprep.subr.mxu0 0.0
        %3068 = vmatpush1.msra.mxu0 0.0
        %3069 = vmatprep.subr.mxu0 0.0
        %3070 = vmatpush1.msra.mxu0 0.0
        %3071 = vmatprep.subr.mxu0 0.0
        %3072 = vmatpush1.msra.mxu0 0.0
        %3073 = vmatprep.subr.mxu0 0.0
        %3074 = vmatpush1.msra.mxu0 0.0
        %3075 = vmatprep.subr.mxu0 0.0
        %3076 = vmatpush1.msra.mxu0 0.0
        %3077 = vmatprep.subr.mxu0 0.0
        %3078 = vmatpush1.msra.mxu0 0.0
        %3079 = vmatprep.subr.mxu0 0.0
        %3080 = vmatpush1.msra.mxu0 0.0
        %3081 = vmatprep.subr.mxu0 0.0
        %3082 = vmatpush1.msra.mxu0 0.0
        %3083 = vmatprep.subr.mxu0 0.0
        %3084 = vmatpush1.msra.mxu0 0.0
        %3085 = vmatprep.subr.mxu0 0.0
        %3086 = vmatpush1.msra.mxu0 0.0
        %3087 = vmatprep.subr.mxu0 0.0
        %3088 = vmatpush1.msra.mxu0 0.0
        %3089 = vmatprep.subr.mxu0 0.0
        %3090 = vmatpush1.msra.mxu0 0.0
        %3091 = vmatprep.subr.mxu0 0.0
        %3092 = vmatpush1.msra.mxu0 0.0
        %3093 = vmatprep.subr.mxu0 0.0
        %3094 = vmatpush1.msra.mxu0 0.0
        %3095 = vmatprep.subr.mxu0 0.0
        %3096 = vmatpush1.msra.mxu0 0.0
        %3097 = vmatprep.subr.mxu0 0.0
        %3098 = vmatpush1.msra.mxu0 0.0
        %3099 = vmatprep.subr.mxu0 0.0
        %3100 = vmatpush1.msra.mxu0 0.0
        %3101 = vmatprep.subr.mxu0 0.0
        %3102 = vmatpush1.msra.mxu0 0.0
        %3103 = vmatprep.subr.mxu0 0.0
        %3104 = vmatpush1.msra.mxu0 0.0
        %3105 = vmatprep.subr.mxu0 0.0
        %3106 = vmatpush1.msra.mxu0 0.0
        %3107 = vmatprep.mubr.f32.mxu0 0.0
        %3108 = vmatmul.mubr.f32.gmra.mrb[0].mxu0 %v3041
        %v3109 = vpop.f32.mrb[0].mxu0
        %v3110 = vadd.f32 0.0, %v3109
        %v3111 = vpop.f32.mrb[0].mxu0
        %3112 = vdwg.mxu0
        %v3114 = vsel %vm1270, %v3110, 0
        %3116 = vmatprep.subr.mxu0 0.0
        %3117 = vmatpush1.msra.mxu0 %v2445
        %3118 = vmatprep.subr.mxu0 0.0
        %3119 = vmatpush1.msra.mxu0 0.0
        %3120 = vmatprep.subr.mxu0 0.0
        %3121 = vmatpush1.msra.mxu0 0.0
        %3122 = vmatprep.subr.mxu0 0.0
        %3123 = vmatpush1.msra.mxu0 0.0
        %3124 = vmatprep.subr.mxu0 0.0
        %3125 = vmatpush1.msra.mxu0 0.0
        %3126 = vmatprep.subr.mxu0 0.0
        %3127 = vmatpush1.msra.mxu0 0.0
        %3128 = vmatprep.subr.mxu0 0.0
        %3129 = vmatpush1.msra.mxu0 0.0
        %3130 = vmatprep.subr.mxu0 0.0
        %3131 = vmatpush1.msra.mxu0 0.0
        %3132 = vmatprep.subr.mxu0 0.0
        %3133 = vmatpush1.msra.mxu0 0.0
        %3134 = vmatprep.subr.mxu0 0.0
        %3135 = vmatpush1.msra.mxu0 0.0
        %3136 = vmatprep.subr.mxu0 0.0
        %3137 = vmatpush1.msra.mxu0 0.0
        %3138 = vmatprep.subr.mxu0 0.0
        %3139 = vmatpush1.msra.mxu0 0.0
        %3140 = vmatprep.subr.mxu0 0.0
        %3141 = vmatpush1.msra.mxu0 0.0
        %3142 = vmatprep.subr.mxu0 0.0
        %3143 = vmatpush1.msra.mxu0 0.0
        %3144 = vmatprep.subr.mxu0 0.0
        %3145 = vmatpush1.msra.mxu0 0.0
        %3146 = vmatprep.subr.mxu0 0.0
        %3147 = vmatpush1.msra.mxu0 0.0
        %3148 = vmatprep.subr.mxu0 0.0
        %3149 = vmatpush1.msra.mxu0 0.0
        %3150 = vmatprep.subr.mxu0 0.0
        %3151 = vmatpush1.msra.mxu0 0.0
        %3152 = vmatprep.subr.mxu0 0.0
        %3153 = vmatpush1.msra.mxu0 0.0
        %3154 = vmatprep.subr.mxu0 0.0
        %3155 = vmatpush1.msra.mxu0 0.0
        %3156 = vmatprep.subr.mxu0 0.0
        %3157 = vmatpush1.msra.mxu0 0.0
        %3158 = vmatprep.subr.mxu0 0.0
        %3159 = vmatpush1.msra.mxu0 0.0
        %3160 = vmatprep.subr.mxu0 0.0
        %3161 = vmatpush1.msra.mxu0 0.0
        %3162 = vmatprep.subr.mxu0 0.0
        %3163 = vmatpush1.msra.mxu0 0.0
        %3164 = vmatprep.subr.mxu0 0.0
        %3165 = vmatpush1.msra.mxu0 0.0
        %3166 = vmatprep.subr.mxu0 0.0
        %3167 = vmatpush1.msra.mxu0 0.0
        %3168 = vmatprep.subr.mxu0 0.0
        %3169 = vmatpush1.msra.mxu0 0.0
        %3170 = vmatprep.subr.mxu0 0.0
        %3171 = vmatpush1.msra.mxu0 0.0
        %3172 = vmatprep.subr.mxu0 0.0
        %3173 = vmatpush1.msra.mxu0 0.0
        %3174 = vmatprep.subr.mxu0 0.0
        %3175 = vmatpush1.msra.mxu0 0.0
        %3176 = vmatprep.subr.mxu0 0.0
        %3177 = vmatpush1.msra.mxu0 0.0
        %3178 = vmatprep.subr.mxu0 0.0
        %3179 = vmatpush1.msra.mxu0 0.0
        %3180 = vmatprep.mubr.f32.mxu0 0.0
        %3181 = vmatmul.mubr.f32.gmra.mrb[0].mxu0 %v3114
        %v3182 = vpop.f32.mrb[0].mxu0
        %v3183 = vadd.f32 0.0, %v3182
        %v3184 = vpop.f32.mrb[0].mxu0
        %3185 = vdwg.mxu0
        %v3186 = vadd.f32 %v2936, %v3183
        %v3187 = vadd.f32 %v2939, %v3033
        %3188 = vrot.lane.b32.xlu0 %v2348, 104
        %v3189 = vpop.permute.xlu0 %3188
        %3190 = vrot.lane.b32.xlu0 %v2435, 104
        %v3191 = vpop.permute.xlu0 %3190
        %3192 = vrot.lane.b32.xlu0 %v2440, 104
        %v3193 = vpop.permute.xlu0 %3192
        %v3194 = vsel %vm1270, %v3189, 0
        %v3196 = vsel %vm1270, %v3191, 0
        %v3198 = vsel %vm1270, %v3193, 0
        %3200 = vmatprep.subr.mxu0 0.0
        %3201 = vmatpush1.xpose.msra.mxu0 %v3196
        %3202 = vmatprep.subr.mxu0 0.0
        %3203 = vmatpush1.xpose.msra.mxu0 %v3198
        %3204 = vmatprep.subr.mxu0 0.0
        %3205 = vmatpush1.xpose.msra.mxu0 0.0
        %3206 = vmatprep.subr.mxu0 0.0
        %3207 = vmatpush1.xpose.msra.mxu0 0.0
        %3208 = vmatprep.subr.mxu0 0.0
        %3209 = vmatpush1.xpose.msra.mxu0 0.0
        %3210 = vmatprep.subr.mxu0 0.0
        %3211 = vmatpush1.xpose.msra.mxu0 0.0
        %3212 = vmatprep.subr.mxu0 0.0
        %3213 = vmatpush1.xpose.msra.mxu0 0.0
        %3214 = vmatprep.subr.mxu0 0.0
        %3215 = vmatpush1.xpose.msra.mxu0 0.0
        %3216 = vmatprep.subr.mxu0 0.0
        %3217 = vmatpush1.xpose.msra.mxu0 0.0
        %3218 = vmatprep.subr.mxu0 0.0
        %3219 = vmatpush1.xpose.msra.mxu0 0.0
        %3220 = vmatprep.subr.mxu0 0.0
        %3221 = vmatpush1.xpose.msra.mxu0 0.0
        %3222 = vmatprep.subr.mxu0 0.0
        %3223 = vmatpush1.xpose.msra.mxu0 0.0
        %3224 = vmatprep.subr.mxu0 0.0
        %3225 = vmatpush1.xpose.msra.mxu0 0.0
        %3226 = vmatprep.subr.mxu0 0.0
        %3227 = vmatpush1.xpose.msra.mxu0 0.0
        %3228 = vmatprep.subr.mxu0 0.0
        %3229 = vmatpush1.xpose.msra.mxu0 0.0
        %3230 = vmatprep.subr.mxu0 0.0
        %3231 = vmatpush1.xpose.msra.mxu0 0.0
        %3232 = vmatprep.subr.mxu0 0.0
        %3233 = vmatpush1.xpose.msra.mxu0 0.0
        %3234 = vmatprep.subr.mxu0 0.0
        %3235 = vmatpush1.xpose.msra.mxu0 0.0
        %3236 = vmatprep.subr.mxu0 0.0
        %3237 = vmatpush1.xpose.msra.mxu0 0.0
        %3238 = vmatprep.subr.mxu0 0.0
        %3239 = vmatpush1.xpose.msra.mxu0 0.0
        %3240 = vmatprep.subr.mxu0 0.0
        %3241 = vmatpush1.xpose.msra.mxu0 0.0
        %3242 = vmatprep.subr.mxu0 0.0
        %3243 = vmatpush1.xpose.msra.mxu0 0.0
        %3244 = vmatprep.subr.mxu0 0.0
        %3245 = vmatpush1.xpose.msra.mxu0 0.0
        %3246 = vmatprep.subr.mxu0 0.0
        %3247 = vmatpush1.xpose.msra.mxu0 0.0
        %3248 = vmatprep.subr.mxu0 0.0
        %3249 = vmatpush1.xpose.msra.mxu0 0.0
        %3250 = vmatprep.subr.mxu0 0.0
        %3251 = vmatpush1.xpose.msra.mxu0 0.0
        %3252 = vmatprep.subr.mxu0 0.0
        %3253 = vmatpush1.xpose.msra.mxu0 0.0
        %3254 = vmatprep.subr.mxu0 0.0
        %3255 = vmatpush1.xpose.msra.mxu0 0.0
        %3256 = vmatprep.subr.mxu0 0.0
        %3257 = vmatpush1.xpose.msra.mxu0 0.0
        %3258 = vmatprep.subr.mxu0 0.0
        %3259 = vmatpush1.xpose.msra.mxu0 0.0
        %3260 = vmatprep.subr.mxu0 0.0
        %3261 = vmatpush1.xpose.msra.mxu0 0.0
        %3262 = vmatprep.subr.mxu0 0.0
        %3263 = vmatpush1.xpose.msra.mxu0 0.0
        %3264 = vmatprep.mubr.f32.mxu0 0.0
        %3265 = vmatmul.mubr.f32.gmra.mrb[0].mxu0 %v3194
        %v3266 = vpop.f32.mrb[0].mxu0
        %v3267 = vadd.f32 0.0, %v3266
        %v3268 = vpop.f32.mrb[0].mxu0
        %3269 = vdwg.mxu0
        %v3270 = vmul.f32 %v3267, 0.35355338
        %v3271 = vsel %vm2528, %v3270, -inf
        %3272 = vmax.xlane.f32.xlu0 %v3271
        %v3273 = vpop.xlane.xlu0 %3272
        %v3274 = vsub.f32 %v3270, %v3273
        %v3275 = vmul.f32 %v3274, 1.442695
        %v3276 = vpow.pop %v3275
        %v3277 = vsel %vm2528, %v3276, 0.0
        %3278 = vadd.xlane.f32.xlu0 %v3277
        %v3279 = vpop.xlane.xlu0 %3278
        %v3280 = vrcp.pop %v3279
        %v3281 = vmul.f32 %v3276, %v3280
        %3282 = vrot.lane.b32.xlu0 %v2435, 72
        %v3283 = vpop.permute.xlu0 %3282
        %3284 = vrot.lane.b32.xlu0 %v2440, 72
        %v3285 = vpop.permute.xlu0 %3284
        %v3289 = vsel %vm2528, %v3281, 0
        %3291 = vmatprep.subr.mxu0 0.0
        %3292 = vmatpush1.msra.mxu0 %v3283
        %3293 = vmatprep.subr.mxu0 0.0
        %3294 = vmatpush1.msra.mxu0 %v3285
        %3295 = vmatprep.subr.mxu0 0.0
        %3296 = vmatpush1.msra.mxu0 0.0
        %3297 = vmatprep.subr.mxu0 0.0
        %3298 = vmatpush1.msra.mxu0 0.0
        %3299 = vmatprep.subr.mxu0 0.0
        %3300 = vmatpush1.msra.mxu0 0.0
        %3301 = vmatprep.subr.mxu0 0.0
        %3302 = vmatpush1.msra.mxu0 0.0
        %3303 = vmatprep.subr.mxu0 0.0
        %3304 = vmatpush1.msra.mxu0 0.0
        %3305 = vmatprep.subr.mxu0 0.0
        %3306 = vmatpush1.msra.mxu0 0.0
        %3307 = vmatprep.subr.mxu0 0.0
        %3308 = vmatpush1.msra.mxu0 0.0
        %3309 = vmatprep.subr.mxu0 0.0
        %3310 = vmatpush1.msra.mxu0 0.0
        %3311 = vmatprep.subr.mxu0 0.0
        %3312 = vmatpush1.msra.mxu0 0.0
        %3313 = vmatprep.subr.mxu0 0.0
        %3314 = vmatpush1.msra.mxu0 0.0
        %3315 = vmatprep.subr.mxu0 0.0
        %3316 = vmatpush1.msra.mxu0 0.0
        %3317 = vmatprep.subr.mxu0 0.0
        %3318 = vmatpush1.msra.mxu0 0.0
        %3319 = vmatprep.subr.mxu0 0.0
        %3320 = vmatpush1.msra.mxu0 0.0
        %3321 = vmatprep.subr.mxu0 0.0
        %3322 = vmatpush1.msra.mxu0 0.0
        %3323 = vmatprep.subr.mxu0 0.0
        %3324 = vmatpush1.msra.mxu0 0.0
        %3325 = vmatprep.subr.mxu0 0.0
        %3326 = vmatpush1.msra.mxu0 0.0
        %3327 = vmatprep.subr.mxu0 0.0
        %3328 = vmatpush1.msra.mxu0 0.0
        %3329 = vmatprep.subr.mxu0 0.0
        %3330 = vmatpush1.msra.mxu0 0.0
        %3331 = vmatprep.subr.mxu0 0.0
        %3332 = vmatpush1.msra.mxu0 0.0
        %3333 = vmatprep.subr.mxu0 0.0
        %3334 = vmatpush1.msra.mxu0 0.0
        %3335 = vmatprep.subr.mxu0 0.0
        %3336 = vmatpush1.msra.mxu0 0.0
        %3337 = vmatprep.subr.mxu0 0.0
        %3338 = vmatpush1.msra.mxu0 0.0
        %3339 = vmatprep.subr.mxu0 0.0
        %3340 = vmatpush1.msra.mxu0 0.0
        %3341 = vmatprep.subr.mxu0 0.0
        %3342 = vmatpush1.msra.mxu0 0.0
        %3343 = vmatprep.subr.mxu0 0.0
        %3344 = vmatpush1.msra.mxu0 0.0
        %3345 = vmatprep.subr.mxu0 0.0
        %3346 = vmatpush1.msra.mxu0 0.0
        %3347 = vmatprep.subr.mxu0 0.0
        %3348 = vmatpush1.msra.mxu0 0.0
        %3349 = vmatprep.subr.mxu0 0.0
        %3350 = vmatpush1.msra.mxu0 0.0
        %3351 = vmatprep.subr.mxu0 0.0
        %3352 = vmatpush1.msra.mxu0 0.0
        %3353 = vmatprep.subr.mxu0 0.0
        %3354 = vmatpush1.msra.mxu0 0.0
        %3355 = vmatprep.mubr.f32.mxu0 0.0
        %3356 = vmatmul.mubr.f32.gmra.mrb[0].mxu0 %v3289
        %v3357 = vpop.f32.mrb[0].mxu0
        %v3358 = vadd.f32 0.0, %v3357
        %v3359 = vpop.f32.mrb[0].mxu0
        %3360 = vdwg.mxu0
        %v3362 = vsel %vm1270, %v3358, 0
        %3364 = vmatprep.subr.mxu0 0.0
        %3365 = vmatpush1.msra.mxu0 %v2446
        %3366 = vmatprep.subr.mxu0 0.0
        %3367 = vmatpush1.msra.mxu0 0.0
        %3368 = vmatprep.subr.mxu0 0.0
        %3369 = vmatpush1.msra.mxu0 0.0
        %3370 = vmatprep.subr.mxu0 0.0
        %3371 = vmatpush1.msra.mxu0 0.0
        %3372 = vmatprep.subr.mxu0 0.0
        %3373 = vmatpush1.msra.mxu0 0.0
        %3374 = vmatprep.subr.mxu0 0.0
        %3375 = vmatpush1.msra.mxu0 0.0
        %3376 = vmatprep.subr.mxu0 0.0
        %3377 = vmatpush1.msra.mxu0 0.0
        %3378 = vmatprep.subr.mxu0 0.0
        %3379 = vmatpush1.msra.mxu0 0.0
        %3380 = vmatprep.subr.mxu0 0.0
        %3381 = vmatpush1.msra.mxu0 0.0
        %3382 = vmatprep.subr.mxu0 0.0
        %3383 = vmatpush1.msra.mxu0 0.0
        %3384 = vmatprep.subr.mxu0 0.0
        %3385 = vmatpush1.msra.mxu0 0.0
        %3386 = vmatprep.subr.mxu0 0.0
        %3387 = vmatpush1.msra.mxu0 0.0
        %3388 = vmatprep.subr.mxu0 0.0
        %3389 = vmatpush1.msra.mxu0 0.0
        %3390 = vmatprep.subr.mxu0 0.0
        %3391 = vmatpush1.msra.mxu0 0.0
        %3392 = vmatprep.subr.mxu0 0.0
        %3393 = vmatpush1.msra.mxu0 0.0
        %3394 = vmatprep.subr.mxu0 0.0
        %3395 = vmatpush1.msra.mxu0 0.0
        %3396 = vmatprep.subr.mxu0 0.0
        %3397 = vmatpush1.msra.mxu0 0.0
        %3398 = vmatprep.subr.mxu0 0.0
        %3399 = vmatpush1.msra.mxu0 0.0
        %3400 = vmatprep.subr.mxu0 0.0
        %3401 = vmatpush1.msra.mxu0 0.0
        %3402 = vmatprep.subr.mxu0 0.0
        %3403 = vmatpush1.msra.mxu0 0.0
        %3404 = vmatprep.subr.mxu0 0.0
        %3405 = vmatpush1.msra.mxu0 0.0
        %3406 = vmatprep.subr.mxu0 0.0
        %3407 = vmatpush1.msra.mxu0 0.0
        %3408 = vmatprep.subr.mxu0 0.0
        %3409 = vmatpush1.msra.mxu0 0.0
        %3410 = vmatprep.subr.mxu0 0.0
        %3411 = vmatpush1.msra.mxu0 0.0
        %3412 = vmatprep.subr.mxu0 0.0
        %3413 = vmatpush1.msra.mxu0 0.0
        %3414 = vmatprep.subr.mxu0 0.0
        %3415 = vmatpush1.msra.mxu0 0.0
        %3416 = vmatprep.subr.mxu0 0.0
        %3417 = vmatpush1.msra.mxu0 0.0
        %3418 = vmatprep.subr.mxu0 0.0
        %3419 = vmatpush1.msra.mxu0 0.0
        %3420 = vmatprep.subr.mxu0 0.0
        %3421 = vmatpush1.msra.mxu0 0.0
        %3422 = vmatprep.subr.mxu0 0.0
        %3423 = vmatpush1.msra.mxu0 0.0
        %3424 = vmatprep.subr.mxu0 0.0
        %3425 = vmatpush1.msra.mxu0 0.0
        %3426 = vmatprep.subr.mxu0 0.0
        %3427 = vmatpush1.msra.mxu0 0.0
        %3428 = vmatprep.mubr.f32.mxu0 0.0
        %3429 = vmatmul.mubr.f32.gmra.mrb[0].mxu0 %v3362
        %v3430 = vpop.f32.mrb[0].mxu0
        %v3431 = vadd.f32 0.0, %v3430
        %v3432 = vpop.f32.mrb[0].mxu0
        %3433 = vdwg.mxu0
        %v3434 = vadd.f32 %v3186, %v3431
        %v3435 = vadd.f32 %v3187, %v3281
        %v3437 = vlaneseq
        %v3438 = vshrl.u32 %v3437, 7
        %v3439 = vsub.s32 0, %v3438
        %v3440 = vrot.slane %v2447, %v3439
        %v3442 = vadd.f32 %v3434, %v3440
        %v3443 = vmul.f32 %v3435, 0.25
        %v3444 = vadd.f32 %v2266, %v3442
        %v3445 = vld [vmem:[#allocation15] sm:$0x1]
        %v3446 = vld [vmem:[#allocation16] sm:$0x1]
        %v3447 = vsel %vm1080, %v3444, 0.0
        %3448 = vadd.xlane.f32.xlu0 %v3447
        %v3449 = vpop.xlane.xlu0 %3448
        %v3450 = vmul.f32 %v3449, %v2242
        %v3451 = vsub.f32 %v3444, %v3450
        %v3452 = vmul.f32 %v3451, %v3451
        %v3453 = vsel %vm1080, %v3452, 0.0
        %3454 = vadd.xlane.f32.xlu0 %v3453
        %v3455 = vpop.xlane.xlu0 %3454
        %v3456 = vmul.f32 %v3455, %v2242
        %v3457 = vadd.f32 %v3456, 1e-05
        %v3458 = vrsqrt.pop %v3457
        %v3459 = vmul.f32 %v3451, %v3458
        %v3461 = vlaneseq
        %v3462 = vshrl.u32 %v3461, 7
        %v3463 = vsub.s32 0, %v3462
        %v3464 = vrot.slane %v3445, %v3463
        %v3466 = vmul.f32 %v3459, %v3464
        %v3468 = vlaneseq
        %v3469 = vshrl.u32 %v3468, 7
        %v3470 = vsub.s32 0, %v3469
        %v3471 = vrot.slane %v3446, %v3470
        %v3473 = vadd.f32 %v3466, %v3471
        %3474 = vst.msk [vmem:[%s1021] sm:$0xff] %vm2528, %v3443
        %v3475 = vld [vmem:[#allocation18] sm:$0xff]
        %v3476 = vld [vmem:[#allocation18 + $0x8] sm:$0xff]
        %v3477 = vld [vmem:[#allocation18 + $0x10] sm:$0xff]
        %v3478 = vld [vmem:[#allocation18 + $0x18] sm:$0xff]
        %v3479 = vld [vmem:[#allocation19] sm:$0x1]
        %v3481 = vlaneseq
        %v3482 = vshrl.u32 %v3481, 7
        %v3483 = vsub.s32 0, %v3482
        %v3484 = vrot.slane %v3479, %v3483
        %v3487 = vsel %vm1080, %v3473, 0
        %3489 = vmatprep.subr.mxu0 0.0
        %3490 = vmatpush1.msra.mxu0 %v3475
        %3491 = vmatprep.subr.mxu0 0.0
        %3492 = vmatpush1.msra.mxu0 %v3476
        %3493 = vmatprep.subr.mxu0 0.0
        %3494 = vmatpush1.msra.mxu0 %v3477
        %3495 = vmatprep.subr.mxu0 0.0
        %3496 = vmatpush1.msra.mxu0 %v3478
        %3497 = vmatprep.subr.mxu0 0.0
        %3498 = vmatpush1.msra.mxu0 0.0
        %3499 = vmatprep.subr.mxu0 0.0
        %3500 = vmatpush1.msra.mxu0 0.0
        %3501 = vmatprep.subr.mxu0 0.0
        %3502 = vmatpush1.msra.mxu0 0.0
        %3503 = vmatprep.subr.mxu0 0.0
        %3504 = vmatpush1.msra.mxu0 0.0
        %3505 = vmatprep.subr.mxu0 0.0
        %3506 = vmatpush1.msra.mxu0 0.0
        %3507 = vmatprep.subr.mxu0 0.0
        %3508 = vmatpush1.msra.mxu0 0.0
        %3509 = vmatprep.subr.mxu0 0.0
        %3510 = vmatpush1.msra.mxu0 0.0
        %3511 = vmatprep.subr.mxu0 0.0
        %3512 = vmatpush1.msra.mxu0 0.0
        %3513 = vmatprep.subr.mxu0 0.0
        %3514 = vmatpush1.msra.mxu0 0.0
        %3515 = vmatprep.subr.mxu0 0.0
        %3516 = vmatpush1.msra.mxu0 0.0
        %3517 = vmatprep.subr.mxu0 0.0
        %3518 = vmatpush1.msra.mxu0 0.0
        %3519 = vmatprep.subr.mxu0 0.0
        %3520 = vmatpush1.msra.mxu0 0.0
        %3521 = vmatprep.subr.mxu0 0.0
        %3522 = vmatpush1.msra.mxu0 0.0
        %3523 = vmatprep.subr.mxu0 0.0
        %3524 = vmatpush1.msra.mxu0 0.0
        %3525 = vmatprep.subr.mxu0 0.0
        %3526 = vmatpush1.msra.mxu0 0.0
        %3527 = vmatprep.subr.mxu0 0.0
        %3528 = vmatpush1.msra.mxu0 0.0
        %3529 = vmatprep.subr.mxu0 0.0
        %3530 = vmatpush1.msra.mxu0 0.0
        %3531 = vmatprep.subr.mxu0 0.0
        %3532 = vmatpush1.msra.mxu0 0.0
        %3533 = vmatprep.subr.mxu0 0.0
        %3534 = vmatpush1.msra.mxu0 0.0
        %3535 = vmatprep.subr.mxu0 0.0
        %3536 = vmatpush1.msra.mxu0 0.0
        %3537 = vmatprep.subr.mxu0 0.0
        %3538 = vmatpush1.msra.mxu0 0.0
        %3539 = vmatprep.subr.mxu0 0.0
        %3540 = vmatpush1.msra.mxu0 0.0
        %3541 = vmatprep.subr.mxu0 0.0
        %3542 = vmatpush1.msra.mxu0 0.0
        %3543 = vmatprep.subr.mxu0 0.0
        %3544 = vmatpush1.msra.mxu0 0.0
        %3545 = vmatprep.subr.mxu0 0.0
        %3546 = vmatpush1.msra.mxu0 0.0
        %3547 = vmatprep.subr.mxu0 0.0
        %3548 = vmatpush1.msra.mxu0 0.0
        %3549 = vmatprep.subr.mxu0 0.0
        %3550 = vmatpush1.msra.mxu0 0.0
        %3551 = vmatprep.subr.mxu0 0.0
        %3552 = vmatpush1.msra.mxu0 0.0
        %3553 = vmatprep.mubr.f32.mxu0 0.0
        %3554 = vmatmul.mubr.f32.gmra.mrb[0].mxu0 %v3487
        %v3555 = vpop.f32.mrb[0].mxu0
        %v3556 = vadd.f32 %v3484, %v3555
        %v3557 = vpop.f32.mrb[0].mxu0
        %3558 = vdwg.mxu0
        %v3559 = vmax.f32 %v3556, 0.0
        %v3560 = vld [vmem:[%s20] sm:$0xff]
        %v3561 = vld [vmem:[%s20 + $0x8] sm:$0xff]
        %v3562 = vld [vmem:[%s20 + $0x10] sm:$0xff]
        %v3563 = vld [vmem:[%s20 + $0x18] sm:$0xff]
        %v3564 = vld [vmem:[%s20 + $0x20] sm:$0xff]
        %v3565 = vld [vmem:[%s20 + $0x28] sm:$0xff]
        %v3566 = vld [vmem:[%s20 + $0x30] sm:$0xff]
        %v3567 = vld [vmem:[%s20 + $0x38] sm:$0xff]
        %v3568 = vld [vmem:[#allocation21] sm:$0x1]
        %v3570 = vlaneseq
        %v3571 = vshrl.u32 %v3570, 7
        %v3572 = vsub.s32 0, %v3571
        %v3573 = vrot.slane %v3568, %v3572
        %vm3575 = vcmask 523264
        %v3577 = vsel %vm3575, %v3559, 0
        %3579 = vmatprep.subr.mxu0 0.0
        %3580 = vmatpush1.msra.mxu0 %v3560
        %3581 = vmatprep.subr.mxu0 0.0
        %3582 = vmatpush1.msra.mxu0 %v3561
        %3583 = vmatprep.subr.mxu0 0.0
        %3584 = vmatpush1.msra.mxu0 %v3562
        %3585 = vmatprep.subr.mxu0 0.0
        %3586 = vmatpush1.msra.mxu0 %v3563
        %3587 = vmatprep.subr.mxu0 0.0
        %3588 = vmatpush1.msra.mxu0 %v3564
        %3589 = vmatprep.subr.mxu0 0.0
        %3590 = vmatpush1.msra.mxu0 %v3565
        %3591 = vmatprep.subr.mxu0 0.0
        %3592 = vmatpush1.msra.mxu0 %v3566
        %3593 = vmatprep.subr.mxu0 0.0
        %3594 = vmatpush1.msra.mxu0 %v3567
        %3595 = vmatprep.subr.mxu0 0.0
        %3596 = vmatpush1.msra.mxu0 0.0
        %3597 = vmatprep.subr.mxu0 0.0
        %3598 = vmatpush1.msra.mxu0 0.0
        %3599 = vmatprep.subr.mxu0 0.0
        %3600 = vmatpush1.msra.mxu0 0.0
        %3601 = vmatprep.subr.mxu0 0.0
        %3602 = vmatpush1.msra.mxu0 0.0
        %3603 = vmatprep.subr.mxu0 0.0
        %3604 = vmatpush1.msra.mxu0 0.0
        %3605 = vmatprep.subr.mxu0 0.0
        %3606 = vmatpush1.msra.mxu0 0.0
        %3607 = vmatprep.subr.mxu0 0.0
        %3608 = vmatpush1.msra.mxu0 0.0
        %3609 = vmatprep.subr.mxu0 0.0
        %3610 = vmatpush1.msra.mxu0 0.0
        %3611 = vmatprep.subr.mxu0 0.0
        %3612 = vmatpush1.msra.mxu0 0.0
        %3613 = vmatprep.subr.mxu0 0.0
        %3614 = vmatpush1.msra.mxu0 0.0
        %3615 = vmatprep.subr.mxu0 0.0
        %3616 = vmatpush1.msra.mxu0 0.0
        %3617 = vmatprep.subr.mxu0 0.0
        %3618 = vmatpush1.msra.mxu0 0.0
        %3619 = vmatprep.subr.mxu0 0.0
        %3620 = vmatpush1.msra.mxu0 0.0
        %3621 = vmatprep.subr.mxu0 0.0
        %3622 = vmatpush1.msra.mxu0 0.0
        %3623 = vmatprep.subr.mxu0 0.0
        %3624 = vmatpush1.msra.mxu0 0.0
        %3625 = vmatprep.subr.mxu0 0.0
        %3626 = vmatpush1.msra.mxu0 0.0
        %3627 = vmatprep.subr.mxu0 0.0
        %3628 = vmatpush1.msra.mxu0 0.0
        %3629 = vmatprep.subr.mxu0 0.0
        %3630 = vmatpush1.msra.mxu0 0.0
        %3631 = vmatprep.subr.mxu0 0.0
        %3632 = vmatpush1.msra.mxu0 0.0
        %3633 = vmatprep.subr.mxu0 0.0
        %3634 = vmatpush1.msra.mxu0 0.0
        %3635 = vmatprep.subr.mxu0 0.0
        %3636 = vmatpush1.msra.mxu0 0.0
        %3637 = vmatprep.subr.mxu0 0.0
        %3638 = vmatpush1.msra.mxu0 0.0
        %3639 = vmatprep.subr.mxu0 0.0
        %3640 = vmatpush1.msra.mxu0 0.0
        %3641 = vmatprep.subr.mxu0 0.0
        %3642 = vmatpush1.msra.mxu0 0.0
        %3643 = vmatprep.mubr.f32.mxu0 0.0
        %3644 = vmatmul.mubr.f32.gmra.mrb[0].mxu0 %v3577
        %v3645 = vpop.f32.mrb[0].mxu0
        %v3646 = vadd.f32 %v3573, %v3645
        %v3647 = vpop.f32.mrb[0].mxu0
        %3648 = vdwg.mxu0
        %v3649 = vadd.f32 %v3473, %v3646
        %v3650 = vld [vmem:[#allocation22] sm:$0x1]
        %v3651 = vld [vmem:[#allocation24] sm:$0x1]
        %v3652 = vsel %vm1080, %v3649, 0.0
        %3653 = vadd.xlane.f32.xlu0 %v3652
        %v3654 = vpop.xlane.xlu0 %3653
        %v3655 = vmul.f32 %v3654, %v2242
        %v3656 = vsub.f32 %v3649, %v3655
        %v3657 = vmul.f32 %v3656, %v3656
        %v3658 = vsel %vm1080, %v3657, 0.0
        %3659 = vadd.xlane.f32.xlu0 %v3658
        %v3660 = vpop.xlane.xlu0 %3659
        %v3661 = vmul.f32 %v3660, %v2242
        %v3662 = vadd.f32 %v3661, 1e-05
        %v3663 = vrsqrt.pop %v3662
        %v3664 = vmul.f32 %v3656, %v3663
        %v3666 = vlaneseq
        %v3667 = vshrl.u32 %v3666, 7
        %v3668 = vsub.s32 0, %v3667
        %v3669 = vrot.slane %v3650, %v3668
        %v3671 = vmul.f32 %v3664, %v3669
        %v3673 = vlaneseq
        %v3674 = vshrl.u32 %v3673, 7
        %v3675 = vsub.s32 0, %v3674
        %v3676 = vrot.slane %v3651, %v3675
        %v3678 = vadd.f32 %v3671, %v3676
        %s3679 = scalar_lea.vmem %s4, 32
        %v3680 = vld [vmem:[%s3679] sm:$0xff]
        %v3681 = vld [vmem:[%s3679 + $0x8] sm:$0xff]
        %v3682 = vld [vmem:[%s3679 + $0x10] sm:$0xff]
        %v3683 = vld [vmem:[%s3679 + $0x18] sm:$0xff]
        %s3684 = scalar_lea.vmem [#allocation4], 1
        %v3685 = vld [vmem:[%s3684] sm:$0x1]
        %v3687 = vlaneseq
        %v3688 = vshrl.u32 %v3687, 7
        %v3689 = vsub.s32 0, %v3688
        %v3690 = vrot.slane %v3685, %v3689
        %v3693 = vsel %vm1080, %v3678, 0
        %3695 = vmatprep.subr.mxu0 0.0
        %3696 = vmatpush1.msra.mxu0 %v3680
        %3697 = vmatprep.subr.mxu0 0.0
        %3698 = vmatpush1.msra.mxu0 %v3681
        %3699 = vmatprep.subr.mxu0 0.0
        %3700 = vmatpush1.msra.mxu0 %v3682
        %3701 = vmatprep.subr.mxu0 0.0
        %3702 = vmatpush1.msra.mxu0 %v3683
        %3703 = vmatprep.subr.mxu0 0.0
        %3704 = vmatpush1.msra.mxu0 0.0
        %3705 = vmatprep.subr.mxu0 0.0
        %3706 = vmatpush1.msra.mxu0 0.0
        %3707 = vmatprep.subr.mxu0 0.0
        %3708 = vmatpush1.msra.mxu0 0.0
        %3709 = vmatprep.subr.mxu0 0.0
        %3710 = vmatpush1.msra.mxu0 0.0
        %3711 = vmatprep.subr.mxu0 0.0
        %3712 = vmatpush1.msra.mxu0 0.0
        %3713 = vmatprep.subr.mxu0 0.0
        %3714 = vmatpush1.msra.mxu0 0.0
        %3715 = vmatprep.subr.mxu0 0.0
        %3716 = vmatpush1.msra.mxu0 0.0
        %3717 = vmatprep.subr.mxu0 0.0
        %3718 = vmatpush1.msra.mxu0 0.0
        %3719 = vmatprep.subr.mxu0 0.0
        %3720 = vmatpush1.msra.mxu0 0.0
        %3721 = vmatprep.subr.mxu0 0.0
        %3722 = vmatpush1.msra.mxu0 0.0
        %3723 = vmatprep.subr.mxu0 0.0
        %3724 = vmatpush1.msra.mxu0 0.0
        %3725 = vmatprep.subr.mxu0 0.0
        %3726 = vmatpush1.msra.mxu0 0.0
        %3727 = vmatprep.subr.mxu0 0.0
        %3728 = vmatpush1.msra.mxu0 0.0
        %3729 = vmatprep.subr.mxu0 0.0
        %3730 = vmatpush1.msra.mxu0 0.0
        %3731 = vmatprep.subr.mxu0 0.0
        %3732 = vmatpush1.msra.mxu0 0.0
        %3733 = vmatprep.subr.mxu0 0.0
        %3734 = vmatpush1.msra.mxu0 0.0
        %3735 = vmatprep.subr.mxu0 0.0
        %3736 = vmatpush1.msra.mxu0 0.0
        %3737 = vmatprep.subr.mxu0 0.0
        %3738 = vmatpush1.msra.mxu0 0.0
        %3739 = vmatprep.subr.mxu0 0.0
        %3740 = vmatpush1.msra.mxu0 0.0
        %3741 = vmatprep.subr.mxu0 0.0
        %3742 = vmatpush1.msra.mxu0 0.0
        %3743 = vmatprep.subr.mxu0 0.0
        %3744 = vmatpush1.msra.mxu0 0.0
        %3745 = vmatprep.subr.mxu0 0.0
        %3746 = vmatpush1.msra.mxu0 0.0
        %3747 = vmatprep.subr.mxu0 0.0
        %3748 = vmatpush1.msra.mxu0 0.0
        %3749 = vmatprep.subr.mxu0 0.0
        %3750 = vmatpush1.msra.mxu0 0.0
        %3751 = vmatprep.subr.mxu0 0.0
        %3752 = vmatpush1.msra.mxu0 0.0
        %3753 = vmatprep.subr.mxu0 0.0
        %3754 = vmatpush1.msra.mxu0 0.0
        %3755 = vmatprep.subr.mxu0 0.0
        %3756 = vmatpush1.msra.mxu0 0.0
        %3757 = vmatprep.subr.mxu0 0.0
        %3758 = vmatpush1.msra.mxu0 0.0
        %3759 = vmatprep.mubr.f32.mxu0 0.0
        %3760 = vmatmul.mubr.f32.gmra.mrb[0].mxu0 %v3693
        %v3761 = vpop.f32.mrb[0].mxu0
        %v3762 = vadd.f32 %v3690, %v3761
        %v3763 = vpop.f32.mrb[0].mxu0
        %3764 = vdwg.mxu0
        %s3765 = scalar_lea.vmem %s6, 32
        %v3766 = vld [vmem:[%s3765] sm:$0xff]
        %v3767 = vld [vmem:[%s3765 + $0x8] sm:$0xff]
        %v3768 = vld [vmem:[%s3765 + $0x10] sm:$0xff]
        %v3769 = vld [vmem:[%s3765 + $0x18] sm:$0xff]
        %s3770 = scalar_lea.vmem [#allocation6], 1
        %v3771 = vld [vmem:[%s3770] sm:$0x1]
        %3773 = vrot.lane.b32.xlu0 %v3762, 96
        %v3774 = vpop.permute.xlu0 %3773
        %v3775 = vsel %vm1270, %v3762, 0
        %v3777 = vsel %vm1270, %v3774, 0
        %3779 = vmatprep.subr.mxu0 0.0
        %3780 = vmatpush1.xpose.msra.mxu0 %v3777
        %3781 = vmatprep.subr.mxu0 0.0
        %3782 = vmatpush1.xpose.msra.mxu0 0.0
        %3783 = vmatprep.subr.mxu0 0.0
        %3784 = vmatpush1.xpose.msra.mxu0 0.0
        %3785 = vmatprep.subr.mxu0 0.0
        %3786 = vmatpush1.xpose.msra.mxu0 0.0
        %3787 = vmatprep.subr.mxu0 0.0
        %3788 = vmatpush1.xpose.msra.mxu0 0.0
        %3789 = vmatprep.subr.mxu0 0.0
        %3790 = vmatpush1.xpose.msra.mxu0 0.0
        %3791 = vmatprep.subr.mxu0 0.0
        %3792 = vmatpush1.xpose.msra.mxu0 0.0
        %3793 = vmatprep.subr.mxu0 0.0
        %3794 = vmatpush1.xpose.msra.mxu0 0.0
        %3795 = vmatprep.subr.mxu0 0.0
        %3796 = vmatpush1.xpose.msra.mxu0 0.0
        %3797 = vmatprep.subr.mxu0 0.0
        %3798 = vmatpush1.xpose.msra.mxu0 0.0
        %3799 = vmatprep.subr.mxu0 0.0
        %3800 = vmatpush1.xpose.msra.mxu0 0.0
        %3801 = vmatprep.subr.mxu0 0.0
        %3802 = vmatpush1.xpose.msra.mxu0 0.0
        %3803 = vmatprep.subr.mxu0 0.0
        %3804 = vmatpush1.xpose.msra.mxu0 0.0
        %3805 = vmatprep.subr.mxu0 0.0
        %3806 = vmatpush1.xpose.msra.mxu0 0.0
        %3807 = vmatprep.subr.mxu0 0.0
        %3808 = vmatpush1.xpose.msra.mxu0 0.0
        %3809 = vmatprep.subr.mxu0 0.0
        %3810 = vmatpush1.xpose.msra.mxu0 0.0
        %3811 = vmatprep.subr.mxu0 0.0
        %3812 = vmatpush1.xpose.msra.mxu0 0.0
        %3813 = vmatprep.subr.mxu0 0.0
        %3814 = vmatpush1.xpose.msra.mxu0 0.0
        %3815 = vmatprep.subr.mxu0 0.0
        %3816 = vmatpush1.xpose.msra.mxu0 0.0
        %3817 = vmatprep.subr.mxu0 0.0
        %3818 = vmatpush1.xpose.msra.mxu0 0.0
        %3819 = vmatprep.subr.mxu0 0.0
        %3820 = vmatpush1.xpose.msra.mxu0 0.0
        %3821 = vmatprep.subr.mxu0 0.0
        %3822 = vmatpush1.xpose.msra.mxu0 0.0
        %3823 = vmatprep.subr.mxu0 0.0
        %3824 = vmatpush1.xpose.msra.mxu0 0.0
        %3825 = vmatprep.subr.mxu0 0.0
        %3826 = vmatpush1.xpose.msra.mxu0 0.0
        %3827 = vmatprep.subr.mxu0 0.0
        %3828 = vmatpush1.xpose.msra.mxu0 0.0
        %3829 = vmatprep.subr.mxu0 0.0
        %3830 = vmatpush1.xpose.msra.mxu0 0.0
        %3831 = vmatprep.subr.mxu0 0.0
        %3832 = vmatpush1.xpose.msra.mxu0 0.0
        %3833 = vmatprep.subr.mxu0 0.0
        %3834 = vmatpush1.xpose.msra.mxu0 0.0
        %3835 = vmatprep.subr.mxu0 0.0
        %3836 = vmatpush1.xpose.msra.mxu0 0.0
        %3837 = vmatprep.subr.mxu0 0.0
        %3838 = vmatpush1.xpose.msra.mxu0 0.0
        %3839 = vmatprep.subr.mxu0 0.0
        %3840 = vmatpush1.xpose.msra.mxu0 0.0
        %3841 = vmatprep.subr.mxu0 0.0
        %3842 = vmatpush1.xpose.msra.mxu0 0.0
        %3843 = vmatprep.mubr.f32.mxu0 0.0
        %3844 = vmatmul.mubr.f32.gmra.mrb[0].mxu0 %v3775
        %v3845 = vpop.f32.mrb[0].mxu0
        %v3846 = vadd.f32 0.0, %v3845
        %v3847 = vpop.f32.mrb[0].mxu0
        %3848 = vdwg.mxu0
        %v3849 = vmul.f32 %v3846, 0.35355338
        %v3850 = vadd.f32 %v3849, %v1166
        %v3851 = vsel %vm1270, %v3850, -inf
        %3852 = vmax.xlane.f32.xlu0 %v3851
        %v3853 = vpop.xlane.xlu0 %3852
        %v3854 = vsub.f32 %v3850, %v3853
        %v3855 = vmul.f32 %v3854, 1.442695
        %v3856 = vpow.pop %v3855
        %v3857 = vsel %vm1270, %v3856, 0.0
        %3858 = vadd.xlane.f32.xlu0 %v3857
        %v3859 = vpop.xlane.xlu0 %3858
        %v3860 = vrcp.pop %v3859
        %v3861 = vmul.f32 %v3856, %v3860
        %3862 = vrot.lane.b32.xlu0 %v3762, 64
        %v3863 = vpop.permute.xlu0 %3862
        %v3866 = vsel %vm1270, %v3861, 0
        %3868 = vmatprep.subr.mxu0 0.0
        %3869 = vmatpush1.msra.mxu0 %v3863
        %3870 = vmatprep.subr.mxu0 0.0
        %3871 = vmatpush1.msra.mxu0 0.0
        %3872 = vmatprep.subr.mxu0 0.0
        %3873 = vmatpush1.msra.mxu0 0.0
        %3874 = vmatprep.subr.mxu0 0.0
        %3875 = vmatpush1.msra.mxu0 0.0
        %3876 = vmatprep.subr.mxu0 0.0
        %3877 = vmatpush1.msra.mxu0 0.0
        %3878 = vmatprep.subr.mxu0 0.0
        %3879 = vmatpush1.msra.mxu0 0.0
        %3880 = vmatprep.subr.mxu0 0.0
        %3881 = vmatpush1.msra.mxu0 0.0
        %3882 = vmatprep.subr.mxu0 0.0
        %3883 = vmatpush1.msra.mxu0 0.0
        %3884 = vmatprep.subr.mxu0 0.0
        %3885 = vmatpush1.msra.mxu0 0.0
        %3886 = vmatprep.subr.mxu0 0.0
        %3887 = vmatpush1.msra.mxu0 0.0
        %3888 = vmatprep.subr.mxu0 0.0
        %3889 = vmatpush1.msra.mxu0 0.0
        %3890 = vmatprep.subr.mxu0 0.0
        %3891 = vmatpush1.msra.mxu0 0.0
        %3892 = vmatprep.subr.mxu0 0.0
        %3893 = vmatpush1.msra.mxu0 0.0
        %3894 = vmatprep.subr.mxu0 0.0
        %3895 = vmatpush1.msra.mxu0 0.0
        %3896 = vmatprep.subr.mxu0 0.0
        %3897 = vmatpush1.msra.mxu0 0.0
        %3898 = vmatprep.subr.mxu0 0.0
        %3899 = vmatpush1.msra.mxu0 0.0
        %3900 = vmatprep.subr.mxu0 0.0
        %3901 = vmatpush1.msra.mxu0 0.0
        %3902 = vmatprep.subr.mxu0 0.0
        %3903 = vmatpush1.msra.mxu0 0.0
        %3904 = vmatprep.subr.mxu0 0.0
        %3905 = vmatpush1.msra.mxu0 0.0
        %3906 = vmatprep.subr.mxu0 0.0
        %3907 = vmatpush1.msra.mxu0 0.0
        %3908 = vmatprep.subr.mxu0 0.0
        %3909 = vmatpush1.msra.mxu0 0.0
        %3910 = vmatprep.subr.mxu0 0.0
        %3911 = vmatpush1.msra.mxu0 0.0
        %3912 = vmatprep.subr.mxu0 0.0
        %3913 = vmatpush1.msra.mxu0 0.0
        %3914 = vmatprep.subr.mxu0 0.0
        %3915 = vmatpush1.msra.mxu0 0.0
        %3916 = vmatprep.subr.mxu0 0.0
        %3917 = vmatpush1.msra.mxu0 0.0
        %3918 = vmatprep.subr.mxu0 0.0
        %3919 = vmatpush1.msra.mxu0 0.0
        %3920 = vmatprep.subr.mxu0 0.0
        %3921 = vmatpush1.msra.mxu0 0.0
        %3922 = vmatprep.subr.mxu0 0.0
        %3923 = vmatpush1.msra.mxu0 0.0
        %3924 = vmatprep.subr.mxu0 0.0
        %3925 = vmatpush1.msra.mxu0 0.0
        %3926 = vmatprep.subr.mxu0 0.0
        %3927 = vmatpush1.msra.mxu0 0.0
        %3928 = vmatprep.subr.mxu0 0.0
        %3929 = vmatpush1.msra.mxu0 0.0
        %3930 = vmatprep.subr.mxu0 0.0
        %3931 = vmatpush1.msra.mxu0 0.0
        %3932 = vmatprep.mubr.f32.mxu0 0.0
        %3933 = vmatmul.mubr.f32.gmra.mrb[0].mxu0 %v3866
        %v3934 = vpop.f32.mrb[0].mxu0
        %v3935 = vadd.f32 0.0, %v3934
        %v3936 = vpop.f32.mrb[0].mxu0
        %3937 = vdwg.mxu0
        %3938 = vrot.lane.b32.xlu0 %v3762, 120
        %v3939 = vpop.permute.xlu0 %3938
        %3940 = vrot.lane.b32.xlu0 %v3762, 88
        %v3941 = vpop.permute.xlu0 %3940
        %v3942 = vsel %vm1270, %v3939, 0
        %v3944 = vsel %vm1270, %v3941, 0
        %3946 = vmatprep.subr.mxu0 0.0
        %3947 = vmatpush1.xpose.msra.mxu0 %v3944
        %3948 = vmatprep.subr.mxu0 0.0
        %3949 = vmatpush1.xpose.msra.mxu0 0.0
        %3950 = vmatprep.subr.mxu0 0.0
        %3951 = vmatpush1.xpose.msra.mxu0 0.0
        %3952 = vmatprep.subr.mxu0 0.0
        %3953 = vmatpush1.xpose.msra.mxu0 0.0
        %3954 = vmatprep.subr.mxu0 0.0
        %3955 = vmatpush1.xpose.msra.mxu0 0.0
        %3956 = vmatprep.subr.mxu0 0.0
        %3957 = vmatpush1.xpose.msra.mxu0 0.0
        %3958 = vmatprep.subr.mxu0 0.0
        %3959 = vmatpush1.xpose.msra.mxu0 0.0
        %3960 = vmatprep.subr.mxu0 0.0
        %3961 = vmatpush1.xpose.msra.mxu0 0.0
        %3962 = vmatprep.subr.mxu0 0.0
        %3963 = vmatpush1.xpose.msra.mxu0 0.0
        %3964 = vmatprep.subr.mxu0 0.0
        %3965 = vmatpush1.xpose.msra.mxu0 0.0
        %3966 = vmatprep.subr.mxu0 0.0
        %3967 = vmatpush1.xpose.msra.mxu0 0.0
        %3968 = vmatprep.subr.mxu0 0.0
        %3969 = vmatpush1.xpose.msra.mxu0 0.0
        %3970 = vmatprep.subr.mxu0 0.0
        %3971 = vmatpush1.xpose.msra.mxu0 0.0
        %3972 = vmatprep.subr.mxu0 0.0
        %3973 = vmatpush1.xpose.msra.mxu0 0.0
        %3974 = vmatprep.subr.mxu0 0.0
        %3975 = vmatpush1.xpose.msra.mxu0 0.0
        %3976 = vmatprep.subr.mxu0 0.0
        %3977 = vmatpush1.xpose.msra.mxu0 0.0
        %3978 = vmatprep.subr.mxu0 0.0
        %3979 = vmatpush1.xpose.msra.mxu0 0.0
        %3980 = vmatprep.subr.mxu0 0.0
        %3981 = vmatpush1.xpose.msra.mxu0 0.0
        %3982 = vmatprep.subr.mxu0 0.0
        %3983 = vmatpush1.xpose.msra.mxu0 0.0
        %3984 = vmatprep.subr.mxu0 0.0
        %3985 = vmatpush1.xpose.msra.mxu0 0.0
        %3986 = vmatprep.subr.mxu0 0.0
        %3987 = vmatpush1.xpose.msra.mxu0 0.0
        %3988 = vmatprep.subr.mxu0 0.0
        %3989 = vmatpush1.xpose.msra.mxu0 0.0
        %3990 = vmatprep.subr.mxu0 0.0
        %3991 = vmatpush1.xpose.msra.mxu0 0.0
        %3992 = vmatprep.subr.mxu0 0.0
        %3993 = vmatpush1.xpose.msra.mxu0 0.0
        %3994 = vmatprep.subr.mxu0 0.0
        %3995 = vmatpush1.xpose.msra.mxu0 0.0
        %3996 = vmatprep.subr.mxu0 0.0
        %3997 = vmatpush1.xpose.msra.mxu0 0.0
        %3998 = vmatprep.subr.mxu0 0.0
        %3999 = vmatpush1.xpose.msra.mxu0 0.0
        %4000 = vmatprep.subr.mxu0 0.0
        %4001 = vmatpush1.xpose.msra.mxu0 0.0
        %4002 = vmatprep.subr.mxu0 0.0
        %4003 = vmatpush1.xpose.msra.mxu0 0.0
        %4004 = vmatprep.subr.mxu0 0.0
        %4005 = vmatpush1.xpose.msra.mxu0 0.0
        %4006 = vmatprep.subr.mxu0 0.0
        %4007 = vmatpush1.xpose.msra.mxu0 0.0
        %4008 = vmatprep.subr.mxu0 0.0
        %4009 = vmatpush1.xpose.msra.mxu0 0.0
        %4010 = vmatprep.mubr.f32.mxu0 0.0
        %4011 = vmatmul.mubr.f32.gmra.mrb[0].mxu0 %v3942
        %v4012 = vpop.f32.mrb[0].mxu0
        %v4013 = vadd.f32 0.0, %v4012
        %v4014 = vpop.f32.mrb[0].mxu0
        %4015 = vdwg.mxu0
        %v4016 = vmul.f32 %v4013, 0.35355338
        %v4017 = vadd.f32 %v4016, %v1166
        %v4018 = vsel %vm1270, %v4017, -inf
        %4019 = vmax.xlane.f32.xlu0 %v4018
        %v4020 = vpop.xlane.xlu0 %4019
        %v4021 = vsub.f32 %v4017, %v4020
        %v4022 = vmul.f32 %v4021, 1.442695
        %v4023 = vpow.pop %v4022
        %v4024 = vsel %vm1270, %v4023, 0.0
        %4025 = vadd.xlane.f32.xlu0 %v4024
        %v4026 = vpop.xlane.xlu0 %4025
        %v4027 = vrcp.pop %v4026
        %v4028 = vmul.f32 %v4023, %v4027
        %4029 = vrot.lane.b32.xlu0 %v3762, 56
        %v4030 = vpop.permute.xlu0 %4029
        %v4033 = vsel %vm1270, %v4028, 0
        %4035 = vmatprep.subr.mxu0 0.0
        %4036 = vmatpush1.msra.mxu0 %v4030
        %4037 = vmatprep.subr.mxu0 0.0
        %4038 = vmatpush1.msra.mxu0 0.0
        %4039 = vmatprep.subr.mxu0 0.0
        %4040 = vmatpush1.msra.mxu0 0.0
        %4041 = vmatprep.subr.mxu0 0.0
        %4042 = vmatpush1.msra.mxu0 0.0
        %4043 = vmatprep.subr.mxu0 0.0
        %4044 = vmatpush1.msra.mxu0 0.0
        %4045 = vmatprep.subr.mxu0 0.0
        %4046 = vmatpush1.msra.mxu0 0.0
        %4047 = vmatprep.subr.mxu0 0.0
        %4048 = vmatpush1.msra.mxu0 0.0
        %4049 = vmatprep.subr.mxu0 0.0
        %4050 = vmatpush1.msra.mxu0 0.0
        %4051 = vmatprep.subr.mxu0 0.0
        %4052 = vmatpush1.msra.mxu0 0.0
        %4053 = vmatprep.subr.mxu0 0.0
        %4054 = vmatpush1.msra.mxu0 0.0
        %4055 = vmatprep.subr.mxu0 0.0
        %4056 = vmatpush1.msra.mxu0 0.0
        %4057 = vmatprep.subr.mxu0 0.0
        %4058 = vmatpush1.msra.mxu0 0.0
        %4059 = vmatprep.subr.mxu0 0.0
        %4060 = vmatpush1.msra.mxu0 0.0
        %4061 = vmatprep.subr.mxu0 0.0
        %4062 = vmatpush1.msra.mxu0 0.0
        %4063 = vmatprep.subr.mxu0 0.0
        %4064 = vmatpush1.msra.mxu0 0.0
        %4065 = vmatprep.subr.mxu0 0.0
        %4066 = vmatpush1.msra.mxu0 0.0
        %4067 = vmatprep.subr.mxu0 0.0
        %4068 = vmatpush1.msra.mxu0 0.0
        %4069 = vmatprep.subr.mxu0 0.0
        %4070 = vmatpush1.msra.mxu0 0.0
        %4071 = vmatprep.subr.mxu0 0.0
        %4072 = vmatpush1.msra.mxu0 0.0
        %4073 = vmatprep.subr.mxu0 0.0
        %4074 = vmatpush1.msra.mxu0 0.0
        %4075 = vmatprep.subr.mxu0 0.0
        %4076 = vmatpush1.msra.mxu0 0.0
        %4077 = vmatprep.subr.mxu0 0.0
        %4078 = vmatpush1.msra.mxu0 0.0
        %4079 = vmatprep.subr.mxu0 0.0
        %4080 = vmatpush1.msra.mxu0 0.0
        %4081 = vmatprep.subr.mxu0 0.0
        %4082 = vmatpush1.msra.mxu0 0.0
        %4083 = vmatprep.subr.mxu0 0.0
        %4084 = vmatpush1.msra.mxu0 0.0
        %4085 = vmatprep.subr.mxu0 0.0
        %4086 = vmatpush1.msra.mxu0 0.0
        %4087 = vmatprep.subr.mxu0 0.0
        %4088 = vmatpush1.msra.mxu0 0.0
        %4089 = vmatprep.subr.mxu0 0.0
        %4090 = vmatpush1.msra.mxu0 0.0
        %4091 = vmatprep.subr.mxu0 0.0
        %4092 = vmatpush1.msra.mxu0 0.0
        %4093 = vmatprep.subr.mxu0 0.0
        %4094 = vmatpush1.msra.mxu0 0.0
        %4095 = vmatprep.subr.mxu0 0.0
        %4096 = vmatpush1.msra.mxu0 0.0
        %4097 = vmatprep.subr.mxu0 0.0
        %4098 = vmatpush1.msra.mxu0 0.0
        %4099 = vmatprep.mubr.f32.mxu0 0.0
        %4100 = vmatmul.mubr.f32.gmra.mrb[0].mxu0 %v4033
        %v4101 = vpop.f32.mrb[0].mxu0
        %v4102 = vadd.f32 0.0, %v4101
        %v4103 = vpop.f32.mrb[0].mxu0
        %4104 = vdwg.mxu0
        %v4106 = vsel %vm1270, %v4102, 0
        %4108 = vmatprep.subr.mxu0 0.0
        %4109 = vmatpush1.msra.mxu0 %v3767
        %4110 = vmatprep.subr.mxu0 0.0
        %4111 = vmatpush1.msra.mxu0 0.0
        %4112 = vmatprep.subr.mxu0 0.0
        %4113 = vmatpush1.msra.mxu0 0.0
        %4114 = vmatprep.subr.mxu0 0.0
        %4115 = vmatpush1.msra.mxu0 0.0
        %4116 = vmatprep.subr.mxu0 0.0
        %4117 = vmatpush1.msra.mxu0 0.0
        %4118 = vmatprep.subr.mxu0 0.0
        %4119 = vmatpush1.msra.mxu0 0.0
        %4120 = vmatprep.subr.mxu0 0.0
        %4121 = vmatpush1.msra.mxu0 0.0
        %4122 = vmatprep.subr.mxu0 0.0
        %4123 = vmatpush1.msra.mxu0 0.0
        %4124 = vmatprep.subr.mxu0 0.0
        %4125 = vmatpush1.msra.mxu0 0.0
        %4126 = vmatprep.subr.mxu0 0.0
        %4127 = vmatpush1.msra.mxu0 0.0
        %4128 = vmatprep.subr.mxu0 0.0
        %4129 = vmatpush1.msra.mxu0 0.0
        %4130 = vmatprep.subr.mxu0 0.0
        %4131 = vmatpush1.msra.mxu0 0.0
        %4132 = vmatprep.subr.mxu0 0.0
        %4133 = vmatpush1.msra.mxu0 0.0
        %4134 = vmatprep.subr.mxu0 0.0
        %4135 = vmatpush1.msra.mxu0 0.0
        %4136 = vmatprep.subr.mxu0 0.0
        %4137 = vmatpush1.msra.mxu0 0.0
        %4138 = vmatprep.subr.mxu0 0.0
        %4139 = vmatpush1.msra.mxu0 0.0
        %4140 = vmatprep.subr.mxu0 0.0
        %4141 = vmatpush1.msra.mxu0 0.0
        %4142 = vmatprep.subr.mxu0 0.0
        %4143 = vmatpush1.msra.mxu0 0.0
        %4144 = vmatprep.subr.mxu0 0.0
        %4145 = vmatpush1.msra.mxu0 0.0
        %4146 = vmatprep.subr.mxu0 0.0
        %4147 = vmatpush1.msra.mxu0 0.0
        %4148 = vmatprep.subr.mxu0 0.0
        %4149 = vmatpush1.msra.mxu0 0.0
        %4150 = vmatprep.subr.mxu0 0.0
        %4151 = vmatpush1.msra.mxu0 0.0
        %4152 = vmatprep.subr.mxu0 0.0
        %4153 = vmatpush1.msra.mxu0 0.0
        %4154 = vmatprep.subr.mxu0 0.0
        %4155 = vmatpush1.msra.mxu0 0.0
        %4156 = vmatprep.subr.mxu0 0.0
        %4157 = vmatpush1.msra.mxu0 0.0
        %4158 = vmatprep.subr.mxu0 0.0
        %4159 = vmatpush1.msra.mxu0 0.0
        %4160 = vmatprep.subr.mxu0 0.0
        %4161 = vmatpush1.msra.mxu0 0.0
        %4162 = vmatprep.subr.mxu0 0.0
        %4163 = vmatpush1.msra.mxu0 0.0
        %4164 = vmatprep.subr.mxu0 0.0
        %4165 = vmatpush1.msra.mxu0 0.0
        %4166 = vmatprep.subr.mxu0 0.0
        %4167 = vmatpush1.msra.mxu0 0.0
        %4168 = vmatprep.subr.mxu0 0.0
        %4169 = vmatpush1.msra.mxu0 0.0
        %4170 = vmatprep.subr.mxu0 0.0
        %4171 = vmatpush1.msra.mxu0 0.0
        %4172 = vmatprep.mubr.f32.mxu0 0.0
        %4173 = vmatmul.mubr.f32.gmra.mrb[0].mxu0 %v4106
        %v4174 = vpop.f32.mrb[0].mxu0
        %v4175 = vadd.f32 0.0, %v4174
        %v4176 = vpop.f32.mrb[0].mxu0
        %4177 = vdwg.mxu0
        %v4179 = vsel %vm1270, %v3935, 0
        %4181 = vmatprep.subr.mxu0 0.0
        %4182 = vmatpush1.msra.mxu0 %v3766
        %4183 = vmatprep.subr.mxu0 0.0
        %4184 = vmatpush1.msra.mxu0 0.0
        %4185 = vmatprep.subr.mxu0 0.0
        %4186 = vmatpush1.msra.mxu0 0.0
        %4187 = vmatprep.subr.mxu0 0.0
        %4188 = vmatpush1.msra.mxu0 0.0
        %4189 = vmatprep.subr.mxu0 0.0
        %4190 = vmatpush1.msra.mxu0 0.0
        %4191 = vmatprep.subr.mxu0 0.0
        %4192 = vmatpush1.msra.mxu0 0.0
        %4193 = vmatprep.subr.mxu0 0.0
        %4194 = vmatpush1.msra.mxu0 0.0
        %4195 = vmatprep.subr.mxu0 0.0
        %4196 = vmatpush1.msra.mxu0 0.0
        %4197 = vmatprep.subr.mxu0 0.0
        %4198 = vmatpush1.msra.mxu0 0.0
        %4199 = vmatprep.subr.mxu0 0.0
        %4200 = vmatpush1.msra.mxu0 0.0
        %4201 = vmatprep.subr.mxu0 0.0
        %4202 = vmatpush1.msra.mxu0 0.0
        %4203 = vmatprep.subr.mxu0 0.0
        %4204 = vmatpush1.msra.mxu0 0.0
        %4205 = vmatprep.subr.mxu0 0.0
        %4206 = vmatpush1.msra.mxu0 0.0
        %4207 = vmatprep.subr.mxu0 0.0
        %4208 = vmatpush1.msra.mxu0 0.0
        %4209 = vmatprep.subr.mxu0 0.0
        %4210 = vmatpush1.msra.mxu0 0.0
        %4211 = vmatprep.subr.mxu0 0.0
        %4212 = vmatpush1.msra.mxu0 0.0
        %4213 = vmatprep.subr.mxu0 0.0
        %4214 = vmatpush1.msra.mxu0 0.0
        %4215 = vmatprep.subr.mxu0 0.0
        %4216 = vmatpush1.msra.mxu0 0.0
        %4217 = vmatprep.subr.mxu0 0.0
        %4218 = vmatpush1.msra.mxu0 0.0
        %4219 = vmatprep.subr.mxu0 0.0
        %4220 = vmatpush1.msra.mxu0 0.0
        %4221 = vmatprep.subr.mxu0 0.0
        %4222 = vmatpush1.msra.mxu0 0.0
        %4223 = vmatprep.subr.mxu0 0.0
        %4224 = vmatpush1.msra.mxu0 0.0
        %4225 = vmatprep.subr.mxu0 0.0
        %4226 = vmatpush1.msra.mxu0 0.0
        %4227 = vmatprep.subr.mxu0 0.0
        %4228 = vmatpush1.msra.mxu0 0.0
        %4229 = vmatprep.subr.mxu0 0.0
        %4230 = vmatpush1.msra.mxu0 0.0
        %4231 = vmatprep.subr.mxu0 0.0
        %4232 = vmatpush1.msra.mxu0 0.0
        %4233 = vmatprep.subr.mxu0 0.0
        %4234 = vmatpush1.msra.mxu0 0.0
        %4235 = vmatprep.subr.mxu0 0.0
        %4236 = vmatpush1.msra.mxu0 0.0
        %4237 = vmatprep.subr.mxu0 0.0
        %4238 = vmatpush1.msra.mxu0 0.0
        %4239 = vmatprep.subr.mxu0 0.0
        %4240 = vmatpush1.msra.mxu0 0.0
        %4241 = vmatprep.subr.mxu0 0.0
        %4242 = vmatpush1.msra.mxu0 0.0
        %4243 = vmatprep.subr.mxu0 0.0
        %4244 = vmatpush1.msra.mxu0 0.0
        %4245 = vmatprep.mubr.f32.mxu0 0.0
        %4246 = vmatmul.mubr.f32.gmra.mrb[0].mxu0 %v4179
        %v4247 = vpop.f32.mrb[0].mxu0
        %v4248 = vadd.f32 %v4175, %v4247
        %v4249 = vpop.f32.mrb[0].mxu0
        %4250 = vdwg.mxu0
        %4251 = vrot.lane.b32.xlu0 %v3762, 112
        %v4252 = vpop.permute.xlu0 %4251
        %4253 = vrot.lane.b32.xlu0 %v3762, 80
        %v4254 = vpop.permute.xlu0 %4253
        %v4255 = vsel %vm1270, %v4252, 0
        %v4257 = vsel %vm1270, %v4254, 0
        %4259 = vmatprep.subr.mxu0 0.0
        %4260 = vmatpush1.xpose.msra.mxu0 %v4257
        %4261 = vmatprep.subr.mxu0 0.0
        %4262 = vmatpush1.xpose.msra.mxu0 0.0
        %4263 = vmatprep.subr.mxu0 0.0
        %4264 = vmatpush1.xpose.msra.mxu0 0.0
        %4265 = vmatprep.subr.mxu0 0.0
        %4266 = vmatpush1.xpose.msra.mxu0 0.0
        %4267 = vmatprep.subr.mxu0 0.0
        %4268 = vmatpush1.xpose.msra.mxu0 0.0
        %4269 = vmatprep.subr.mxu0 0.0
        %4270 = vmatpush1.xpose.msra.mxu0 0.0
        %4271 = vmatprep.subr.mxu0 0.0
        %4272 = vmatpush1.xpose.msra.mxu0 0.0
        %4273 = vmatprep.subr.mxu0 0.0
        %4274 = vmatpush1.xpose.msra.mxu0 0.0
        %4275 = vmatprep.subr.mxu0 0.0
        %4276 = vmatpush1.xpose.msra.mxu0 0.0
        %4277 = vmatprep.subr.mxu0 0.0
        %4278 = vmatpush1.xpose.msra.mxu0 0.0
        %4279 = vmatprep.subr.mxu0 0.0
        %4280 = vmatpush1.xpose.msra.mxu0 0.0
        %4281 = vmatprep.subr.mxu0 0.0
        %4282 = vmatpush1.xpose.msra.mxu0 0.0
        %4283 = vmatprep.subr.mxu0 0.0
        %4284 = vmatpush1.xpose.msra.mxu0 0.0
        %4285 = vmatprep.subr.mxu0 0.0
        %4286 = vmatpush1.xpose.msra.mxu0 0.0
        %4287 = vmatprep.subr.mxu0 0.0
        %4288 = vmatpush1.xpose.msra.mxu0 0.0
        %4289 = vmatprep.subr.mxu0 0.0
        %4290 = vmatpush1.xpose.msra.mxu0 0.0
        %4291 = vmatprep.subr.mxu0 0.0
        %4292 = vmatpush1.xpose.msra.mxu0 0.0
        %4293 = vmatprep.subr.mxu0 0.0
        %4294 = vmatpush1.xpose.msra.mxu0 0.0
        %4295 = vmatprep.subr.mxu0 0.0
        %4296 = vmatpush1.xpose.msra.mxu0 0.0
        %4297 = vmatprep.subr.mxu0 0.0
        %4298 = vmatpush1.xpose.msra.mxu0 0.0
        %4299 = vmatprep.subr.mxu0 0.0
        %4300 = vmatpush1.xpose.msra.mxu0 0.0
        %4301 = vmatprep.subr.mxu0 0.0
        %4302 = vmatpush1.xpose.msra.mxu0 0.0
        %4303 = vmatprep.subr.mxu0 0.0
        %4304 = vmatpush1.xpose.msra.mxu0 0.0
        %4305 = vmatprep.subr.mxu0 0.0
        %4306 = vmatpush1.xpose.msra.mxu0 0.0
        %4307 = vmatprep.subr.mxu0 0.0
        %4308 = vmatpush1.xpose.msra.mxu0 0.0
        %4309 = vmatprep.subr.mxu0 0.0
        %4310 = vmatpush1.xpose.msra.mxu0 0.0
        %4311 = vmatprep.subr.mxu0 0.0
        %4312 = vmatpush1.xpose.msra.mxu0 0.0
        %4313 = vmatprep.subr.mxu0 0.0
        %4314 = vmatpush1.xpose.msra.mxu0 0.0
        %4315 = vmatprep.subr.mxu0 0.0
        %4316 = vmatpush1.xpose.msra.mxu0 0.0
        %4317 = vmatprep.subr.mxu0 0.0
        %4318 = vmatpush1.xpose.msra.mxu0 0.0
        %4319 = vmatprep.subr.mxu0 0.0
        %4320 = vmatpush1.xpose.msra.mxu0 0.0
        %4321 = vmatprep.subr.mxu0 0.0
        %4322 = vmatpush1.xpose.msra.mxu0 0.0
        %4323 = vmatprep.mubr.f32.mxu0 0.0
        %4324 = vmatmul.mubr.f32.gmra.mrb[0].mxu0 %v4255
        %v4325 = vpop.f32.mrb[0].mxu0
        %v4326 = vadd.f32 0.0, %v4325
        %v4327 = vpop.f32.mrb[0].mxu0
        %4328 = vdwg.mxu0
        %v4329 = vmul.f32 %v4326, 0.35355338
        %v4330 = vadd.f32 %v4329, %v1166
        %v4331 = vsel %vm1270, %v4330, -inf
        %4332 = vmax.xlane.f32.xlu0 %v4331
        %v4333 = vpop.xlane.xlu0 %4332
        %v4334 = vsub.f32 %v4330, %v4333
        %v4335 = vmul.f32 %v4334, 1.442695
        %v4336 = vpow.pop %v4335
        %v4337 = vsel %vm1270, %v4336, 0.0
        %4338 = vadd.xlane.f32.xlu0 %v4337
        %v4339 = vpop.xlane.xlu0 %4338
        %v4340 = vrcp.pop %v4339
        %v4341 = vmul.f32 %v4336, %v4340
        %4342 = vrot.lane.b32.xlu0 %v3762, 48
        %v4343 = vpop.permute.xlu0 %4342
        %v4346 = vsel %vm1270, %v4341, 0
        %4348 = vmatprep.subr.mxu0 0.0
        %4349 = vmatpush1.msra.mxu0 %v4343
        %4350 = vmatprep.subr.mxu0 0.0
        %4351 = vmatpush1.msra.mxu0 0.0
        %4352 = vmatprep.subr.mxu0 0.0
        %4353 = vmatpush1.msra.mxu0 0.0
        %4354 = vmatprep.subr.mxu0 0.0
        %4355 = vmatpush1.msra.mxu0 0.0
        %4356 = vmatprep.subr.mxu0 0.0
        %4357 = vmatpush1.msra.mxu0 0.0
        %4358 = vmatprep.subr.mxu0 0.0
        %4359 = vmatpush1.msra.mxu0 0.0
        %4360 = vmatprep.subr.mxu0 0.0
        %4361 = vmatpush1.msra.mxu0 0.0
        %4362 = vmatprep.subr.mxu0 0.0
        %4363 = vmatpush1.msra.mxu0 0.0
        %4364 = vmatprep.subr.mxu0 0.0
        %4365 = vmatpush1.msra.mxu0 0.0
        %4366 = vmatprep.subr.mxu0 0.0
        %4367 = vmatpush1.msra.mxu0 0.0
        %4368 = vmatprep.subr.mxu0 0.0
        %4369 = vmatpush1.msra.mxu0 0.0
        %4370 = vmatprep.subr.mxu0 0.0
        %4371 = vmatpush1.msra.mxu0 0.0
        %4372 = vmatprep.subr.mxu0 0.0
        %4373 = vmatpush1.msra.mxu0 0.0
        %4374 = vmatprep.subr.mxu0 0.0
        %4375 = vmatpush1.msra.mxu0 0.0
        %4376 = vmatprep.subr.mxu0 0.0
        %4377 = vmatpush1.msra.mxu0 0.0
        %4378 = vmatprep.subr.mxu0 0.0
        %4379 = vmatpush1.msra.mxu0 0.0
        %4380 = vmatprep.subr.mxu0 0.0
        %4381 = vmatpush1.msra.mxu0 0.0
        %4382 = vmatprep.subr.mxu0 0.0
        %4383 = vmatpush1.msra.mxu0 0.0
        %4384 = vmatprep.subr.mxu0 0.0
        %4385 = vmatpush1.msra.mxu0 0.0
        %4386 = vmatprep.subr.mxu0 0.0
        %4387 = vmatpush1.msra.mxu0 0.0
        %4388 = vmatprep.subr.mxu0 0.0
        %4389 = vmatpush1.msra.mxu0 0.0
        %4390 = vmatprep.subr.mxu0 0.0
        %4391 = vmatpush1.msra.mxu0 0.0
        %4392 = vmatprep.subr.mxu0 0.0
        %4393 = vmatpush1.msra.mxu0 0.0
        %4394 = vmatprep.subr.mxu0 0.0
        %4395 = vmatpush1.msra.mxu0 0.0
        %4396 = vmatprep.subr.mxu0 0.0
        %4397 = vmatpush1.msra.mxu0 0.0
        %4398 = vmatprep.subr.mxu0 0.0
        %4399 = vmatpush1.msra.mxu0 0.0
        %4400 = vmatprep.subr.mxu0 0.0
        %4401 = vmatpush1.msra.mxu0 0.0
        %4402 = vmatprep.subr.mxu0 0.0
        %4403 = vmatpush1.msra.mxu0 0.0
        %4404 = vmatprep.subr.mxu0 0.0
        %4405 = vmatpush1.msra.mxu0 0.0
        %4406 = vmatprep.subr.mxu0 0.0
        %4407 = vmatpush1.msra.mxu0 0.0
        %4408 = vmatprep.subr.mxu0 0.0
        %4409 = vmatpush1.msra.mxu0 0.0
        %4410 = vmatprep.subr.mxu0 0.0
        %4411 = vmatpush1.msra.mxu0 0.0
        %4412 = vmatprep.mubr.f32.mxu0 0.0
        %4413 = vmatmul.mubr.f32.gmra.mrb[0].mxu0 %v4346
        %v4414 = vpop.f32.mrb[0].mxu0
        %v4415 = vadd.f32 0.0, %v4414
        %v4416 = vpop.f32.mrb[0].mxu0
        %4417 = vdwg.mxu0
        %v4419 = vsel %vm1270, %v4415, 0
        %4421 = vmatprep.subr.mxu0 0.0
        %4422 = vmatpush1.msra.mxu0 %v3768
        %4423 = vmatprep.subr.mxu0 0.0
        %4424 = vmatpush1.msra.mxu0 0.0
        %4425 = vmatprep.subr.mxu0 0.0
        %4426 = vmatpush1.msra.mxu0 0.0
        %4427 = vmatprep.subr.mxu0 0.0
        %4428 = vmatpush1.msra.mxu0 0.0
        %4429 = vmatprep.subr.mxu0 0.0
        %4430 = vmatpush1.msra.mxu0 0.0
        %4431 = vmatprep.subr.mxu0 0.0
        %4432 = vmatpush1.msra.mxu0 0.0
        %4433 = vmatprep.subr.mxu0 0.0
        %4434 = vmatpush1.msra.mxu0 0.0
        %4435 = vmatprep.subr.mxu0 0.0
        %4436 = vmatpush1.msra.mxu0 0.0
        %4437 = vmatprep.subr.mxu0 0.0
        %4438 = vmatpush1.msra.mxu0 0.0
        %4439 = vmatprep.subr.mxu0 0.0
        %4440 = vmatpush1.msra.mxu0 0.0
        %4441 = vmatprep.subr.mxu0 0.0
        %4442 = vmatpush1.msra.mxu0 0.0
        %4443 = vmatprep.subr.mxu0 0.0
        %4444 = vmatpush1.msra.mxu0 0.0
        %4445 = vmatprep.subr.mxu0 0.0
        %4446 = vmatpush1.msra.mxu0 0.0
        %4447 = vmatprep.subr.mxu0 0.0
        %4448 = vmatpush1.msra.mxu0 0.0
        %4449 = vmatprep.subr.mxu0 0.0
        %4450 = vmatpush1.msra.mxu0 0.0
        %4451 = vmatprep.subr.mxu0 0.0
        %4452 = vmatpush1.msra.mxu0 0.0
        %4453 = vmatprep.subr.mxu0 0.0
        %4454 = vmatpush1.msra.mxu0 0.0
        %4455 = vmatprep.subr.mxu0 0.0
        %4456 = vmatpush1.msra.mxu0 0.0
        %4457 = vmatprep.subr.mxu0 0.0
        %4458 = vmatpush1.msra.mxu0 0.0
        %4459 = vmatprep.subr.mxu0 0.0
        %4460 = vmatpush1.msra.mxu0 0.0
        %4461 = vmatprep.subr.mxu0 0.0
        %4462 = vmatpush1.msra.mxu0 0.0
        %4463 = vmatprep.subr.mxu0 0.0
        %4464 = vmatpush1.msra.mxu0 0.0
        %4465 = vmatprep.subr.mxu0 0.0
        %4466 = vmatpush1.msra.mxu0 0.0
        %4467 = vmatprep.subr.mxu0 0.0
        %4468 = vmatpush1.msra.mxu0 0.0
        %4469 = vmatprep.subr.mxu0 0.0
        %4470 = vmatpush1.msra.mxu0 0.0
        %4471 = vmatprep.subr.mxu0 0.0
        %4472 = vmatpush1.msra.mxu0 0.0
        %4473 = vmatprep.subr.mxu0 0.0
        %4474 = vmatpush1.msra.mxu0 0.0
        %4475 = vmatprep.subr.mxu0 0.0
        %4476 = vmatpush1.msra.mxu0 0.0
        %4477 = vmatprep.subr.mxu0 0.0
        %4478 = vmatpush1.msra.mxu0 0.0
        %4479 = vmatprep.subr.mxu0 0.0
        %4480 = vmatpush1.msra.mxu0 0.0
        %4481 = vmatprep.subr.mxu0 0.0
        %4482 = vmatpush1.msra.mxu0 0.0
        %4483 = vmatprep.subr.mxu0 0.0
        %4484 = vmatpush1.msra.mxu0 0.0
        %4485 = vmatprep.mubr.f32.mxu0 0.0
        %4486 = vmatmul.mubr.f32.gmra.mrb[0].mxu0 %v4419
        %v4487 = vpop.f32.mrb[0].mxu0
        %v4488 = vadd.f32 0.0, %v4487
        %v4489 = vpop.f32.mrb[0].mxu0
        %4490 = vdwg.mxu0
        %v4491 = vadd.f32 %v4248, %v4488
        %4492 = vrot.lane.b32.xlu0 %v3762, 104
        %v4493 = vpop.permute.xlu0 %4492
        %4494 = vrot.lane.b32.xlu0 %v3762, 72
        %v4495 = vpop.permute.xlu0 %4494
        %v4496 = vsel %vm1270, %v4493, 0
        %v4498 = vsel %vm1270, %v4495, 0
        %4500 = vmatprep.subr.mxu0 0.0
        %4501 = vmatpush1.xpose.msra.mxu0 %v4498
        %4502 = vmatprep.subr.mxu0 0.0
        %4503 = vmatpush1.xpose.msra.mxu0 0.0
        %4504 = vmatprep.subr.mxu0 0.0
        %4505 = vmatpush1.xpose.msra.mxu0 0.0
        %4506 = vmatprep.subr.mxu0 0.0
        %4507 = vmatpush1.xpose.msra.mxu0 0.0
        %4508 = vmatprep.subr.mxu0 0.0
        %4509 = vmatpush1.xpose.msra.mxu0 0.0
        %4510 = vmatprep.subr.mxu0 0.0
        %4511 = vmatpush1.xpose.msra.mxu0 0.0
        %4512 = vmatprep.subr.mxu0 0.0
        %4513 = vmatpush1.xpose.msra.mxu0 0.0
        %4514 = vmatprep.subr.mxu0 0.0
        %4515 = vmatpush1.xpose.msra.mxu0 0.0
        %4516 = vmatprep.subr.mxu0 0.0
        %4517 = vmatpush1.xpose.msra.mxu0 0.0
        %4518 = vmatprep.subr.mxu0 0.0
        %4519 = vmatpush1.xpose.msra.mxu0 0.0
        %4520 = vmatprep.subr.mxu0 0.0
        %4521 = vmatpush1.xpose.msra.mxu0 0.0
        %4522 = vmatprep.subr.mxu0 0.0
        %4523 = vmatpush1.xpose.msra.mxu0 0.0
        %4524 = vmatprep.subr.mxu0 0.0
        %4525 = vmatpush1.xpose.msra.mxu0 0.0
        %4526 = vmatprep.subr.mxu0 0.0
        %4527 = vmatpush1.xpose.msra.mxu0 0.0
        %4528 = vmatprep.subr.mxu0 0.0
        %4529 = vmatpush1.xpose.msra.mxu0 0.0
        %4530 = vmatprep.subr.mxu0 0.0
        %4531 = vmatpush1.xpose.msra.mxu0 0.0
        %4532 = vmatprep.subr.mxu0 0.0
        %4533 = vmatpush1.xpose.msra.mxu0 0.0
        %4534 = vmatprep.subr.mxu0 0.0
        %4535 = vmatpush1.xpose.msra.mxu0 0.0
        %4536 = vmatprep.subr.mxu0 0.0
        %4537 = vmatpush1.xpose.msra.mxu0 0.0
        %4538 = vmatprep.subr.mxu0 0.0
        %4539 = vmatpush1.xpose.msra.mxu0 0.0
        %4540 = vmatprep.subr.mxu0 0.0
        %4541 = vmatpush1.xpose.msra.mxu0 0.0
        %4542 = vmatprep.subr.mxu0 0.0
        %4543 = vmatpush1.xpose.msra.mxu0 0.0
        %4544 = vmatprep.subr.mxu0 0.0
        %4545 = vmatpush1.xpose.msra.mxu0 0.0
        %4546 = vmatprep.subr.mxu0 0.0
        %4547 = vmatpush1.xpose.msra.mxu0 0.0
        %4548 = vmatprep.subr.mxu0 0.0
        %4549 = vmatpush1.xpose.msra.mxu0 0.0
        %4550 = vmatprep.subr.mxu0 0.0
        %4551 = vmatpush1.xpose.msra.mxu0 0.0
        %4552 = vmatprep.subr.mxu0 0.0
        %4553 = vmatpush1.xpose.msra.mxu0 0.0
        %4554 = vmatprep.subr.mxu0 0.0
        %4555 = vmatpush1.xpose.msra.mxu0 0.0
        %4556 = vmatprep.subr.mxu0 0.0
        %4557 = vmatpush1.xpose.msra.mxu0 0.0
        %4558 = vmatprep.subr.mxu0 0.0
        %4559 = vmatpush1.xpose.msra.mxu0 0.0
        %4560 = vmatprep.subr.mxu0 0.0
        %4561 = vmatpush1.xpose.msra.mxu0 0.0
        %4562 = vmatprep.subr.mxu0 0.0
        %4563 = vmatpush1.xpose.msra.mxu0 0.0
        %4564 = vmatprep.mubr.f32.mxu0 0.0
        %4565 = vmatmul.mubr.f32.gmra.mrb[0].mxu0 %v4496
        %v4566 = vpop.f32.mrb[0].mxu0
        %v4567 = vadd.f32 0.0, %v4566
        %v4568 = vpop.f32.mrb[0].mxu0
        %4569 = vdwg.mxu0
        %v4570 = vmul.f32 %v4567, 0.35355338
        %v4571 = vadd.f32 %v4570, %v1166
        %v4572 = vsel %vm1270, %v4571, -inf
        %4573 = vmax.xlane.f32.xlu0 %v4572
        %v4574 = vpop.xlane.xlu0 %4573
        %v4575 = vsub.f32 %v4571, %v4574
        %v4576 = vmul.f32 %v4575, 1.442695
        %v4577 = vpow.pop %v4576
        %v4578 = vsel %vm1270, %v4577, 0.0
        %4579 = vadd.xlane.f32.xlu0 %v4578
        %v4580 = vpop.xlane.xlu0 %4579
        %v4581 = vrcp.pop %v4580
        %v4582 = vmul.f32 %v4577, %v4581
        %4583 = vrot.lane.b32.xlu0 %v3762, 40
        %v4584 = vpop.permute.xlu0 %4583
        %v4587 = vsel %vm1270, %v4582, 0
        %4589 = vmatprep.subr.mxu0 0.0
        %4590 = vmatpush1.msra.mxu0 %v4584
        %4591 = vmatprep.subr.mxu0 0.0
        %4592 = vmatpush1.msra.mxu0 0.0
        %4593 = vmatprep.subr.mxu0 0.0
        %4594 = vmatpush1.msra.mxu0 0.0
        %4595 = vmatprep.subr.mxu0 0.0
        %4596 = vmatpush1.msra.mxu0 0.0
        %4597 = vmatprep.subr.mxu0 0.0
        %4598 = vmatpush1.msra.mxu0 0.0
        %4599 = vmatprep.subr.mxu0 0.0
        %4600 = vmatpush1.msra.mxu0 0.0
        %4601 = vmatprep.subr.mxu0 0.0
        %4602 = vmatpush1.msra.mxu0 0.0
        %4603 = vmatprep.subr.mxu0 0.0
        %4604 = vmatpush1.msra.mxu0 0.0
        %4605 = vmatprep.subr.mxu0 0.0
        %4606 = vmatpush1.msra.mxu0 0.0
        %4607 = vmatprep.subr.mxu0 0.0
        %4608 = vmatpush1.msra.mxu0 0.0
        %4609 = vmatprep.subr.mxu0 0.0
        %4610 = vmatpush1.msra.mxu0 0.0
        %4611 = vmatprep.subr.mxu0 0.0
        %4612 = vmatpush1.msra.mxu0 0.0
        %4613 = vmatprep.subr.mxu0 0.0
        %4614 = vmatpush1.msra.mxu0 0.0
        %4615 = vmatprep.subr.mxu0 0.0
        %4616 = vmatpush1.msra.mxu0 0.0
        %4617 = vmatprep.subr.mxu0 0.0
        %4618 = vmatpush1.msra.mxu0 0.0
        %4619 = vmatprep.subr.mxu0 0.0
        %4620 = vmatpush1.msra.mxu0 0.0
        %4621 = vmatprep.subr.mxu0 0.0
        %4622 = vmatpush1.msra.mxu0 0.0
        %4623 = vmatprep.subr.mxu0 0.0
        %4624 = vmatpush1.msra.mxu0 0.0
        %4625 = vmatprep.subr.mxu0 0.0
        %4626 = vmatpush1.msra.mxu0 0.0
        %4627 = vmatprep.subr.mxu0 0.0
        %4628 = vmatpush1.msra.mxu0 0.0
        %4629 = vmatprep.subr.mxu0 0.0
        %4630 = vmatpush1.msra.mxu0 0.0
        %4631 = vmatprep.subr.mxu0 0.0
        %4632 = vmatpush1.msra.mxu0 0.0
        %4633 = vmatprep.subr.mxu0 0.0
        %4634 = vmatpush1.msra.mxu0 0.0
        %4635 = vmatprep.subr.mxu0 0.0
        %4636 = vmatpush1.msra.mxu0 0.0
        %4637 = vmatprep.subr.mxu0 0.0
        %4638 = vmatpush1.msra.mxu0 0.0
        %4639 = vmatprep.subr.mxu0 0.0
        %4640 = vmatpush1.msra.mxu0 0.0
        %4641 = vmatprep.subr.mxu0 0.0
        %4642 = vmatpush1.msra.mxu0 0.0
        %4643 = vmatprep.subr.mxu0 0.0
        %4644 = vmatpush1.msra.mxu0 0.0
        %4645 = vmatprep.subr.mxu0 0.0
        %4646 = vmatpush1.msra.mxu0 0.0
        %4647 = vmatprep.subr.mxu0 0.0
        %4648 = vmatpush1.msra.mxu0 0.0
        %4649 = vmatprep.subr.mxu0 0.0
        %4650 = vmatpush1.msra.mxu0 0.0
        %4651 = vmatprep.subr.mxu0 0.0
        %4652 = vmatpush1.msra.mxu0 0.0
        %4653 = vmatprep.mubr.f32.mxu0 0.0
        %4654 = vmatmul.mubr.f32.gmra.mrb[0].mxu0 %v4587
        %v4655 = vpop.f32.mrb[0].mxu0
        %v4656 = vadd.f32 0.0, %v4655
        %v4657 = vpop.f32.mrb[0].mxu0
        %4658 = vdwg.mxu0
        %v4660 = vsel %vm1270, %v4656, 0
        %4662 = vmatprep.subr.mxu0 0.0
        %4663 = vmatpush1.msra.mxu0 %v3769
        %4664 = vmatprep.subr.mxu0 0.0
        %4665 = vmatpush1.msra.mxu0 0.0
        %4666 = vmatprep.subr.mxu0 0.0
        %4667 = vmatpush1.msra.mxu0 0.0
        %4668 = vmatprep.subr.mxu0 0.0
        %4669 = vmatpush1.msra.mxu0 0.0
        %4670 = vmatprep.subr.mxu0 0.0
        %4671 = vmatpush1.msra.mxu0 0.0
        %4672 = vmatprep.subr.mxu0 0.0
        %4673 = vmatpush1.msra.mxu0 0.0
        %4674 = vmatprep.subr.mxu0 0.0
        %4675 = vmatpush1.msra.mxu0 0.0
        %4676 = vmatprep.subr.mxu0 0.0
        %4677 = vmatpush1.msra.mxu0 0.0
        %4678 = vmatprep.subr.mxu0 0.0
        %4679 = vmatpush1.msra.mxu0 0.0
        %4680 = vmatprep.subr.mxu0 0.0
        %4681 = vmatpush1.msra.mxu0 0.0
        %4682 = vmatprep.subr.mxu0 0.0
        %4683 = vmatpush1.msra.mxu0 0.0
        %4684 = vmatprep.subr.mxu0 0.0
        %4685 = vmatpush1.msra.mxu0 0.0
        %4686 = vmatprep.subr.mxu0 0.0
        %4687 = vmatpush1.msra.mxu0 0.0
        %4688 = vmatprep.subr.mxu0 0.0
        %4689 = vmatpush1.msra.mxu0 0.0
        %4690 = vmatprep.subr.mxu0 0.0
        %4691 = vmatpush1.msra.mxu0 0.0
        %4692 = vmatprep.subr.mxu0 0.0
        %4693 = vmatpush1.msra.mxu0 0.0
        %4694 = vmatprep.subr.mxu0 0.0
        %4695 = vmatpush1.msra.mxu0 0.0
        %4696 = vmatprep.subr.mxu0 0.0
        %4697 = vmatpush1.msra.mxu0 0.0
        %4698 = vmatprep.subr.mxu0 0.0
        %4699 = vmatpush1.msra.mxu0 0.0
        %4700 = vmatprep.subr.mxu0 0.0
        %4701 = vmatpush1.msra.mxu0 0.0
        %4702 = vmatprep.subr.mxu0 0.0
        %4703 = vmatpush1.msra.mxu0 0.0
        %4704 = vmatprep.subr.mxu0 0.0
        %4705 = vmatpush1.msra.mxu0 0.0
        %4706 = vmatprep.subr.mxu0 0.0
        %4707 = vmatpush1.msra.mxu0 0.0
        %4708 = vmatprep.subr.mxu0 0.0
        %4709 = vmatpush1.msra.mxu0 0.0
        %4710 = vmatprep.subr.mxu0 0.0
        %4711 = vmatpush1.msra.mxu0 0.0
        %4712 = vmatprep.subr.mxu0 0.0
        %4713 = vmatpush1.msra.mxu0 0.0
        %4714 = vmatprep.subr.mxu0 0.0
        %4715 = vmatpush1.msra.mxu0 0.0
        %4716 = vmatprep.subr.mxu0 0.0
        %4717 = vmatpush1.msra.mxu0 0.0
        %4718 = vmatprep.subr.mxu0 0.0
        %4719 = vmatpush1.msra.mxu0 0.0
        %4720 = vmatprep.subr.mxu0 0.0
        %4721 = vmatpush1.msra.mxu0 0.0
        %4722 = vmatprep.subr.mxu0 0.0
        %4723 = vmatpush1.msra.mxu0 0.0
        %4724 = vmatprep.subr.mxu0 0.0
        %4725 = vmatpush1.msra.mxu0 0.0
        %4726 = vmatprep.mubr.f32.mxu0 0.0
        %4727 = vmatmul.mubr.f32.gmra.mrb[0].mxu0 %v4660
        %v4728 = vpop.f32.mrb[0].mxu0
        %v4729 = vadd.f32 0.0, %v4728
        %v4730 = vpop.f32.mrb[0].mxu0
        %4731 = vdwg.mxu0
        %v4732 = vadd.f32 %v4491, %v4729
        %v4734 = vlaneseq
        %v4735 = vshrl.u32 %v4734, 7
        %v4736 = vsub.s32 0, %v4735
        %v4737 = vrot.slane %v3771, %v4736
        %v4739 = vadd.f32 %v4732, %v4737
        %v4740 = vadd.f32 %v3678, %v4739
        %s4741 = scalar_lea.vmem [#allocation7], 1
        %v4742 = vld [vmem:[%s4741] sm:$0x1]
        %s4743 = scalar_lea.vmem [#allocation9], 1
        %v4744 = vld [vmem:[%s4743] sm:$0x1]
        %v4745 = vsel %vm1080, %v4740, 0.0
        %4746 = vadd.xlane.f32.xlu0 %v4745
        %v4747 = vpop.xlane.xlu0 %4746
        %v4748 = vmul.f32 %v4747, %v2242
        %v4749 = vsub.f32 %v4740, %v4748
        %v4750 = vmul.f32 %v4749, %v4749
        %v4751 = vsel %vm1080, %v4750, 0.0
        %4752 = vadd.xlane.f32.xlu0 %v4751
        %v4753 = vpop.xlane.xlu0 %4752
        %v4754 = vmul.f32 %v4753, %v2242
        %v4755 = vadd.f32 %v4754, 1e-05
        %v4756 = vrsqrt.pop %v4755
        %v4757 = vmul.f32 %v4749, %v4756
        %v4759 = vlaneseq
        %v4760 = vshrl.u32 %v4759, 7
        %v4761 = vsub.s32 0, %v4760
        %v4762 = vrot.slane %v4742, %v4761
        %v4764 = vmul.f32 %v4757, %v4762
        %v4766 = vlaneseq
        %v4767 = vshrl.u32 %v4766, 7
        %v4768 = vsub.s32 0, %v4767
        %v4769 = vrot.slane %v4744, %v4768
        %v4771 = vadd.f32 %v4764, %v4769
        %s4772 = scalar_lea.vmem %s10, 32
        %v4773 = vld [vmem:[%s4772] sm:$0xff]
        %v4774 = vld [vmem:[%s4772 + $0x8] sm:$0xff]
        %v4775 = vld [vmem:[%s4772 + $0x10] sm:$0xff]
        %v4776 = vld [vmem:[%s4772 + $0x18] sm:$0xff]
        %s4777 = scalar_lea.vmem [#allocation10], 1
        %v4778 = vld [vmem:[%s4777] sm:$0x1]
        %v4780 = vlaneseq
        %v4781 = vshrl.u32 %v4780, 7
        %v4782 = vsub.s32 0, %v4781
        %v4783 = vrot.slane %v4778, %v4782
        %v4786 = vsel %vm1080, %v4771, 0
        %4788 = vmatprep.subr.mxu0 0.0
        %4789 = vmatpush1.msra.mxu0 %v4773
        %4790 = vmatprep.subr.mxu0 0.0
        %4791 = vmatpush1.msra.mxu0 %v4774
        %4792 = vmatprep.subr.mxu0 0.0
        %4793 = vmatpush1.msra.mxu0 %v4775
        %4794 = vmatprep.subr.mxu0 0.0
        %4795 = vmatpush1.msra.mxu0 %v4776
        %4796 = vmatprep.subr.mxu0 0.0
        %4797 = vmatpush1.msra.mxu0 0.0
        %4798 = vmatprep.subr.mxu0 0.0
        %4799 = vmatpush1.msra.mxu0 0.0
        %4800 = vmatprep.subr.mxu0 0.0
        %4801 = vmatpush1.msra.mxu0 0.0
        %4802 = vmatprep.subr.mxu0 0.0
        %4803 = vmatpush1.msra.mxu0 0.0
        %4804 = vmatprep.subr.mxu0 0.0
        %4805 = vmatpush1.msra.mxu0 0.0
        %4806 = vmatprep.subr.mxu0 0.0
        %4807 = vmatpush1.msra.mxu0 0.0
        %4808 = vmatprep.subr.mxu0 0.0
        %4809 = vmatpush1.msra.mxu0 0.0
        %4810 = vmatprep.subr.mxu0 0.0
        %4811 = vmatpush1.msra.mxu0 0.0
        %4812 = vmatprep.subr.mxu0 0.0
        %4813 = vmatpush1.msra.mxu0 0.0
        %4814 = vmatprep.subr.mxu0 0.0
        %4815 = vmatpush1.msra.mxu0 0.0
        %4816 = vmatprep.subr.mxu0 0.0
        %4817 = vmatpush1.msra.mxu0 0.0
        %4818 = vmatprep.subr.mxu0 0.0
        %4819 = vmatpush1.msra.mxu0 0.0
        %4820 = vmatprep.subr.mxu0 0.0
        %4821 = vmatpush1.msra.mxu0 0.0
        %4822 = vmatprep.subr.mxu0 0.0
        %4823 = vmatpush1.msra.mxu0 0.0
        %4824 = vmatprep.subr.mxu0 0.0
        %4825 = vmatpush1.msra.mxu0 0.0
        %4826 = vmatprep.subr.mxu0 0.0
        %4827 = vmatpush1.msra.mxu0 0.0
        %4828 = vmatprep.subr.mxu0 0.0
        %4829 = vmatpush1.msra.mxu0 0.0
        %4830 = vmatprep.subr.mxu0 0.0
        %4831 = vmatpush1.msra.mxu0 0.0
        %4832 = vmatprep.subr.mxu0 0.0
        %4833 = vmatpush1.msra.mxu0 0.0
        %4834 = vmatprep.subr.mxu0 0.0
        %4835 = vmatpush1.msra.mxu0 0.0
        %4836 = vmatprep.subr.mxu0 0.0
        %4837 = vmatpush1.msra.mxu0 0.0
        %4838 = vmatprep.subr.mxu0 0.0
        %4839 = vmatpush1.msra.mxu0 0.0
        %4840 = vmatprep.subr.mxu0 0.0
        %4841 = vmatpush1.msra.mxu0 0.0
        %4842 = vmatprep.subr.mxu0 0.0
        %4843 = vmatpush1.msra.mxu0 0.0
        %4844 = vmatprep.subr.mxu0 0.0
        %4845 = vmatpush1.msra.mxu0 0.0
        %4846 = vmatprep.subr.mxu0 0.0
        %4847 = vmatpush1.msra.mxu0 0.0
        %4848 = vmatprep.subr.mxu0 0.0
        %4849 = vmatpush1.msra.mxu0 0.0
        %4850 = vmatprep.subr.mxu0 0.0
        %4851 = vmatpush1.msra.mxu0 0.0
        %4852 = vmatprep.mubr.f32.mxu0 0.0
        %4853 = vmatmul.mubr.f32.gmra.mrb[0].mxu0 %v4786
        %v4854 = vpop.f32.mrb[0].mxu0
        %v4855 = vadd.f32 %v4783, %v4854
        %v4856 = vpop.f32.mrb[0].mxu0
        %4857 = vdwg.mxu0
        %s4858 = scalar_lea.vmem %s12, 32
        %v4859 = vld [vmem:[%s4858] sm:$0xff]
        %v4860 = vld [vmem:[%s4858 + $0x8] sm:$0xff]
        %v4861 = vld [vmem:[%s4858 + $0x10] sm:$0xff]
        %v4862 = vld [vmem:[%s4858 + $0x18] sm:$0xff]
        %s4863 = scalar_lea.vmem [#allocation12], 1
        %v4864 = vld [vmem:[%s4863] sm:$0x1]
        %v4866 = vlaneseq
        %v4867 = vshrl.u32 %v4866, 7
        %v4868 = vsub.s32 0, %v4867
        %v4869 = vrot.slane %v4864, %v4868
        %4871 = vmatprep.subr.mxu0 0.0
        %4872 = vmatpush1.msra.mxu0 %v4859
        %4873 = vmatprep.subr.mxu0 0.0
        %4874 = vmatpush1.msra.mxu0 %v4860
        %4875 = vmatprep.subr.mxu0 0.0
        %4876 = vmatpush1.msra.mxu0 %v4861
        %4877 = vmatprep.subr.mxu0 0.0
        %4878 = vmatpush1.msra.mxu0 %v4862
        %4879 = vmatprep.subr.mxu0 0.0
        %4880 = vmatpush1.msra.mxu0 0.0
        %4881 = vmatprep.subr.mxu0 0.0
        %4882 = vmatpush1.msra.mxu0 0.0
        %4883 = vmatprep.subr.mxu0 0.0
        %4884 = vmatpush1.msra.mxu0 0.0
        %4885 = vmatprep.subr.mxu0 0.0
        %4886 = vmatpush1.msra.mxu0 0.0
        %4887 = vmatprep.subr.mxu0 0.0
        %4888 = vmatpush1.msra.mxu0 0.0
        %4889 = vmatprep.subr.mxu0 0.0
        %4890 = vmatpush1.msra.mxu0 0.0
        %4891 = vmatprep.subr.mxu0 0.0
        %4892 = vmatpush1.msra.mxu0 0.0
        %4893 = vmatprep.subr.mxu0 0.0
        %4894 = vmatpush1.msra.mxu0 0.0
        %4895 = vmatprep.subr.mxu0 0.0
        %4896 = vmatpush1.msra.mxu0 0.0
        %4897 = vmatprep.subr.mxu0 0.0
        %4898 = vmatpush1.msra.mxu0 0.0
        %4899 = vmatprep.subr.mxu0 0.0
        %4900 = vmatpush1.msra.mxu0 0.0
        %4901 = vmatprep.subr.mxu0 0.0
        %4902 = vmatpush1.msra.mxu0 0.0
        %4903 = vmatprep.subr.mxu0 0.0
        %4904 = vmatpush1.msra.mxu0 0.0
        %4905 = vmatprep.subr.mxu0 0.0
        %4906 = vmatpush1.msra.mxu0 0.0
        %4907 = vmatprep.subr.mxu0 0.0
        %4908 = vmatpush1.msra.mxu0 0.0
        %4909 = vmatprep.subr.mxu0 0.0
        %4910 = vmatpush1.msra.mxu0 0.0
        %4911 = vmatprep.subr.mxu0 0.0
        %4912 = vmatpush1.msra.mxu0 0.0
        %4913 = vmatprep.subr.mxu0 0.0
        %4914 = vmatpush1.msra.mxu0 0.0
        %4915 = vmatprep.subr.mxu0 0.0
        %4916 = vmatpush1.msra.mxu0 0.0
        %4917 = vmatprep.subr.mxu0 0.0
        %4918 = vmatpush1.msra.mxu0 0.0
        %4919 = vmatprep.subr.mxu0 0.0
        %4920 = vmatpush1.msra.mxu0 0.0
        %4921 = vmatprep.subr.mxu0 0.0
        %4922 = vmatpush1.msra.mxu0 0.0
        %4923 = vmatprep.subr.mxu0 0.0
        %4924 = vmatpush1.msra.mxu0 0.0
        %4925 = vmatprep.subr.mxu0 0.0
        %4926 = vmatpush1.msra.mxu0 0.0
        %4927 = vmatprep.subr.mxu0 0.0
        %4928 = vmatpush1.msra.mxu0 0.0
        %4929 = vmatprep.subr.mxu0 0.0
        %4930 = vmatpush1.msra.mxu0 0.0
        %4931 = vmatprep.subr.mxu0 0.0
        %4932 = vmatpush1.msra.mxu0 0.0
        %4933 = vmatprep.subr.mxu0 0.0
        %4934 = vmatpush1.msra.mxu0 0.0
        %4935 = vmatprep.mubr.f32.mxu0 0.0
        %4936 = vmatmul.mubr.f32.gmra.mrb[0].mxu0 %v2363
        %v4937 = vpop.f32.mrb[0].mxu0
        %v4938 = vadd.f32 %v4869, %v4937
        %v4939 = vpop.f32.mrb[0].mxu0
        %4940 = vmatprep.mubr.f32.mxu0 0.0
        %4941 = vmatmul.mubr.f32.gmra.mrb[0].mxu0 %v2366
        %v4942 = vpop.f32.mrb[0].mxu0
        %v4943 = vadd.f32 %v4869, %v4942
        %v4944 = vpop.f32.mrb[0].mxu0
        %4945 = vdwg.mxu0
        %s4946 = scalar_lea.vmem %s14, 32
        %v4947 = vld [vmem:[%s4946] sm:$0xff]
        %v4948 = vld [vmem:[%s4946 + $0x8] sm:$0xff]
        %v4949 = vld [vmem:[%s4946 + $0x10] sm:$0xff]
        %v4950 = vld [vmem:[%s4946 + $0x18] sm:$0xff]
        %s4951 = scalar_lea.vmem [#allocation13], 1
        %v4952 = vld [vmem:[%s4951] sm:$0x1]
        %v4954 = vsel %vm1270, %v4855, 0
        %v4957 = vsel %vm1270, %v4938, 0
        %v4960 = vsel %vm1270, %v4943, 0
        %4962 = vmatprep.subr.mxu0 0.0
        %4963 = vmatpush1.xpose.msra.mxu0 %v4957
        %4964 = vmatprep.subr.mxu0 0.0
        %4965 = vmatpush1.xpose.msra.mxu0 %v4960
        %4966 = vmatprep.subr.mxu0 0.0
        %4967 = vmatpush1.xpose.msra.mxu0 0.0
        %4968 = vmatprep.subr.mxu0 0.0
        %4969 = vmatpush1.xpose.msra.mxu0 0.0
        %4970 = vmatprep.subr.mxu0 0.0
        %4971 = vmatpush1.xpose.msra.mxu0 0.0
        %4972 = vmatprep.subr.mxu0 0.0
        %4973 = vmatpush1.xpose.msra.mxu0 0.0
        %4974 = vmatprep.subr.mxu0 0.0
        %4975 = vmatpush1.xpose.msra.mxu0 0.0
        %4976 = vmatprep.subr.mxu0 0.0
        %4977 = vmatpush1.xpose.msra.mxu0 0.0
        %4978 = vmatprep.subr.mxu0 0.0
        %4979 = vmatpush1.xpose.msra.mxu0 0.0
        %4980 = vmatprep.subr.mxu0 0.0
        %4981 = vmatpush1.xpose.msra.mxu0 0.0
        %4982 = vmatprep.subr.mxu0 0.0
        %4983 = vmatpush1.xpose.msra.mxu0 0.0
        %4984 = vmatprep.subr.mxu0 0.0
        %4985 = vmatpush1.xpose.msra.mxu0 0.0
        %4986 = vmatprep.subr.mxu0 0.0
        %4987 = vmatpush1.xpose.msra.mxu0 0.0
        %4988 = vmatprep.subr.mxu0 0.0
        %4989 = vmatpush1.xpose.msra.mxu0 0.0
        %4990 = vmatprep.subr.mxu0 0.0
        %4991 = vmatpush1.xpose.msra.mxu0 0.0
        %4992 = vmatprep.subr.mxu0 0.0
        %4993 = vmatpush1.xpose.msra.mxu0 0.0
        %4994 = vmatprep.subr.mxu0 0.0
        %4995 = vmatpush1.xpose.msra.mxu0 0.0
        %4996 = vmatprep.subr.mxu0 0.0
        %4997 = vmatpush1.xpose.msra.mxu0 0.0
        %4998 = vmatprep.subr.mxu0 0.0
        %4999 = vmatpush1.xpose.msra.mxu0 0.0
        %5000 = vmatprep.subr.mxu0 0.0
        %5001 = vmatpush1.xpose.msra.mxu0 0.0
        %5002 = vmatprep.subr.mxu0 0.0
        %5003 = vmatpush1.xpose.msra.mxu0 0.0
        %5004 = vmatprep.subr.mxu0 0.0
        %5005 = vmatpush1.xpose.msra.mxu0 0.0
        %5006 = vmatprep.subr.mxu0 0.0
        %5007 = vmatpush1.xpose.msra.mxu0 0.0
        %5008 = vmatprep.subr.mxu0 0.0
        %5009 = vmatpush1.xpose.msra.mxu0 0.0
        %5010 = vmatprep.subr.mxu0 0.0
        %5011 = vmatpush1.xpose.msra.mxu0 0.0
        %5012 = vmatprep.subr.mxu0 0.0
        %5013 = vmatpush1.xpose.msra.mxu0 0.0
        %5014 = vmatprep.subr.mxu0 0.0
        %5015 = vmatpush1.xpose.msra.mxu0 0.0
        %5016 = vmatprep.subr.mxu0 0.0
        %5017 = vmatpush1.xpose.msra.mxu0 0.0
        %5018 = vmatprep.subr.mxu0 0.0
        %5019 = vmatpush1.xpose.msra.mxu0 0.0
        %5020 = vmatprep.subr.mxu0 0.0
        %5021 = vmatpush1.xpose.msra.mxu0 0.0
        %5022 = vmatprep.subr.mxu0 0.0
        %5023 = vmatpush1.xpose.msra.mxu0 0.0
        %5024 = vmatprep.subr.mxu0 0.0
        %5025 = vmatpush1.xpose.msra.mxu0 0.0
        %5026 = vmatprep.mubr.f32.mxu0 0.0
        %5027 = vmatmul.mubr.f32.gmra.mrb[0].mxu0 %v4954
        %v5028 = vpop.f32.mrb[0].mxu0
        %v5029 = vadd.f32 0.0, %v5028
        %v5030 = vpop.f32.mrb[0].mxu0
        %5031 = vdwg.mxu0
        %v5032 = vmul.f32 %v5029, 0.35355338
        %v5033 = vsel %vm2528, %v5032, -inf
        %5034 = vmax.xlane.f32.xlu0 %v5033
        %v5035 = vpop.xlane.xlu0 %5034
        %v5036 = vsub.f32 %v5032, %v5035
        %v5037 = vmul.f32 %v5036, 1.442695
        %v5038 = vpow.pop %v5037
        %v5039 = vsel %vm2528, %v5038, 0.0
        %5040 = vadd.xlane.f32.xlu0 %v5039
        %v5041 = vpop.xlane.xlu0 %5040
        %v5042 = vrcp.pop %v5041
        %v5043 = vmul.f32 %v5038, %v5042
        %5044 = vrot.lane.b32.xlu0 %v4938, 96
        %v5045 = vpop.permute.xlu0 %5044
        %5046 = vrot.lane.b32.xlu0 %v4943, 96
        %v5047 = vpop.permute.xlu0 %5046
        %v5051 = vsel %vm2528, %v5043, 0
        %5053 = vmatprep.subr.mxu0 0.0
        %5054 = vmatpush1.msra.mxu0 %v5045
        %5055 = vmatprep.subr.mxu0 0.0
        %5056 = vmatpush1.msra.mxu0 %v5047
        %5057 = vmatprep.subr.mxu0 0.0
        %5058 = vmatpush1.msra.mxu0 0.0
        %5059 = vmatprep.subr.mxu0 0.0
        %5060 = vmatpush1.msra.mxu0 0.0
        %5061 = vmatprep.subr.mxu0 0.0
        %5062 = vmatpush1.msra.mxu0 0.0
        %5063 = vmatprep.subr.mxu0 0.0
        %5064 = vmatpush1.msra.mxu0 0.0
        %5065 = vmatprep.subr.mxu0 0.0
        %5066 = vmatpush1.msra.mxu0 0.0
        %5067 = vmatprep.subr.mxu0 0.0
        %5068 = vmatpush1.msra.mxu0 0.0
        %5069 = vmatprep.subr.mxu0 0.0
        %5070 = vmatpush1.msra.mxu0 0.0
        %5071 = vmatprep.subr.mxu0 0.0
        %5072 = vmatpush1.msra.mxu0 0.0
        %5073 = vmatprep.subr.mxu0 0.0
        %5074 = vmatpush1.msra.mxu0 0.0
        %5075 = vmatprep.subr.mxu0 0.0
        %5076 = vmatpush1.msra.mxu0 0.0
        %5077 = vmatprep.subr.mxu0 0.0
        %5078 = vmatpush1.msra.mxu0 0.0
        %5079 = vmatprep.subr.mxu0 0.0
        %5080 = vmatpush1.msra.mxu0 0.0
        %5081 = vmatprep.subr.mxu0 0.0
        %5082 = vmatpush1.msra.mxu0 0.0
        %5083 = vmatprep.subr.mxu0 0.0
        %5084 = vmatpush1.msra.mxu0 0.0
        %5085 = vmatprep.subr.mxu0 0.0
        %5086 = vmatpush1.msra.mxu0 0.0
        %5087 = vmatprep.subr.mxu0 0.0
        %5088 = vmatpush1.msra.mxu0 0.0
        %5089 = vmatprep.subr.mxu0 0.0
        %5090 = vmatpush1.msra.mxu0 0.0
        %5091 = vmatprep.subr.mxu0 0.0
        %5092 = vmatpush1.msra.mxu0 0.0
        %5093 = vmatprep.subr.mxu0 0.0
        %5094 = vmatpush1.msra.mxu0 0.0
        %5095 = vmatprep.subr.mxu0 0.0
        %5096 = vmatpush1.msra.mxu0 0.0
        %5097 = vmatprep.subr.mxu0 0.0
        %5098 = vmatpush1.msra.mxu0 0.0
        %5099 = vmatprep.subr.mxu0 0.0
        %5100 = vmatpush1.msra.mxu0 0.0
        %5101 = vmatprep.subr.mxu0 0.0
        %5102 = vmatpush1.msra.mxu0 0.0
        %5103 = vmatprep.subr.mxu0 0.0
        %5104 = vmatpush1.msra.mxu0 0.0
        %5105 = vmatprep.subr.mxu0 0.0
        %5106 = vmatpush1.msra.mxu0 0.0
        %5107 = vmatprep.subr.mxu0 0.0
        %5108 = vmatpush1.msra.mxu0 0.0
        %5109 = vmatprep.subr.mxu0 0.0
        %5110 = vmatpush1.msra.mxu0 0.0
        %5111 = vmatprep.subr.mxu0 0.0
        %5112 = vmatpush1.msra.mxu0 0.0
        %5113 = vmatprep.subr.mxu0 0.0
        %5114 = vmatpush1.msra.mxu0 0.0
        %5115 = vmatprep.subr.mxu0 0.0
        %5116 = vmatpush1.msra.mxu0 0.0
        %5117 = vmatprep.mubr.f32.mxu0 0.0
        %5118 = vmatmul.mubr.f32.gmra.mrb[0].mxu0 %v5051
        %v5119 = vpop.f32.mrb[0].mxu0
        %v5120 = vadd.f32 0.0, %v5119
        %v5121 = vpop.f32.mrb[0].mxu0
        %5122 = vdwg.mxu0
        %v5123 = vadd.f32 %v5043, 0.0
        %5124 = vrot.lane.b32.xlu0 %v4855, 120
        %v5125 = vpop.permute.xlu0 %5124
        %5126 = vrot.lane.b32.xlu0 %v4938, 120
        %v5127 = vpop.permute.xlu0 %5126
        %5128 = vrot.lane.b32.xlu0 %v4943, 120
        %v5129 = vpop.permute.xlu0 %5128
        %v5130 = vsel %vm1270, %v5125, 0
        %v5132 = vsel %vm1270, %v5127, 0
        %v5134 = vsel %vm1270, %v5129, 0
        %5136 = vmatprep.subr.mxu0 0.0
        %5137 = vmatpush1.xpose.msra.mxu0 %v5132
        %5138 = vmatprep.subr.mxu0 0.0
        %5139 = vmatpush1.xpose.msra.mxu0 %v5134
        %5140 = vmatprep.subr.mxu0 0.0
        %5141 = vmatpush1.xpose.msra.mxu0 0.0
        %5142 = vmatprep.subr.mxu0 0.0
        %5143 = vmatpush1.xpose.msra.mxu0 0.0
        %5144 = vmatprep.subr.mxu0 0.0
        %5145 = vmatpush1.xpose.msra.mxu0 0.0
        %5146 = vmatprep.subr.mxu0 0.0
        %5147 = vmatpush1.xpose.msra.mxu0 0.0
        %5148 = vmatprep.subr.mxu0 0.0
        %5149 = vmatpush1.xpose.msra.mxu0 0.0
        %5150 = vmatprep.subr.mxu0 0.0
        %5151 = vmatpush1.xpose.msra.mxu0 0.0
        %5152 = vmatprep.subr.mxu0 0.0
        %5153 = vmatpush1.xpose.msra.mxu0 0.0
        %5154 = vmatprep.subr.mxu0 0.0
        %5155 = vmatpush1.xpose.msra.mxu0 0.0
        %5156 = vmatprep.subr.mxu0 0.0
        %5157 = vmatpush1.xpose.msra.mxu0 0.0
        %5158 = vmatprep.subr.mxu0 0.0
        %5159 = vmatpush1.xpose.msra.mxu0 0.0
        %5160 = vmatprep.subr.mxu0 0.0
        %5161 = vmatpush1.xpose.msra.mxu0 0.0
        %5162 = vmatprep.subr.mxu0 0.0
        %5163 = vmatpush1.xpose.msra.mxu0 0.0
        %5164 = vmatprep.subr.mxu0 0.0
        %5165 = vmatpush1.xpose.msra.mxu0 0.0
        %5166 = vmatprep.subr.mxu0 0.0
        %5167 = vmatpush1.xpose.msra.mxu0 0.0
        %5168 = vmatprep.subr.mxu0 0.0
        %5169 = vmatpush1.xpose.msra.mxu0 0.0
        %5170 = vmatprep.subr.mxu0 0.0
        %5171 = vmatpush1.xpose.msra.mxu0 0.0
        %5172 = vmatprep.subr.mxu0 0.0
        %5173 = vmatpush1.xpose.msra.mxu0 0.0
        %5174 = vmatprep.subr.mxu0 0.0
        %5175 = vmatpush1.xpose.msra.mxu0 0.0
        %5176 = vmatprep.subr.mxu0 0.0
        %5177 = vmatpush1.xpose.msra.mxu0 0.0
        %5178 = vmatprep.subr.mxu0 0.0
        %5179 = vmatpush1.xpose.msra.mxu0 0.0
        %5180 = vmatprep.subr.mxu0 0.0
        %5181 = vmatpush1.xpose.msra.mxu0 0.0
        %5182 = vmatprep.subr.mxu0 0.0
        %5183 = vmatpush1.xpose.msra.mxu0 0.0
        %5184 = vmatprep.subr.mxu0 0.0
        %5185 = vmatpush1.xpose.msra.mxu0 0.0
        %5186 = vmatprep.subr.mxu0 0.0
        %5187 = vmatpush1.xpose.msra.mxu0 0.0
        %5188 = vmatprep.subr.mxu0 0.0
        %5189 = vmatpush1.xpose.msra.mxu0 0.0
        %5190 = vmatprep.subr.mxu0 0.0
        %5191 = vmatpush1.xpose.msra.mxu0 0.0
        %5192 = vmatprep.subr.mxu0 0.0
        %5193 = vmatpush1.xpose.msra.mxu0 0.0
        %5194 = vmatprep.subr.mxu0 0.0
        %5195 = vmatpush1.xpose.msra.mxu0 0.0
        %5196 = vmatprep.subr.mxu0 0.0
        %5197 = vmatpush1.xpose.msra.mxu0 0.0
        %5198 = vmatprep.subr.mxu0 0.0
        %5199 = vmatpush1.xpose.msra.mxu0 0.0
        %5200 = vmatprep.mubr.f32.mxu0 0.0
        %5201 = vmatmul.mubr.f32.gmra.mrb[0].mxu0 %v5130
        %v5202 = vpop.f32.mrb[0].mxu0
        %v5203 = vadd.f32 0.0, %v5202
        %v5204 = vpop.f32.mrb[0].mxu0
        %5205 = vdwg.mxu0
        %v5206 = vmul.f32 %v5203, 0.35355338
        %v5207 = vsel %vm2528, %v5206, -inf
        %5208 = vmax.xlane.f32.xlu0 %v5207
        %v5209 = vpop.xlane.xlu0 %5208
        %v5210 = vsub.f32 %v5206, %v5209
        %v5211 = vmul.f32 %v5210, 1.442695
        %v5212 = vpow.pop %v5211
        %v5213 = vsel %vm2528, %v5212, 0.0
        %5214 = vadd.xlane.f32.xlu0 %v5213
        %v5215 = vpop.xlane.xlu0 %5214
        %v5216 = vrcp.pop %v5215
        %v5217 = vmul.f32 %v5212, %v5216
        %5218 = vrot.lane.b32.xlu0 %v4938, 88
        %v5219 = vpop.permute.xlu0 %5218
        %5220 = vrot.lane.b32.xlu0 %v4943, 88
        %v5221 = vpop.permute.xlu0 %5220
        %v5225 = vsel %vm2528, %v5217, 0
        %5227 = vmatprep.subr.mxu0 0.0
        %5228 = vmatpush1.msra.mxu0 %v5219
        %5229 = vmatprep.subr.mxu0 0.0
        %5230 = vmatpush1.msra.mxu0 %v5221
        %5231 = vmatprep.subr.mxu0 0.0
        %5232 = vmatpush1.msra.mxu0 0.0
        %5233 = vmatprep.subr.mxu0 0.0
        %5234 = vmatpush1.msra.mxu0 0.0
        %5235 = vmatprep.subr.mxu0 0.0
        %5236 = vmatpush1.msra.mxu0 0.0
        %5237 = vmatprep.subr.mxu0 0.0
        %5238 = vmatpush1.msra.mxu0 0.0
        %5239 = vmatprep.subr.mxu0 0.0
        %5240 = vmatpush1.msra.mxu0 0.0
        %5241 = vmatprep.subr.mxu0 0.0
        %5242 = vmatpush1.msra.mxu0 0.0
        %5243 = vmatprep.subr.mxu0 0.0
        %5244 = vmatpush1.msra.mxu0 0.0
        %5245 = vmatprep.subr.mxu0 0.0
        %5246 = vmatpush1.msra.mxu0 0.0
        %5247 = vmatprep.subr.mxu0 0.0
        %5248 = vmatpush1.msra.mxu0 0.0
        %5249 = vmatprep.subr.mxu0 0.0
        %5250 = vmatpush1.msra.mxu0 0.0
        %5251 = vmatprep.subr.mxu0 0.0
        %5252 = vmatpush1.msra.mxu0 0.0
        %5253 = vmatprep.subr.mxu0 0.0
        %5254 = vmatpush1.msra.mxu0 0.0
        %5255 = vmatprep.subr.mxu0 0.0
        %5256 = vmatpush1.msra.mxu0 0.0
        %5257 = vmatprep.subr.mxu0 0.0
        %5258 = vmatpush1.msra.mxu0 0.0
        %5259 = vmatprep.subr.mxu0 0.0
        %5260 = vmatpush1.msra.mxu0 0.0
        %5261 = vmatprep.subr.mxu0 0.0
        %5262 = vmatpush1.msra.mxu0 0.0
        %5263 = vmatprep.subr.mxu0 0.0
        %5264 = vmatpush1.msra.mxu0 0.0
        %5265 = vmatprep.subr.mxu0 0.0
        %5266 = vmatpush1.msra.mxu0 0.0
        %5267 = vmatprep.subr.mxu0 0.0
        %5268 = vmatpush1.msra.mxu0 0.0
        %5269 = vmatprep.subr.mxu0 0.0
        %5270 = vmatpush1.msra.mxu0 0.0
        %5271 = vmatprep.subr.mxu0 0.0
        %5272 = vmatpush1.msra.mxu0 0.0
        %5273 = vmatprep.subr.mxu0 0.0
        %5274 = vmatpush1.msra.mxu0 0.0
        %5275 = vmatprep.subr.mxu0 0.0
        %5276 = vmatpush1.msra.mxu0 0.0
        %5277 = vmatprep.subr.mxu0 0.0
        %5278 = vmatpush1.msra.mxu0 0.0
        %5279 = vmatprep.subr.mxu0 0.0
        %5280 = vmatpush1.msra.mxu0 0.0
        %5281 = vmatprep.subr.mxu0 0.0
        %5282 = vmatpush1.msra.mxu0 0.0
        %5283 = vmatprep.subr.mxu0 0.0
        %5284 = vmatpush1.msra.mxu0 0.0
        %5285 = vmatprep.subr.mxu0 0.0
        %5286 = vmatpush1.msra.mxu0 0.0
        %5287 = vmatprep.subr.mxu0 0.0
        %5288 = vmatpush1.msra.mxu0 0.0
        %5289 = vmatprep.subr.mxu0 0.0
        %5290 = vmatpush1.msra.mxu0 0.0
        %5291 = vmatprep.mubr.f32.mxu0 0.0
        %5292 = vmatmul.mubr.f32.gmra.mrb[0].mxu0 %v5225
        %v5293 = vpop.f32.mrb[0].mxu0
        %v5294 = vadd.f32 0.0, %v5293
        %v5295 = vpop.f32.mrb[0].mxu0
        %5296 = vdwg.mxu0
        %v5298 = vsel %vm1270, %v5294, 0
        %5300 = vmatprep.subr.mxu0 0.0
        %5301 = vmatpush1.msra.mxu0 %v4948
        %5302 = vmatprep.subr.mxu0 0.0
        %5303 = vmatpush1.msra.mxu0 0.0
        %5304 = vmatprep.subr.mxu0 0.0
        %5305 = vmatpush1.msra.mxu0 0.0
        %5306 = vmatprep.subr.mxu0 0.0
        %5307 = vmatpush1.msra.mxu0 0.0
        %5308 = vmatprep.subr.mxu0 0.0
        %5309 = vmatpush1.msra.mxu0 0.0
        %5310 = vmatprep.subr.mxu0 0.0
        %5311 = vmatpush1.msra.mxu0 0.0
        %5312 = vmatprep.subr.mxu0 0.0
        %5313 = vmatpush1.msra.mxu0 0.0
        %5314 = vmatprep.subr.mxu0 0.0
        %5315 = vmatpush1.msra.mxu0 0.0
        %5316 = vmatprep.subr.mxu0 0.0
        %5317 = vmatpush1.msra.mxu0 0.0
        %5318 = vmatprep.subr.mxu0 0.0
        %5319 = vmatpush1.msra.mxu0 0.0
        %5320 = vmatprep.subr.mxu0 0.0
        %5321 = vmatpush1.msra.mxu0 0.0
        %5322 = vmatprep.subr.mxu0 0.0
        %5323 = vmatpush1.msra.mxu0 0.0
        %5324 = vmatprep.subr.mxu0 0.0
        %5325 = vmatpush1.msra.mxu0 0.0
        %5326 = vmatprep.subr.mxu0 0.0
        %5327 = vmatpush1.msra.mxu0 0.0
        %5328 = vmatprep.subr.mxu0 0.0
        %5329 = vmatpush1.msra.mxu0 0.0
        %5330 = vmatprep.subr.mxu0 0.0
        %5331 = vmatpush1.msra.mxu0 0.0
        %5332 = vmatprep.subr.mxu0 0.0
        %5333 = vmatpush1.msra.mxu0 0.0
        %5334 = vmatprep.subr.mxu0 0.0
        %5335 = vmatpush1.msra.mxu0 0.0
        %5336 = vmatprep.subr.mxu0 0.0
        %5337 = vmatpush1.msra.mxu0 0.0
        %5338 = vmatprep.subr.mxu0 0.0
        %5339 = vmatpush1.msra.mxu0 0.0
        %5340 = vmatprep.subr.mxu0 0.0
        %5341 = vmatpush1.msra.mxu0 0.0
        %5342 = vmatprep.subr.mxu0 0.0
        %5343 = vmatpush1.msra.mxu0 0.0
        %5344 = vmatprep.subr.mxu0 0.0
        %5345 = vmatpush1.msra.mxu0 0.0
        %5346 = vmatprep.subr.mxu0 0.0
        %5347 = vmatpush1.msra.mxu0 0.0
        %5348 = vmatprep.subr.mxu0 0.0
        %5349 = vmatpush1.msra.mxu0 0.0
        %5350 = vmatprep.subr.mxu0 0.0
        %5351 = vmatpush1.msra.mxu0 0.0
        %5352 = vmatprep.subr.mxu0 0.0
        %5353 = vmatpush1.msra.mxu0 0.0
        %5354 = vmatprep.subr.mxu0 0.0
        %5355 = vmatpush1.msra.mxu0 0.0
        %5356 = vmatprep.subr.mxu0 0.0
        %5357 = vmatpush1.msra.mxu0 0.0
        %5358 = vmatprep.subr.mxu0 0.0
        %5359 = vmatpush1.msra.mxu0 0.0
        %5360 = vmatprep.subr.mxu0 0.0
        %5361 = vmatpush1.msra.mxu0 0.0
        %5362 = vmatprep.subr.mxu0 0.0
        %5363 = vmatpush1.msra.mxu0 0.0
        %5364 = vmatprep.mubr.f32.mxu0 0.0
        %5365 = vmatmul.mubr.f32.gmra.mrb[0].mxu0 %v5298
        %v5366 = vpop.f32.mrb[0].mxu0
        %v5367 = vadd.f32 0.0, %v5366
        %v5368 = vpop.f32.mrb[0].mxu0
        %5369 = vdwg.mxu0
        %v5371 = vsel %vm1270, %v5120, 0
        %5373 = vmatprep.subr.mxu0 0.0
        %5374 = vmatpush1.msra.mxu0 %v4947
        %5375 = vmatprep.subr.mxu0 0.0
        %5376 = vmatpush1.msra.mxu0 0.0
        %5377 = vmatprep.subr.mxu0 0.0
        %5378 = vmatpush1.msra.mxu0 0.0
        %5379 = vmatprep.subr.mxu0 0.0
        %5380 = vmatpush1.msra.mxu0 0.0
        %5381 = vmatprep.subr.mxu0 0.0
        %5382 = vmatpush1.msra.mxu0 0.0
        %5383 = vmatprep.subr.mxu0 0.0
        %5384 = vmatpush1.msra.mxu0 0.0
        %5385 = vmatprep.subr.mxu0 0.0
        %5386 = vmatpush1.msra.mxu0 0.0
        %5387 = vmatprep.subr.mxu0 0.0
        %5388 = vmatpush1.msra.mxu0 0.0
        %5389 = vmatprep.subr.mxu0 0.0
        %5390 = vmatpush1.msra.mxu0 0.0
        %5391 = vmatprep.subr.mxu0 0.0
        %5392 = vmatpush1.msra.mxu0 0.0
        %5393 = vmatprep.subr.mxu0 0.0
        %5394 = vmatpush1.msra.mxu0 0.0
        %5395 = vmatprep.subr.mxu0 0.0
        %5396 = vmatpush1.msra.mxu0 0.0
        %5397 = vmatprep.subr.mxu0 0.0
        %5398 = vmatpush1.msra.mxu0 0.0
        %5399 = vmatprep.subr.mxu0 0.0
        %5400 = vmatpush1.msra.mxu0 0.0
        %5401 = vmatprep.subr.mxu0 0.0
        %5402 = vmatpush1.msra.mxu0 0.0
        %5403 = vmatprep.subr.mxu0 0.0
        %5404 = vmatpush1.msra.mxu0 0.0
        %5405 = vmatprep.subr.mxu0 0.0
        %5406 = vmatpush1.msra.mxu0 0.0
        %5407 = vmatprep.subr.mxu0 0.0
        %5408 = vmatpush1.msra.mxu0 0.0
        %5409 = vmatprep.subr.mxu0 0.0
        %5410 = vmatpush1.msra.mxu0 0.0
        %5411 = vmatprep.subr.mxu0 0.0
        %5412 = vmatpush1.msra.mxu0 0.0
        %5413 = vmatprep.subr.mxu0 0.0
        %5414 = vmatpush1.msra.mxu0 0.0
        %5415 = vmatprep.subr.mxu0 0.0
        %5416 = vmatpush1.msra.mxu0 0.0
        %5417 = vmatprep.subr.mxu0 0.0
        %5418 = vmatpush1.msra.mxu0 0.0
        %5419 = vmatprep.subr.mxu0 0.0
        %5420 = vmatpush1.msra.mxu0 0.0
        %5421 = vmatprep.subr.mxu0 0.0
        %5422 = vmatpush1.msra.mxu0 0.0
        %5423 = vmatprep.subr.mxu0 0.0
        %5424 = vmatpush1.msra.mxu0 0.0
        %5425 = vmatprep.subr.mxu0 0.0
        %5426 = vmatpush1.msra.mxu0 0.0
        %5427 = vmatprep.subr.mxu0 0.0
        %5428 = vmatpush1.msra.mxu0 0.0
        %5429 = vmatprep.subr.mxu0 0.0
        %5430 = vmatpush1.msra.mxu0 0.0
        %5431 = vmatprep.subr.mxu0 0.0
        %5432 = vmatpush1.msra.mxu0 0.0
        %5433 = vmatprep.subr.mxu0 0.0
        %5434 = vmatpush1.msra.mxu0 0.0
        %5435 = vmatprep.subr.mxu0 0.0
        %5436 = vmatpush1.msra.mxu0 0.0
        %5437 = vmatprep.mubr.f32.mxu0 0.0
        %5438 = vmatmul.mubr.f32.gmra.mrb[0].mxu0 %v5371
        %v5439 = vpop.f32.mrb[0].mxu0
        %v5440 = vadd.f32 %v5367, %v5439
        %v5441 = vpop.f32.mrb[0].mxu0
        %5442 = vdwg.mxu0
        %v5443 = vadd.f32 %v5123, %v5217
        %5444 = vrot.lane.b32.xlu0 %v4855, 112
        %v5445 = vpop.permute.xlu0 %5444
        %5446 = vrot.lane.b32.xlu0 %v4938, 112
        %v5447 = vpop.permute.xlu0 %5446
        %5448 = vrot.lane.b32.xlu0 %v4943, 112
        %v5449 = vpop.permute.xlu0 %5448
        %v5450 = vsel %vm1270, %v5445, 0
        %v5452 = vsel %vm1270, %v5447, 0
        %v5454 = vsel %vm1270, %v5449, 0
        %5456 = vmatprep.subr.mxu0 0.0
        %5457 = vmatpush1.xpose.msra.mxu0 %v5452
        %5458 = vmatprep.subr.mxu0 0.0
        %5459 = vmatpush1.xpose.msra.mxu0 %v5454
        %5460 = vmatprep.subr.mxu0 0.0
        %5461 = vmatpush1.xpose.msra.mxu0 0.0
        %5462 = vmatprep.subr.mxu0 0.0
        %5463 = vmatpush1.xpose.msra.mxu0 0.0
        %5464 = vmatprep.subr.mxu0 0.0
        %5465 = vmatpush1.xpose.msra.mxu0 0.0
        %5466 = vmatprep.subr.mxu0 0.0
        %5467 = vmatpush1.xpose.msra.mxu0 0.0
        %5468 = vmatprep.subr.mxu0 0.0
        %5469 = vmatpush1.xpose.msra.mxu0 0.0
        %5470 = vmatprep.subr.mxu0 0.0
        %5471 = vmatpush1.xpose.msra.mxu0 0.0
        %5472 = vmatprep.subr.mxu0 0.0
        %5473 = vmatpush1.xpose.msra.mxu0 0.0
        %5474 = vmatprep.subr.mxu0 0.0
        %5475 = vmatpush1.xpose.msra.mxu0 0.0
        %5476 = vmatprep.subr.mxu0 0.0
        %5477 = vmatpush1.xpose.msra.mxu0 0.0
        %5478 = vmatprep.subr.mxu0 0.0
        %5479 = vmatpush1.xpose.msra.mxu0 0.0
        %5480 = vmatprep.subr.mxu0 0.0
        %5481 = vmatpush1.xpose.msra.mxu0 0.0
        %5482 = vmatprep.subr.mxu0 0.0
        %5483 = vmatpush1.xpose.msra.mxu0 0.0
        %5484 = vmatprep.subr.mxu0 0.0
        %5485 = vmatpush1.xpose.msra.mxu0 0.0
        %5486 = vmatprep.subr.mxu0 0.0
        %5487 = vmatpush1.xpose.msra.mxu0 0.0
        %5488 = vmatprep.subr.mxu0 0.0
        %5489 = vmatpush1.xpose.msra.mxu0 0.0
        %5490 = vmatprep.subr.mxu0 0.0
        %5491 = vmatpush1.xpose.msra.mxu0 0.0
        %5492 = vmatprep.subr.mxu0 0.0
        %5493 = vmatpush1.xpose.msra.mxu0 0.0
        %5494 = vmatprep.subr.mxu0 0.0
        %5495 = vmatpush1.xpose.msra.mxu0 0.0
        %5496 = vmatprep.subr.mxu0 0.0
        %5497 = vmatpush1.xpose.msra.mxu0 0.0
        %5498 = vmatprep.subr.mxu0 0.0
        %5499 = vmatpush1.xpose.msra.mxu0 0.0
        %5500 = vmatprep.subr.mxu0 0.0
        %5501 = vmatpush1.xpose.msra.mxu0 0.0
        %5502 = vmatprep.subr.mxu0 0.0
        %5503 = vmatpush1.xpose.msra.mxu0 0.0
        %5504 = vmatprep.subr.mxu0 0.0
        %5505 = vmatpush1.xpose.msra.mxu0 0.0
        %5506 = vmatprep.subr.mxu0 0.0
        %5507 = vmatpush1.xpose.msra.mxu0 0.0
        %5508 = vmatprep.subr.mxu0 0.0
        %5509 = vmatpush1.xpose.msra.mxu0 0.0
        %5510 = vmatprep.subr.mxu0 0.0
        %5511 = vmatpush1.xpose.msra.mxu0 0.0
        %5512 = vmatprep.subr.mxu0 0.0
        %5513 = vmatpush1.xpose.msra.mxu0 0.0
        %5514 = vmatprep.subr.mxu0 0.0
        %5515 = vmatpush1.xpose.msra.mxu0 0.0
        %5516 = vmatprep.subr.mxu0 0.0
        %5517 = vmatpush1.xpose.msra.mxu0 0.0
        %5518 = vmatprep.subr.mxu0 0.0
        %5519 = vmatpush1.xpose.msra.mxu0 0.0
        %5520 = vmatprep.mubr.f32.mxu0 0.0
        %5521 = vmatmul.mubr.f32.gmra.mrb[0].mxu0 %v5450
        %v5522 = vpop.f32.mrb[0].mxu0
        %v5523 = vadd.f32 0.0, %v5522
        %v5524 = vpop.f32.mrb[0].mxu0
        %5525 = vdwg.mxu0
        %v5526 = vmul.f32 %v5523, 0.35355338
        %v5527 = vsel %vm2528, %v5526, -inf
        %5528 = vmax.xlane.f32.xlu0 %v5527
        %v5529 = vpop.xlane.xlu0 %5528
        %v5530 = vsub.f32 %v5526, %v5529
        %v5531 = vmul.f32 %v5530, 1.442695
        %v5532 = vpow.pop %v5531
        %v5533 = vsel %vm2528, %v5532, 0.0
        %5534 = vadd.xlane.f32.xlu0 %v5533
        %v5535 = vpop.xlane.xlu0 %5534
        %v5536 = vrcp.pop %v5535
        %v5537 = vmul.f32 %v5532, %v5536
        %5538 = vrot.lane.b32.xlu0 %v4938, 80
        %v5539 = vpop.permute.xlu0 %5538
        %5540 = vrot.lane.b32.xlu0 %v4943, 80
        %v5541 = vpop.permute.xlu0 %5540
        %v5545 = vsel %vm2528, %v5537, 0
        %5547 = vmatprep.subr.mxu0 0.0
        %5548 = vmatpush1.msra.mxu0 %v5539
        %5549 = vmatprep.subr.mxu0 0.0
        %5550 = vmatpush1.msra.mxu0 %v5541
        %5551 = vmatprep.subr.mxu0 0.0
        %5552 = vmatpush1.msra.mxu0 0.0
        %5553 = vmatprep.subr.mxu0 0.0
        %5554 = vmatpush1.msra.mxu0 0.0
        %5555 = vmatprep.subr.mxu0 0.0
        %5556 = vmatpush1.msra.mxu0 0.0
        %5557 = vmatprep.subr.mxu0 0.0
        %5558 = vmatpush1.msra.mxu0 0.0
        %5559 = vmatprep.subr.mxu0 0.0
        %5560 = vmatpush1.msra.mxu0 0.0
        %5561 = vmatprep.subr.mxu0 0.0
        %5562 = vmatpush1.msra.mxu0 0.0
        %5563 = vmatprep.subr.mxu0 0.0
        %5564 = vmatpush1.msra.mxu0 0.0
        %5565 = vmatprep.subr.mxu0 0.0
        %5566 = vmatpush1.msra.mxu0 0.0
        %5567 = vmatprep.subr.mxu0 0.0
        %5568 = vmatpush1.msra.mxu0 0.0
        %5569 = vmatprep.subr.mxu0 0.0
        %5570 = vmatpush1.msra.mxu0 0.0
        %5571 = vmatprep.subr.mxu0 0.0
        %5572 = vmatpush1.msra.mxu0 0.0
        %5573 = vmatprep.subr.mxu0 0.0
        %5574 = vmatpush1.msra.mxu0 0.0
        %5575 = vmatprep.subr.mxu0 0.0
        %5576 = vmatpush1.msra.mxu0 0.0
        %5577 = vmatprep.subr.mxu0 0.0
        %5578 = vmatpush1.msra.mxu0 0.0
        %5579 = vmatprep.subr.mxu0 0.0
        %5580 = vmatpush1.msra.mxu0 0.0
        %5581 = vmatprep.subr.mxu0 0.0
        %5582 = vmatpush1.msra.mxu0 0.0
        %5583 = vmatprep.subr.mxu0 0.0
        %5584 = vmatpush1.msra.mxu0 0.0
        %5585 = vmatprep.subr.mxu0 0.0
        %5586 = vmatpush1.msra.mxu0 0.0
        %5587 = vmatprep.subr.mxu0 0.0
        %5588 = vmatpush1.msra.mxu0 0.0
        %5589 = vmatprep.subr.mxu0 0.0
        %5590 = vmatpush1.msra.mxu0 0.0
        %5591 = vmatprep.subr.mxu0 0.0
        %5592 = vmatpush1.msra.mxu0 0.0
        %5593 = vmatprep.subr.mxu0 0.0
        %5594 = vmatpush1.msra.mxu0 0.0
        %5595 = vmatprep.subr.mxu0 0.0
        %5596 = vmatpush1.msra.mxu0 0.0
        %5597 = vmatprep.subr.mxu0 0.0
        %5598 = vmatpush1.msra.mxu0 0.0
        %5599 = vmatprep.subr.mxu0 0.0
        %5600 = vmatpush1.msra.mxu0 0.0
        %5601 = vmatprep.subr.mxu0 0.0
        %5602 = vmatpush1.msra.mxu0 0.0
        %5603 = vmatprep.subr.mxu0 0.0
        %5604 = vmatpush1.msra.mxu0 0.0
        %5605 = vmatprep.subr.mxu0 0.0
        %5606 = vmatpush1.msra.mxu0 0.0
        %5607 = vmatprep.subr.mxu0 0.0
        %5608 = vmatpush1.msra.mxu0 0.0
        %5609 = vmatprep.subr.mxu0 0.0
        %5610 = vmatpush1.msra.mxu0 0.0
        %5611 = vmatprep.mubr.f32.mxu0 0.0
        %5612 = vmatmul.mubr.f32.gmra.mrb[0].mxu0 %v5545
        %v5613 = vpop.f32.mrb[0].mxu0
        %v5614 = vadd.f32 0.0, %v5613
        %v5615 = vpop.f32.mrb[0].mxu0
        %5616 = vdwg.mxu0
        %v5618 = vsel %vm1270, %v5614, 0
        %5620 = vmatprep.subr.mxu0 0.0
        %5621 = vmatpush1.msra.mxu0 %v4949
        %5622 = vmatprep.subr.mxu0 0.0
        %5623 = vmatpush1.msra.mxu0 0.0
        %5624 = vmatprep.subr.mxu0 0.0
        %5625 = vmatpush1.msra.mxu0 0.0
        %5626 = vmatprep.subr.mxu0 0.0
        %5627 = vmatpush1.msra.mxu0 0.0
        %5628 = vmatprep.subr.mxu0 0.0
        %5629 = vmatpush1.msra.mxu0 0.0
        %5630 = vmatprep.subr.mxu0 0.0
        %5631 = vmatpush1.msra.mxu0 0.0
        %5632 = vmatprep.subr.mxu0 0.0
        %5633 = vmatpush1.msra.mxu0 0.0
        %5634 = vmatprep.subr.mxu0 0.0
        %5635 = vmatpush1.msra.mxu0 0.0
        %5636 = vmatprep.subr.mxu0 0.0
        %5637 = vmatpush1.msra.mxu0 0.0
        %5638 = vmatprep.subr.mxu0 0.0
        %5639 = vmatpush1.msra.mxu0 0.0
        %5640 = vmatprep.subr.mxu0 0.0
        %5641 = vmatpush1.msra.mxu0 0.0
        %5642 = vmatprep.subr.mxu0 0.0
        %5643 = vmatpush1.msra.mxu0 0.0
        %5644 = vmatprep.subr.mxu0 0.0
        %5645 = vmatpush1.msra.mxu0 0.0
        %5646 = vmatprep.subr.mxu0 0.0
        %5647 = vmatpush1.msra.mxu0 0.0
        %5648 = vmatprep.subr.mxu0 0.0
        %5649 = vmatpush1.msra.mxu0 0.0
        %5650 = vmatprep.subr.mxu0 0.0
        %5651 = vmatpush1.msra.mxu0 0.0
        %5652 = vmatprep.subr.mxu0 0.0
        %5653 = vmatpush1.msra.mxu0 0.0
        %5654 = vmatprep.subr.mxu0 0.0
        %5655 = vmatpush1.msra.mxu0 0.0
        %5656 = vmatprep.subr.mxu0 0.0
        %5657 = vmatpush1.msra.mxu0 0.0
        %5658 = vmatprep.subr.mxu0 0.0
        %5659 = vmatpush1.msra.mxu0 0.0
        %5660 = vmatprep.subr.mxu0 0.0
        %5661 = vmatpush1.msra.mxu0 0.0
        %5662 = vmatprep.subr.mxu0 0.0
        %5663 = vmatpush1.msra.mxu0 0.0
        %5664 = vmatprep.subr.mxu0 0.0
        %5665 = vmatpush1.msra.mxu0 0.0
        %5666 = vmatprep.subr.mxu0 0.0
        %5667 = vmatpush1.msra.mxu0 0.0
        %5668 = vmatprep.subr.mxu0 0.0
        %5669 = vmatpush1.msra.mxu0 0.0
        %5670 = vmatprep.subr.mxu0 0.0
        %5671 = vmatpush1.msra.mxu0 0.0
        %5672 = vmatprep.subr.mxu0 0.0
        %5673 = vmatpush1.msra.mxu0 0.0
        %5674 = vmatprep.subr.mxu0 0.0
        %5675 = vmatpush1.msra.mxu0 0.0
        %5676 = vmatprep.subr.mxu0 0.0
        %5677 = vmatpush1.msra.mxu0 0.0
        %5678 = vmatprep.subr.mxu0 0.0
        %5679 = vmatpush1.msra.mxu0 0.0
        %5680 = vmatprep.subr.mxu0 0.0
        %5681 = vmatpush1.msra.mxu0 0.0
        %5682 = vmatprep.subr.mxu0 0.0
        %5683 = vmatpush1.msra.mxu0 0.0
        %5684 = vmatprep.mubr.f32.mxu0 0.0
        %5685 = vmatmul.mubr.f32.gmra.mrb[0].mxu0 %v5618
        %v5686 = vpop.f32.mrb[0].mxu0
        %v5687 = vadd.f32 0.0, %v5686
        %v5688 = vpop.f32.mrb[0].mxu0
        %5689 = vdwg.mxu0
        %v5690 = vadd.f32 %v5440, %v5687
        %v5691 = vadd.f32 %v5443, %v5537
        %5692 = vrot.lane.b32.xlu0 %v4855, 104
        %v5693 = vpop.permute.xlu0 %5692
        %5694 = vrot.lane.b32.xlu0 %v4938, 104
        %v5695 = vpop.permute.xlu0 %5694
        %5696 = vrot.lane.b32.xlu0 %v4943, 104
        %v5697 = vpop.permute.xlu0 %5696
        %v5698 = vsel %vm1270, %v5693, 0
        %v5700 = vsel %vm1270, %v5695, 0
        %v5702 = vsel %vm1270, %v5697, 0
        %5704 = vmatprep.subr.mxu0 0.0
        %5705 = vmatpush1.xpose.msra.mxu0 %v5700
        %5706 = vmatprep.subr.mxu0 0.0
        %5707 = vmatpush1.xpose.msra.mxu0 %v5702
        %5708 = vmatprep.subr.mxu0 0.0
        %5709 = vmatpush1.xpose.msra.mxu0 0.0
        %5710 = vmatprep.subr.mxu0 0.0
        %5711 = vmatpush1.xpose.msra.mxu0 0.0
        %5712 = vmatprep.subr.mxu0 0.0
        %5713 = vmatpush1.xpose.msra.mxu0 0.0
        %5714 = vmatprep.subr.mxu0 0.0
        %5715 = vmatpush1.xpose.msra.mxu0 0.0
        %5716 = vmatprep.subr.mxu0 0.0
        %5717 = vmatpush1.xpose.msra.mxu0 0.0
        %5718 = vmatprep.subr.mxu0 0.0
        %5719 = vmatpush1.xpose.msra.mxu0 0.0
        %5720 = vmatprep.subr.mxu0 0.0
        %5721 = vmatpush1.xpose.msra.mxu0 0.0
        %5722 = vmatprep.subr.mxu0 0.0
        %5723 = vmatpush1.xpose.msra.mxu0 0.0
        %5724 = vmatprep.subr.mxu0 0.0
        %5725 = vmatpush1.xpose.msra.mxu0 0.0
        %5726 = vmatprep.subr.mxu0 0.0
        %5727 = vmatpush1.xpose.msra.mxu0 0.0
        %5728 = vmatprep.subr.mxu0 0.0
        %5729 = vmatpush1.xpose.msra.mxu0 0.0
        %5730 = vmatprep.subr.mxu0 0.0
        %5731 = vmatpush1.xpose.msra.mxu0 0.0
        %5732 = vmatprep.subr.mxu0 0.0
        %5733 = vmatpush1.xpose.msra.mxu0 0.0
        %5734 = vmatprep.subr.mxu0 0.0
        %5735 = vmatpush1.xpose.msra.mxu0 0.0
        %5736 = vmatprep.subr.mxu0 0.0
        %5737 = vmatpush1.xpose.msra.mxu0 0.0
        %5738 = vmatprep.subr.mxu0 0.0
        %5739 = vmatpush1.xpose.msra.mxu0 0.0
        %5740 = vmatprep.subr.mxu0 0.0
        %5741 = vmatpush1.xpose.msra.mxu0 0.0
        %5742 = vmatprep.subr.mxu0 0.0
        %5743 = vmatpush1.xpose.msra.mxu0 0.0
        %5744 = vmatprep.subr.mxu0 0.0
        %5745 = vmatpush1.xpose.msra.mxu0 0.0
        %5746 = vmatprep.subr.mxu0 0.0
        %5747 = vmatpush1.xpose.msra.mxu0 0.0
        %5748 = vmatprep.subr.mxu0 0.0
        %5749 = vmatpush1.xpose.msra.mxu0 0.0
        %5750 = vmatprep.subr.mxu0 0.0
        %5751 = vmatpush1.xpose.msra.mxu0 0.0
        %5752 = vmatprep.subr.mxu0 0.0
        %5753 = vmatpush1.xpose.msra.mxu0 0.0
        %5754 = vmatprep.subr.mxu0 0.0
        %5755 = vmatpush1.xpose.msra.mxu0 0.0
        %5756 = vmatprep.subr.mxu0 0.0
        %5757 = vmatpush1.xpose.msra.mxu0 0.0
        %5758 = vmatprep.subr.mxu0 0.0
        %5759 = vmatpush1.xpose.msra.mxu0 0.0
        %5760 = vmatprep.subr.mxu0 0.0
        %5761 = vmatpush1.xpose.msra.mxu0 0.0
        %5762 = vmatprep.subr.mxu0 0.0
        %5763 = vmatpush1.xpose.msra.mxu0 0.0
        %5764 = vmatprep.subr.mxu0 0.0
        %5765 = vmatpush1.xpose.msra.mxu0 0.0
        %5766 = vmatprep.subr.mxu0 0.0
        %5767 = vmatpush1.xpose.msra.mxu0 0.0
        %5768 = vmatprep.mubr.f32.mxu0 0.0
        %5769 = vmatmul.mubr.f32.gmra.mrb[0].mxu0 %v5698
        %v5770 = vpop.f32.mrb[0].mxu0
        %v5771 = vadd.f32 0.0, %v5770
        %v5772 = vpop.f32.mrb[0].mxu0
        %5773 = vdwg.mxu0
        %v5774 = vmul.f32 %v5771, 0.35355338
        %v5775 = vsel %vm2528, %v5774, -inf
        %5776 = vmax.xlane.f32.xlu0 %v5775
        %v5777 = vpop.xlane.xlu0 %5776
        %v5778 = vsub.f32 %v5774, %v5777
        %v5779 = vmul.f32 %v5778, 1.442695
        %v5780 = vpow.pop %v5779
        %v5781 = vsel %vm2528, %v5780, 0.0
        %5782 = vadd.xlane.f32.xlu0 %v5781
        %v5783 = vpop.xlane.xlu0 %5782
        %v5784 = vrcp.pop %v5783
        %v5785 = vmul.f32 %v5780, %v5784
        %5786 = vrot.lane.b32.xlu0 %v4938, 72
        %v5787 = vpop.permute.xlu0 %5786
        %5788 = vrot.lane.b32.xlu0 %v4943, 72
        %v5789 = vpop.permute.xlu0 %5788
        %v5793 = vsel %vm2528, %v5785, 0
        %5795 = vmatprep.subr.mxu0 0.0
        %5796 = vmatpush1.msra.mxu0 %v5787
        %5797 = vmatprep.subr.mxu0 0.0
        %5798 = vmatpush1.msra.mxu0 %v5789
        %5799 = vmatprep.subr.mxu0 0.0
        %5800 = vmatpush1.msra.mxu0 0.0
        %5801 = vmatprep.subr.mxu0 0.0
        %5802 = vmatpush1.msra.mxu0 0.0
        %5803 = vmatprep.subr.mxu0 0.0
        %5804 = vmatpush1.msra.mxu0 0.0
        %5805 = vmatprep.subr.mxu0 0.0
        %5806 = vmatpush1.msra.mxu0 0.0
        %5807 = vmatprep.subr.mxu0 0.0
        %5808 = vmatpush1.msra.mxu0 0.0
        %5809 = vmatprep.subr.mxu0 0.0
        %5810 = vmatpush1.msra.mxu0 0.0
        %5811 = vmatprep.subr.mxu0 0.0
        %5812 = vmatpush1.msra.mxu0 0.0
        %5813 = vmatprep.subr.mxu0 0.0
        %5814 = vmatpush1.msra.mxu0 0.0
        %5815 = vmatprep.subr.mxu0 0.0
        %5816 = vmatpush1.msra.mxu0 0.0
        %5817 = vmatprep.subr.mxu0 0.0
        %5818 = vmatpush1.msra.mxu0 0.0
        %5819 = vmatprep.subr.mxu0 0.0
        %5820 = vmatpush1.msra.mxu0 0.0
        %5821 = vmatprep.subr.mxu0 0.0
        %5822 = vmatpush1.msra.mxu0 0.0
        %5823 = vmatprep.subr.mxu0 0.0
        %5824 = vmatpush1.msra.mxu0 0.0
        %5825 = vmatprep.subr.mxu0 0.0
        %5826 = vmatpush1.msra.mxu0 0.0
        %5827 = vmatprep.subr.mxu0 0.0
        %5828 = vmatpush1.msra.mxu0 0.0
        %5829 = vmatprep.subr.mxu0 0.0
        %5830 = vmatpush1.msra.mxu0 0.0
        %5831 = vmatprep.subr.mxu0 0.0
        %5832 = vmatpush1.msra.mxu0 0.0
        %5833 = vmatprep.subr.mxu0 0.0
        %5834 = vmatpush1.msra.mxu0 0.0
        %5835 = vmatprep.subr.mxu0 0.0
        %5836 = vmatpush1.msra.mxu0 0.0
        %5837 = vmatprep.subr.mxu0 0.0
        %5838 = vmatpush1.msra.mxu0 0.0
        %5839 = vmatprep.subr.mxu0 0.0
        %5840 = vmatpush1.msra.mxu0 0.0
        %5841 = vmatprep.subr.mxu0 0.0
        %5842 = vmatpush1.msra.mxu0 0.0
        %5843 = vmatprep.subr.mxu0 0.0
        %5844 = vmatpush1.msra.mxu0 0.0
        %5845 = vmatprep.subr.mxu0 0.0
        %5846 = vmatpush1.msra.mxu0 0.0
        %5847 = vmatprep.subr.mxu0 0.0
        %5848 = vmatpush1.msra.mxu0 0.0
        %5849 = vmatprep.subr.mxu0 0.0
        %5850 = vmatpush1.msra.mxu0 0.0
        %5851 = vmatprep.subr.mxu0 0.0
        %5852 = vmatpush1.msra.mxu0 0.0
        %5853 = vmatprep.subr.mxu0 0.0
        %5854 = vmatpush1.msra.mxu0 0.0
        %5855 = vmatprep.subr.mxu0 0.0
        %5856 = vmatpush1.msra.mxu0 0.0
        %5857 = vmatprep.subr.mxu0 0.0
        %5858 = vmatpush1.msra.mxu0 0.0
        %5859 = vmatprep.mubr.f32.mxu0 0.0
        %5860 = vmatmul.mubr.f32.gmra.mrb[0].mxu0 %v5793
        %v5861 = vpop.f32.mrb[0].mxu0
        %v5862 = vadd.f32 0.0, %v5861
        %v5863 = vpop.f32.mrb[0].mxu0
        %5864 = vdwg.mxu0
        %v5866 = vsel %vm1270, %v5862, 0
        %5868 = vmatprep.subr.mxu0 0.0
        %5869 = vmatpush1.msra.mxu0 %v4950
        %5870 = vmatprep.subr.mxu0 0.0
        %5871 = vmatpush1.msra.mxu0 0.0
        %5872 = vmatprep.subr.mxu0 0.0
        %5873 = vmatpush1.msra.mxu0 0.0
        %5874 = vmatprep.subr.mxu0 0.0
        %5875 = vmatpush1.msra.mxu0 0.0
        %5876 = vmatprep.subr.mxu0 0.0
        %5877 = vmatpush1.msra.mxu0 0.0
        %5878 = vmatprep.subr.mxu0 0.0
        %5879 = vmatpush1.msra.mxu0 0.0
        %5880 = vmatprep.subr.mxu0 0.0
        %5881 = vmatpush1.msra.mxu0 0.0
        %5882 = vmatprep.subr.mxu0 0.0
        %5883 = vmatpush1.msra.mxu0 0.0
        %5884 = vmatprep.subr.mxu0 0.0
        %5885 = vmatpush1.msra.mxu0 0.0
        %5886 = vmatprep.subr.mxu0 0.0
        %5887 = vmatpush1.msra.mxu0 0.0
        %5888 = vmatprep.subr.mxu0 0.0
        %5889 = vmatpush1.msra.mxu0 0.0
        %5890 = vmatprep.subr.mxu0 0.0
        %5891 = vmatpush1.msra.mxu0 0.0
        %5892 = vmatprep.subr.mxu0 0.0
        %5893 = vmatpush1.msra.mxu0 0.0
        %5894 = vmatprep.subr.mxu0 0.0
        %5895 = vmatpush1.msra.mxu0 0.0
        %5896 = vmatprep.subr.mxu0 0.0
        %5897 = vmatpush1.msra.mxu0 0.0
        %5898 = vmatprep.subr.mxu0 0.0
        %5899 = vmatpush1.msra.mxu0 0.0
        %5900 = vmatprep.subr.mxu0 0.0
        %5901 = vmatpush1.msra.mxu0 0.0
        %5902 = vmatprep.subr.mxu0 0.0
        %5903 = vmatpush1.msra.mxu0 0.0
        %5904 = vmatprep.subr.mxu0 0.0
        %5905 = vmatpush1.msra.mxu0 0.0
        %5906 = vmatprep.subr.mxu0 0.0
        %5907 = vmatpush1.msra.mxu0 0.0
        %5908 = vmatprep.subr.mxu0 0.0
        %5909 = vmatpush1.msra.mxu0 0.0
        %5910 = vmatprep.subr.mxu0 0.0
        %5911 = vmatpush1.msra.mxu0 0.0
        %5912 = vmatprep.subr.mxu0 0.0
        %5913 = vmatpush1.msra.mxu0 0.0
        %5914 = vmatprep.subr.mxu0 0.0
        %5915 = vmatpush1.msra.mxu0 0.0
        %5916 = vmatprep.subr.mxu0 0.0
        %5917 = vmatpush1.msra.mxu0 0.0
        %5918 = vmatprep.subr.mxu0 0.0
        %5919 = vmatpush1.msra.mxu0 0.0
        %5920 = vmatprep.subr.mxu0 0.0
        %5921 = vmatpush1.msra.mxu0 0.0
        %5922 = vmatprep.subr.mxu0 0.0
        %5923 = vmatpush1.msra.mxu0 0.0
        %5924 = vmatprep.subr.mxu0 0.0
        %5925 = vmatpush1.msra.mxu0 0.0
        %5926 = vmatprep.subr.mxu0 0.0
        %5927 = vmatpush1.msra.mxu0 0.0
        %5928 = vmatprep.subr.mxu0 0.0
        %5929 = vmatpush1.msra.mxu0 0.0
        %5930 = vmatprep.subr.mxu0 0.0
        %5931 = vmatpush1.msra.mxu0 0.0
        %5932 = vmatprep.mubr.f32.mxu0 0.0
        %5933 = vmatmul.mubr.f32.gmra.mrb[0].mxu0 %v5866
        %v5934 = vpop.f32.mrb[0].mxu0
        %v5935 = vadd.f32 0.0, %v5934
        %v5936 = vpop.f32.mrb[0].mxu0
        %5937 = vdwg.mxu0
        %v5938 = vadd.f32 %v5690, %v5935
        %v5939 = vadd.f32 %v5691, %v5785
        %v5941 = vlaneseq
        %v5942 = vshrl.u32 %v5941, 7
        %v5943 = vsub.s32 0, %v5942
        %v5944 = vrot.slane %v4952, %v5943
        %v5946 = vadd.f32 %v5938, %v5944
        %v5947 = vmul.f32 %v5939, 0.25
        %v5948 = vadd.f32 %v4771, %v5946
        %s5949 = scalar_lea.vmem [#allocation15], 1
        %v5950 = vld [vmem:[%s5949] sm:$0x1]
        %s5951 = scalar_lea.vmem [#allocation16], 1
        %v5952 = vld [vmem:[%s5951] sm:$0x1]
        %v5953 = vsel %vm1080, %v5948, 0.0
        %5954 = vadd.xlane.f32.xlu0 %v5953
        %v5955 = vpop.xlane.xlu0 %5954
        %v5956 = vmul.f32 %v5955, %v2242
        %v5957 = vsub.f32 %v5948, %v5956
        %v5958 = vmul.f32 %v5957, %v5957
        %v5959 = vsel %vm1080, %v5958, 0.0
        %5960 = vadd.xlane.f32.xlu0 %v5959
        %v5961 = vpop.xlane.xlu0 %5960
        %v5962 = vmul.f32 %v5961, %v2242
        %v5963 = vadd.f32 %v5962, 1e-05
        %v5964 = vrsqrt.pop %v5963
        %v5965 = vmul.f32 %v5957, %v5964
        %v5967 = vlaneseq
        %v5968 = vshrl.u32 %v5967, 7
        %v5969 = vsub.s32 0, %v5968
        %v5970 = vrot.slane %v5950, %v5969
        %v5972 = vmul.f32 %v5965, %v5970
        %v5974 = vlaneseq
        %v5975 = vshrl.u32 %v5974, 7
        %v5976 = vsub.s32 0, %v5975
        %v5977 = vrot.slane %v5952, %v5976
        %v5979 = vadd.f32 %v5972, %v5977
        %s5980 = scalar_lea.vmem %s1021, 8
        %5981 = vst.msk [vmem:[%s5980] sm:$0xff] %vm2528, %v5947
        %s5982 = scalar_lea.vmem [#allocation18], 32
        %v5983 = vld [vmem:[%s5982] sm:$0xff]
        %v5984 = vld [vmem:[%s5982 + $0x8] sm:$0xff]
        %v5985 = vld [vmem:[%s5982 + $0x10] sm:$0xff]
        %v5986 = vld [vmem:[%s5982 + $0x18] sm:$0xff]
        %s5987 = scalar_lea.vmem [#allocation19], 1
        %v5988 = vld [vmem:[%s5987] sm:$0x1]
        %v5990 = vlaneseq
        %v5991 = vshrl.u32 %v5990, 7
        %v5992 = vsub.s32 0, %v5991
        %v5993 = vrot.slane %v5988, %v5992
        %v5996 = vsel %vm1080, %v5979, 0
        %5998 = vmatprep.subr.mxu0 0.0
        %5999 = vmatpush1.msra.mxu0 %v5983
        %6000 = vmatprep.subr.mxu0 0.0
        %6001 = vmatpush1.msra.mxu0 %v5984
        %6002 = vmatprep.subr.mxu0 0.0
        %6003 = vmatpush1.msra.mxu0 %v5985
        %6004 = vmatprep.subr.mxu0 0.0
        %6005 = vmatpush1.msra.mxu0 %v5986
        %6006 = vmatprep.subr.mxu0 0.0
        %6007 = vmatpush1.msra.mxu0 0.0
        %6008 = vmatprep.subr.mxu0 0.0
        %6009 = vmatpush1.msra.mxu0 0.0
        %6010 = vmatprep.subr.mxu0 0.0
        %6011 = vmatpush1.msra.mxu0 0.0
        %6012 = vmatprep.subr.mxu0 0.0
        %6013 = vmatpush1.msra.mxu0 0.0
        %6014 = vmatprep.subr.mxu0 0.0
        %6015 = vmatpush1.msra.mxu0 0.0
        %6016 = vmatprep.subr.mxu0 0.0
        %6017 = vmatpush1.msra.mxu0 0.0
        %6018 = vmatprep.subr.mxu0 0.0
        %6019 = vmatpush1.msra.mxu0 0.0
        %6020 = vmatprep.subr.mxu0 0.0
        %6021 = vmatpush1.msra.mxu0 0.0
        %6022 = vmatprep.subr.mxu0 0.0
        %6023 = vmatpush1.msra.mxu0 0.0
        %6024 = vmatprep.subr.mxu0 0.0
        %6025 = vmatpush1.msra.mxu0 0.0
        %6026 = vmatprep.subr.mxu0 0.0
        %6027 = vmatpush1.msra.mxu0 0.0
        %6028 = vmatprep.subr.mxu0 0.0
        %6029 = vmatpush1.msra.mxu0 0.0
        %6030 = vmatprep.subr.mxu0 0.0
        %6031 = vmatpush1.msra.mxu0 0.0
        %6032 = vmatprep.subr.mxu0 0.0
        %6033 = vmatpush1.msra.mxu0 0.0
        %6034 = vmatprep.subr.mxu0 0.0
        %6035 = vmatpush1.msra.mxu0 0.0
        %6036 = vmatprep.subr.mxu0 0.0
        %6037 = vmatpush1.msra.mxu0 0.0
        %6038 = vmatprep.subr.mxu0 0.0
        %6039 = vmatpush1.msra.mxu0 0.0
        %6040 = vmatprep.subr.mxu0 0.0
        %6041 = vmatpush1.msra.mxu0 0.0
        %6042 = vmatprep.subr.mxu0 0.0
        %6043 = vmatpush1.msra.mxu0 0.0
        %6044 = vmatprep.subr.mxu0 0.0
        %6045 = vmatpush1.msra.mxu0 0.0
        %6046 = vmatprep.subr.mxu0 0.0
        %6047 = vmatpush1.msra.mxu0 0.0
        %6048 = vmatprep.subr.mxu0 0.0
        %6049 = vmatpush1.msra.mxu0 0.0
        %6050 = vmatprep.subr.mxu0 0.0
        %6051 = vmatpush1.msra.mxu0 0.0
        %6052 = vmatprep.subr.mxu0 0.0
        %6053 = vmatpush1.msra.mxu0 0.0
        %6054 = vmatprep.subr.mxu0 0.0
        %6055 = vmatpush1.msra.mxu0 0.0
        %6056 = vmatprep.subr.mxu0 0.0
        %6057 = vmatpush1.msra.mxu0 0.0
        %6058 = vmatprep.subr.mxu0 0.0
        %6059 = vmatpush1.msra.mxu0 0.0
        %6060 = vmatprep.subr.mxu0 0.0
        %6061 = vmatpush1.msra.mxu0 0.0
        %6062 = vmatprep.mubr.f32.mxu0 0.0
        %6063 = vmatmul.mubr.f32.gmra.mrb[0].mxu0 %v5996
        %v6064 = vpop.f32.mrb[0].mxu0
        %v6065 = vadd.f32 %v5993, %v6064
        %v6066 = vpop.f32.mrb[0].mxu0
        %6067 = vdwg.mxu0
        %v6068 = vmax.f32 %v6065, 0.0
        %s6069 = scalar_lea.vmem %s20, 64
        %v6070 = vld [vmem:[%s6069] sm:$0xff]
        %v6071 = vld [vmem:[%s6069 + $0x8] sm:$0xff]
        %v6072 = vld [vmem:[%s6069 + $0x10] sm:$0xff]
        %v6073 = vld [vmem:[%s6069 + $0x18] sm:$0xff]
        %v6074 = vld [vmem:[%s6069 + $0x20] sm:$0xff]
        %v6075 = vld [vmem:[%s6069 + $0x28] sm:$0xff]
        %v6076 = vld [vmem:[%s6069 + $0x30] sm:$0xff]
        %v6077 = vld [vmem:[%s6069 + $0x38] sm:$0xff]
        %s6078 = scalar_lea.vmem [#allocation21], 1
        %v6079 = vld [vmem:[%s6078] sm:$0x1]
        %v6081 = vlaneseq
        %v6082 = vshrl.u32 %v6081, 7
        %v6083 = vsub.s32 0, %v6082
        %v6084 = vrot.slane %v6079, %v6083
        %v6087 = vsel %vm3575, %v6068, 0
        %6089 = vmatprep.subr.mxu0 0.0
        %6090 = vmatpush1.msra.mxu0 %v6070
        %6091 = vmatprep.subr.mxu0 0.0
        %6092 = vmatpush1.msra.mxu0 %v6071
        %6093 = vmatprep.subr.mxu0 0.0
        %6094 = vmatpush1.msra.mxu0 %v6072
        %6095 = vmatprep.subr.mxu0 0.0
        %6096 = vmatpush1.msra.mxu0 %v6073
        %6097 = vmatprep.subr.mxu0 0.0
        %6098 = vmatpush1.msra.mxu0 %v6074
        %6099 = vmatprep.subr.mxu0 0.0
        %6100 = vmatpush1.msra.mxu0 %v6075
        %6101 = vmatprep.subr.mxu0 0.0
        %6102 = vmatpush1.msra.mxu0 %v6076
        %6103 = vmatprep.subr.mxu0 0.0
        %6104 = vmatpush1.msra.mxu0 %v6077
        %6105 = vmatprep.subr.mxu0 0.0
        %6106 = vmatpush1.msra.mxu0 0.0
        %6107 = vmatprep.subr.mxu0 0.0
        %6108 = vmatpush1.msra.mxu0 0.0
        %6109 = vmatprep.subr.mxu0 0.0
        %6110 = vmatpush1.msra.mxu0 0.0
        %6111 = vmatprep.subr.mxu0 0.0
        %6112 = vmatpush1.msra.mxu0 0.0
        %6113 = vmatprep.subr.mxu0 0.0
        %6114 = vmatpush1.msra.mxu0 0.0
        %6115 = vmatprep.subr.mxu0 0.0
        %6116 = vmatpush1.msra.mxu0 0.0
        %6117 = vmatprep.subr.mxu0 0.0
        %6118 = vmatpush1.msra.mxu0 0.0
        %6119 = vmatprep.subr.mxu0 0.0
        %6120 = vmatpush1.msra.mxu0 0.0
        %6121 = vmatprep.subr.mxu0 0.0
        %6122 = vmatpush1.msra.mxu0 0.0
        %6123 = vmatprep.subr.mxu0 0.0
        %6124 = vmatpush1.msra.mxu0 0.0
        %6125 = vmatprep.subr.mxu0 0.0
        %6126 = vmatpush1.msra.mxu0 0.0
        %6127 = vmatprep.subr.mxu0 0.0
        %6128 = vmatpush1.msra.mxu0 0.0
        %6129 = vmatprep.subr.mxu0 0.0
        %6130 = vmatpush1.msra.mxu0 0.0
        %6131 = vmatprep.subr.mxu0 0.0
        %6132 = vmatpush1.msra.mxu0 0.0
        %6133 = vmatprep.subr.mxu0 0.0
        %6134 = vmatpush1.msra.mxu0 0.0
        %6135 = vmatprep.subr.mxu0 0.0
        %6136 = vmatpush1.msra.mxu0 0.0
        %6137 = vmatprep.subr.mxu0 0.0
        %6138 = vmatpush1.msra.mxu0 0.0
        %6139 = vmatprep.subr.mxu0 0.0
        %6140 = vmatpush1.msra.mxu0 0.0
        %6141 = vmatprep.subr.mxu0 0.0
        %6142 = vmatpush1.msra.mxu0 0.0
        %6143 = vmatprep.subr.mxu0 0.0
        %6144 = vmatpush1.msra.mxu0 0.0
        %6145 = vmatprep.subr.mxu0 0.0
        %6146 = vmatpush1.msra.mxu0 0.0
        %6147 = vmatprep.subr.mxu0 0.0
        %6148 = vmatpush1.msra.mxu0 0.0
        %6149 = vmatprep.subr.mxu0 0.0
        %6150 = vmatpush1.msra.mxu0 0.0
        %6151 = vmatprep.subr.mxu0 0.0
        %6152 = vmatpush1.msra.mxu0 0.0
        %6153 = vmatprep.mubr.f32.mxu0 0.0
        %6154 = vmatmul.mubr.f32.gmra.mrb[0].mxu0 %v6087
        %v6155 = vpop.f32.mrb[0].mxu0
        %v6156 = vadd.f32 %v6084, %v6155
        %v6157 = vpop.f32.mrb[0].mxu0
        %6158 = vdwg.mxu0
        %v6159 = vadd.f32 %v5979, %v6156
        %s6160 = scalar_lea.vmem [#allocation22], 1
        %v6161 = vld [vmem:[%s6160] sm:$0x1]
        %s6162 = scalar_lea.vmem [#allocation24], 1
        %v6163 = vld [vmem:[%s6162] sm:$0x1]
        %v6164 = vsel %vm1080, %v6159, 0.0
        %6165 = vadd.xlane.f32.xlu0 %v6164
        %v6166 = vpop.xlane.xlu0 %6165
        %v6167 = vmul.f32 %v6166, %v2242
        %v6168 = vsub.f32 %v6159, %v6167
        %v6169 = vmul.f32 %v6168, %v6168
        %v6170 = vsel %vm1080, %v6169, 0.0
        %6171 = vadd.xlane.f32.xlu0 %v6170
        %v6172 = vpop.xlane.xlu0 %6171
        %v6173 = vmul.f32 %v6172, %v2242
        %v6174 = vadd.f32 %v6173, 1e-05
        %v6175 = vrsqrt.pop %v6174
        %v6176 = vmul.f32 %v6168, %v6175
        %v6178 = vlaneseq
        %v6179 = vshrl.u32 %v6178, 7
        %v6180 = vsub.s32 0, %v6179
        %v6181 = vrot.slane %v6161, %v6180
        %v6183 = vmul.f32 %v6176, %v6181
        %v6185 = vlaneseq
        %v6186 = vshrl.u32 %v6185, 7
        %v6187 = vsub.s32 0, %v6186
        %v6188 = vrot.slane %v6163, %v6187
        %v6190 = vadd.f32 %v6183, %v6188
        %6191 = vst.msk [vmem:[%s1016] sm:$0xff] %vm1080, %v6190
        %p6192 = scmp.lt.s32.totalorder %s45, 1
        %s6193 = scalar_select %p6192, %s45, 1
        %s6194 = smul.addr %s6193, 8
        %s6195 = scalar_lea.vmem %s24, %s6194
        %p6196 = scmp.lt.s32.totalorder %s45, 1
        %s6197 = scalar_select %p6196, %s45, 1
        %s6198 = smul.addr %s6197, 2
        %s6199 = smul.addr %s6198, 8
        %s6200 = scalar_lea.vmem %s25, %s6199
        // Predicated region
        $region177: #{decoder_forward.1} parent=115 // pred_check
          %p6201 = pneg %p582
        $region178: #{decoder_forward.1} parent=115 // pred_check_branch
          %6203 = sbr.rel (%p6201) target = $region180
        $region179: #{decoder_forward.1} parent=115 // pred_region
          _
        $region180: #{decoder_forward.1} parent=115 // pred_fallthru
          _
        // Predicated region
        $region181: #{decoder_forward.1} parent=115 // pred_check
          %p6204 = pneg %p608
        $region182: #{decoder_forward.1} parent=115 // pred_check_branch
          %6206 = sbr.rel (%p6204) target = $region184
        $region183: #{decoder_forward.1} parent=115 // pred_region
          _
        $region184: #{decoder_forward.1} parent=115 // pred_fallthru
          _
      $region116: #{decoder_forward.1} parent=5 // pred_fallthru
        _
      %p6207 = scmp.le.s32.totalorder 2, %s40
      // Predicated region
      $region185: #{decoder_forward.1} parent=5 // pred_check
        %p6208 = pneg %p6207
      $region186: #{decoder_forward.1} parent=5 // pred_check_branch
        %6210 = sbr.rel (%p6208) target = $region188
      $region187: #{decoder_forward.1} parent=5 // pred_region
        %s6211 = ssub.s32 %s40, 2
        // Predicated region
        $region189: #{decoder_forward.1} parent=187 // pred_check
          %p6212 = pneg %p588
        $region190: #{decoder_forward.1} parent=187 // pred_check_branch
          %6214 = sbr.rel (%p6212) target = $region192
        $region191: #{decoder_forward.1} parent=187 // pred_region
          %p6215 = scmp.lt.s32.totalorder %s46, 1
          %s6216 = scalar_select %p6215, %s46, 1
          %s6217 = smul.addr %s6216, 8
          %s6218 = scalar_lea.vmem %s24, %s6217
        $region192: #{decoder_forward.1} parent=187 // pred_fallthru
          _
        // Predicated region
        $region193: #{decoder_forward.1} parent=187 // pred_check
          %p6219 = pneg %p614
        $region194: #{decoder_forward.1} parent=187 // pred_check_branch
          %6221 = sbr.rel (%p6219) target = $region196
        $region195: #{decoder_forward.1} parent=187 // pred_region
          %p6222 = scmp.lt.s32.totalorder %s46, 1
          %s6223 = scalar_select %p6222, %s46, 1
          %s6224 = smul.addr %s6223, 2
          %s6225 = smul.addr %s6224, 8
          %s6226 = scalar_lea.vmem %s25, %s6225
        $region196: #{decoder_forward.1} parent=187 // pred_fallthru
          _
      $region188: #{decoder_forward.1} parent=5 // pred_fallthru
        _
    $region6: #{decoder_forward.1} parent=1 // loop_footer
      %s44 = sadd.s32 1, %s40
    $region7: #{decoder_forward.1} parent=1 // loop_footer_branch
      %39 = sbr.rel target = $region3
    $region8: #{decoder_forward.1} parent=1 // loop_exit
      _
    %6227 = vsyncpa [#allocation3], 1
    %s6228 = scalar_lea.sflag [#allocation3], 1
    %6229 = vsyncpa %s6228, 1
    %6230 = vsyncpa [#allocation5], 1
    %6231 = vsyncpa [#allocation8], 1
    %6232 = vsyncpa [#allocation11], 1
    %6233 = vsyncpa [#allocation14], 1
    %6234 = vsyncpa [#allocation17], 1
    %6235 = vsyncpa [#allocation20], 1
    %6236 = vsyncpa [#allocation23], 1

</llo_original>
